<compile_context>
chip_gen: v6e
topology: v6e:2x2x1
jax: 0.10.0
libtpu: 0.0.40
codegen_flags: <defaults>
</compile_context>

<pallas_src>
import functools

import numpy as np
import jax
import jax.numpy as jnp
from jax import lax
from jax.experimental import pallas as pl
from jax.experimental.pallas import tpu as pltpu

EPS = 1e-5


# ----------------------------------------------------------------------------
# Pallas kernel: GAP-hoisted fused multi-branch conv (window-sum matmuls + dot)
# ----------------------------------------------------------------------------
def _fused_conv_gap_kernel(xf_ref, q_ref, u_ref, w_ref, b_ref, o_ref,
                           *, N, H, K, inv_hw):
    """xf_ref: (N*H, W*Cin)       lane-dense flattened NHWC input (unpadded)
       q_ref : (W*Cin, K*Cin)     0/1 W-axis sliding-window summation matrix
       u_ref : (K, H)             0/1 H-axis sliding-window summation matrix
       w_ref : (K*K*Cin, M*Cout)  fused (BN-folded, group-expanded, K-padded)
       b_ref : (1, M*Cout)        fused bias
       o_ref : (N, M*Cout)        concatenated per-branch GAP features
    """
    # Stage 1: W-axis window sums for every (n, h) row at once (one MXU op).
    colcat = jnp.dot(xf_ref[...], q_ref[...],
                     preferred_element_type=jnp.float32,
                     precision=lax.Precision.HIGHEST)         # (N*H, K*Cin)
    u = u_ref[...]                                            # (K, H)
    w = w_ref[...]                                            # (K*K*Cin, MCout)
    bias = b_ref[...]                                         # (1, MCout)

    for n in range(N):                                        # static unroll
        # Stage 2: H-axis window sums for image n (one small MXU op).
        t_n = jnp.dot(u, colcat[n * H:(n + 1) * H, :],
                      preferred_element_type=jnp.float32,
                      precision=lax.Precision.HIGHEST)        # (K, K*Cin)
        # Flatten taps (dy major, then dx, then ci) onto the lane axis.
        s_n = jnp.concatenate([t_n[dy:dy + 1, :] for dy in range(K)],
                              axis=-1)                        # (1, K*K*Cin)
        # Stage 3: ONE dot against the fused multi-branch weight.
        out_n = jnp.dot(s_n, w, preferred_element_type=jnp.float32,
                        precision=lax.Precision.HIGHEST)      # (1, MCout)
        o_ref[n:n + 1, :] = (out_n * inv_hw + bias).astype(o_ref.dtype)


def _window_matrices(H, W, Cin, K):
    """Constant 0/1 sliding-window summation matrices.  The clipped bounds
    encode the zero padding of a stride-1 "same" conv, so the input is never
    physically padded."""
    P = K // 2
    u = np.zeros((K, H), np.float32)
    q = np.zeros((W * Cin, K * Cin), np.float32)
    eye = np.eye(Cin, dtype=np.float32)
    for d in range(K):
        lo_h, hi_h = max(0, d - P), min(H, d - P + H)
        u[d, lo_h:hi_h] = 1.0
        lo_w, hi_w = max(0, d - P), min(W, d - P + W)
        for j in range(lo_w, hi_w):
            q[j * Cin:(j + 1) * Cin, d * Cin:(d + 1) * Cin] = eye
    return jnp.asarray(u), jnp.asarray(q)


def ac_multi_kernal_forward(x_nchw, w2d, b_all, *, K):
    """Full AC_Multi_Kernal forward.  Returns (N, M*Cout)."""
    N, Cin, H, W = x_nchw.shape
    MCout = w2d.shape[-1]
    # NHWC (channels on the lane axis) flattened to a lane-dense 2-D slab;
    # the reshape/transpose is cheap wrapper-side layout plumbing.
    xf = jnp.transpose(x_nchw, (0, 2, 3, 1)).reshape(N * H, W * Cin)
    u, q = _window_matrices(H, W, Cin, K)

    kern = functools.partial(_fused_conv_gap_kernel, N=N, H=H, K=K,
                             inv_hw=1.0 / float(H * W))
    out = pl.pallas_call(
        kern,
        out_shape=jax.ShapeDtypeStruct((N, MCout), jnp.float32),
        grid=(1,),
        in_specs=[
            pl.BlockSpec((N * H, W * Cin), lambda i: (0, 0)),
            pl.BlockSpec((W * Cin, K * Cin), lambda i: (0, 0)),
            pl.BlockSpec((K, H), lambda i: (0, 0)),
            pl.BlockSpec(w2d.shape, lambda i: (0, 0)),
            pl.BlockSpec((1, MCout), lambda i: (0, 0)),
        ],
        out_specs=pl.BlockSpec((N, MCout), lambda i: (0, 0)),
        compiler_params=pltpu.CompilerParams(
            dimension_semantics=("arbitrary",)),
    )(xf, q, u, w2d, b_all.reshape(1, MCout))
    return out


# ----------------------------------------------------------------------------
# Parameter construction (deterministic) and ACBlock fusion (plain JAX glue)
# ----------------------------------------------------------------------------
def build_acblock_params(key, Cin, Cout, K, G):
    ks = jax.random.split(key, 6)
    cin_g = Cin // G

    def bn_params(k):
        k0, k1, k2, k3 = jax.random.split(k, 4)
        gamma = 1.0 + 0.1 * jax.random.normal(k0, (Cout,), jnp.float32)
        beta = 0.1 * jax.random.normal(k1, (Cout,), jnp.float32)
        mean = 0.05 * jax.random.normal(k2, (Cout,), jnp.float32)
        var = 1.0 + 0.1 * jax.random.uniform(k3, (Cout,), jnp.float32)
        return gamma, beta, mean, var

    return {
        "w_sq": 0.1 * jax.random.normal(ks[0], (Cout, cin_g, K, K), jnp.float32),
        "w_ver": 0.1 * jax.random.normal(ks[1], (Cout, cin_g, K, 1), jnp.float32),
        "w_hor": 0.1 * jax.random.normal(ks[2], (Cout, cin_g, 1, K), jnp.float32),
        "bn_sq": bn_params(ks[3]),
        "bn_ver": bn_params(ks[4]),
        "bn_hor": bn_params(ks[5]),
    }


def _fold_bn(w, bn):
    gamma, beta, mean, var = bn
    scale = gamma / jnp.sqrt(var + EPS)
    return w * scale[:, None, None, None], beta - mean * scale


def fuse_acblock(params, Cin, Cout, K, G):
    """Fuse square+ver+hor convs (BN folded) and expand groups to a dense
    block-diagonal kernel.  Returns (w:(K,K,Cin,Cout), b:(Cout,))."""
    cin_g, cout_g = Cin // G, Cout // G
    c = K // 2
    w_sq, b_sq = _fold_bn(params["w_sq"], params["bn_sq"])
    w_v, b_v = _fold_bn(params["w_ver"], params["bn_ver"])
    w_h, b_h = _fold_bn(params["w_hor"], params["bn_hor"])
    w_eff = w_sq
    w_eff = w_eff.at[:, :, :, c].add(w_v[:, :, :, 0])   # center column
    w_eff = w_eff.at[:, :, c, :].add(w_h[:, :, 0, :])   # center row
    b_eff = b_sq + b_v + b_h

    w_dense = jnp.zeros((Cout, Cin, K, K), jnp.float32)
    for g in range(G):
        w_dense = w_dense.at[g * cout_g:(g + 1) * cout_g,
                             g * cin_g:(g + 1) * cin_g].set(
            w_eff[g * cout_g:(g + 1) * cout_g])
    return jnp.transpose(w_dense, (2, 3, 1, 0)), b_eff   # (K,K,Cin,Cout)


def fuse_branches(raw_params, kernel_sizes, Cin, Cout, G):
    """Zero-pad every branch's fused KxK kernel to Kmax x Kmax (exactly
    equivalent for stride-1 'same' convs) and concatenate along Cout, so the
    whole module becomes ONE weight (Kmax*Kmax*Cin, M*Cout) + bias."""
    Kmax = max(kernel_sizes)
    ws, bs = [], []
    for p_, K in zip(raw_params, kernel_sizes):
        w, b = fuse_acblock(p_, Cin, Cout, K, G)          # (K,K,Cin,Cout)
        off = (Kmax - K) // 2
        w_pad = jnp.zeros((Kmax, Kmax, Cin, Cout), jnp.float32)
        w_pad = w_pad.at[off:off + K, off:off + K].set(w)
        ws.append(w_pad)
        bs.append(b)
    w_all = jnp.concatenate(ws, axis=-1)                  # (Kmax,Kmax,Cin,M*Cout)
    b_all = jnp.concatenate(bs, axis=-1)                  # (M*Cout,)
    return w_all.reshape(Kmax * Kmax * Cin, -1), b_all, Kmax


# ----------------------------------------------------------------------------
# Pure-JAX reference (per-branch grouped convs + eval BN + GAP + concat)
# ----------------------------------------------------------------------------
def _bn_eval(y, bn):
    gamma, beta, mean, var = bn
    scale = gamma / jnp.sqrt(var + EPS)
    return (y * scale[None, :, None, None]
            + (beta - mean * scale)[None, :, None, None])


def acblock_gap_ref(x_nchw, p_, K, G):
    p = K // 2

    def conv(w, pad):
        return lax.conv_general_dilated(
            x_nchw, w, (1, 1), pad,
            dimension_numbers=("NCHW", "OIHW", "NCHW"),
            feature_group_count=G, precision=lax.Precision.HIGHEST)

    y = (_bn_eval(conv(p_["w_sq"], [(p, p), (p, p)]), p_["bn_sq"])
         + _bn_eval(conv(p_["w_ver"], [(p, p), (0, 0)]), p_["bn_ver"])
         + _bn_eval(conv(p_["w_hor"], [(0, 0), (p, p)]), p_["bn_hor"]))
    return jnp.mean(y, axis=(2, 3))


def ac_multi_kernal_ref(x_nchw, raw_params, kernel_sizes, G):
    feas = [acblock_gap_ref(x_nchw, p, K, G)
            for p, K in zip(raw_params, kernel_sizes)]
    return jnp.concatenate(feas, axis=1)


# ----------------------------------------------------------------------------
if __name__ == "__main__":
    N, Cin, Cout, H, W = 2, 16, 16, 16, 16
    M, G = 3, 8

    key = jax.random.PRNGKey(0)
    kx, kp = jax.random.split(key)
    x = jax.random.normal(kx, (N, Cin, H, W), jnp.float32)   # NCHW like PyTorch

    kernel_sizes = [3 + 2 * i for i in range(M)]             # 3, 5, 7
    branch_keys = jax.random.split(kp, M)
    raw_params = [build_acblock_params(branch_keys[i], Cin, Cout,
                                       kernel_sizes[i], G) for i in range(M)]
    w2d, b_all, Kmax = fuse_branches(raw_params, kernel_sizes, Cin, Cout, G)

    out = ac_multi_kernal_forward(x, w2d, b_all, K=Kmax)
    out = jax.block_until_ready(out)
    assert out.shape == (N, M * Cout), out.shape

    ref = ac_multi_kernal_ref(x, raw_params, kernel_sizes, G)
    ref = jax.block_until_ready(ref)
    np.testing.assert_allclose(np.asarray(out), np.asarray(ref),
                               rtol=1e-2, atol=1e-3)
    print("KERNEL_OK")
</pallas_src>

<mosaic_0001>
module attributes {stable_mosaic.version = 11 : i64} {
  func.func @_fused_conv_gap_kernel(%arg0: i32, %arg1: memref<32x256xf32, #tpu.memory_space<vmem>>, %arg2: memref<256x112xf32, #tpu.memory_space<vmem>>, %arg3: memref<7x16xf32, #tpu.memory_space<vmem>>, %arg4: memref<784x48xf32, #tpu.memory_space<vmem>>, %arg5: memref<1x48xf32, #tpu.memory_space<vmem>>, %arg6: memref<2x48xf32, #tpu.memory_space<vmem>>) attributes {dimension_semantics = [#tpu.dimension_semantics<arbitrary>], iteration_bounds = array<i64: 1>, scalar_prefetch = 0 : i64, scratch_operands = 0 : i64, tpu.core_type = #tpu.core_type<tc>, window_params = [{pipeline_mode = #tpu.pipeline_mode<synchronous>, transform_indices = @transform_0, window_bounds = array<i64: 32, 256>}, {pipeline_mode = #tpu.pipeline_mode<synchronous>, transform_indices = @transform_1, window_bounds = array<i64: 256, 112>}, {pipeline_mode = #tpu.pipeline_mode<synchronous>, transform_indices = @transform_2, window_bounds = array<i64: 7, 16>}, {pipeline_mode = #tpu.pipeline_mode<synchronous>, transform_indices = @transform_3, window_bounds = array<i64: 784, 48>}, {pipeline_mode = #tpu.pipeline_mode<synchronous>, transform_indices = @transform_4, window_bounds = array<i64: 1, 48>}, {pipeline_mode = #tpu.pipeline_mode<synchronous>, transform_indices = @transform_5, window_bounds = array<i64: 2, 48>}]} {
    %c0 = arith.constant 0 : index
    %c0_0 = arith.constant 0 : index
    %0 = vector.load %arg1[%c0, %c0_0] : memref<32x256xf32, #tpu.memory_space<vmem>>, vector<32x256xf32>
    %c0_1 = arith.constant 0 : index
    %c0_2 = arith.constant 0 : index
    %1 = vector.load %arg2[%c0_1, %c0_2] : memref<256x112xf32, #tpu.memory_space<vmem>>, vector<256x112xf32>
    %cst = arith.constant dense<0.000000e+00> : vector<32x112xf32>
    %2 = tpu.matmul %0, %1, %cst {dimension_numbers = #tpu.dot_dimension_numbers<[1], [0], [0], [1], [0, 0, 1, 1], [], []>, precision = #tpu.contract_precision<fp32>} : vector<32x256xf32>, vector<256x112xf32>, vector<32x112xf32> -> vector<32x112xf32>
    %c0_3 = arith.constant 0 : index
    %c0_4 = arith.constant 0 : index
    %3 = vector.load %arg3[%c0_3, %c0_4] : memref<7x16xf32, #tpu.memory_space<vmem>>, vector<7x16xf32>
    %c0_5 = arith.constant 0 : index
    %c0_6 = arith.constant 0 : index
    %4 = vector.load %arg4[%c0_5, %c0_6] : memref<784x48xf32, #tpu.memory_space<vmem>>, vector<784x48xf32>
    %c0_7 = arith.constant 0 : index
    %c0_8 = arith.constant 0 : index
    %5 = vector.load %arg5[%c0_7, %c0_8] : memref<1x48xf32, #tpu.memory_space<vmem>>, vector<1x48xf32>
    %6 = vector.extract_strided_slice %2 {offsets = [0, 0], sizes = [16, 112], strides = [1, 1]} : vector<32x112xf32> to vector<16x112xf32>
    %cst_9 = arith.constant dense<0.000000e+00> : vector<7x112xf32>
    %7 = tpu.matmul %3, %6, %cst_9 {dimension_numbers = #tpu.dot_dimension_numbers<[1], [0], [0], [1], [0, 0, 1, 1], [], []>, precision = #tpu.contract_precision<fp32>} : vector<7x16xf32>, vector<16x112xf32>, vector<7x112xf32> -> vector<7x112xf32>
    %8 = vector.extract_strided_slice %7 {offsets = [0, 0], sizes = [1, 112], strides = [1, 1]} : vector<7x112xf32> to vector<1x112xf32>
    %9 = vector.extract_strided_slice %7 {offsets = [1, 0], sizes = [1, 112], strides = [1, 1]} : vector<7x112xf32> to vector<1x112xf32>
    %10 = vector.extract_strided_slice %7 {offsets = [2, 0], sizes = [1, 112], strides = [1, 1]} : vector<7x112xf32> to vector<1x112xf32>
    %11 = vector.extract_strided_slice %7 {offsets = [3, 0], sizes = [1, 112], strides = [1, 1]} : vector<7x112xf32> to vector<1x112xf32>
    %12 = vector.extract_strided_slice %7 {offsets = [4, 0], sizes = [1, 112], strides = [1, 1]} : vector<7x112xf32> to vector<1x112xf32>
    %13 = vector.extract_strided_slice %7 {offsets = [5, 0], sizes = [1, 112], strides = [1, 1]} : vector<7x112xf32> to vector<1x112xf32>
    %14 = vector.extract_strided_slice %7 {offsets = [6, 0], sizes = [1, 112], strides = [1, 1]} : vector<7x112xf32> to vector<1x112xf32>
    %15 = tpu.concatenate %8, %9, %10, %11, %12, %13, %14 in 1 : vector<1x112xf32>, vector<1x112xf32>, vector<1x112xf32>, vector<1x112xf32>, vector<1x112xf32>, vector<1x112xf32>, vector<1x112xf32> -> vector<1x784xf32>
    %cst_10 = arith.constant dense<0.000000e+00> : vector<1x48xf32>
    %16 = tpu.matmul %15, %4, %cst_10 {dimension_numbers = #tpu.dot_dimension_numbers<[1], [0], [0], [1], [0, 0, 1, 1], [], []>, precision = #tpu.contract_precision<fp32>} : vector<1x784xf32>, vector<784x48xf32>, vector<1x48xf32> -> vector<1x48xf32>
    %cst_11 = arith.constant 3.906250e-03 : f32
    %17 = vector.broadcast %cst_11 : f32 to vector<1x48xf32>
    %18 = arith.mulf %16, %17 : vector<1x48xf32>
    %19 = arith.addf %18, %5 : vector<1x48xf32>
    %c0_12 = arith.constant 0 : index
    %c0_13 = arith.constant 0 : index
    %20 = vector.load %arg6[%c0_12, %c0_13] : memref<2x48xf32, #tpu.memory_space<vmem>>, vector<1x48xf32>
    tpu.vector_store %arg6[%c0_12, %c0_13], %19 {strides = array<i32>} : memref<2x48xf32, #tpu.memory_space<vmem>>, vector<1x48xf32>,
    %21 = vector.extract_strided_slice %2 {offsets = [16, 0], sizes = [16, 112], strides = [1, 1]} : vector<32x112xf32> to vector<16x112xf32>
    %cst_14 = arith.constant dense<0.000000e+00> : vector<7x112xf32>
    %22 = tpu.matmul %3, %21, %cst_14 {dimension_numbers = #tpu.dot_dimension_numbers<[1], [0], [0], [1], [0, 0, 1, 1], [], []>, precision = #tpu.contract_precision<fp32>} : vector<7x16xf32>, vector<16x112xf32>, vector<7x112xf32> -> vector<7x112xf32>
    %23 = vector.extract_strided_slice %22 {offsets = [0, 0], sizes = [1, 112], strides = [1, 1]} : vector<7x112xf32> to vector<1x112xf32>
    %24 = vector.extract_strided_slice %22 {offsets = [1, 0], sizes = [1, 112], strides = [1, 1]} : vector<7x112xf32> to vector<1x112xf32>
    %25 = vector.extract_strided_slice %22 {offsets = [2, 0], sizes = [1, 112], strides = [1, 1]} : vector<7x112xf32> to vector<1x112xf32>
    %26 = vector.extract_strided_slice %22 {offsets = [3, 0], sizes = [1, 112], strides = [1, 1]} : vector<7x112xf32> to vector<1x112xf32>
    %27 = vector.extract_strided_slice %22 {offsets = [4, 0], sizes = [1, 112], strides = [1, 1]} : vector<7x112xf32> to vector<1x112xf32>
    %28 = vector.extract_strided_slice %22 {offsets = [5, 0], sizes = [1, 112], strides = [1, 1]} : vector<7x112xf32> to vector<1x112xf32>
    %29 = vector.extract_strided_slice %22 {offsets = [6, 0], sizes = [1, 112], strides = [1, 1]} : vector<7x112xf32> to vector<1x112xf32>
    %30 = tpu.concatenate %23, %24, %25, %26, %27, %28, %29 in 1 : vector<1x112xf32>, vector<1x112xf32>, vector<1x112xf32>, vector<1x112xf32>, vector<1x112xf32>, vector<1x112xf32>, vector<1x112xf32> -> vector<1x784xf32>
    %cst_15 = arith.constant dense<0.000000e+00> : vector<1x48xf32>
    %31 = tpu.matmul %30, %4, %cst_15 {dimension_numbers = #tpu.dot_dimension_numbers<[1], [0], [0], [1], [0, 0, 1, 1], [], []>, precision = #tpu.contract_precision<fp32>} : vector<1x784xf32>, vector<784x48xf32>, vector<1x48xf32> -> vector<1x48xf32>
    %cst_16 = arith.constant 3.906250e-03 : f32
    %32 = vector.broadcast %cst_16 : f32 to vector<1x48xf32>
    %33 = arith.mulf %31, %32 : vector<1x48xf32>
    %34 = arith.addf %33, %5 : vector<1x48xf32>
    %c1 = arith.constant 1 : index
    %c0_17 = arith.constant 0 : index
    %35 = vector.load %arg6[%c1, %c0_17] : memref<2x48xf32, #tpu.memory_space<vmem>>, vector<1x48xf32>
    tpu.vector_store %arg6[%c1, %c0_17], %34 {strides = array<i32>} : memref<2x48xf32, #tpu.memory_space<vmem>>, vector<1x48xf32>,
    return
  }
  func.func @transform_0(%arg0: i32) -> (i32, i32) {
    %c0_i32 = arith.constant 0 : i32
    %c0_i32_0 = arith.constant 0 : i32
    %c0_i32_1 = arith.constant 0 : i32
    return %c0_i32, %c0_i32_0 : i32, i32
  }
  func.func @transform_1(%arg0: i32) -> (i32, i32) {
    %c0_i32 = arith.constant 0 : i32
    %c0_i32_0 = arith.constant 0 : i32
    %c0_i32_1 = arith.constant 0 : i32
    return %c0_i32, %c0_i32_0 : i32, i32
  }
  func.func @transform_2(%arg0: i32) -> (i32, i32) {
    %c0_i32 = arith.constant 0 : i32
    %c0_i32_0 = arith.constant 0 : i32
    %c0_i32_1 = arith.constant 0 : i32
    return %c0_i32, %c0_i32_0 : i32, i32
  }
  func.func @transform_3(%arg0: i32) -> (i32, i32) {
    %c0_i32 = arith.constant 0 : i32
    %c0_i32_0 = arith.constant 0 : i32
    %c0_i32_1 = arith.constant 0 : i32
    return %c0_i32, %c0_i32_0 : i32, i32
  }
  func.func @transform_4(%arg0: i32) -> (i32, i32) {
    %c0_i32 = arith.constant 0 : i32
    %c0_i32_0 = arith.constant 0 : i32
    %c0_i32_1 = arith.constant 0 : i32
    return %c0_i32, %c0_i32_0 : i32, i32
  }
  func.func @transform_5(%arg0: i32) -> (i32, i32) {
    %c0_i32 = arith.constant 0 : i32
    %c0_i32_0 = arith.constant 0 : i32
    %c0_i32_1 = arith.constant 0 : i32
    return %c0_i32, %c0_i32_0 : i32, i32
  }
}

</mosaic_0001>

<llo_original>
// kernel: tpu_custom_call.1
$region0: #{tpu_custom_call.1}
  #allocation0 [shape = 'u32[]', space=smem, size = 0x4, offset = 0x4, fixed_abs, tag = 'smem constant byte address 0x4 - core index']
  #allocation1 [shape = 'u32[144,128]{1,0:T(1,128)}', space=vmem, size = 0x12000, scoped, tag = 'internal scratch']
  %s0 = inlined_call_operand.vmem [shape: f32[32,256], index: 0, kind: input, shape index: {}]
  %s1 = inlined_call_operand.vmem [shape: f32[256,112], index: 1, kind: input, shape index: {}]
  %s2 = inlined_call_operand.vmem [shape: f32[7,16], index: 2, kind: input, shape index: {}]
  %s3 = inlined_call_operand.vmem [shape: f32[784,48], index: 3, kind: input, shape index: {}]
  %s4 = inlined_call_operand.vmem [shape: f32[1,48], index: 4, kind: input, shape index: {}]
  %s5 = inlined_call_operand.hbm [shape: f32[2,48], index: 5, kind: output, shape index: {}]
  %s6 = sld [smem:[#allocation0]]
  $region30: #{tpu_custom_call.1} parent=0
    _
  %s8 = ssub.s32 1, %s6
  %s9 = scalar_select 0, %s8, %s6
  $region1: #{tpu_custom_call.1} parent=0
    #allocation2 [shape = 'u8[1024]{0}', space=vmem, size = 0x400, scoped, tag = 'output window, operand 0, single buffered']
    #allocation3 [shape = 's32[1]{0}', space=sflag, size = 0x4, scoped, tag = 'scoped memory for tpu_custom_call.1']
    %10 = vsyncpa [#allocation3], 0
    // Predicated region
    $region2: #{tpu_custom_call.1} parent=1 // pred_check
      _
    $region3: #{tpu_custom_call.1} parent=1 // pred_check_branch
      %12 = sbr.rel (0) target = $region5
    $region4: #{tpu_custom_call.1} parent=1 // pred_region
      _
    $region5: #{tpu_custom_call.1} parent=1 // pred_fallthru
      _
    // Predicated region
    $region6: #{tpu_custom_call.1} parent=1 // pred_check
      _
    $region7: #{tpu_custom_call.1} parent=1 // pred_check_branch
      %14 = sbr.rel (0) target = $region9
    $region8: #{tpu_custom_call.1} parent=1 // pred_region
      _
    $region9: #{tpu_custom_call.1} parent=1 // pred_fallthru
      _
    // Predicated region
    $region10: #{tpu_custom_call.1} parent=1 // pred_check
      _
    $region11: #{tpu_custom_call.1} parent=1 // pred_check_branch
      %16 = sbr.rel (0) target = $region13
    $region12: #{tpu_custom_call.1} parent=1 // pred_region
      _
    $region13: #{tpu_custom_call.1} parent=1 // pred_fallthru
      _
    // Predicated region
    $region14: #{tpu_custom_call.1} parent=1 // pred_check
      _
    $region15: #{tpu_custom_call.1} parent=1 // pred_check_branch
      %18 = sbr.rel (0) target = $region17
    $region16: #{tpu_custom_call.1} parent=1 // pred_region
      _
    $region17: #{tpu_custom_call.1} parent=1 // pred_fallthru
      _
    // Predicated region
    $region18: #{tpu_custom_call.1} parent=1 // pred_check
      _
    $region19: #{tpu_custom_call.1} parent=1 // pred_check_branch
      %20 = sbr.rel (0) target = $region21
    $region20: #{tpu_custom_call.1} parent=1 // pred_region
      _
    $region21: #{tpu_custom_call.1} parent=1 // pred_fallthru
      _
    %v21 = vld [vmem:[%s0] sm:$0xff]
    %v22 = vld [vmem:[%s0 + $0x8] sm:$0xff]
    %v23 = vld [vmem:[%s0 + $0x10] sm:$0xff]
    %v24 = vld [vmem:[%s0 + $0x18] sm:$0xff]
    %v25 = vld [vmem:[%s0 + $0x20] sm:$0xff]
    %v26 = vld [vmem:[%s0 + $0x28] sm:$0xff]
    %v27 = vld [vmem:[%s0 + $0x30] sm:$0xff]
    %v28 = vld [vmem:[%s0 + $0x38] sm:$0xff]
    %v29 = vld [vmem:[%s1] sm:$0xff]
    %v30 = vld [vmem:[%s1 + $0x8] sm:$0xff]
    %v31 = vld [vmem:[%s1 + $0x10] sm:$0xff]
    %v32 = vld [vmem:[%s1 + $0x18] sm:$0xff]
    %v33 = vld [vmem:[%s1 + $0x20] sm:$0xff]
    %v34 = vld [vmem:[%s1 + $0x28] sm:$0xff]
    %v35 = vld [vmem:[%s1 + $0x30] sm:$0xff]
    %v36 = vld [vmem:[%s1 + $0x38] sm:$0xff]
    %v37 = vld [vmem:[%s1 + $0x40] sm:$0xff]
    %v38 = vld [vmem:[%s1 + $0x48] sm:$0xff]
    %v39 = vld [vmem:[%s1 + $0x50] sm:$0xff]
    %v40 = vld [vmem:[%s1 + $0x58] sm:$0xff]
    %v41 = vld [vmem:[%s1 + $0x60] sm:$0xff]
    %v42 = vld [vmem:[%s1 + $0x68] sm:$0xff]
    %v43 = vld [vmem:[%s1 + $0x70] sm:$0xff]
    %v44 = vld [vmem:[%s1 + $0x78] sm:$0xff]
    %v45 = vld [vmem:[%s1 + $0x80] sm:$0xff]
    %v46 = vld [vmem:[%s1 + $0x88] sm:$0xff]
    %v47 = vld [vmem:[%s1 + $0x90] sm:$0xff]
    %v48 = vld [vmem:[%s1 + $0x98] sm:$0xff]
    %v49 = vld [vmem:[%s1 + $0xa0] sm:$0xff]
    %v50 = vld [vmem:[%s1 + $0xa8] sm:$0xff]
    %v51 = vld [vmem:[%s1 + $0xb0] sm:$0xff]
    %v52 = vld [vmem:[%s1 + $0xb8] sm:$0xff]
    %v53 = vld [vmem:[%s1 + $0xc0] sm:$0xff]
    %v54 = vld [vmem:[%s1 + $0xc8] sm:$0xff]
    %v55 = vld [vmem:[%s1 + $0xd0] sm:$0xff]
    %v56 = vld [vmem:[%s1 + $0xd8] sm:$0xff]
    %v57 = vld [vmem:[%s1 + $0xe0] sm:$0xff]
    %v58 = vld [vmem:[%s1 + $0xe8] sm:$0xff]
    %v59 = vld [vmem:[%s1 + $0xf0] sm:$0xff]
    %v60 = vld [vmem:[%s1 + $0xf8] sm:$0xff]
    %61 = vmatprep.subr.mxu0 0.0
    %v62 = vand.u32 %v44, 4294901760
    %63 = vmatpush1.msra.mxu0 %v62
    %64 = vmatprep.subr.mxu0 0.0
    %v65 = vand.u32 %v43, 4294901760
    %66 = vmatpush1.msra.mxu0 %v65
    %67 = vmatprep.subr.mxu0 0.0
    %v68 = vand.u32 %v42, 4294901760
    %69 = vmatpush1.msra.mxu0 %v68
    %70 = vmatprep.subr.mxu0 0.0
    %v71 = vand.u32 %v41, 4294901760
    %72 = vmatpush1.msra.mxu0 %v71
    %73 = vmatprep.subr.mxu0 0.0
    %v74 = vand.u32 %v40, 4294901760
    %75 = vmatpush1.msra.mxu0 %v74
    %76 = vmatprep.subr.mxu0 0.0
    %v77 = vand.u32 %v39, 4294901760
    %78 = vmatpush1.msra.mxu0 %v77
    %79 = vmatprep.subr.mxu0 0.0
    %v80 = vand.u32 %v38, 4294901760
    %81 = vmatpush1.msra.mxu0 %v80
    %82 = vmatprep.subr.mxu0 0.0
    %v83 = vand.u32 %v37, 4294901760
    %84 = vmatpush1.msra.mxu0 %v83
    %85 = vmatprep.subr.mxu0 0.0
    %v86 = vand.u32 %v36, 4294901760
    %87 = vmatpush1.msra.mxu0 %v86
    %88 = vmatprep.subr.mxu0 0.0
    %v89 = vand.u32 %v35, 4294901760
    %90 = vmatpush1.msra.mxu0 %v89
    %91 = vmatprep.subr.mxu0 0.0
    %v92 = vand.u32 %v34, 4294901760
    %93 = vmatpush1.msra.mxu0 %v92
    %94 = vmatprep.subr.mxu0 0.0
    %v95 = vand.u32 %v33, 4294901760
    %96 = vmatpush1.msra.mxu0 %v95
    %97 = vmatprep.subr.mxu0 0.0
    %v98 = vand.u32 %v32, 4294901760
    %99 = vmatpush1.msra.mxu0 %v98
    %100 = vmatprep.subr.mxu0 0.0
    %v101 = vand.u32 %v31, 4294901760
    %102 = vmatpush1.msra.mxu0 %v101
    %103 = vmatprep.subr.mxu0 0.0
    %v104 = vand.u32 %v30, 4294901760
    %105 = vmatpush1.msra.mxu0 %v104
    %106 = vmatprep.subr.mxu0 0.0
    %v107 = vand.u32 %v29, 4294901760
    %108 = vmatpush1.msra.mxu0 %v107
    %109 = vmatprep.subr.mxu0 0.0
    %v110 = vand.u32 %v60, 4294901760
    %111 = vmatpush2.msra.mxu0 %v110
    %112 = vmatprep.subr.mxu0 0.0
    %v113 = vand.u32 %v59, 4294901760
    %114 = vmatpush2.msra.mxu0 %v113
    %115 = vmatprep.subr.mxu0 0.0
    %v116 = vand.u32 %v58, 4294901760
    %117 = vmatpush2.msra.mxu0 %v116
    %118 = vmatprep.subr.mxu0 0.0
    %v119 = vand.u32 %v57, 4294901760
    %120 = vmatpush2.msra.mxu0 %v119
    %121 = vmatprep.subr.mxu0 0.0
    %v122 = vand.u32 %v56, 4294901760
    %123 = vmatpush2.msra.mxu0 %v122
    %124 = vmatprep.subr.mxu0 0.0
    %v125 = vand.u32 %v55, 4294901760
    %126 = vmatpush2.msra.mxu0 %v125
    %127 = vmatprep.subr.mxu0 0.0
    %v128 = vand.u32 %v54, 4294901760
    %129 = vmatpush2.msra.mxu0 %v128
    %130 = vmatprep.subr.mxu0 0.0
    %v131 = vand.u32 %v53, 4294901760
    %132 = vmatpush2.msra.mxu0 %v131
    %133 = vmatprep.subr.mxu0 0.0
    %v134 = vand.u32 %v52, 4294901760
    %135 = vmatpush2.msra.mxu0 %v134
    %136 = vmatprep.subr.mxu0 0.0
    %v137 = vand.u32 %v51, 4294901760
    %138 = vmatpush2.msra.mxu0 %v137
    %139 = vmatprep.subr.mxu0 0.0
    %v140 = vand.u32 %v50, 4294901760
    %141 = vmatpush2.msra.mxu0 %v140
    %142 = vmatprep.subr.mxu0 0.0
    %v143 = vand.u32 %v49, 4294901760
    %144 = vmatpush2.msra.mxu0 %v143
    %145 = vmatprep.subr.mxu0 0.0
    %v146 = vand.u32 %v48, 4294901760
    %147 = vmatpush2.msra.mxu0 %v146
    %148 = vmatprep.subr.mxu0 0.0
    %v149 = vand.u32 %v47, 4294901760
    %150 = vmatpush2.msra.mxu0 %v149
    %151 = vmatprep.subr.mxu0 0.0
    %v152 = vand.u32 %v46, 4294901760
    %153 = vmatpush2.msra.mxu0 %v152
    %154 = vmatprep.subr.mxu0 0.0
    %v155 = vand.u32 %v45, 4294901760
    %156 = vmatpush2.msra.mxu0 %v155
    %v157 = vand.u32 %v22, 4294901760
    %v158 = vsub.f32 %v22, %v157
    %v159 = vand.u32 %v158, 4294901760
    %v160 = vsub.f32 %v158, %v159
    %v161 = vand.u32 %v160, 4294901760
    %162 = vmatprep.mubr.f32.mxu0 %v161
    %v163 = vand.u32 %v21, 4294901760
    %v164 = vsub.f32 %v21, %v163
    %v165 = vand.u32 %v164, 4294901760
    %v166 = vsub.f32 %v164, %v165
    %v167 = vand.u32 %v166, 4294901760
    %168 = vmatmul.mubr.f32.gmra.mxu0 %v167
    %v169 = vpop.f32.mrf.mxu0
    %v170 = vadd.f32 0.0, %v169
    %v171 = vpop.f32.mrf.mxu0
    %v172 = vand.u32 %v24, 4294901760
    %v173 = vsub.f32 %v24, %v172
    %v174 = vand.u32 %v173, 4294901760
    %v175 = vsub.f32 %v173, %v174
    %v176 = vand.u32 %v175, 4294901760
    %177 = vmatprep.mubr.f32.mxu0 %v176
    %v178 = vand.u32 %v23, 4294901760
    %v179 = vsub.f32 %v23, %v178
    %v180 = vand.u32 %v179, 4294901760
    %v181 = vsub.f32 %v179, %v180
    %v182 = vand.u32 %v181, 4294901760
    %183 = vmatmul.mubr.f32.gmra.mxu0 %v182
    %v184 = vpop.f32.mrf.mxu0
    %v185 = vadd.f32 0.0, %v184
    %v186 = vpop.f32.mrf.mxu0
    %v187 = vand.u32 %v26, 4294901760
    %v188 = vsub.f32 %v26, %v187
    %v189 = vand.u32 %v188, 4294901760
    %v190 = vsub.f32 %v188, %v189
    %v191 = vand.u32 %v190, 4294901760
    %192 = vmatprep.mubr.f32.mxu0 %v191
    %v193 = vand.u32 %v25, 4294901760
    %v194 = vsub.f32 %v25, %v193
    %v195 = vand.u32 %v194, 4294901760
    %v196 = vsub.f32 %v194, %v195
    %v197 = vand.u32 %v196, 4294901760
    %198 = vmatmul.mubr.f32.gmra.mxu0 %v197
    %v199 = vpop.f32.mrf.mxu0
    %v200 = vadd.f32 0.0, %v199
    %v201 = vpop.f32.mrf.mxu0
    %v202 = vand.u32 %v28, 4294901760
    %v203 = vsub.f32 %v28, %v202
    %v204 = vand.u32 %v203, 4294901760
    %v205 = vsub.f32 %v203, %v204
    %v206 = vand.u32 %v205, 4294901760
    %207 = vmatprep.mubr.f32.mxu0 %v206
    %v208 = vand.u32 %v27, 4294901760
    %v209 = vsub.f32 %v27, %v208
    %v210 = vand.u32 %v209, 4294901760
    %v211 = vsub.f32 %v209, %v210
    %v212 = vand.u32 %v211, 4294901760
    %213 = vmatmul.mubr.f32.gmra.mxu0 %v212
    %v214 = vpop.f32.mrf.mxu0
    %v215 = vadd.f32 0.0, %v214
    %v216 = vpop.f32.mrf.mxu0
    %217 = vdwg.mxu0
    %218 = vmatprep.subr.mxu0 0.0
    %v219 = vand.u32 %v44, 4294901760
    %v220 = vsub.f32 %v44, %v219
    %v221 = vand.u32 %v220, 4294901760
    %v222 = vsub.f32 %v220, %v221
    %v223 = vand.u32 %v222, 4294901760
    %224 = vmatpush1.msra.mxu0 %v223
    %225 = vmatprep.subr.mxu0 0.0
    %v226 = vand.u32 %v43, 4294901760
    %v227 = vsub.f32 %v43, %v226
    %v228 = vand.u32 %v227, 4294901760
    %v229 = vsub.f32 %v227, %v228
    %v230 = vand.u32 %v229, 4294901760
    %231 = vmatpush1.msra.mxu0 %v230
    %232 = vmatprep.subr.mxu0 0.0
    %v233 = vand.u32 %v42, 4294901760
    %v234 = vsub.f32 %v42, %v233
    %v235 = vand.u32 %v234, 4294901760
    %v236 = vsub.f32 %v234, %v235
    %v237 = vand.u32 %v236, 4294901760
    %238 = vmatpush1.msra.mxu0 %v237
    %239 = vmatprep.subr.mxu0 0.0
    %v240 = vand.u32 %v41, 4294901760
    %v241 = vsub.f32 %v41, %v240
    %v242 = vand.u32 %v241, 4294901760
    %v243 = vsub.f32 %v241, %v242
    %v244 = vand.u32 %v243, 4294901760
    %245 = vmatpush1.msra.mxu0 %v244
    %246 = vmatprep.subr.mxu0 0.0
    %v247 = vand.u32 %v40, 4294901760
    %v248 = vsub.f32 %v40, %v247
    %v249 = vand.u32 %v248, 4294901760
    %v250 = vsub.f32 %v248, %v249
    %v251 = vand.u32 %v250, 4294901760
    %252 = vmatpush1.msra.mxu0 %v251
    %253 = vmatprep.subr.mxu0 0.0
    %v254 = vand.u32 %v39, 4294901760
    %v255 = vsub.f32 %v39, %v254
    %v256 = vand.u32 %v255, 4294901760
    %v257 = vsub.f32 %v255, %v256
    %v258 = vand.u32 %v257, 4294901760
    %259 = vmatpush1.msra.mxu0 %v258
    %260 = vmatprep.subr.mxu0 0.0
    %v261 = vand.u32 %v38, 4294901760
    %v262 = vsub.f32 %v38, %v261
    %v263 = vand.u32 %v262, 4294901760
    %v264 = vsub.f32 %v262, %v263
    %v265 = vand.u32 %v264, 4294901760
    %266 = vmatpush1.msra.mxu0 %v265
    %267 = vmatprep.subr.mxu0 0.0
    %v268 = vand.u32 %v37, 4294901760
    %v269 = vsub.f32 %v37, %v268
    %v270 = vand.u32 %v269, 4294901760
    %v271 = vsub.f32 %v269, %v270
    %v272 = vand.u32 %v271, 4294901760
    %273 = vmatpush1.msra.mxu0 %v272
    %274 = vmatprep.subr.mxu0 0.0
    %v275 = vand.u32 %v36, 4294901760
    %v276 = vsub.f32 %v36, %v275
    %v277 = vand.u32 %v276, 4294901760
    %v278 = vsub.f32 %v276, %v277
    %v279 = vand.u32 %v278, 4294901760
    %280 = vmatpush1.msra.mxu0 %v279
    %281 = vmatprep.subr.mxu0 0.0
    %v282 = vand.u32 %v35, 4294901760
    %v283 = vsub.f32 %v35, %v282
    %v284 = vand.u32 %v283, 4294901760
    %v285 = vsub.f32 %v283, %v284
    %v286 = vand.u32 %v285, 4294901760
    %287 = vmatpush1.msra.mxu0 %v286
    %288 = vmatprep.subr.mxu0 0.0
    %v289 = vand.u32 %v34, 4294901760
    %v290 = vsub.f32 %v34, %v289
    %v291 = vand.u32 %v290, 4294901760
    %v292 = vsub.f32 %v290, %v291
    %v293 = vand.u32 %v292, 4294901760
    %294 = vmatpush1.msra.mxu0 %v293
    %295 = vmatprep.subr.mxu0 0.0
    %v296 = vand.u32 %v33, 4294901760
    %v297 = vsub.f32 %v33, %v296
    %v298 = vand.u32 %v297, 4294901760
    %v299 = vsub.f32 %v297, %v298
    %v300 = vand.u32 %v299, 4294901760
    %301 = vmatpush1.msra.mxu0 %v300
    %302 = vmatprep.subr.mxu0 0.0
    %v303 = vand.u32 %v32, 4294901760
    %v304 = vsub.f32 %v32, %v303
    %v305 = vand.u32 %v304, 4294901760
    %v306 = vsub.f32 %v304, %v305
    %v307 = vand.u32 %v306, 4294901760
    %308 = vmatpush1.msra.mxu0 %v307
    %309 = vmatprep.subr.mxu0 0.0
    %v310 = vand.u32 %v31, 4294901760
    %v311 = vsub.f32 %v31, %v310
    %v312 = vand.u32 %v311, 4294901760
    %v313 = vsub.f32 %v311, %v312
    %v314 = vand.u32 %v313, 4294901760
    %315 = vmatpush1.msra.mxu0 %v314
    %316 = vmatprep.subr.mxu0 0.0
    %v317 = vand.u32 %v30, 4294901760
    %v318 = vsub.f32 %v30, %v317
    %v319 = vand.u32 %v318, 4294901760
    %v320 = vsub.f32 %v318, %v319
    %v321 = vand.u32 %v320, 4294901760
    %322 = vmatpush1.msra.mxu0 %v321
    %323 = vmatprep.subr.mxu0 0.0
    %v324 = vand.u32 %v29, 4294901760
    %v325 = vsub.f32 %v29, %v324
    %v326 = vand.u32 %v325, 4294901760
    %v327 = vsub.f32 %v325, %v326
    %v328 = vand.u32 %v327, 4294901760
    %329 = vmatpush1.msra.mxu0 %v328
    %330 = vmatprep.subr.mxu0 0.0
    %v331 = vand.u32 %v60, 4294901760
    %v332 = vsub.f32 %v60, %v331
    %v333 = vand.u32 %v332, 4294901760
    %v334 = vsub.f32 %v332, %v333
    %v335 = vand.u32 %v334, 4294901760
    %336 = vmatpush2.msra.mxu0 %v335
    %337 = vmatprep.subr.mxu0 0.0
    %v338 = vand.u32 %v59, 4294901760
    %v339 = vsub.f32 %v59, %v338
    %v340 = vand.u32 %v339, 4294901760
    %v341 = vsub.f32 %v339, %v340
    %v342 = vand.u32 %v341, 4294901760
    %343 = vmatpush2.msra.mxu0 %v342
    %344 = vmatprep.subr.mxu0 0.0
    %v345 = vand.u32 %v58, 4294901760
    %v346 = vsub.f32 %v58, %v345
    %v347 = vand.u32 %v346, 4294901760
    %v348 = vsub.f32 %v346, %v347
    %v349 = vand.u32 %v348, 4294901760
    %350 = vmatpush2.msra.mxu0 %v349
    %351 = vmatprep.subr.mxu0 0.0
    %v352 = vand.u32 %v57, 4294901760
    %v353 = vsub.f32 %v57, %v352
    %v354 = vand.u32 %v353, 4294901760
    %v355 = vsub.f32 %v353, %v354
    %v356 = vand.u32 %v355, 4294901760
    %357 = vmatpush2.msra.mxu0 %v356
    %358 = vmatprep.subr.mxu0 0.0
    %v359 = vand.u32 %v56, 4294901760
    %v360 = vsub.f32 %v56, %v359
    %v361 = vand.u32 %v360, 4294901760
    %v362 = vsub.f32 %v360, %v361
    %v363 = vand.u32 %v362, 4294901760
    %364 = vmatpush2.msra.mxu0 %v363
    %365 = vmatprep.subr.mxu0 0.0
    %v366 = vand.u32 %v55, 4294901760
    %v367 = vsub.f32 %v55, %v366
    %v368 = vand.u32 %v367, 4294901760
    %v369 = vsub.f32 %v367, %v368
    %v370 = vand.u32 %v369, 4294901760
    %371 = vmatpush2.msra.mxu0 %v370
    %372 = vmatprep.subr.mxu0 0.0
    %v373 = vand.u32 %v54, 4294901760
    %v374 = vsub.f32 %v54, %v373
    %v375 = vand.u32 %v374, 4294901760
    %v376 = vsub.f32 %v374, %v375
    %v377 = vand.u32 %v376, 4294901760
    %378 = vmatpush2.msra.mxu0 %v377
    %379 = vmatprep.subr.mxu0 0.0
    %v380 = vand.u32 %v53, 4294901760
    %v381 = vsub.f32 %v53, %v380
    %v382 = vand.u32 %v381, 4294901760
    %v383 = vsub.f32 %v381, %v382
    %v384 = vand.u32 %v383, 4294901760
    %385 = vmatpush2.msra.mxu0 %v384
    %386 = vmatprep.subr.mxu0 0.0
    %v387 = vand.u32 %v52, 4294901760
    %v388 = vsub.f32 %v52, %v387
    %v389 = vand.u32 %v388, 4294901760
    %v390 = vsub.f32 %v388, %v389
    %v391 = vand.u32 %v390, 4294901760
    %392 = vmatpush2.msra.mxu0 %v391
    %393 = vmatprep.subr.mxu0 0.0
    %v394 = vand.u32 %v51, 4294901760
    %v395 = vsub.f32 %v51, %v394
    %v396 = vand.u32 %v395, 4294901760
    %v397 = vsub.f32 %v395, %v396
    %v398 = vand.u32 %v397, 4294901760
    %399 = vmatpush2.msra.mxu0 %v398
    %400 = vmatprep.subr.mxu0 0.0
    %v401 = vand.u32 %v50, 4294901760
    %v402 = vsub.f32 %v50, %v401
    %v403 = vand.u32 %v402, 4294901760
    %v404 = vsub.f32 %v402, %v403
    %v405 = vand.u32 %v404, 4294901760
    %406 = vmatpush2.msra.mxu0 %v405
    %407 = vmatprep.subr.mxu0 0.0
    %v408 = vand.u32 %v49, 4294901760
    %v409 = vsub.f32 %v49, %v408
    %v410 = vand.u32 %v409, 4294901760
    %v411 = vsub.f32 %v409, %v410
    %v412 = vand.u32 %v411, 4294901760
    %413 = vmatpush2.msra.mxu0 %v412
    %414 = vmatprep.subr.mxu0 0.0
    %v415 = vand.u32 %v48, 4294901760
    %v416 = vsub.f32 %v48, %v415
    %v417 = vand.u32 %v416, 4294901760
    %v418 = vsub.f32 %v416, %v417
    %v419 = vand.u32 %v418, 4294901760
    %420 = vmatpush2.msra.mxu0 %v419
    %421 = vmatprep.subr.mxu0 0.0
    %v422 = vand.u32 %v47, 4294901760
    %v423 = vsub.f32 %v47, %v422
    %v424 = vand.u32 %v423, 4294901760
    %v425 = vsub.f32 %v423, %v424
    %v426 = vand.u32 %v425, 4294901760
    %427 = vmatpush2.msra.mxu0 %v426
    %428 = vmatprep.subr.mxu0 0.0
    %v429 = vand.u32 %v46, 4294901760
    %v430 = vsub.f32 %v46, %v429
    %v431 = vand.u32 %v430, 4294901760
    %v432 = vsub.f32 %v430, %v431
    %v433 = vand.u32 %v432, 4294901760
    %434 = vmatpush2.msra.mxu0 %v433
    %435 = vmatprep.subr.mxu0 0.0
    %v436 = vand.u32 %v45, 4294901760
    %v437 = vsub.f32 %v45, %v436
    %v438 = vand.u32 %v437, 4294901760
    %v439 = vsub.f32 %v437, %v438
    %v440 = vand.u32 %v439, 4294901760
    %441 = vmatpush2.msra.mxu0 %v440
    %v442 = vand.u32 %v22, 4294901760
    %443 = vmatprep.mubr.f32.mxu0 %v442
    %v444 = vand.u32 %v21, 4294901760
    %445 = vmatmul.mubr.f32.gmra.mxu0 %v444
    %v446 = vpop.f32.mrf.mxu0
    %v447 = vadd.f32 %v170, %v446
    %v448 = vpop.f32.mrf.mxu0
    %v449 = vand.u32 %v24, 4294901760
    %450 = vmatprep.mubr.f32.mxu0 %v449
    %v451 = vand.u32 %v23, 4294901760
    %452 = vmatmul.mubr.f32.gmra.mxu0 %v451
    %v453 = vpop.f32.mrf.mxu0
    %v454 = vadd.f32 %v185, %v453
    %v455 = vpop.f32.mrf.mxu0
    %v456 = vand.u32 %v26, 4294901760
    %457 = vmatprep.mubr.f32.mxu0 %v456
    %v458 = vand.u32 %v25, 4294901760
    %459 = vmatmul.mubr.f32.gmra.mxu0 %v458
    %v460 = vpop.f32.mrf.mxu0
    %v461 = vadd.f32 %v200, %v460
    %v462 = vpop.f32.mrf.mxu0
    %v463 = vand.u32 %v28, 4294901760
    %464 = vmatprep.mubr.f32.mxu0 %v463
    %v465 = vand.u32 %v27, 4294901760
    %466 = vmatmul.mubr.f32.gmra.mxu0 %v465
    %v467 = vpop.f32.mrf.mxu0
    %v468 = vadd.f32 %v215, %v467
    %v469 = vpop.f32.mrf.mxu0
    %470 = vdwg.mxu0
    %471 = vmatprep.subr.mxu0 0.0
    %v472 = vand.u32 %v44, 4294901760
    %v473 = vsub.f32 %v44, %v472
    %474 = vmatpush1.msra.mxu0 %v473
    %475 = vmatprep.subr.mxu0 0.0
    %v476 = vand.u32 %v43, 4294901760
    %v477 = vsub.f32 %v43, %v476
    %478 = vmatpush1.msra.mxu0 %v477
    %479 = vmatprep.subr.mxu0 0.0
    %v480 = vand.u32 %v42, 4294901760
    %v481 = vsub.f32 %v42, %v480
    %482 = vmatpush1.msra.mxu0 %v481
    %483 = vmatprep.subr.mxu0 0.0
    %v484 = vand.u32 %v41, 4294901760
    %v485 = vsub.f32 %v41, %v484
    %486 = vmatpush1.msra.mxu0 %v485
    %487 = vmatprep.subr.mxu0 0.0
    %v488 = vand.u32 %v40, 4294901760
    %v489 = vsub.f32 %v40, %v488
    %490 = vmatpush1.msra.mxu0 %v489
    %491 = vmatprep.subr.mxu0 0.0
    %v492 = vand.u32 %v39, 4294901760
    %v493 = vsub.f32 %v39, %v492
    %494 = vmatpush1.msra.mxu0 %v493
    %495 = vmatprep.subr.mxu0 0.0
    %v496 = vand.u32 %v38, 4294901760
    %v497 = vsub.f32 %v38, %v496
    %498 = vmatpush1.msra.mxu0 %v497
    %499 = vmatprep.subr.mxu0 0.0
    %v500 = vand.u32 %v37, 4294901760
    %v501 = vsub.f32 %v37, %v500
    %502 = vmatpush1.msra.mxu0 %v501
    %503 = vmatprep.subr.mxu0 0.0
    %v504 = vand.u32 %v36, 4294901760
    %v505 = vsub.f32 %v36, %v504
    %506 = vmatpush1.msra.mxu0 %v505
    %507 = vmatprep.subr.mxu0 0.0
    %v508 = vand.u32 %v35, 4294901760
    %v509 = vsub.f32 %v35, %v508
    %510 = vmatpush1.msra.mxu0 %v509
    %511 = vmatprep.subr.mxu0 0.0
    %v512 = vand.u32 %v34, 4294901760
    %v513 = vsub.f32 %v34, %v512
    %514 = vmatpush1.msra.mxu0 %v513
    %515 = vmatprep.subr.mxu0 0.0
    %v516 = vand.u32 %v33, 4294901760
    %v517 = vsub.f32 %v33, %v516
    %518 = vmatpush1.msra.mxu0 %v517
    %519 = vmatprep.subr.mxu0 0.0
    %v520 = vand.u32 %v32, 4294901760
    %v521 = vsub.f32 %v32, %v520
    %522 = vmatpush1.msra.mxu0 %v521
    %523 = vmatprep.subr.mxu0 0.0
    %v524 = vand.u32 %v31, 4294901760
    %v525 = vsub.f32 %v31, %v524
    %526 = vmatpush1.msra.mxu0 %v525
    %527 = vmatprep.subr.mxu0 0.0
    %v528 = vand.u32 %v30, 4294901760
    %v529 = vsub.f32 %v30, %v528
    %530 = vmatpush1.msra.mxu0 %v529
    %531 = vmatprep.subr.mxu0 0.0
    %v532 = vand.u32 %v29, 4294901760
    %v533 = vsub.f32 %v29, %v532
    %534 = vmatpush1.msra.mxu0 %v533
    %535 = vmatprep.subr.mxu0 0.0
    %v536 = vand.u32 %v60, 4294901760
    %v537 = vsub.f32 %v60, %v536
    %538 = vmatpush2.msra.mxu0 %v537
    %539 = vmatprep.subr.mxu0 0.0
    %v540 = vand.u32 %v59, 4294901760
    %v541 = vsub.f32 %v59, %v540
    %542 = vmatpush2.msra.mxu0 %v541
    %543 = vmatprep.subr.mxu0 0.0
    %v544 = vand.u32 %v58, 4294901760
    %v545 = vsub.f32 %v58, %v544
    %546 = vmatpush2.msra.mxu0 %v545
    %547 = vmatprep.subr.mxu0 0.0
    %v548 = vand.u32 %v57, 4294901760
    %v549 = vsub.f32 %v57, %v548
    %550 = vmatpush2.msra.mxu0 %v549
    %551 = vmatprep.subr.mxu0 0.0
    %v552 = vand.u32 %v56, 4294901760
    %v553 = vsub.f32 %v56, %v552
    %554 = vmatpush2.msra.mxu0 %v553
    %555 = vmatprep.subr.mxu0 0.0
    %v556 = vand.u32 %v55, 4294901760
    %v557 = vsub.f32 %v55, %v556
    %558 = vmatpush2.msra.mxu0 %v557
    %559 = vmatprep.subr.mxu0 0.0
    %v560 = vand.u32 %v54, 4294901760
    %v561 = vsub.f32 %v54, %v560
    %562 = vmatpush2.msra.mxu0 %v561
    %563 = vmatprep.subr.mxu0 0.0
    %v564 = vand.u32 %v53, 4294901760
    %v565 = vsub.f32 %v53, %v564
    %566 = vmatpush2.msra.mxu0 %v565
    %567 = vmatprep.subr.mxu0 0.0
    %v568 = vand.u32 %v52, 4294901760
    %v569 = vsub.f32 %v52, %v568
    %570 = vmatpush2.msra.mxu0 %v569
    %571 = vmatprep.subr.mxu0 0.0
    %v572 = vand.u32 %v51, 4294901760
    %v573 = vsub.f32 %v51, %v572
    %574 = vmatpush2.msra.mxu0 %v573
    %575 = vmatprep.subr.mxu0 0.0
    %v576 = vand.u32 %v50, 4294901760
    %v577 = vsub.f32 %v50, %v576
    %578 = vmatpush2.msra.mxu0 %v577
    %579 = vmatprep.subr.mxu0 0.0
    %v580 = vand.u32 %v49, 4294901760
    %v581 = vsub.f32 %v49, %v580
    %582 = vmatpush2.msra.mxu0 %v581
    %583 = vmatprep.subr.mxu0 0.0
    %v584 = vand.u32 %v48, 4294901760
    %v585 = vsub.f32 %v48, %v584
    %586 = vmatpush2.msra.mxu0 %v585
    %587 = vmatprep.subr.mxu0 0.0
    %v588 = vand.u32 %v47, 4294901760
    %v589 = vsub.f32 %v47, %v588
    %590 = vmatpush2.msra.mxu0 %v589
    %591 = vmatprep.subr.mxu0 0.0
    %v592 = vand.u32 %v46, 4294901760
    %v593 = vsub.f32 %v46, %v592
    %594 = vmatpush2.msra.mxu0 %v593
    %595 = vmatprep.subr.mxu0 0.0
    %v596 = vand.u32 %v45, 4294901760
    %v597 = vsub.f32 %v45, %v596
    %598 = vmatpush2.msra.mxu0 %v597
    %v599 = vand.u32 %v22, 4294901760
    %v600 = vsub.f32 %v22, %v599
    %601 = vmatprep.mubr.f32.mxu0 %v600
    %v602 = vand.u32 %v21, 4294901760
    %v603 = vsub.f32 %v21, %v602
    %604 = vmatmul.mubr.f32.gmra.mxu0 %v603
    %v605 = vpop.f32.mrf.mxu0
    %v606 = vadd.f32 %v447, %v605
    %v607 = vpop.f32.mrf.mxu0
    %v608 = vand.u32 %v24, 4294901760
    %v609 = vsub.f32 %v24, %v608
    %610 = vmatprep.mubr.f32.mxu0 %v609
    %v611 = vand.u32 %v23, 4294901760
    %v612 = vsub.f32 %v23, %v611
    %613 = vmatmul.mubr.f32.gmra.mxu0 %v612
    %v614 = vpop.f32.mrf.mxu0
    %v615 = vadd.f32 %v454, %v614
    %v616 = vpop.f32.mrf.mxu0
    %v617 = vand.u32 %v26, 4294901760
    %v618 = vsub.f32 %v26, %v617
    %619 = vmatprep.mubr.f32.mxu0 %v618
    %v620 = vand.u32 %v25, 4294901760
    %v621 = vsub.f32 %v25, %v620
    %622 = vmatmul.mubr.f32.gmra.mxu0 %v621
    %v623 = vpop.f32.mrf.mxu0
    %v624 = vadd.f32 %v461, %v623
    %v625 = vpop.f32.mrf.mxu0
    %v626 = vand.u32 %v28, 4294901760
    %v627 = vsub.f32 %v28, %v626
    %628 = vmatprep.mubr.f32.mxu0 %v627
    %v629 = vand.u32 %v27, 4294901760
    %v630 = vsub.f32 %v27, %v629
    %631 = vmatmul.mubr.f32.gmra.mxu0 %v630
    %v632 = vpop.f32.mrf.mxu0
    %v633 = vadd.f32 %v468, %v632
    %v634 = vpop.f32.mrf.mxu0
    %635 = vdwg.mxu0
    %636 = vmatprep.subr.mxu0 0.0
    %v637 = vand.u32 %v44, 4294901760
    %638 = vmatpush1.msra.mxu0 %v637
    %639 = vmatprep.subr.mxu0 0.0
    %v640 = vand.u32 %v43, 4294901760
    %641 = vmatpush1.msra.mxu0 %v640
    %642 = vmatprep.subr.mxu0 0.0
    %v643 = vand.u32 %v42, 4294901760
    %644 = vmatpush1.msra.mxu0 %v643
    %645 = vmatprep.subr.mxu0 0.0
    %v646 = vand.u32 %v41, 4294901760
    %647 = vmatpush1.msra.mxu0 %v646
    %648 = vmatprep.subr.mxu0 0.0
    %v649 = vand.u32 %v40, 4294901760
    %650 = vmatpush1.msra.mxu0 %v649
    %651 = vmatprep.subr.mxu0 0.0
    %v652 = vand.u32 %v39, 4294901760
    %653 = vmatpush1.msra.mxu0 %v652
    %654 = vmatprep.subr.mxu0 0.0
    %v655 = vand.u32 %v38, 4294901760
    %656 = vmatpush1.msra.mxu0 %v655
    %657 = vmatprep.subr.mxu0 0.0
    %v658 = vand.u32 %v37, 4294901760
    %659 = vmatpush1.msra.mxu0 %v658
    %660 = vmatprep.subr.mxu0 0.0
    %v661 = vand.u32 %v36, 4294901760
    %662 = vmatpush1.msra.mxu0 %v661
    %663 = vmatprep.subr.mxu0 0.0
    %v664 = vand.u32 %v35, 4294901760
    %665 = vmatpush1.msra.mxu0 %v664
    %666 = vmatprep.subr.mxu0 0.0
    %v667 = vand.u32 %v34, 4294901760
    %668 = vmatpush1.msra.mxu0 %v667
    %669 = vmatprep.subr.mxu0 0.0
    %v670 = vand.u32 %v33, 4294901760
    %671 = vmatpush1.msra.mxu0 %v670
    %672 = vmatprep.subr.mxu0 0.0
    %v673 = vand.u32 %v32, 4294901760
    %674 = vmatpush1.msra.mxu0 %v673
    %675 = vmatprep.subr.mxu0 0.0
    %v676 = vand.u32 %v31, 4294901760
    %677 = vmatpush1.msra.mxu0 %v676
    %678 = vmatprep.subr.mxu0 0.0
    %v679 = vand.u32 %v30, 4294901760
    %680 = vmatpush1.msra.mxu0 %v679
    %681 = vmatprep.subr.mxu0 0.0
    %v682 = vand.u32 %v29, 4294901760
    %683 = vmatpush1.msra.mxu0 %v682
    %684 = vmatprep.subr.mxu0 0.0
    %v685 = vand.u32 %v60, 4294901760
    %686 = vmatpush2.msra.mxu0 %v685
    %687 = vmatprep.subr.mxu0 0.0
    %v688 = vand.u32 %v59, 4294901760
    %689 = vmatpush2.msra.mxu0 %v688
    %690 = vmatprep.subr.mxu0 0.0
    %v691 = vand.u32 %v58, 4294901760
    %692 = vmatpush2.msra.mxu0 %v691
    %693 = vmatprep.subr.mxu0 0.0
    %v694 = vand.u32 %v57, 4294901760
    %695 = vmatpush2.msra.mxu0 %v694
    %696 = vmatprep.subr.mxu0 0.0
    %v697 = vand.u32 %v56, 4294901760
    %698 = vmatpush2.msra.mxu0 %v697
    %699 = vmatprep.subr.mxu0 0.0
    %v700 = vand.u32 %v55, 4294901760
    %701 = vmatpush2.msra.mxu0 %v700
    %702 = vmatprep.subr.mxu0 0.0
    %v703 = vand.u32 %v54, 4294901760
    %704 = vmatpush2.msra.mxu0 %v703
    %705 = vmatprep.subr.mxu0 0.0
    %v706 = vand.u32 %v53, 4294901760
    %707 = vmatpush2.msra.mxu0 %v706
    %708 = vmatprep.subr.mxu0 0.0
    %v709 = vand.u32 %v52, 4294901760
    %710 = vmatpush2.msra.mxu0 %v709
    %711 = vmatprep.subr.mxu0 0.0
    %v712 = vand.u32 %v51, 4294901760
    %713 = vmatpush2.msra.mxu0 %v712
    %714 = vmatprep.subr.mxu0 0.0
    %v715 = vand.u32 %v50, 4294901760
    %716 = vmatpush2.msra.mxu0 %v715
    %717 = vmatprep.subr.mxu0 0.0
    %v718 = vand.u32 %v49, 4294901760
    %719 = vmatpush2.msra.mxu0 %v718
    %720 = vmatprep.subr.mxu0 0.0
    %v721 = vand.u32 %v48, 4294901760
    %722 = vmatpush2.msra.mxu0 %v721
    %723 = vmatprep.subr.mxu0 0.0
    %v724 = vand.u32 %v47, 4294901760
    %725 = vmatpush2.msra.mxu0 %v724
    %726 = vmatprep.subr.mxu0 0.0
    %v727 = vand.u32 %v46, 4294901760
    %728 = vmatpush2.msra.mxu0 %v727
    %729 = vmatprep.subr.mxu0 0.0
    %v730 = vand.u32 %v45, 4294901760
    %731 = vmatpush2.msra.mxu0 %v730
    %v732 = vand.u32 %v22, 4294901760
    %v733 = vsub.f32 %v22, %v732
    %v734 = vand.u32 %v733, 4294901760
    %735 = vmatprep.mubr.f32.mxu0 %v734
    %v736 = vand.u32 %v21, 4294901760
    %v737 = vsub.f32 %v21, %v736
    %v738 = vand.u32 %v737, 4294901760
    %739 = vmatmul.mubr.f32.gmra.mxu0 %v738
    %v740 = vpop.f32.mrf.mxu0
    %v741 = vadd.f32 %v606, %v740
    %v742 = vpop.f32.mrf.mxu0
    %v743 = vand.u32 %v24, 4294901760
    %v744 = vsub.f32 %v24, %v743
    %v745 = vand.u32 %v744, 4294901760
    %746 = vmatprep.mubr.f32.mxu0 %v745
    %v747 = vand.u32 %v23, 4294901760
    %v748 = vsub.f32 %v23, %v747
    %v749 = vand.u32 %v748, 4294901760
    %750 = vmatmul.mubr.f32.gmra.mxu0 %v749
    %v751 = vpop.f32.mrf.mxu0
    %v752 = vadd.f32 %v615, %v751
    %v753 = vpop.f32.mrf.mxu0
    %v754 = vand.u32 %v26, 4294901760
    %v755 = vsub.f32 %v26, %v754
    %v756 = vand.u32 %v755, 4294901760
    %757 = vmatprep.mubr.f32.mxu0 %v756
    %v758 = vand.u32 %v25, 4294901760
    %v759 = vsub.f32 %v25, %v758
    %v760 = vand.u32 %v759, 4294901760
    %761 = vmatmul.mubr.f32.gmra.mxu0 %v760
    %v762 = vpop.f32.mrf.mxu0
    %v763 = vadd.f32 %v624, %v762
    %v764 = vpop.f32.mrf.mxu0
    %v765 = vand.u32 %v28, 4294901760
    %v766 = vsub.f32 %v28, %v765
    %v767 = vand.u32 %v766, 4294901760
    %768 = vmatprep.mubr.f32.mxu0 %v767
    %v769 = vand.u32 %v27, 4294901760
    %v770 = vsub.f32 %v27, %v769
    %v771 = vand.u32 %v770, 4294901760
    %772 = vmatmul.mubr.f32.gmra.mxu0 %v771
    %v773 = vpop.f32.mrf.mxu0
    %v774 = vadd.f32 %v633, %v773
    %v775 = vpop.f32.mrf.mxu0
    %776 = vdwg.mxu0
    %777 = vmatprep.subr.mxu0 0.0
    %v778 = vand.u32 %v44, 4294901760
    %v779 = vsub.f32 %v44, %v778
    %v780 = vand.u32 %v779, 4294901760
    %781 = vmatpush1.msra.mxu0 %v780
    %782 = vmatprep.subr.mxu0 0.0
    %v783 = vand.u32 %v43, 4294901760
    %v784 = vsub.f32 %v43, %v783
    %v785 = vand.u32 %v784, 4294901760
    %786 = vmatpush1.msra.mxu0 %v785
    %787 = vmatprep.subr.mxu0 0.0
    %v788 = vand.u32 %v42, 4294901760
    %v789 = vsub.f32 %v42, %v788
    %v790 = vand.u32 %v789, 4294901760
    %791 = vmatpush1.msra.mxu0 %v790
    %792 = vmatprep.subr.mxu0 0.0
    %v793 = vand.u32 %v41, 4294901760
    %v794 = vsub.f32 %v41, %v793
    %v795 = vand.u32 %v794, 4294901760
    %796 = vmatpush1.msra.mxu0 %v795
    %797 = vmatprep.subr.mxu0 0.0
    %v798 = vand.u32 %v40, 4294901760
    %v799 = vsub.f32 %v40, %v798
    %v800 = vand.u32 %v799, 4294901760
    %801 = vmatpush1.msra.mxu0 %v800
    %802 = vmatprep.subr.mxu0 0.0
    %v803 = vand.u32 %v39, 4294901760
    %v804 = vsub.f32 %v39, %v803
    %v805 = vand.u32 %v804, 4294901760
    %806 = vmatpush1.msra.mxu0 %v805
    %807 = vmatprep.subr.mxu0 0.0
    %v808 = vand.u32 %v38, 4294901760
    %v809 = vsub.f32 %v38, %v808
    %v810 = vand.u32 %v809, 4294901760
    %811 = vmatpush1.msra.mxu0 %v810
    %812 = vmatprep.subr.mxu0 0.0
    %v813 = vand.u32 %v37, 4294901760
    %v814 = vsub.f32 %v37, %v813
    %v815 = vand.u32 %v814, 4294901760
    %816 = vmatpush1.msra.mxu0 %v815
    %817 = vmatprep.subr.mxu0 0.0
    %v818 = vand.u32 %v36, 4294901760
    %v819 = vsub.f32 %v36, %v818
    %v820 = vand.u32 %v819, 4294901760
    %821 = vmatpush1.msra.mxu0 %v820
    %822 = vmatprep.subr.mxu0 0.0
    %v823 = vand.u32 %v35, 4294901760
    %v824 = vsub.f32 %v35, %v823
    %v825 = vand.u32 %v824, 4294901760
    %826 = vmatpush1.msra.mxu0 %v825
    %827 = vmatprep.subr.mxu0 0.0
    %v828 = vand.u32 %v34, 4294901760
    %v829 = vsub.f32 %v34, %v828
    %v830 = vand.u32 %v829, 4294901760
    %831 = vmatpush1.msra.mxu0 %v830
    %832 = vmatprep.subr.mxu0 0.0
    %v833 = vand.u32 %v33, 4294901760
    %v834 = vsub.f32 %v33, %v833
    %v835 = vand.u32 %v834, 4294901760
    %836 = vmatpush1.msra.mxu0 %v835
    %837 = vmatprep.subr.mxu0 0.0
    %v838 = vand.u32 %v32, 4294901760
    %v839 = vsub.f32 %v32, %v838
    %v840 = vand.u32 %v839, 4294901760
    %841 = vmatpush1.msra.mxu0 %v840
    %842 = vmatprep.subr.mxu0 0.0
    %v843 = vand.u32 %v31, 4294901760
    %v844 = vsub.f32 %v31, %v843
    %v845 = vand.u32 %v844, 4294901760
    %846 = vmatpush1.msra.mxu0 %v845
    %847 = vmatprep.subr.mxu0 0.0
    %v848 = vand.u32 %v30, 4294901760
    %v849 = vsub.f32 %v30, %v848
    %v850 = vand.u32 %v849, 4294901760
    %851 = vmatpush1.msra.mxu0 %v850
    %852 = vmatprep.subr.mxu0 0.0
    %v853 = vand.u32 %v29, 4294901760
    %v854 = vsub.f32 %v29, %v853
    %v855 = vand.u32 %v854, 4294901760
    %856 = vmatpush1.msra.mxu0 %v855
    %857 = vmatprep.subr.mxu0 0.0
    %v858 = vand.u32 %v60, 4294901760
    %v859 = vsub.f32 %v60, %v858
    %v860 = vand.u32 %v859, 4294901760
    %861 = vmatpush2.msra.mxu0 %v860
    %862 = vmatprep.subr.mxu0 0.0
    %v863 = vand.u32 %v59, 4294901760
    %v864 = vsub.f32 %v59, %v863
    %v865 = vand.u32 %v864, 4294901760
    %866 = vmatpush2.msra.mxu0 %v865
    %867 = vmatprep.subr.mxu0 0.0
    %v868 = vand.u32 %v58, 4294901760
    %v869 = vsub.f32 %v58, %v868
    %v870 = vand.u32 %v869, 4294901760
    %871 = vmatpush2.msra.mxu0 %v870
    %872 = vmatprep.subr.mxu0 0.0
    %v873 = vand.u32 %v57, 4294901760
    %v874 = vsub.f32 %v57, %v873
    %v875 = vand.u32 %v874, 4294901760
    %876 = vmatpush2.msra.mxu0 %v875
    %877 = vmatprep.subr.mxu0 0.0
    %v878 = vand.u32 %v56, 4294901760
    %v879 = vsub.f32 %v56, %v878
    %v880 = vand.u32 %v879, 4294901760
    %881 = vmatpush2.msra.mxu0 %v880
    %882 = vmatprep.subr.mxu0 0.0
    %v883 = vand.u32 %v55, 4294901760
    %v884 = vsub.f32 %v55, %v883
    %v885 = vand.u32 %v884, 4294901760
    %886 = vmatpush2.msra.mxu0 %v885
    %887 = vmatprep.subr.mxu0 0.0
    %v888 = vand.u32 %v54, 4294901760
    %v889 = vsub.f32 %v54, %v888
    %v890 = vand.u32 %v889, 4294901760
    %891 = vmatpush2.msra.mxu0 %v890
    %892 = vmatprep.subr.mxu0 0.0
    %v893 = vand.u32 %v53, 4294901760
    %v894 = vsub.f32 %v53, %v893
    %v895 = vand.u32 %v894, 4294901760
    %896 = vmatpush2.msra.mxu0 %v895
    %897 = vmatprep.subr.mxu0 0.0
    %v898 = vand.u32 %v52, 4294901760
    %v899 = vsub.f32 %v52, %v898
    %v900 = vand.u32 %v899, 4294901760
    %901 = vmatpush2.msra.mxu0 %v900
    %902 = vmatprep.subr.mxu0 0.0
    %v903 = vand.u32 %v51, 4294901760
    %v904 = vsub.f32 %v51, %v903
    %v905 = vand.u32 %v904, 4294901760
    %906 = vmatpush2.msra.mxu0 %v905
    %907 = vmatprep.subr.mxu0 0.0
    %v908 = vand.u32 %v50, 4294901760
    %v909 = vsub.f32 %v50, %v908
    %v910 = vand.u32 %v909, 4294901760
    %911 = vmatpush2.msra.mxu0 %v910
    %912 = vmatprep.subr.mxu0 0.0
    %v913 = vand.u32 %v49, 4294901760
    %v914 = vsub.f32 %v49, %v913
    %v915 = vand.u32 %v914, 4294901760
    %916 = vmatpush2.msra.mxu0 %v915
    %917 = vmatprep.subr.mxu0 0.0
    %v918 = vand.u32 %v48, 4294901760
    %v919 = vsub.f32 %v48, %v918
    %v920 = vand.u32 %v919, 4294901760
    %921 = vmatpush2.msra.mxu0 %v920
    %922 = vmatprep.subr.mxu0 0.0
    %v923 = vand.u32 %v47, 4294901760
    %v924 = vsub.f32 %v47, %v923
    %v925 = vand.u32 %v924, 4294901760
    %926 = vmatpush2.msra.mxu0 %v925
    %927 = vmatprep.subr.mxu0 0.0
    %v928 = vand.u32 %v46, 4294901760
    %v929 = vsub.f32 %v46, %v928
    %v930 = vand.u32 %v929, 4294901760
    %931 = vmatpush2.msra.mxu0 %v930
    %932 = vmatprep.subr.mxu0 0.0
    %v933 = vand.u32 %v45, 4294901760
    %v934 = vsub.f32 %v45, %v933
    %v935 = vand.u32 %v934, 4294901760
    %936 = vmatpush2.msra.mxu0 %v935
    %v937 = vand.u32 %v22, 4294901760
    %938 = vmatprep.mubr.f32.mxu0 %v937
    %v939 = vand.u32 %v21, 4294901760
    %940 = vmatmul.mubr.f32.gmra.mxu0 %v939
    %v941 = vpop.f32.mrf.mxu0
    %v942 = vadd.f32 %v741, %v941
    %v943 = vpop.f32.mrf.mxu0
    %v944 = vand.u32 %v24, 4294901760
    %945 = vmatprep.mubr.f32.mxu0 %v944
    %v946 = vand.u32 %v23, 4294901760
    %947 = vmatmul.mubr.f32.gmra.mxu0 %v946
    %v948 = vpop.f32.mrf.mxu0
    %v949 = vadd.f32 %v752, %v948
    %v950 = vpop.f32.mrf.mxu0
    %v951 = vand.u32 %v26, 4294901760
    %952 = vmatprep.mubr.f32.mxu0 %v951
    %v953 = vand.u32 %v25, 4294901760
    %954 = vmatmul.mubr.f32.gmra.mxu0 %v953
    %v955 = vpop.f32.mrf.mxu0
    %v956 = vadd.f32 %v763, %v955
    %v957 = vpop.f32.mrf.mxu0
    %v958 = vand.u32 %v28, 4294901760
    %959 = vmatprep.mubr.f32.mxu0 %v958
    %v960 = vand.u32 %v27, 4294901760
    %961 = vmatmul.mubr.f32.gmra.mxu0 %v960
    %v962 = vpop.f32.mrf.mxu0
    %v963 = vadd.f32 %v774, %v962
    %v964 = vpop.f32.mrf.mxu0
    %965 = vdwg.mxu0
    %966 = vmatprep.subr.mxu0 0.0
    %v967 = vand.u32 %v44, 4294901760
    %968 = vmatpush1.msra.mxu0 %v967
    %969 = vmatprep.subr.mxu0 0.0
    %v970 = vand.u32 %v43, 4294901760
    %971 = vmatpush1.msra.mxu0 %v970
    %972 = vmatprep.subr.mxu0 0.0
    %v973 = vand.u32 %v42, 4294901760
    %974 = vmatpush1.msra.mxu0 %v973
    %975 = vmatprep.subr.mxu0 0.0
    %v976 = vand.u32 %v41, 4294901760
    %977 = vmatpush1.msra.mxu0 %v976
    %978 = vmatprep.subr.mxu0 0.0
    %v979 = vand.u32 %v40, 4294901760
    %980 = vmatpush1.msra.mxu0 %v979
    %981 = vmatprep.subr.mxu0 0.0
    %v982 = vand.u32 %v39, 4294901760
    %983 = vmatpush1.msra.mxu0 %v982
    %984 = vmatprep.subr.mxu0 0.0
    %v985 = vand.u32 %v38, 4294901760
    %986 = vmatpush1.msra.mxu0 %v985
    %987 = vmatprep.subr.mxu0 0.0
    %v988 = vand.u32 %v37, 4294901760
    %989 = vmatpush1.msra.mxu0 %v988
    %990 = vmatprep.subr.mxu0 0.0
    %v991 = vand.u32 %v36, 4294901760
    %992 = vmatpush1.msra.mxu0 %v991
    %993 = vmatprep.subr.mxu0 0.0
    %v994 = vand.u32 %v35, 4294901760
    %995 = vmatpush1.msra.mxu0 %v994
    %996 = vmatprep.subr.mxu0 0.0
    %v997 = vand.u32 %v34, 4294901760
    %998 = vmatpush1.msra.mxu0 %v997
    %999 = vmatprep.subr.mxu0 0.0
    %v1000 = vand.u32 %v33, 4294901760
    %1001 = vmatpush1.msra.mxu0 %v1000
    %1002 = vmatprep.subr.mxu0 0.0
    %v1003 = vand.u32 %v32, 4294901760
    %1004 = vmatpush1.msra.mxu0 %v1003
    %1005 = vmatprep.subr.mxu0 0.0
    %v1006 = vand.u32 %v31, 4294901760
    %1007 = vmatpush1.msra.mxu0 %v1006
    %1008 = vmatprep.subr.mxu0 0.0
    %v1009 = vand.u32 %v30, 4294901760
    %1010 = vmatpush1.msra.mxu0 %v1009
    %1011 = vmatprep.subr.mxu0 0.0
    %v1012 = vand.u32 %v29, 4294901760
    %1013 = vmatpush1.msra.mxu0 %v1012
    %1014 = vmatprep.subr.mxu0 0.0
    %v1015 = vand.u32 %v60, 4294901760
    %1016 = vmatpush2.msra.mxu0 %v1015
    %1017 = vmatprep.subr.mxu0 0.0
    %v1018 = vand.u32 %v59, 4294901760
    %1019 = vmatpush2.msra.mxu0 %v1018
    %1020 = vmatprep.subr.mxu0 0.0
    %v1021 = vand.u32 %v58, 4294901760
    %1022 = vmatpush2.msra.mxu0 %v1021
    %1023 = vmatprep.subr.mxu0 0.0
    %v1024 = vand.u32 %v57, 4294901760
    %1025 = vmatpush2.msra.mxu0 %v1024
    %1026 = vmatprep.subr.mxu0 0.0
    %v1027 = vand.u32 %v56, 4294901760
    %1028 = vmatpush2.msra.mxu0 %v1027
    %1029 = vmatprep.subr.mxu0 0.0
    %v1030 = vand.u32 %v55, 4294901760
    %1031 = vmatpush2.msra.mxu0 %v1030
    %1032 = vmatprep.subr.mxu0 0.0
    %v1033 = vand.u32 %v54, 4294901760
    %1034 = vmatpush2.msra.mxu0 %v1033
    %1035 = vmatprep.subr.mxu0 0.0
    %v1036 = vand.u32 %v53, 4294901760
    %1037 = vmatpush2.msra.mxu0 %v1036
    %1038 = vmatprep.subr.mxu0 0.0
    %v1039 = vand.u32 %v52, 4294901760
    %1040 = vmatpush2.msra.mxu0 %v1039
    %1041 = vmatprep.subr.mxu0 0.0
    %v1042 = vand.u32 %v51, 4294901760
    %1043 = vmatpush2.msra.mxu0 %v1042
    %1044 = vmatprep.subr.mxu0 0.0
    %v1045 = vand.u32 %v50, 4294901760
    %1046 = vmatpush2.msra.mxu0 %v1045
    %1047 = vmatprep.subr.mxu0 0.0
    %v1048 = vand.u32 %v49, 4294901760
    %1049 = vmatpush2.msra.mxu0 %v1048
    %1050 = vmatprep.subr.mxu0 0.0
    %v1051 = vand.u32 %v48, 4294901760
    %1052 = vmatpush2.msra.mxu0 %v1051
    %1053 = vmatprep.subr.mxu0 0.0
    %v1054 = vand.u32 %v47, 4294901760
    %1055 = vmatpush2.msra.mxu0 %v1054
    %1056 = vmatprep.subr.mxu0 0.0
    %v1057 = vand.u32 %v46, 4294901760
    %1058 = vmatpush2.msra.mxu0 %v1057
    %1059 = vmatprep.subr.mxu0 0.0
    %v1060 = vand.u32 %v45, 4294901760
    %1061 = vmatpush2.msra.mxu0 %v1060
    %v1062 = vand.u32 %v22, 4294901760
    %1063 = vmatprep.mubr.f32.mxu0 %v1062
    %v1064 = vand.u32 %v21, 4294901760
    %1065 = vmatmul.mubr.f32.gmra.mxu0 %v1064
    %v1066 = vpop.f32.mrf.mxu0
    %v1067 = vadd.f32 %v942, %v1066
    %v1068 = vpop.f32.mrf.mxu0
    %v1069 = vand.u32 %v24, 4294901760
    %1070 = vmatprep.mubr.f32.mxu0 %v1069
    %v1071 = vand.u32 %v23, 4294901760
    %1072 = vmatmul.mubr.f32.gmra.mxu0 %v1071
    %v1073 = vpop.f32.mrf.mxu0
    %v1074 = vadd.f32 %v949, %v1073
    %v1075 = vpop.f32.mrf.mxu0
    %v1076 = vand.u32 %v26, 4294901760
    %1077 = vmatprep.mubr.f32.mxu0 %v1076
    %v1078 = vand.u32 %v25, 4294901760
    %1079 = vmatmul.mubr.f32.gmra.mxu0 %v1078
    %v1080 = vpop.f32.mrf.mxu0
    %v1081 = vadd.f32 %v956, %v1080
    %v1082 = vpop.f32.mrf.mxu0
    %v1083 = vand.u32 %v28, 4294901760
    %1084 = vmatprep.mubr.f32.mxu0 %v1083
    %v1085 = vand.u32 %v27, 4294901760
    %1086 = vmatmul.mubr.f32.gmra.mxu0 %v1085
    %v1087 = vpop.f32.mrf.mxu0
    %v1088 = vadd.f32 %v963, %v1087
    %v1089 = vpop.f32.mrf.mxu0
    %1090 = vdwg.mxu0
    %v1091 = vld [vmem:[%s2] sm:$0x7f]
    %v1092 = vld [vmem:[%s3] sm:$0xff]
    %v1093 = vld [vmem:[%s3 + $0x8] sm:$0xff]
    %v1094 = vld [vmem:[%s3 + $0x10] sm:$0xff]
    %v1095 = vld [vmem:[%s3 + $0x18] sm:$0xff]
    %v1096 = vld [vmem:[%s3 + $0x20] sm:$0xff]
    %v1097 = vld [vmem:[%s3 + $0x28] sm:$0xff]
    %v1098 = vld [vmem:[%s3 + $0x30] sm:$0xff]
    %v1099 = vld [vmem:[%s3 + $0x38] sm:$0xff]
    %v1100 = vld [vmem:[%s3 + $0x40] sm:$0xff]
    %v1101 = vld [vmem:[%s3 + $0x48] sm:$0xff]
    %v1102 = vld [vmem:[%s3 + $0x50] sm:$0xff]
    %v1103 = vld [vmem:[%s3 + $0x58] sm:$0xff]
    %v1104 = vld [vmem:[%s3 + $0x60] sm:$0xff]
    %v1105 = vld [vmem:[%s3 + $0x68] sm:$0xff]
    %v1106 = vld [vmem:[%s3 + $0x70] sm:$0xff]
    %v1107 = vld [vmem:[%s3 + $0x78] sm:$0xff]
    %v1108 = vld [vmem:[%s3 + $0x80] sm:$0xff]
    %v1109 = vld [vmem:[%s3 + $0x88] sm:$0xff]
    %v1110 = vld [vmem:[%s3 + $0x90] sm:$0xff]
    %v1111 = vld [vmem:[%s3 + $0x98] sm:$0xff]
    %v1112 = vld [vmem:[%s3 + $0xa0] sm:$0xff]
    %v1113 = vld [vmem:[%s3 + $0xa8] sm:$0xff]
    %v1114 = vld [vmem:[%s3 + $0xb0] sm:$0xff]
    %v1115 = vld [vmem:[%s3 + $0xb8] sm:$0xff]
    %v1116 = vld [vmem:[%s3 + $0xc0] sm:$0xff]
    %v1117 = vld [vmem:[%s3 + $0xc8] sm:$0xff]
    %v1118 = vld [vmem:[%s3 + $0xd0] sm:$0xff]
    %v1119 = vld [vmem:[%s3 + $0xd8] sm:$0xff]
    %v1120 = vld [vmem:[%s3 + $0xe0] sm:$0xff]
    %v1121 = vld [vmem:[%s3 + $0xe8] sm:$0xff]
    %v1122 = vld [vmem:[%s3 + $0xf0] sm:$0xff]
    %v1123 = vld [vmem:[%s3 + $0xf8] sm:$0xff]
    %v1124 = vld [vmem:[%s3 + $0x100] sm:$0xff]
    %v1125 = vld [vmem:[%s3 + $0x108] sm:$0xff]
    %v1126 = vld [vmem:[%s3 + $0x110] sm:$0xff]
    %v1127 = vld [vmem:[%s3 + $0x118] sm:$0xff]
    %v1128 = vld [vmem:[%s3 + $0x120] sm:$0xff]
    %v1129 = vld [vmem:[%s3 + $0x128] sm:$0xff]
    %v1130 = vld [vmem:[%s3 + $0x130] sm:$0xff]
    %v1131 = vld [vmem:[%s3 + $0x138] sm:$0xff]
    %v1132 = vld [vmem:[%s3 + $0x140] sm:$0xff]
    %v1133 = vld [vmem:[%s3 + $0x148] sm:$0xff]
    %v1134 = vld [vmem:[%s3 + $0x150] sm:$0xff]
    %v1135 = vld [vmem:[%s3 + $0x158] sm:$0xff]
    %v1136 = vld [vmem:[%s3 + $0x160] sm:$0xff]
    %v1137 = vld [vmem:[%s3 + $0x168] sm:$0xff]
    %v1138 = vld [vmem:[%s3 + $0x170] sm:$0xff]
    %v1139 = vld [vmem:[%s3 + $0x178] sm:$0xff]
    %v1140 = vld [vmem:[%s3 + $0x180] sm:$0xff]
    %v1141 = vld [vmem:[%s3 + $0x188] sm:$0xff]
    %v1142 = vld [vmem:[%s3 + $0x190] sm:$0xff]
    %v1143 = vld [vmem:[%s3 + $0x198] sm:$0xff]
    %v1144 = vld [vmem:[%s3 + $0x1a0] sm:$0xff]
    %v1145 = vld [vmem:[%s3 + $0x1a8] sm:$0xff]
    %v1146 = vld [vmem:[%s3 + $0x1b0] sm:$0xff]
    %v1147 = vld [vmem:[%s3 + $0x1b8] sm:$0xff]
    %v1148 = vld [vmem:[%s3 + $0x1c0] sm:$0xff]
    %v1149 = vld [vmem:[%s3 + $0x1c8] sm:$0xff]
    %v1150 = vld [vmem:[%s3 + $0x1d0] sm:$0xff]
    %v1151 = vld [vmem:[%s3 + $0x1d8] sm:$0xff]
    %v1152 = vld [vmem:[%s3 + $0x1e0] sm:$0xff]
    %v1153 = vld [vmem:[%s3 + $0x1e8] sm:$0xff]
    %v1154 = vld [vmem:[%s3 + $0x1f0] sm:$0xff]
    %v1155 = vld [vmem:[%s3 + $0x1f8] sm:$0xff]
    %v1156 = vld [vmem:[%s3 + $0x200] sm:$0xff]
    %v1157 = vld [vmem:[%s3 + $0x208] sm:$0xff]
    %v1158 = vld [vmem:[%s3 + $0x210] sm:$0xff]
    %v1159 = vld [vmem:[%s3 + $0x218] sm:$0xff]
    %v1160 = vld [vmem:[%s3 + $0x220] sm:$0xff]
    %v1161 = vld [vmem:[%s3 + $0x228] sm:$0xff]
    %v1162 = vld [vmem:[%s3 + $0x230] sm:$0xff]
    %v1163 = vld [vmem:[%s3 + $0x238] sm:$0xff]
    %v1164 = vld [vmem:[%s3 + $0x240] sm:$0xff]
    %v1165 = vld [vmem:[%s3 + $0x248] sm:$0xff]
    %v1166 = vld [vmem:[%s3 + $0x250] sm:$0xff]
    %v1167 = vld [vmem:[%s3 + $0x258] sm:$0xff]
    %v1168 = vld [vmem:[%s3 + $0x260] sm:$0xff]
    %v1169 = vld [vmem:[%s3 + $0x268] sm:$0xff]
    %v1170 = vld [vmem:[%s3 + $0x270] sm:$0xff]
    %v1171 = vld [vmem:[%s3 + $0x278] sm:$0xff]
    %v1172 = vld [vmem:[%s3 + $0x280] sm:$0xff]
    %v1173 = vld [vmem:[%s3 + $0x288] sm:$0xff]
    %v1174 = vld [vmem:[%s3 + $0x290] sm:$0xff]
    %v1175 = vld [vmem:[%s3 + $0x298] sm:$0xff]
    %v1176 = vld [vmem:[%s3 + $0x2a0] sm:$0xff]
    %v1177 = vld [vmem:[%s3 + $0x2a8] sm:$0xff]
    %v1178 = vld [vmem:[%s3 + $0x2b0] sm:$0xff]
    %v1179 = vld [vmem:[%s3 + $0x2b8] sm:$0xff]
    %v1180 = vld [vmem:[%s3 + $0x2c0] sm:$0xff]
    %v1181 = vld [vmem:[%s3 + $0x2c8] sm:$0xff]
    %v1182 = vld [vmem:[%s3 + $0x2d0] sm:$0xff]
    %v1183 = vld [vmem:[%s3 + $0x2d8] sm:$0xff]
    %v1184 = vld [vmem:[%s3 + $0x2e0] sm:$0xff]
    %v1185 = vld [vmem:[%s3 + $0x2e8] sm:$0xff]
    %v1186 = vld [vmem:[%s3 + $0x2f0] sm:$0xff]
    %v1187 = vld [vmem:[%s3 + $0x2f8] sm:$0xff]
    %v1188 = vld [vmem:[%s3 + $0x300] sm:$0xff]
    %v1189 = vld [vmem:[%s3 + $0x308] sm:$0xff]
    %v1190 = vld [vmem:[%s4] sm:$0x1]
    %vm1191 = vcmask 130048
    %v1193 = vsel %vm1191, %v1091, 0
    %1195 = vmatprep.subr.mxu0 0.0
    %1196 = vmatpush1.msra.mxu0 0.0
    %1197 = vmatprep.subr.mxu0 0.0
    %1198 = vmatpush1.msra.mxu0 0.0
    %1199 = vmatprep.subr.mxu0 0.0
    %1200 = vmatpush1.msra.mxu0 0.0
    %1201 = vmatprep.subr.mxu0 0.0
    %1202 = vmatpush1.msra.mxu0 0.0
    %1203 = vmatprep.subr.mxu0 0.0
    %1204 = vmatpush1.msra.mxu0 0.0
    %1205 = vmatprep.subr.mxu0 0.0
    %1206 = vmatpush1.msra.mxu0 0.0
    %1207 = vmatprep.subr.mxu0 0.0
    %1208 = vmatpush1.msra.mxu0 0.0
    %1209 = vmatprep.subr.mxu0 0.0
    %1210 = vmatpush1.msra.mxu0 0.0
    %1211 = vmatprep.subr.mxu0 0.0
    %1212 = vmatpush1.msra.mxu0 0.0
    %1213 = vmatprep.subr.mxu0 0.0
    %1214 = vmatpush1.msra.mxu0 0.0
    %1215 = vmatprep.subr.mxu0 0.0
    %1216 = vmatpush1.msra.mxu0 0.0
    %1217 = vmatprep.subr.mxu0 0.0
    %1218 = vmatpush1.msra.mxu0 0.0
    %1219 = vmatprep.subr.mxu0 0.0
    %1220 = vmatpush1.msra.mxu0 0.0
    %1221 = vmatprep.subr.mxu0 0.0
    %1222 = vmatpush1.msra.mxu0 0.0
    %1223 = vmatprep.subr.mxu0 0.0
    %v1224 = vand.u32 %v1074, 4294901760
    %1225 = vmatpush1.msra.mxu0 %v1224
    %1226 = vmatprep.subr.mxu0 0.0
    %v1227 = vand.u32 %v1067, 4294901760
    %1228 = vmatpush1.msra.mxu0 %v1227
    %1229 = vmatprep.subr.mxu0 0.0
    %1230 = vmatpush2.msra.mxu0 0.0
    %1231 = vmatprep.subr.mxu0 0.0
    %1232 = vmatpush2.msra.mxu0 0.0
    %1233 = vmatprep.subr.mxu0 0.0
    %1234 = vmatpush2.msra.mxu0 0.0
    %1235 = vmatprep.subr.mxu0 0.0
    %1236 = vmatpush2.msra.mxu0 0.0
    %1237 = vmatprep.subr.mxu0 0.0
    %1238 = vmatpush2.msra.mxu0 0.0
    %1239 = vmatprep.subr.mxu0 0.0
    %1240 = vmatpush2.msra.mxu0 0.0
    %1241 = vmatprep.subr.mxu0 0.0
    %1242 = vmatpush2.msra.mxu0 0.0
    %1243 = vmatprep.subr.mxu0 0.0
    %1244 = vmatpush2.msra.mxu0 0.0
    %1245 = vmatprep.subr.mxu0 0.0
    %1246 = vmatpush2.msra.mxu0 0.0
    %1247 = vmatprep.subr.mxu0 0.0
    %1248 = vmatpush2.msra.mxu0 0.0
    %1249 = vmatprep.subr.mxu0 0.0
    %1250 = vmatpush2.msra.mxu0 0.0
    %1251 = vmatprep.subr.mxu0 0.0
    %1252 = vmatpush2.msra.mxu0 0.0
    %1253 = vmatprep.subr.mxu0 0.0
    %1254 = vmatpush2.msra.mxu0 0.0
    %1255 = vmatprep.subr.mxu0 0.0
    %1256 = vmatpush2.msra.mxu0 0.0
    %1257 = vmatprep.subr.mxu0 0.0
    %1258 = vmatpush2.msra.mxu0 0.0
    %1259 = vmatprep.subr.mxu0 0.0
    %1260 = vmatpush2.msra.mxu0 0.0
    %1261 = vmatprep.mubr.f32.mxu0 0.0
    %v1262 = vand.u32 %v1193, 4294901760
    %v1263 = vsub.f32 %v1193, %v1262
    %v1264 = vand.u32 %v1263, 4294901760
    %v1265 = vsub.f32 %v1263, %v1264
    %v1266 = vand.u32 %v1265, 4294901760
    %1267 = vmatmul.mubr.f32.gmra.mxu0 %v1266
    %v1268 = vpop.f32.mrf.mxu0
    %v1269 = vadd.f32 0.0, %v1268
    %v1270 = vpop.f32.mrf.mxu0
    %1271 = vdwg.mxu0
    %1272 = vmatprep.subr.mxu0 0.0
    %1273 = vmatpush1.msra.mxu0 0.0
    %1274 = vmatprep.subr.mxu0 0.0
    %1275 = vmatpush1.msra.mxu0 0.0
    %1276 = vmatprep.subr.mxu0 0.0
    %1277 = vmatpush1.msra.mxu0 0.0
    %1278 = vmatprep.subr.mxu0 0.0
    %1279 = vmatpush1.msra.mxu0 0.0
    %1280 = vmatprep.subr.mxu0 0.0
    %1281 = vmatpush1.msra.mxu0 0.0
    %1282 = vmatprep.subr.mxu0 0.0
    %1283 = vmatpush1.msra.mxu0 0.0
    %1284 = vmatprep.subr.mxu0 0.0
    %1285 = vmatpush1.msra.mxu0 0.0
    %1286 = vmatprep.subr.mxu0 0.0
    %1287 = vmatpush1.msra.mxu0 0.0
    %1288 = vmatprep.subr.mxu0 0.0
    %1289 = vmatpush1.msra.mxu0 0.0
    %1290 = vmatprep.subr.mxu0 0.0
    %1291 = vmatpush1.msra.mxu0 0.0
    %1292 = vmatprep.subr.mxu0 0.0
    %1293 = vmatpush1.msra.mxu0 0.0
    %1294 = vmatprep.subr.mxu0 0.0
    %1295 = vmatpush1.msra.mxu0 0.0
    %1296 = vmatprep.subr.mxu0 0.0
    %1297 = vmatpush1.msra.mxu0 0.0
    %1298 = vmatprep.subr.mxu0 0.0
    %1299 = vmatpush1.msra.mxu0 0.0
    %1300 = vmatprep.subr.mxu0 0.0
    %v1301 = vand.u32 %v1074, 4294901760
    %v1302 = vsub.f32 %v1074, %v1301
    %v1303 = vand.u32 %v1302, 4294901760
    %v1304 = vsub.f32 %v1302, %v1303
    %v1305 = vand.u32 %v1304, 4294901760
    %1306 = vmatpush1.msra.mxu0 %v1305
    %1307 = vmatprep.subr.mxu0 0.0
    %v1308 = vand.u32 %v1067, 4294901760
    %v1309 = vsub.f32 %v1067, %v1308
    %v1310 = vand.u32 %v1309, 4294901760
    %v1311 = vsub.f32 %v1309, %v1310
    %v1312 = vand.u32 %v1311, 4294901760
    %1313 = vmatpush1.msra.mxu0 %v1312
    %1314 = vmatprep.subr.mxu0 0.0
    %1315 = vmatpush2.msra.mxu0 0.0
    %1316 = vmatprep.subr.mxu0 0.0
    %1317 = vmatpush2.msra.mxu0 0.0
    %1318 = vmatprep.subr.mxu0 0.0
    %1319 = vmatpush2.msra.mxu0 0.0
    %1320 = vmatprep.subr.mxu0 0.0
    %1321 = vmatpush2.msra.mxu0 0.0
    %1322 = vmatprep.subr.mxu0 0.0
    %1323 = vmatpush2.msra.mxu0 0.0
    %1324 = vmatprep.subr.mxu0 0.0
    %1325 = vmatpush2.msra.mxu0 0.0
    %1326 = vmatprep.subr.mxu0 0.0
    %1327 = vmatpush2.msra.mxu0 0.0
    %1328 = vmatprep.subr.mxu0 0.0
    %1329 = vmatpush2.msra.mxu0 0.0
    %1330 = vmatprep.subr.mxu0 0.0
    %1331 = vmatpush2.msra.mxu0 0.0
    %1332 = vmatprep.subr.mxu0 0.0
    %1333 = vmatpush2.msra.mxu0 0.0
    %1334 = vmatprep.subr.mxu0 0.0
    %1335 = vmatpush2.msra.mxu0 0.0
    %1336 = vmatprep.subr.mxu0 0.0
    %1337 = vmatpush2.msra.mxu0 0.0
    %1338 = vmatprep.subr.mxu0 0.0
    %1339 = vmatpush2.msra.mxu0 0.0
    %1340 = vmatprep.subr.mxu0 0.0
    %1341 = vmatpush2.msra.mxu0 0.0
    %1342 = vmatprep.subr.mxu0 0.0
    %1343 = vmatpush2.msra.mxu0 0.0
    %1344 = vmatprep.subr.mxu0 0.0
    %1345 = vmatpush2.msra.mxu0 0.0
    %1346 = vmatprep.mubr.f32.mxu0 0.0
    %v1347 = vand.u32 %v1193, 4294901760
    %1348 = vmatmul.mubr.f32.gmra.mxu0 %v1347
    %v1349 = vpop.f32.mrf.mxu0
    %v1350 = vadd.f32 %v1269, %v1349
    %v1351 = vpop.f32.mrf.mxu0
    %1352 = vdwg.mxu0
    %1353 = vmatprep.subr.mxu0 0.0
    %1354 = vmatpush1.msra.mxu0 0.0
    %1355 = vmatprep.subr.mxu0 0.0
    %1356 = vmatpush1.msra.mxu0 0.0
    %1357 = vmatprep.subr.mxu0 0.0
    %1358 = vmatpush1.msra.mxu0 0.0
    %1359 = vmatprep.subr.mxu0 0.0
    %1360 = vmatpush1.msra.mxu0 0.0
    %1361 = vmatprep.subr.mxu0 0.0
    %1362 = vmatpush1.msra.mxu0 0.0
    %1363 = vmatprep.subr.mxu0 0.0
    %1364 = vmatpush1.msra.mxu0 0.0
    %1365 = vmatprep.subr.mxu0 0.0
    %1366 = vmatpush1.msra.mxu0 0.0
    %1367 = vmatprep.subr.mxu0 0.0
    %1368 = vmatpush1.msra.mxu0 0.0
    %1369 = vmatprep.subr.mxu0 0.0
    %1370 = vmatpush1.msra.mxu0 0.0
    %1371 = vmatprep.subr.mxu0 0.0
    %1372 = vmatpush1.msra.mxu0 0.0
    %1373 = vmatprep.subr.mxu0 0.0
    %1374 = vmatpush1.msra.mxu0 0.0
    %1375 = vmatprep.subr.mxu0 0.0
    %1376 = vmatpush1.msra.mxu0 0.0
    %1377 = vmatprep.subr.mxu0 0.0
    %1378 = vmatpush1.msra.mxu0 0.0
    %1379 = vmatprep.subr.mxu0 0.0
    %1380 = vmatpush1.msra.mxu0 0.0
    %1381 = vmatprep.subr.mxu0 0.0
    %v1382 = vand.u32 %v1074, 4294901760
    %v1383 = vsub.f32 %v1074, %v1382
    %1384 = vmatpush1.msra.mxu0 %v1383
    %1385 = vmatprep.subr.mxu0 0.0
    %v1386 = vand.u32 %v1067, 4294901760
    %v1387 = vsub.f32 %v1067, %v1386
    %1388 = vmatpush1.msra.mxu0 %v1387
    %1389 = vmatprep.subr.mxu0 0.0
    %1390 = vmatpush2.msra.mxu0 0.0
    %1391 = vmatprep.subr.mxu0 0.0
    %1392 = vmatpush2.msra.mxu0 0.0
    %1393 = vmatprep.subr.mxu0 0.0
    %1394 = vmatpush2.msra.mxu0 0.0
    %1395 = vmatprep.subr.mxu0 0.0
    %1396 = vmatpush2.msra.mxu0 0.0
    %1397 = vmatprep.subr.mxu0 0.0
    %1398 = vmatpush2.msra.mxu0 0.0
    %1399 = vmatprep.subr.mxu0 0.0
    %1400 = vmatpush2.msra.mxu0 0.0
    %1401 = vmatprep.subr.mxu0 0.0
    %1402 = vmatpush2.msra.mxu0 0.0
    %1403 = vmatprep.subr.mxu0 0.0
    %1404 = vmatpush2.msra.mxu0 0.0
    %1405 = vmatprep.subr.mxu0 0.0
    %1406 = vmatpush2.msra.mxu0 0.0
    %1407 = vmatprep.subr.mxu0 0.0
    %1408 = vmatpush2.msra.mxu0 0.0
    %1409 = vmatprep.subr.mxu0 0.0
    %1410 = vmatpush2.msra.mxu0 0.0
    %1411 = vmatprep.subr.mxu0 0.0
    %1412 = vmatpush2.msra.mxu0 0.0
    %1413 = vmatprep.subr.mxu0 0.0
    %1414 = vmatpush2.msra.mxu0 0.0
    %1415 = vmatprep.subr.mxu0 0.0
    %1416 = vmatpush2.msra.mxu0 0.0
    %1417 = vmatprep.subr.mxu0 0.0
    %1418 = vmatpush2.msra.mxu0 0.0
    %1419 = vmatprep.subr.mxu0 0.0
    %1420 = vmatpush2.msra.mxu0 0.0
    %1421 = vmatprep.mubr.f32.mxu0 0.0
    %v1422 = vand.u32 %v1193, 4294901760
    %v1423 = vsub.f32 %v1193, %v1422
    %1424 = vmatmul.mubr.f32.gmra.mxu0 %v1423
    %v1425 = vpop.f32.mrf.mxu0
    %v1426 = vadd.f32 %v1350, %v1425
    %v1427 = vpop.f32.mrf.mxu0
    %1428 = vdwg.mxu0
    %1429 = vmatprep.subr.mxu0 0.0
    %1430 = vmatpush1.msra.mxu0 0.0
    %1431 = vmatprep.subr.mxu0 0.0
    %1432 = vmatpush1.msra.mxu0 0.0
    %1433 = vmatprep.subr.mxu0 0.0
    %1434 = vmatpush1.msra.mxu0 0.0
    %1435 = vmatprep.subr.mxu0 0.0
    %1436 = vmatpush1.msra.mxu0 0.0
    %1437 = vmatprep.subr.mxu0 0.0
    %1438 = vmatpush1.msra.mxu0 0.0
    %1439 = vmatprep.subr.mxu0 0.0
    %1440 = vmatpush1.msra.mxu0 0.0
    %1441 = vmatprep.subr.mxu0 0.0
    %1442 = vmatpush1.msra.mxu0 0.0
    %1443 = vmatprep.subr.mxu0 0.0
    %1444 = vmatpush1.msra.mxu0 0.0
    %1445 = vmatprep.subr.mxu0 0.0
    %1446 = vmatpush1.msra.mxu0 0.0
    %1447 = vmatprep.subr.mxu0 0.0
    %1448 = vmatpush1.msra.mxu0 0.0
    %1449 = vmatprep.subr.mxu0 0.0
    %1450 = vmatpush1.msra.mxu0 0.0
    %1451 = vmatprep.subr.mxu0 0.0
    %1452 = vmatpush1.msra.mxu0 0.0
    %1453 = vmatprep.subr.mxu0 0.0
    %1454 = vmatpush1.msra.mxu0 0.0
    %1455 = vmatprep.subr.mxu0 0.0
    %1456 = vmatpush1.msra.mxu0 0.0
    %1457 = vmatprep.subr.mxu0 0.0
    %v1458 = vand.u32 %v1074, 4294901760
    %1459 = vmatpush1.msra.mxu0 %v1458
    %1460 = vmatprep.subr.mxu0 0.0
    %v1461 = vand.u32 %v1067, 4294901760
    %1462 = vmatpush1.msra.mxu0 %v1461
    %1463 = vmatprep.subr.mxu0 0.0
    %1464 = vmatpush2.msra.mxu0 0.0
    %1465 = vmatprep.subr.mxu0 0.0
    %1466 = vmatpush2.msra.mxu0 0.0
    %1467 = vmatprep.subr.mxu0 0.0
    %1468 = vmatpush2.msra.mxu0 0.0
    %1469 = vmatprep.subr.mxu0 0.0
    %1470 = vmatpush2.msra.mxu0 0.0
    %1471 = vmatprep.subr.mxu0 0.0
    %1472 = vmatpush2.msra.mxu0 0.0
    %1473 = vmatprep.subr.mxu0 0.0
    %1474 = vmatpush2.msra.mxu0 0.0
    %1475 = vmatprep.subr.mxu0 0.0
    %1476 = vmatpush2.msra.mxu0 0.0
    %1477 = vmatprep.subr.mxu0 0.0
    %1478 = vmatpush2.msra.mxu0 0.0
    %1479 = vmatprep.subr.mxu0 0.0
    %1480 = vmatpush2.msra.mxu0 0.0
    %1481 = vmatprep.subr.mxu0 0.0
    %1482 = vmatpush2.msra.mxu0 0.0
    %1483 = vmatprep.subr.mxu0 0.0
    %1484 = vmatpush2.msra.mxu0 0.0
    %1485 = vmatprep.subr.mxu0 0.0
    %1486 = vmatpush2.msra.mxu0 0.0
    %1487 = vmatprep.subr.mxu0 0.0
    %1488 = vmatpush2.msra.mxu0 0.0
    %1489 = vmatprep.subr.mxu0 0.0
    %1490 = vmatpush2.msra.mxu0 0.0
    %1491 = vmatprep.subr.mxu0 0.0
    %1492 = vmatpush2.msra.mxu0 0.0
    %1493 = vmatprep.subr.mxu0 0.0
    %1494 = vmatpush2.msra.mxu0 0.0
    %1495 = vmatprep.mubr.f32.mxu0 0.0
    %v1496 = vand.u32 %v1193, 4294901760
    %v1497 = vsub.f32 %v1193, %v1496
    %v1498 = vand.u32 %v1497, 4294901760
    %1499 = vmatmul.mubr.f32.gmra.mxu0 %v1498
    %v1500 = vpop.f32.mrf.mxu0
    %v1501 = vadd.f32 %v1426, %v1500
    %v1502 = vpop.f32.mrf.mxu0
    %1503 = vdwg.mxu0
    %1504 = vmatprep.subr.mxu0 0.0
    %1505 = vmatpush1.msra.mxu0 0.0
    %1506 = vmatprep.subr.mxu0 0.0
    %1507 = vmatpush1.msra.mxu0 0.0
    %1508 = vmatprep.subr.mxu0 0.0
    %1509 = vmatpush1.msra.mxu0 0.0
    %1510 = vmatprep.subr.mxu0 0.0
    %1511 = vmatpush1.msra.mxu0 0.0
    %1512 = vmatprep.subr.mxu0 0.0
    %1513 = vmatpush1.msra.mxu0 0.0
    %1514 = vmatprep.subr.mxu0 0.0
    %1515 = vmatpush1.msra.mxu0 0.0
    %1516 = vmatprep.subr.mxu0 0.0
    %1517 = vmatpush1.msra.mxu0 0.0
    %1518 = vmatprep.subr.mxu0 0.0
    %1519 = vmatpush1.msra.mxu0 0.0
    %1520 = vmatprep.subr.mxu0 0.0
    %1521 = vmatpush1.msra.mxu0 0.0
    %1522 = vmatprep.subr.mxu0 0.0
    %1523 = vmatpush1.msra.mxu0 0.0
    %1524 = vmatprep.subr.mxu0 0.0
    %1525 = vmatpush1.msra.mxu0 0.0
    %1526 = vmatprep.subr.mxu0 0.0
    %1527 = vmatpush1.msra.mxu0 0.0
    %1528 = vmatprep.subr.mxu0 0.0
    %1529 = vmatpush1.msra.mxu0 0.0
    %1530 = vmatprep.subr.mxu0 0.0
    %1531 = vmatpush1.msra.mxu0 0.0
    %1532 = vmatprep.subr.mxu0 0.0
    %v1533 = vand.u32 %v1074, 4294901760
    %v1534 = vsub.f32 %v1074, %v1533
    %v1535 = vand.u32 %v1534, 4294901760
    %1536 = vmatpush1.msra.mxu0 %v1535
    %1537 = vmatprep.subr.mxu0 0.0
    %v1538 = vand.u32 %v1067, 4294901760
    %v1539 = vsub.f32 %v1067, %v1538
    %v1540 = vand.u32 %v1539, 4294901760
    %1541 = vmatpush1.msra.mxu0 %v1540
    %1542 = vmatprep.subr.mxu0 0.0
    %1543 = vmatpush2.msra.mxu0 0.0
    %1544 = vmatprep.subr.mxu0 0.0
    %1545 = vmatpush2.msra.mxu0 0.0
    %1546 = vmatprep.subr.mxu0 0.0
    %1547 = vmatpush2.msra.mxu0 0.0
    %1548 = vmatprep.subr.mxu0 0.0
    %1549 = vmatpush2.msra.mxu0 0.0
    %1550 = vmatprep.subr.mxu0 0.0
    %1551 = vmatpush2.msra.mxu0 0.0
    %1552 = vmatprep.subr.mxu0 0.0
    %1553 = vmatpush2.msra.mxu0 0.0
    %1554 = vmatprep.subr.mxu0 0.0
    %1555 = vmatpush2.msra.mxu0 0.0
    %1556 = vmatprep.subr.mxu0 0.0
    %1557 = vmatpush2.msra.mxu0 0.0
    %1558 = vmatprep.subr.mxu0 0.0
    %1559 = vmatpush2.msra.mxu0 0.0
    %1560 = vmatprep.subr.mxu0 0.0
    %1561 = vmatpush2.msra.mxu0 0.0
    %1562 = vmatprep.subr.mxu0 0.0
    %1563 = vmatpush2.msra.mxu0 0.0
    %1564 = vmatprep.subr.mxu0 0.0
    %1565 = vmatpush2.msra.mxu0 0.0
    %1566 = vmatprep.subr.mxu0 0.0
    %1567 = vmatpush2.msra.mxu0 0.0
    %1568 = vmatprep.subr.mxu0 0.0
    %1569 = vmatpush2.msra.mxu0 0.0
    %1570 = vmatprep.subr.mxu0 0.0
    %1571 = vmatpush2.msra.mxu0 0.0
    %1572 = vmatprep.subr.mxu0 0.0
    %1573 = vmatpush2.msra.mxu0 0.0
    %1574 = vmatprep.mubr.f32.mxu0 0.0
    %v1575 = vand.u32 %v1193, 4294901760
    %1576 = vmatmul.mubr.f32.gmra.mxu0 %v1575
    %v1577 = vpop.f32.mrf.mxu0
    %v1578 = vadd.f32 %v1501, %v1577
    %v1579 = vpop.f32.mrf.mxu0
    %1580 = vdwg.mxu0
    %1581 = vmatprep.subr.mxu0 0.0
    %1582 = vmatpush1.msra.mxu0 0.0
    %1583 = vmatprep.subr.mxu0 0.0
    %1584 = vmatpush1.msra.mxu0 0.0
    %1585 = vmatprep.subr.mxu0 0.0
    %1586 = vmatpush1.msra.mxu0 0.0
    %1587 = vmatprep.subr.mxu0 0.0
    %1588 = vmatpush1.msra.mxu0 0.0
    %1589 = vmatprep.subr.mxu0 0.0
    %1590 = vmatpush1.msra.mxu0 0.0
    %1591 = vmatprep.subr.mxu0 0.0
    %1592 = vmatpush1.msra.mxu0 0.0
    %1593 = vmatprep.subr.mxu0 0.0
    %1594 = vmatpush1.msra.mxu0 0.0
    %1595 = vmatprep.subr.mxu0 0.0
    %1596 = vmatpush1.msra.mxu0 0.0
    %1597 = vmatprep.subr.mxu0 0.0
    %1598 = vmatpush1.msra.mxu0 0.0
    %1599 = vmatprep.subr.mxu0 0.0
    %1600 = vmatpush1.msra.mxu0 0.0
    %1601 = vmatprep.subr.mxu0 0.0
    %1602 = vmatpush1.msra.mxu0 0.0
    %1603 = vmatprep.subr.mxu0 0.0
    %1604 = vmatpush1.msra.mxu0 0.0
    %1605 = vmatprep.subr.mxu0 0.0
    %1606 = vmatpush1.msra.mxu0 0.0
    %1607 = vmatprep.subr.mxu0 0.0
    %1608 = vmatpush1.msra.mxu0 0.0
    %1609 = vmatprep.subr.mxu0 0.0
    %v1610 = vand.u32 %v1074, 4294901760
    %1611 = vmatpush1.msra.mxu0 %v1610
    %1612 = vmatprep.subr.mxu0 0.0
    %v1613 = vand.u32 %v1067, 4294901760
    %1614 = vmatpush1.msra.mxu0 %v1613
    %1615 = vmatprep.subr.mxu0 0.0
    %1616 = vmatpush2.msra.mxu0 0.0
    %1617 = vmatprep.subr.mxu0 0.0
    %1618 = vmatpush2.msra.mxu0 0.0
    %1619 = vmatprep.subr.mxu0 0.0
    %1620 = vmatpush2.msra.mxu0 0.0
    %1621 = vmatprep.subr.mxu0 0.0
    %1622 = vmatpush2.msra.mxu0 0.0
    %1623 = vmatprep.subr.mxu0 0.0
    %1624 = vmatpush2.msra.mxu0 0.0
    %1625 = vmatprep.subr.mxu0 0.0
    %1626 = vmatpush2.msra.mxu0 0.0
    %1627 = vmatprep.subr.mxu0 0.0
    %1628 = vmatpush2.msra.mxu0 0.0
    %1629 = vmatprep.subr.mxu0 0.0
    %1630 = vmatpush2.msra.mxu0 0.0
    %1631 = vmatprep.subr.mxu0 0.0
    %1632 = vmatpush2.msra.mxu0 0.0
    %1633 = vmatprep.subr.mxu0 0.0
    %1634 = vmatpush2.msra.mxu0 0.0
    %1635 = vmatprep.subr.mxu0 0.0
    %1636 = vmatpush2.msra.mxu0 0.0
    %1637 = vmatprep.subr.mxu0 0.0
    %1638 = vmatpush2.msra.mxu0 0.0
    %1639 = vmatprep.subr.mxu0 0.0
    %1640 = vmatpush2.msra.mxu0 0.0
    %1641 = vmatprep.subr.mxu0 0.0
    %1642 = vmatpush2.msra.mxu0 0.0
    %1643 = vmatprep.subr.mxu0 0.0
    %1644 = vmatpush2.msra.mxu0 0.0
    %1645 = vmatprep.subr.mxu0 0.0
    %1646 = vmatpush2.msra.mxu0 0.0
    %1647 = vmatprep.mubr.f32.mxu0 0.0
    %v1648 = vand.u32 %v1193, 4294901760
    %1649 = vmatmul.mubr.f32.gmra.mxu0 %v1648
    %v1650 = vpop.f32.mrf.mxu0
    %v1651 = vadd.f32 %v1578, %v1650
    %v1652 = vpop.f32.mrf.mxu0
    %1653 = vdwg.mxu0
    %v1655 = vrot.slane %v1651, 1
    %1656 = vrot.lane.b32.xlu0 %v1655, 112
    %v1657 = vpop.permute.xlu0 %1656
    %v1659 = vrot.slane %v1651, 2
    %1660 = vrot.lane.b32.xlu0 %v1659, 96
    %v1661 = vpop.permute.xlu0 %1660
    %v1663 = vrot.slane %v1651, 3
    %1664 = vrot.lane.b32.xlu0 %v1663, 80
    %v1665 = vpop.permute.xlu0 %1664
    %v1667 = vrot.slane %v1651, 4
    %1668 = vrot.lane.b32.xlu0 %v1667, 64
    %v1669 = vpop.permute.xlu0 %1668
    %v1671 = vrot.slane %v1651, 5
    %1672 = vrot.lane.b32.xlu0 %v1671, 48
    %v1673 = vpop.permute.xlu0 %1672
    %v1675 = vrot.slane %v1651, 6
    %1676 = vrot.lane.b32.xlu0 %v1675, 32
    %v1677 = vpop.permute.xlu0 %1676
    %vm1679 = vcmask 916480
    %v1680 = vsel %vm1679, %v1651, %v1657
    %vm1681 = vcmask 785408
    %v1682 = vsel %vm1681, %v1657, %v1661
    %vm1683 = vcmask 654336
    %v1684 = vsel %vm1683, %v1661, %v1665
    %vm1685 = vcmask 523264
    %v1686 = vsel %vm1685, %v1665, %v1669
    %vm1687 = vcmask 392192
    %v1688 = vsel %vm1687, %v1669, %v1673
    %vm1689 = vcmask 261120
    %v1690 = vsel %vm1689, %v1673, %v1677
    %v1691 = vsel %vm1191, %v1677, 0
    %1693 = vmatprep.subr.mxu0 0.0
    %v1694 = vand.u32 %v1107, 4294901760
    %1695 = vmatpush1.msra.mxu0 %v1694
    %1696 = vmatprep.subr.mxu0 0.0
    %v1697 = vand.u32 %v1106, 4294901760
    %1698 = vmatpush1.msra.mxu0 %v1697
    %1699 = vmatprep.subr.mxu0 0.0
    %v1700 = vand.u32 %v1105, 4294901760
    %1701 = vmatpush1.msra.mxu0 %v1700
    %1702 = vmatprep.subr.mxu0 0.0
    %v1703 = vand.u32 %v1104, 4294901760
    %1704 = vmatpush1.msra.mxu0 %v1703
    %1705 = vmatprep.subr.mxu0 0.0
    %v1706 = vand.u32 %v1103, 4294901760
    %1707 = vmatpush1.msra.mxu0 %v1706
    %1708 = vmatprep.subr.mxu0 0.0
    %v1709 = vand.u32 %v1102, 4294901760
    %1710 = vmatpush1.msra.mxu0 %v1709
    %1711 = vmatprep.subr.mxu0 0.0
    %v1712 = vand.u32 %v1101, 4294901760
    %1713 = vmatpush1.msra.mxu0 %v1712
    %1714 = vmatprep.subr.mxu0 0.0
    %v1715 = vand.u32 %v1100, 4294901760
    %1716 = vmatpush1.msra.mxu0 %v1715
    %1717 = vmatprep.subr.mxu0 0.0
    %v1718 = vand.u32 %v1099, 4294901760
    %1719 = vmatpush1.msra.mxu0 %v1718
    %1720 = vmatprep.subr.mxu0 0.0
    %v1721 = vand.u32 %v1098, 4294901760
    %1722 = vmatpush1.msra.mxu0 %v1721
    %1723 = vmatprep.subr.mxu0 0.0
    %v1724 = vand.u32 %v1097, 4294901760
    %1725 = vmatpush1.msra.mxu0 %v1724
    %1726 = vmatprep.subr.mxu0 0.0
    %v1727 = vand.u32 %v1096, 4294901760
    %1728 = vmatpush1.msra.mxu0 %v1727
    %1729 = vmatprep.subr.mxu0 0.0
    %v1730 = vand.u32 %v1095, 4294901760
    %1731 = vmatpush1.msra.mxu0 %v1730
    %1732 = vmatprep.subr.mxu0 0.0
    %v1733 = vand.u32 %v1094, 4294901760
    %1734 = vmatpush1.msra.mxu0 %v1733
    %1735 = vmatprep.subr.mxu0 0.0
    %v1736 = vand.u32 %v1093, 4294901760
    %1737 = vmatpush1.msra.mxu0 %v1736
    %1738 = vmatprep.subr.mxu0 0.0
    %v1739 = vand.u32 %v1092, 4294901760
    %1740 = vmatpush1.msra.mxu0 %v1739
    %1741 = vmatprep.subr.mxu0 0.0
    %v1742 = vand.u32 %v1123, 4294901760
    %1743 = vmatpush2.msra.mxu0 %v1742
    %1744 = vmatprep.subr.mxu0 0.0
    %v1745 = vand.u32 %v1122, 4294901760
    %1746 = vmatpush2.msra.mxu0 %v1745
    %1747 = vmatprep.subr.mxu0 0.0
    %v1748 = vand.u32 %v1121, 4294901760
    %1749 = vmatpush2.msra.mxu0 %v1748
    %1750 = vmatprep.subr.mxu0 0.0
    %v1751 = vand.u32 %v1120, 4294901760
    %1752 = vmatpush2.msra.mxu0 %v1751
    %1753 = vmatprep.subr.mxu0 0.0
    %v1754 = vand.u32 %v1119, 4294901760
    %1755 = vmatpush2.msra.mxu0 %v1754
    %1756 = vmatprep.subr.mxu0 0.0
    %v1757 = vand.u32 %v1118, 4294901760
    %1758 = vmatpush2.msra.mxu0 %v1757
    %1759 = vmatprep.subr.mxu0 0.0
    %v1760 = vand.u32 %v1117, 4294901760
    %1761 = vmatpush2.msra.mxu0 %v1760
    %1762 = vmatprep.subr.mxu0 0.0
    %v1763 = vand.u32 %v1116, 4294901760
    %1764 = vmatpush2.msra.mxu0 %v1763
    %1765 = vmatprep.subr.mxu0 0.0
    %v1766 = vand.u32 %v1115, 4294901760
    %1767 = vmatpush2.msra.mxu0 %v1766
    %1768 = vmatprep.subr.mxu0 0.0
    %v1769 = vand.u32 %v1114, 4294901760
    %1770 = vmatpush2.msra.mxu0 %v1769
    %1771 = vmatprep.subr.mxu0 0.0
    %v1772 = vand.u32 %v1113, 4294901760
    %1773 = vmatpush2.msra.mxu0 %v1772
    %1774 = vmatprep.subr.mxu0 0.0
    %v1775 = vand.u32 %v1112, 4294901760
    %1776 = vmatpush2.msra.mxu0 %v1775
    %1777 = vmatprep.subr.mxu0 0.0
    %v1778 = vand.u32 %v1111, 4294901760
    %1779 = vmatpush2.msra.mxu0 %v1778
    %1780 = vmatprep.subr.mxu0 0.0
    %v1781 = vand.u32 %v1110, 4294901760
    %1782 = vmatpush2.msra.mxu0 %v1781
    %1783 = vmatprep.subr.mxu0 0.0
    %v1784 = vand.u32 %v1109, 4294901760
    %1785 = vmatpush2.msra.mxu0 %v1784
    %1786 = vmatprep.subr.mxu0 0.0
    %v1787 = vand.u32 %v1108, 4294901760
    %1788 = vmatpush2.msra.mxu0 %v1787
    %v1789 = vand.u32 %v1682, 4294901760
    %v1790 = vsub.f32 %v1682, %v1789
    %v1791 = vand.u32 %v1790, 4294901760
    %v1792 = vsub.f32 %v1790, %v1791
    %v1793 = vand.u32 %v1792, 4294901760
    %1794 = vmatprep.mubr.f32.mxu0 %v1793
    %v1795 = vand.u32 %v1680, 4294901760
    %v1796 = vsub.f32 %v1680, %v1795
    %v1797 = vand.u32 %v1796, 4294901760
    %v1798 = vsub.f32 %v1796, %v1797
    %v1799 = vand.u32 %v1798, 4294901760
    %1800 = vmatmul.mubr.f32.gmra.mxu0 %v1799
    %v1801 = vpop.f32.mrf.mxu0
    %v1802 = vadd.f32 0.0, %v1801
    %v1803 = vpop.f32.mrf.mxu0
    %1804 = vdwg.mxu0
    %1805 = vmatprep.subr.mxu0 0.0
    %v1806 = vand.u32 %v1107, 4294901760
    %v1807 = vsub.f32 %v1107, %v1806
    %v1808 = vand.u32 %v1807, 4294901760
    %v1809 = vsub.f32 %v1807, %v1808
    %v1810 = vand.u32 %v1809, 4294901760
    %1811 = vmatpush1.msra.mxu0 %v1810
    %1812 = vmatprep.subr.mxu0 0.0
    %v1813 = vand.u32 %v1106, 4294901760
    %v1814 = vsub.f32 %v1106, %v1813
    %v1815 = vand.u32 %v1814, 4294901760
    %v1816 = vsub.f32 %v1814, %v1815
    %v1817 = vand.u32 %v1816, 4294901760
    %1818 = vmatpush1.msra.mxu0 %v1817
    %1819 = vmatprep.subr.mxu0 0.0
    %v1820 = vand.u32 %v1105, 4294901760
    %v1821 = vsub.f32 %v1105, %v1820
    %v1822 = vand.u32 %v1821, 4294901760
    %v1823 = vsub.f32 %v1821, %v1822
    %v1824 = vand.u32 %v1823, 4294901760
    %1825 = vmatpush1.msra.mxu0 %v1824
    %1826 = vmatprep.subr.mxu0 0.0
    %v1827 = vand.u32 %v1104, 4294901760
    %v1828 = vsub.f32 %v1104, %v1827
    %v1829 = vand.u32 %v1828, 4294901760
    %v1830 = vsub.f32 %v1828, %v1829
    %v1831 = vand.u32 %v1830, 4294901760
    %1832 = vmatpush1.msra.mxu0 %v1831
    %1833 = vmatprep.subr.mxu0 0.0
    %v1834 = vand.u32 %v1103, 4294901760
    %v1835 = vsub.f32 %v1103, %v1834
    %v1836 = vand.u32 %v1835, 4294901760
    %v1837 = vsub.f32 %v1835, %v1836
    %v1838 = vand.u32 %v1837, 4294901760
    %1839 = vmatpush1.msra.mxu0 %v1838
    %1840 = vmatprep.subr.mxu0 0.0
    %v1841 = vand.u32 %v1102, 4294901760
    %v1842 = vsub.f32 %v1102, %v1841
    %v1843 = vand.u32 %v1842, 4294901760
    %v1844 = vsub.f32 %v1842, %v1843
    %v1845 = vand.u32 %v1844, 4294901760
    %1846 = vmatpush1.msra.mxu0 %v1845
    %1847 = vmatprep.subr.mxu0 0.0
    %v1848 = vand.u32 %v1101, 4294901760
    %v1849 = vsub.f32 %v1101, %v1848
    %v1850 = vand.u32 %v1849, 4294901760
    %v1851 = vsub.f32 %v1849, %v1850
    %v1852 = vand.u32 %v1851, 4294901760
    %1853 = vmatpush1.msra.mxu0 %v1852
    %1854 = vmatprep.subr.mxu0 0.0
    %v1855 = vand.u32 %v1100, 4294901760
    %v1856 = vsub.f32 %v1100, %v1855
    %v1857 = vand.u32 %v1856, 4294901760
    %v1858 = vsub.f32 %v1856, %v1857
    %v1859 = vand.u32 %v1858, 4294901760
    %1860 = vmatpush1.msra.mxu0 %v1859
    %1861 = vmatprep.subr.mxu0 0.0
    %v1862 = vand.u32 %v1099, 4294901760
    %v1863 = vsub.f32 %v1099, %v1862
    %v1864 = vand.u32 %v1863, 4294901760
    %v1865 = vsub.f32 %v1863, %v1864
    %v1866 = vand.u32 %v1865, 4294901760
    %1867 = vmatpush1.msra.mxu0 %v1866
    %1868 = vmatprep.subr.mxu0 0.0
    %v1869 = vand.u32 %v1098, 4294901760
    %v1870 = vsub.f32 %v1098, %v1869
    %v1871 = vand.u32 %v1870, 4294901760
    %v1872 = vsub.f32 %v1870, %v1871
    %v1873 = vand.u32 %v1872, 4294901760
    %1874 = vmatpush1.msra.mxu0 %v1873
    %1875 = vmatprep.subr.mxu0 0.0
    %v1876 = vand.u32 %v1097, 4294901760
    %v1877 = vsub.f32 %v1097, %v1876
    %v1878 = vand.u32 %v1877, 4294901760
    %v1879 = vsub.f32 %v1877, %v1878
    %v1880 = vand.u32 %v1879, 4294901760
    %1881 = vmatpush1.msra.mxu0 %v1880
    %1882 = vmatprep.subr.mxu0 0.0
    %v1883 = vand.u32 %v1096, 4294901760
    %v1884 = vsub.f32 %v1096, %v1883
    %v1885 = vand.u32 %v1884, 4294901760
    %v1886 = vsub.f32 %v1884, %v1885
    %v1887 = vand.u32 %v1886, 4294901760
    %1888 = vmatpush1.msra.mxu0 %v1887
    %1889 = vmatprep.subr.mxu0 0.0
    %v1890 = vand.u32 %v1095, 4294901760
    %v1891 = vsub.f32 %v1095, %v1890
    %v1892 = vand.u32 %v1891, 4294901760
    %v1893 = vsub.f32 %v1891, %v1892
    %v1894 = vand.u32 %v1893, 4294901760
    %1895 = vmatpush1.msra.mxu0 %v1894
    %1896 = vmatprep.subr.mxu0 0.0
    %v1897 = vand.u32 %v1094, 4294901760
    %v1898 = vsub.f32 %v1094, %v1897
    %v1899 = vand.u32 %v1898, 4294901760
    %v1900 = vsub.f32 %v1898, %v1899
    %v1901 = vand.u32 %v1900, 4294901760
    %1902 = vmatpush1.msra.mxu0 %v1901
    %1903 = vmatprep.subr.mxu0 0.0
    %v1904 = vand.u32 %v1093, 4294901760
    %v1905 = vsub.f32 %v1093, %v1904
    %v1906 = vand.u32 %v1905, 4294901760
    %v1907 = vsub.f32 %v1905, %v1906
    %v1908 = vand.u32 %v1907, 4294901760
    %1909 = vmatpush1.msra.mxu0 %v1908
    %1910 = vmatprep.subr.mxu0 0.0
    %v1911 = vand.u32 %v1092, 4294901760
    %v1912 = vsub.f32 %v1092, %v1911
    %v1913 = vand.u32 %v1912, 4294901760
    %v1914 = vsub.f32 %v1912, %v1913
    %v1915 = vand.u32 %v1914, 4294901760
    %1916 = vmatpush1.msra.mxu0 %v1915
    %1917 = vmatprep.subr.mxu0 0.0
    %v1918 = vand.u32 %v1123, 4294901760
    %v1919 = vsub.f32 %v1123, %v1918
    %v1920 = vand.u32 %v1919, 4294901760
    %v1921 = vsub.f32 %v1919, %v1920
    %v1922 = vand.u32 %v1921, 4294901760
    %1923 = vmatpush2.msra.mxu0 %v1922
    %1924 = vmatprep.subr.mxu0 0.0
    %v1925 = vand.u32 %v1122, 4294901760
    %v1926 = vsub.f32 %v1122, %v1925
    %v1927 = vand.u32 %v1926, 4294901760
    %v1928 = vsub.f32 %v1926, %v1927
    %v1929 = vand.u32 %v1928, 4294901760
    %1930 = vmatpush2.msra.mxu0 %v1929
    %1931 = vmatprep.subr.mxu0 0.0
    %v1932 = vand.u32 %v1121, 4294901760
    %v1933 = vsub.f32 %v1121, %v1932
    %v1934 = vand.u32 %v1933, 4294901760
    %v1935 = vsub.f32 %v1933, %v1934
    %v1936 = vand.u32 %v1935, 4294901760
    %1937 = vmatpush2.msra.mxu0 %v1936
    %1938 = vmatprep.subr.mxu0 0.0
    %v1939 = vand.u32 %v1120, 4294901760
    %v1940 = vsub.f32 %v1120, %v1939
    %v1941 = vand.u32 %v1940, 4294901760
    %v1942 = vsub.f32 %v1940, %v1941
    %v1943 = vand.u32 %v1942, 4294901760
    %1944 = vmatpush2.msra.mxu0 %v1943
    %1945 = vmatprep.subr.mxu0 0.0
    %v1946 = vand.u32 %v1119, 4294901760
    %v1947 = vsub.f32 %v1119, %v1946
    %v1948 = vand.u32 %v1947, 4294901760
    %v1949 = vsub.f32 %v1947, %v1948
    %v1950 = vand.u32 %v1949, 4294901760
    %1951 = vmatpush2.msra.mxu0 %v1950
    %1952 = vmatprep.subr.mxu0 0.0
    %v1953 = vand.u32 %v1118, 4294901760
    %v1954 = vsub.f32 %v1118, %v1953
    %v1955 = vand.u32 %v1954, 4294901760
    %v1956 = vsub.f32 %v1954, %v1955
    %v1957 = vand.u32 %v1956, 4294901760
    %1958 = vmatpush2.msra.mxu0 %v1957
    %1959 = vmatprep.subr.mxu0 0.0
    %v1960 = vand.u32 %v1117, 4294901760
    %v1961 = vsub.f32 %v1117, %v1960
    %v1962 = vand.u32 %v1961, 4294901760
    %v1963 = vsub.f32 %v1961, %v1962
    %v1964 = vand.u32 %v1963, 4294901760
    %1965 = vmatpush2.msra.mxu0 %v1964
    %1966 = vmatprep.subr.mxu0 0.0
    %v1967 = vand.u32 %v1116, 4294901760
    %v1968 = vsub.f32 %v1116, %v1967
    %v1969 = vand.u32 %v1968, 4294901760
    %v1970 = vsub.f32 %v1968, %v1969
    %v1971 = vand.u32 %v1970, 4294901760
    %1972 = vmatpush2.msra.mxu0 %v1971
    %1973 = vmatprep.subr.mxu0 0.0
    %v1974 = vand.u32 %v1115, 4294901760
    %v1975 = vsub.f32 %v1115, %v1974
    %v1976 = vand.u32 %v1975, 4294901760
    %v1977 = vsub.f32 %v1975, %v1976
    %v1978 = vand.u32 %v1977, 4294901760
    %1979 = vmatpush2.msra.mxu0 %v1978
    %1980 = vmatprep.subr.mxu0 0.0
    %v1981 = vand.u32 %v1114, 4294901760
    %v1982 = vsub.f32 %v1114, %v1981
    %v1983 = vand.u32 %v1982, 4294901760
    %v1984 = vsub.f32 %v1982, %v1983
    %v1985 = vand.u32 %v1984, 4294901760
    %1986 = vmatpush2.msra.mxu0 %v1985
    %1987 = vmatprep.subr.mxu0 0.0
    %v1988 = vand.u32 %v1113, 4294901760
    %v1989 = vsub.f32 %v1113, %v1988
    %v1990 = vand.u32 %v1989, 4294901760
    %v1991 = vsub.f32 %v1989, %v1990
    %v1992 = vand.u32 %v1991, 4294901760
    %1993 = vmatpush2.msra.mxu0 %v1992
    %1994 = vmatprep.subr.mxu0 0.0
    %v1995 = vand.u32 %v1112, 4294901760
    %v1996 = vsub.f32 %v1112, %v1995
    %v1997 = vand.u32 %v1996, 4294901760
    %v1998 = vsub.f32 %v1996, %v1997
    %v1999 = vand.u32 %v1998, 4294901760
    %2000 = vmatpush2.msra.mxu0 %v1999
    %2001 = vmatprep.subr.mxu0 0.0
    %v2002 = vand.u32 %v1111, 4294901760
    %v2003 = vsub.f32 %v1111, %v2002
    %v2004 = vand.u32 %v2003, 4294901760
    %v2005 = vsub.f32 %v2003, %v2004
    %v2006 = vand.u32 %v2005, 4294901760
    %2007 = vmatpush2.msra.mxu0 %v2006
    %2008 = vmatprep.subr.mxu0 0.0
    %v2009 = vand.u32 %v1110, 4294901760
    %v2010 = vsub.f32 %v1110, %v2009
    %v2011 = vand.u32 %v2010, 4294901760
    %v2012 = vsub.f32 %v2010, %v2011
    %v2013 = vand.u32 %v2012, 4294901760
    %2014 = vmatpush2.msra.mxu0 %v2013
    %2015 = vmatprep.subr.mxu0 0.0
    %v2016 = vand.u32 %v1109, 4294901760
    %v2017 = vsub.f32 %v1109, %v2016
    %v2018 = vand.u32 %v2017, 4294901760
    %v2019 = vsub.f32 %v2017, %v2018
    %v2020 = vand.u32 %v2019, 4294901760
    %2021 = vmatpush2.msra.mxu0 %v2020
    %2022 = vmatprep.subr.mxu0 0.0
    %v2023 = vand.u32 %v1108, 4294901760
    %v2024 = vsub.f32 %v1108, %v2023
    %v2025 = vand.u32 %v2024, 4294901760
    %v2026 = vsub.f32 %v2024, %v2025
    %v2027 = vand.u32 %v2026, 4294901760
    %2028 = vmatpush2.msra.mxu0 %v2027
    %v2029 = vand.u32 %v1682, 4294901760
    %2030 = vmatprep.mubr.f32.mxu0 %v2029
    %v2031 = vand.u32 %v1680, 4294901760
    %2032 = vmatmul.mubr.f32.gmra.mxu0 %v2031
    %v2033 = vpop.f32.mrf.mxu0
    %v2034 = vadd.f32 %v1802, %v2033
    %v2035 = vpop.f32.mrf.mxu0
    %2036 = vdwg.mxu0
    %2037 = vmatprep.subr.mxu0 0.0
    %v2038 = vand.u32 %v1107, 4294901760
    %v2039 = vsub.f32 %v1107, %v2038
    %2040 = vmatpush1.msra.mxu0 %v2039
    %2041 = vmatprep.subr.mxu0 0.0
    %v2042 = vand.u32 %v1106, 4294901760
    %v2043 = vsub.f32 %v1106, %v2042
    %2044 = vmatpush1.msra.mxu0 %v2043
    %2045 = vmatprep.subr.mxu0 0.0
    %v2046 = vand.u32 %v1105, 4294901760
    %v2047 = vsub.f32 %v1105, %v2046
    %2048 = vmatpush1.msra.mxu0 %v2047
    %2049 = vmatprep.subr.mxu0 0.0
    %v2050 = vand.u32 %v1104, 4294901760
    %v2051 = vsub.f32 %v1104, %v2050
    %2052 = vmatpush1.msra.mxu0 %v2051
    %2053 = vmatprep.subr.mxu0 0.0
    %v2054 = vand.u32 %v1103, 4294901760
    %v2055 = vsub.f32 %v1103, %v2054
    %2056 = vmatpush1.msra.mxu0 %v2055
    %2057 = vmatprep.subr.mxu0 0.0
    %v2058 = vand.u32 %v1102, 4294901760
    %v2059 = vsub.f32 %v1102, %v2058
    %2060 = vmatpush1.msra.mxu0 %v2059
    %2061 = vmatprep.subr.mxu0 0.0
    %v2062 = vand.u32 %v1101, 4294901760
    %v2063 = vsub.f32 %v1101, %v2062
    %2064 = vmatpush1.msra.mxu0 %v2063
    %2065 = vmatprep.subr.mxu0 0.0
    %v2066 = vand.u32 %v1100, 4294901760
    %v2067 = vsub.f32 %v1100, %v2066
    %2068 = vmatpush1.msra.mxu0 %v2067
    %2069 = vmatprep.subr.mxu0 0.0
    %v2070 = vand.u32 %v1099, 4294901760
    %v2071 = vsub.f32 %v1099, %v2070
    %2072 = vmatpush1.msra.mxu0 %v2071
    %2073 = vmatprep.subr.mxu0 0.0
    %v2074 = vand.u32 %v1098, 4294901760
    %v2075 = vsub.f32 %v1098, %v2074
    %2076 = vmatpush1.msra.mxu0 %v2075
    %2077 = vmatprep.subr.mxu0 0.0
    %v2078 = vand.u32 %v1097, 4294901760
    %v2079 = vsub.f32 %v1097, %v2078
    %2080 = vmatpush1.msra.mxu0 %v2079
    %2081 = vmatprep.subr.mxu0 0.0
    %v2082 = vand.u32 %v1096, 4294901760
    %v2083 = vsub.f32 %v1096, %v2082
    %2084 = vmatpush1.msra.mxu0 %v2083
    %2085 = vmatprep.subr.mxu0 0.0
    %v2086 = vand.u32 %v1095, 4294901760
    %v2087 = vsub.f32 %v1095, %v2086
    %2088 = vmatpush1.msra.mxu0 %v2087
    %2089 = vmatprep.subr.mxu0 0.0
    %v2090 = vand.u32 %v1094, 4294901760
    %v2091 = vsub.f32 %v1094, %v2090
    %2092 = vmatpush1.msra.mxu0 %v2091
    %2093 = vmatprep.subr.mxu0 0.0
    %v2094 = vand.u32 %v1093, 4294901760
    %v2095 = vsub.f32 %v1093, %v2094
    %2096 = vmatpush1.msra.mxu0 %v2095
    %2097 = vmatprep.subr.mxu0 0.0
    %v2098 = vand.u32 %v1092, 4294901760
    %v2099 = vsub.f32 %v1092, %v2098
    %2100 = vmatpush1.msra.mxu0 %v2099
    %2101 = vmatprep.subr.mxu0 0.0
    %v2102 = vand.u32 %v1123, 4294901760
    %v2103 = vsub.f32 %v1123, %v2102
    %2104 = vmatpush2.msra.mxu0 %v2103
    %2105 = vmatprep.subr.mxu0 0.0
    %v2106 = vand.u32 %v1122, 4294901760
    %v2107 = vsub.f32 %v1122, %v2106
    %2108 = vmatpush2.msra.mxu0 %v2107
    %2109 = vmatprep.subr.mxu0 0.0
    %v2110 = vand.u32 %v1121, 4294901760
    %v2111 = vsub.f32 %v1121, %v2110
    %2112 = vmatpush2.msra.mxu0 %v2111
    %2113 = vmatprep.subr.mxu0 0.0
    %v2114 = vand.u32 %v1120, 4294901760
    %v2115 = vsub.f32 %v1120, %v2114
    %2116 = vmatpush2.msra.mxu0 %v2115
    %2117 = vmatprep.subr.mxu0 0.0
    %v2118 = vand.u32 %v1119, 4294901760
    %v2119 = vsub.f32 %v1119, %v2118
    %2120 = vmatpush2.msra.mxu0 %v2119
    %2121 = vmatprep.subr.mxu0 0.0
    %v2122 = vand.u32 %v1118, 4294901760
    %v2123 = vsub.f32 %v1118, %v2122
    %2124 = vmatpush2.msra.mxu0 %v2123
    %2125 = vmatprep.subr.mxu0 0.0
    %v2126 = vand.u32 %v1117, 4294901760
    %v2127 = vsub.f32 %v1117, %v2126
    %2128 = vmatpush2.msra.mxu0 %v2127
    %2129 = vmatprep.subr.mxu0 0.0
    %v2130 = vand.u32 %v1116, 4294901760
    %v2131 = vsub.f32 %v1116, %v2130
    %2132 = vmatpush2.msra.mxu0 %v2131
    %2133 = vmatprep.subr.mxu0 0.0
    %v2134 = vand.u32 %v1115, 4294901760
    %v2135 = vsub.f32 %v1115, %v2134
    %2136 = vmatpush2.msra.mxu0 %v2135
    %2137 = vmatprep.subr.mxu0 0.0
    %v2138 = vand.u32 %v1114, 4294901760
    %v2139 = vsub.f32 %v1114, %v2138
    %2140 = vmatpush2.msra.mxu0 %v2139
    %2141 = vmatprep.subr.mxu0 0.0
    %v2142 = vand.u32 %v1113, 4294901760
    %v2143 = vsub.f32 %v1113, %v2142
    %2144 = vmatpush2.msra.mxu0 %v2143
    %2145 = vmatprep.subr.mxu0 0.0
    %v2146 = vand.u32 %v1112, 4294901760
    %v2147 = vsub.f32 %v1112, %v2146
    %2148 = vmatpush2.msra.mxu0 %v2147
    %2149 = vmatprep.subr.mxu0 0.0
    %v2150 = vand.u32 %v1111, 4294901760
    %v2151 = vsub.f32 %v1111, %v2150
    %2152 = vmatpush2.msra.mxu0 %v2151
    %2153 = vmatprep.subr.mxu0 0.0
    %v2154 = vand.u32 %v1110, 4294901760
    %v2155 = vsub.f32 %v1110, %v2154
    %2156 = vmatpush2.msra.mxu0 %v2155
    %2157 = vmatprep.subr.mxu0 0.0
    %v2158 = vand.u32 %v1109, 4294901760
    %v2159 = vsub.f32 %v1109, %v2158
    %2160 = vmatpush2.msra.mxu0 %v2159
    %2161 = vmatprep.subr.mxu0 0.0
    %v2162 = vand.u32 %v1108, 4294901760
    %v2163 = vsub.f32 %v1108, %v2162
    %2164 = vmatpush2.msra.mxu0 %v2163
    %v2165 = vand.u32 %v1682, 4294901760
    %v2166 = vsub.f32 %v1682, %v2165
    %2167 = vmatprep.mubr.f32.mxu0 %v2166
    %v2168 = vand.u32 %v1680, 4294901760
    %v2169 = vsub.f32 %v1680, %v2168
    %2170 = vmatmul.mubr.f32.gmra.mxu0 %v2169
    %v2171 = vpop.f32.mrf.mxu0
    %v2172 = vadd.f32 %v2034, %v2171
    %v2173 = vpop.f32.mrf.mxu0
    %2174 = vdwg.mxu0
    %2175 = vmatprep.subr.mxu0 0.0
    %v2176 = vand.u32 %v1107, 4294901760
    %2177 = vmatpush1.msra.mxu0 %v2176
    %2178 = vmatprep.subr.mxu0 0.0
    %v2179 = vand.u32 %v1106, 4294901760
    %2180 = vmatpush1.msra.mxu0 %v2179
    %2181 = vmatprep.subr.mxu0 0.0
    %v2182 = vand.u32 %v1105, 4294901760
    %2183 = vmatpush1.msra.mxu0 %v2182
    %2184 = vmatprep.subr.mxu0 0.0
    %v2185 = vand.u32 %v1104, 4294901760
    %2186 = vmatpush1.msra.mxu0 %v2185
    %2187 = vmatprep.subr.mxu0 0.0
    %v2188 = vand.u32 %v1103, 4294901760
    %2189 = vmatpush1.msra.mxu0 %v2188
    %2190 = vmatprep.subr.mxu0 0.0
    %v2191 = vand.u32 %v1102, 4294901760
    %2192 = vmatpush1.msra.mxu0 %v2191
    %2193 = vmatprep.subr.mxu0 0.0
    %v2194 = vand.u32 %v1101, 4294901760
    %2195 = vmatpush1.msra.mxu0 %v2194
    %2196 = vmatprep.subr.mxu0 0.0
    %v2197 = vand.u32 %v1100, 4294901760
    %2198 = vmatpush1.msra.mxu0 %v2197
    %2199 = vmatprep.subr.mxu0 0.0
    %v2200 = vand.u32 %v1099, 4294901760
    %2201 = vmatpush1.msra.mxu0 %v2200
    %2202 = vmatprep.subr.mxu0 0.0
    %v2203 = vand.u32 %v1098, 4294901760
    %2204 = vmatpush1.msra.mxu0 %v2203
    %2205 = vmatprep.subr.mxu0 0.0
    %v2206 = vand.u32 %v1097, 4294901760
    %2207 = vmatpush1.msra.mxu0 %v2206
    %2208 = vmatprep.subr.mxu0 0.0
    %v2209 = vand.u32 %v1096, 4294901760
    %2210 = vmatpush1.msra.mxu0 %v2209
    %2211 = vmatprep.subr.mxu0 0.0
    %v2212 = vand.u32 %v1095, 4294901760
    %2213 = vmatpush1.msra.mxu0 %v2212
    %2214 = vmatprep.subr.mxu0 0.0
    %v2215 = vand.u32 %v1094, 4294901760
    %2216 = vmatpush1.msra.mxu0 %v2215
    %2217 = vmatprep.subr.mxu0 0.0
    %v2218 = vand.u32 %v1093, 4294901760
    %2219 = vmatpush1.msra.mxu0 %v2218
    %2220 = vmatprep.subr.mxu0 0.0
    %v2221 = vand.u32 %v1092, 4294901760
    %2222 = vmatpush1.msra.mxu0 %v2221
    %2223 = vmatprep.subr.mxu0 0.0
    %v2224 = vand.u32 %v1123, 4294901760
    %2225 = vmatpush2.msra.mxu0 %v2224
    %2226 = vmatprep.subr.mxu0 0.0
    %v2227 = vand.u32 %v1122, 4294901760
    %2228 = vmatpush2.msra.mxu0 %v2227
    %2229 = vmatprep.subr.mxu0 0.0
    %v2230 = vand.u32 %v1121, 4294901760
    %2231 = vmatpush2.msra.mxu0 %v2230
    %2232 = vmatprep.subr.mxu0 0.0
    %v2233 = vand.u32 %v1120, 4294901760
    %2234 = vmatpush2.msra.mxu0 %v2233
    %2235 = vmatprep.subr.mxu0 0.0
    %v2236 = vand.u32 %v1119, 4294901760
    %2237 = vmatpush2.msra.mxu0 %v2236
    %2238 = vmatprep.subr.mxu0 0.0
    %v2239 = vand.u32 %v1118, 4294901760
    %2240 = vmatpush2.msra.mxu0 %v2239
    %2241 = vmatprep.subr.mxu0 0.0
    %v2242 = vand.u32 %v1117, 4294901760
    %2243 = vmatpush2.msra.mxu0 %v2242
    %2244 = vmatprep.subr.mxu0 0.0
    %v2245 = vand.u32 %v1116, 4294901760
    %2246 = vmatpush2.msra.mxu0 %v2245
    %2247 = vmatprep.subr.mxu0 0.0
    %v2248 = vand.u32 %v1115, 4294901760
    %2249 = vmatpush2.msra.mxu0 %v2248
    %2250 = vmatprep.subr.mxu0 0.0
    %v2251 = vand.u32 %v1114, 4294901760
    %2252 = vmatpush2.msra.mxu0 %v2251
    %2253 = vmatprep.subr.mxu0 0.0
    %v2254 = vand.u32 %v1113, 4294901760
    %2255 = vmatpush2.msra.mxu0 %v2254
    %2256 = vmatprep.subr.mxu0 0.0
    %v2257 = vand.u32 %v1112, 4294901760
    %2258 = vmatpush2.msra.mxu0 %v2257
    %2259 = vmatprep.subr.mxu0 0.0
    %v2260 = vand.u32 %v1111, 4294901760
    %2261 = vmatpush2.msra.mxu0 %v2260
    %2262 = vmatprep.subr.mxu0 0.0
    %v2263 = vand.u32 %v1110, 4294901760
    %2264 = vmatpush2.msra.mxu0 %v2263
    %2265 = vmatprep.subr.mxu0 0.0
    %v2266 = vand.u32 %v1109, 4294901760
    %2267 = vmatpush2.msra.mxu0 %v2266
    %2268 = vmatprep.subr.mxu0 0.0
    %v2269 = vand.u32 %v1108, 4294901760
    %2270 = vmatpush2.msra.mxu0 %v2269
    %v2271 = vand.u32 %v1682, 4294901760
    %v2272 = vsub.f32 %v1682, %v2271
    %v2273 = vand.u32 %v2272, 4294901760
    %2274 = vmatprep.mubr.f32.mxu0 %v2273
    %v2275 = vand.u32 %v1680, 4294901760
    %v2276 = vsub.f32 %v1680, %v2275
    %v2277 = vand.u32 %v2276, 4294901760
    %2278 = vmatmul.mubr.f32.gmra.mxu0 %v2277
    %v2279 = vpop.f32.mrf.mxu0
    %v2280 = vadd.f32 %v2172, %v2279
    %v2281 = vpop.f32.mrf.mxu0
    %2282 = vdwg.mxu0
    %2283 = vmatprep.subr.mxu0 0.0
    %v2284 = vand.u32 %v1107, 4294901760
    %v2285 = vsub.f32 %v1107, %v2284
    %v2286 = vand.u32 %v2285, 4294901760
    %2287 = vmatpush1.msra.mxu0 %v2286
    %2288 = vmatprep.subr.mxu0 0.0
    %v2289 = vand.u32 %v1106, 4294901760
    %v2290 = vsub.f32 %v1106, %v2289
    %v2291 = vand.u32 %v2290, 4294901760
    %2292 = vmatpush1.msra.mxu0 %v2291
    %2293 = vmatprep.subr.mxu0 0.0
    %v2294 = vand.u32 %v1105, 4294901760
    %v2295 = vsub.f32 %v1105, %v2294
    %v2296 = vand.u32 %v2295, 4294901760
    %2297 = vmatpush1.msra.mxu0 %v2296
    %2298 = vmatprep.subr.mxu0 0.0
    %v2299 = vand.u32 %v1104, 4294901760
    %v2300 = vsub.f32 %v1104, %v2299
    %v2301 = vand.u32 %v2300, 4294901760
    %2302 = vmatpush1.msra.mxu0 %v2301
    %2303 = vmatprep.subr.mxu0 0.0
    %v2304 = vand.u32 %v1103, 4294901760
    %v2305 = vsub.f32 %v1103, %v2304
    %v2306 = vand.u32 %v2305, 4294901760
    %2307 = vmatpush1.msra.mxu0 %v2306
    %2308 = vmatprep.subr.mxu0 0.0
    %v2309 = vand.u32 %v1102, 4294901760
    %v2310 = vsub.f32 %v1102, %v2309
    %v2311 = vand.u32 %v2310, 4294901760
    %2312 = vmatpush1.msra.mxu0 %v2311
    %2313 = vmatprep.subr.mxu0 0.0
    %v2314 = vand.u32 %v1101, 4294901760
    %v2315 = vsub.f32 %v1101, %v2314
    %v2316 = vand.u32 %v2315, 4294901760
    %2317 = vmatpush1.msra.mxu0 %v2316
    %2318 = vmatprep.subr.mxu0 0.0
    %v2319 = vand.u32 %v1100, 4294901760
    %v2320 = vsub.f32 %v1100, %v2319
    %v2321 = vand.u32 %v2320, 4294901760
    %2322 = vmatpush1.msra.mxu0 %v2321
    %2323 = vmatprep.subr.mxu0 0.0
    %v2324 = vand.u32 %v1099, 4294901760
    %v2325 = vsub.f32 %v1099, %v2324
    %v2326 = vand.u32 %v2325, 4294901760
    %2327 = vmatpush1.msra.mxu0 %v2326
    %2328 = vmatprep.subr.mxu0 0.0
    %v2329 = vand.u32 %v1098, 4294901760
    %v2330 = vsub.f32 %v1098, %v2329
    %v2331 = vand.u32 %v2330, 4294901760
    %2332 = vmatpush1.msra.mxu0 %v2331
    %2333 = vmatprep.subr.mxu0 0.0
    %v2334 = vand.u32 %v1097, 4294901760
    %v2335 = vsub.f32 %v1097, %v2334
    %v2336 = vand.u32 %v2335, 4294901760
    %2337 = vmatpush1.msra.mxu0 %v2336
    %2338 = vmatprep.subr.mxu0 0.0
    %v2339 = vand.u32 %v1096, 4294901760
    %v2340 = vsub.f32 %v1096, %v2339
    %v2341 = vand.u32 %v2340, 4294901760
    %2342 = vmatpush1.msra.mxu0 %v2341
    %2343 = vmatprep.subr.mxu0 0.0
    %v2344 = vand.u32 %v1095, 4294901760
    %v2345 = vsub.f32 %v1095, %v2344
    %v2346 = vand.u32 %v2345, 4294901760
    %2347 = vmatpush1.msra.mxu0 %v2346
    %2348 = vmatprep.subr.mxu0 0.0
    %v2349 = vand.u32 %v1094, 4294901760
    %v2350 = vsub.f32 %v1094, %v2349
    %v2351 = vand.u32 %v2350, 4294901760
    %2352 = vmatpush1.msra.mxu0 %v2351
    %2353 = vmatprep.subr.mxu0 0.0
    %v2354 = vand.u32 %v1093, 4294901760
    %v2355 = vsub.f32 %v1093, %v2354
    %v2356 = vand.u32 %v2355, 4294901760
    %2357 = vmatpush1.msra.mxu0 %v2356
    %2358 = vmatprep.subr.mxu0 0.0
    %v2359 = vand.u32 %v1092, 4294901760
    %v2360 = vsub.f32 %v1092, %v2359
    %v2361 = vand.u32 %v2360, 4294901760
    %2362 = vmatpush1.msra.mxu0 %v2361
    %2363 = vmatprep.subr.mxu0 0.0
    %v2364 = vand.u32 %v1123, 4294901760
    %v2365 = vsub.f32 %v1123, %v2364
    %v2366 = vand.u32 %v2365, 4294901760
    %2367 = vmatpush2.msra.mxu0 %v2366
    %2368 = vmatprep.subr.mxu0 0.0
    %v2369 = vand.u32 %v1122, 4294901760
    %v2370 = vsub.f32 %v1122, %v2369
    %v2371 = vand.u32 %v2370, 4294901760
    %2372 = vmatpush2.msra.mxu0 %v2371
    %2373 = vmatprep.subr.mxu0 0.0
    %v2374 = vand.u32 %v1121, 4294901760
    %v2375 = vsub.f32 %v1121, %v2374
    %v2376 = vand.u32 %v2375, 4294901760
    %2377 = vmatpush2.msra.mxu0 %v2376
    %2378 = vmatprep.subr.mxu0 0.0
    %v2379 = vand.u32 %v1120, 4294901760
    %v2380 = vsub.f32 %v1120, %v2379
    %v2381 = vand.u32 %v2380, 4294901760
    %2382 = vmatpush2.msra.mxu0 %v2381
    %2383 = vmatprep.subr.mxu0 0.0
    %v2384 = vand.u32 %v1119, 4294901760
    %v2385 = vsub.f32 %v1119, %v2384
    %v2386 = vand.u32 %v2385, 4294901760
    %2387 = vmatpush2.msra.mxu0 %v2386
    %2388 = vmatprep.subr.mxu0 0.0
    %v2389 = vand.u32 %v1118, 4294901760
    %v2390 = vsub.f32 %v1118, %v2389
    %v2391 = vand.u32 %v2390, 4294901760
    %2392 = vmatpush2.msra.mxu0 %v2391
    %2393 = vmatprep.subr.mxu0 0.0
    %v2394 = vand.u32 %v1117, 4294901760
    %v2395 = vsub.f32 %v1117, %v2394
    %v2396 = vand.u32 %v2395, 4294901760
    %2397 = vmatpush2.msra.mxu0 %v2396
    %2398 = vmatprep.subr.mxu0 0.0
    %v2399 = vand.u32 %v1116, 4294901760
    %v2400 = vsub.f32 %v1116, %v2399
    %v2401 = vand.u32 %v2400, 4294901760
    %2402 = vmatpush2.msra.mxu0 %v2401
    %2403 = vmatprep.subr.mxu0 0.0
    %v2404 = vand.u32 %v1115, 4294901760
    %v2405 = vsub.f32 %v1115, %v2404
    %v2406 = vand.u32 %v2405, 4294901760
    %2407 = vmatpush2.msra.mxu0 %v2406
    %2408 = vmatprep.subr.mxu0 0.0
    %v2409 = vand.u32 %v1114, 4294901760
    %v2410 = vsub.f32 %v1114, %v2409
    %v2411 = vand.u32 %v2410, 4294901760
    %2412 = vmatpush2.msra.mxu0 %v2411
    %2413 = vmatprep.subr.mxu0 0.0
    %v2414 = vand.u32 %v1113, 4294901760
    %v2415 = vsub.f32 %v1113, %v2414
    %v2416 = vand.u32 %v2415, 4294901760
    %2417 = vmatpush2.msra.mxu0 %v2416
    %2418 = vmatprep.subr.mxu0 0.0
    %v2419 = vand.u32 %v1112, 4294901760
    %v2420 = vsub.f32 %v1112, %v2419
    %v2421 = vand.u32 %v2420, 4294901760
    %2422 = vmatpush2.msra.mxu0 %v2421
    %2423 = vmatprep.subr.mxu0 0.0
    %v2424 = vand.u32 %v1111, 4294901760
    %v2425 = vsub.f32 %v1111, %v2424
    %v2426 = vand.u32 %v2425, 4294901760
    %2427 = vmatpush2.msra.mxu0 %v2426
    %2428 = vmatprep.subr.mxu0 0.0
    %v2429 = vand.u32 %v1110, 4294901760
    %v2430 = vsub.f32 %v1110, %v2429
    %v2431 = vand.u32 %v2430, 4294901760
    %2432 = vmatpush2.msra.mxu0 %v2431
    %2433 = vmatprep.subr.mxu0 0.0
    %v2434 = vand.u32 %v1109, 4294901760
    %v2435 = vsub.f32 %v1109, %v2434
    %v2436 = vand.u32 %v2435, 4294901760
    %2437 = vmatpush2.msra.mxu0 %v2436
    %2438 = vmatprep.subr.mxu0 0.0
    %v2439 = vand.u32 %v1108, 4294901760
    %v2440 = vsub.f32 %v1108, %v2439
    %v2441 = vand.u32 %v2440, 4294901760
    %2442 = vmatpush2.msra.mxu0 %v2441
    %v2443 = vand.u32 %v1682, 4294901760
    %2444 = vmatprep.mubr.f32.mxu0 %v2443
    %v2445 = vand.u32 %v1680, 4294901760
    %2446 = vmatmul.mubr.f32.gmra.mxu0 %v2445
    %v2447 = vpop.f32.mrf.mxu0
    %v2448 = vadd.f32 %v2280, %v2447
    %v2449 = vpop.f32.mrf.mxu0
    %2450 = vdwg.mxu0
    %2451 = vmatprep.subr.mxu0 0.0
    %v2452 = vand.u32 %v1107, 4294901760
    %2453 = vmatpush1.msra.mxu0 %v2452
    %2454 = vmatprep.subr.mxu0 0.0
    %v2455 = vand.u32 %v1106, 4294901760
    %2456 = vmatpush1.msra.mxu0 %v2455
    %2457 = vmatprep.subr.mxu0 0.0
    %v2458 = vand.u32 %v1105, 4294901760
    %2459 = vmatpush1.msra.mxu0 %v2458
    %2460 = vmatprep.subr.mxu0 0.0
    %v2461 = vand.u32 %v1104, 4294901760
    %2462 = vmatpush1.msra.mxu0 %v2461
    %2463 = vmatprep.subr.mxu0 0.0
    %v2464 = vand.u32 %v1103, 4294901760
    %2465 = vmatpush1.msra.mxu0 %v2464
    %2466 = vmatprep.subr.mxu0 0.0
    %v2467 = vand.u32 %v1102, 4294901760
    %2468 = vmatpush1.msra.mxu0 %v2467
    %2469 = vmatprep.subr.mxu0 0.0
    %v2470 = vand.u32 %v1101, 4294901760
    %2471 = vmatpush1.msra.mxu0 %v2470
    %2472 = vmatprep.subr.mxu0 0.0
    %v2473 = vand.u32 %v1100, 4294901760
    %2474 = vmatpush1.msra.mxu0 %v2473
    %2475 = vmatprep.subr.mxu0 0.0
    %v2476 = vand.u32 %v1099, 4294901760
    %2477 = vmatpush1.msra.mxu0 %v2476
    %2478 = vmatprep.subr.mxu0 0.0
    %v2479 = vand.u32 %v1098, 4294901760
    %2480 = vmatpush1.msra.mxu0 %v2479
    %2481 = vmatprep.subr.mxu0 0.0
    %v2482 = vand.u32 %v1097, 4294901760
    %2483 = vmatpush1.msra.mxu0 %v2482
    %2484 = vmatprep.subr.mxu0 0.0
    %v2485 = vand.u32 %v1096, 4294901760
    %2486 = vmatpush1.msra.mxu0 %v2485
    %2487 = vmatprep.subr.mxu0 0.0
    %v2488 = vand.u32 %v1095, 4294901760
    %2489 = vmatpush1.msra.mxu0 %v2488
    %2490 = vmatprep.subr.mxu0 0.0
    %v2491 = vand.u32 %v1094, 4294901760
    %2492 = vmatpush1.msra.mxu0 %v2491
    %2493 = vmatprep.subr.mxu0 0.0
    %v2494 = vand.u32 %v1093, 4294901760
    %2495 = vmatpush1.msra.mxu0 %v2494
    %2496 = vmatprep.subr.mxu0 0.0
    %v2497 = vand.u32 %v1092, 4294901760
    %2498 = vmatpush1.msra.mxu0 %v2497
    %2499 = vmatprep.subr.mxu0 0.0
    %v2500 = vand.u32 %v1123, 4294901760
    %2501 = vmatpush2.msra.mxu0 %v2500
    %2502 = vmatprep.subr.mxu0 0.0
    %v2503 = vand.u32 %v1122, 4294901760
    %2504 = vmatpush2.msra.mxu0 %v2503
    %2505 = vmatprep.subr.mxu0 0.0
    %v2506 = vand.u32 %v1121, 4294901760
    %2507 = vmatpush2.msra.mxu0 %v2506
    %2508 = vmatprep.subr.mxu0 0.0
    %v2509 = vand.u32 %v1120, 4294901760
    %2510 = vmatpush2.msra.mxu0 %v2509
    %2511 = vmatprep.subr.mxu0 0.0
    %v2512 = vand.u32 %v1119, 4294901760
    %2513 = vmatpush2.msra.mxu0 %v2512
    %2514 = vmatprep.subr.mxu0 0.0
    %v2515 = vand.u32 %v1118, 4294901760
    %2516 = vmatpush2.msra.mxu0 %v2515
    %2517 = vmatprep.subr.mxu0 0.0
    %v2518 = vand.u32 %v1117, 4294901760
    %2519 = vmatpush2.msra.mxu0 %v2518
    %2520 = vmatprep.subr.mxu0 0.0
    %v2521 = vand.u32 %v1116, 4294901760
    %2522 = vmatpush2.msra.mxu0 %v2521
    %2523 = vmatprep.subr.mxu0 0.0
    %v2524 = vand.u32 %v1115, 4294901760
    %2525 = vmatpush2.msra.mxu0 %v2524
    %2526 = vmatprep.subr.mxu0 0.0
    %v2527 = vand.u32 %v1114, 4294901760
    %2528 = vmatpush2.msra.mxu0 %v2527
    %2529 = vmatprep.subr.mxu0 0.0
    %v2530 = vand.u32 %v1113, 4294901760
    %2531 = vmatpush2.msra.mxu0 %v2530
    %2532 = vmatprep.subr.mxu0 0.0
    %v2533 = vand.u32 %v1112, 4294901760
    %2534 = vmatpush2.msra.mxu0 %v2533
    %2535 = vmatprep.subr.mxu0 0.0
    %v2536 = vand.u32 %v1111, 4294901760
    %2537 = vmatpush2.msra.mxu0 %v2536
    %2538 = vmatprep.subr.mxu0 0.0
    %v2539 = vand.u32 %v1110, 4294901760
    %2540 = vmatpush2.msra.mxu0 %v2539
    %2541 = vmatprep.subr.mxu0 0.0
    %v2542 = vand.u32 %v1109, 4294901760
    %2543 = vmatpush2.msra.mxu0 %v2542
    %2544 = vmatprep.subr.mxu0 0.0
    %v2545 = vand.u32 %v1108, 4294901760
    %2546 = vmatpush2.msra.mxu0 %v2545
    %v2547 = vand.u32 %v1682, 4294901760
    %2548 = vmatprep.mubr.f32.mxu0 %v2547
    %v2549 = vand.u32 %v1680, 4294901760
    %2550 = vmatmul.mubr.f32.gmra.mxu0 %v2549
    %v2551 = vpop.f32.mrf.mxu0
    %v2552 = vadd.f32 %v2448, %v2551
    %v2553 = vpop.f32.mrf.mxu0
    %2554 = vdwg.mxu0
    %2555 = vmatprep.subr.mxu0 0.0
    %v2556 = vand.u32 %v1139, 4294901760
    %2557 = vmatpush1.msra.mxu0 %v2556
    %2558 = vmatprep.subr.mxu0 0.0
    %v2559 = vand.u32 %v1138, 4294901760
    %2560 = vmatpush1.msra.mxu0 %v2559
    %2561 = vmatprep.subr.mxu0 0.0
    %v2562 = vand.u32 %v1137, 4294901760
    %2563 = vmatpush1.msra.mxu0 %v2562
    %2564 = vmatprep.subr.mxu0 0.0
    %v2565 = vand.u32 %v1136, 4294901760
    %2566 = vmatpush1.msra.mxu0 %v2565
    %2567 = vmatprep.subr.mxu0 0.0
    %v2568 = vand.u32 %v1135, 4294901760
    %2569 = vmatpush1.msra.mxu0 %v2568
    %2570 = vmatprep.subr.mxu0 0.0
    %v2571 = vand.u32 %v1134, 4294901760
    %2572 = vmatpush1.msra.mxu0 %v2571
    %2573 = vmatprep.subr.mxu0 0.0
    %v2574 = vand.u32 %v1133, 4294901760
    %2575 = vmatpush1.msra.mxu0 %v2574
    %2576 = vmatprep.subr.mxu0 0.0
    %v2577 = vand.u32 %v1132, 4294901760
    %2578 = vmatpush1.msra.mxu0 %v2577
    %2579 = vmatprep.subr.mxu0 0.0
    %v2580 = vand.u32 %v1131, 4294901760
    %2581 = vmatpush1.msra.mxu0 %v2580
    %2582 = vmatprep.subr.mxu0 0.0
    %v2583 = vand.u32 %v1130, 4294901760
    %2584 = vmatpush1.msra.mxu0 %v2583
    %2585 = vmatprep.subr.mxu0 0.0
    %v2586 = vand.u32 %v1129, 4294901760
    %2587 = vmatpush1.msra.mxu0 %v2586
    %2588 = vmatprep.subr.mxu0 0.0
    %v2589 = vand.u32 %v1128, 4294901760
    %2590 = vmatpush1.msra.mxu0 %v2589
    %2591 = vmatprep.subr.mxu0 0.0
    %v2592 = vand.u32 %v1127, 4294901760
    %2593 = vmatpush1.msra.mxu0 %v2592
    %2594 = vmatprep.subr.mxu0 0.0
    %v2595 = vand.u32 %v1126, 4294901760
    %2596 = vmatpush1.msra.mxu0 %v2595
    %2597 = vmatprep.subr.mxu0 0.0
    %v2598 = vand.u32 %v1125, 4294901760
    %2599 = vmatpush1.msra.mxu0 %v2598
    %2600 = vmatprep.subr.mxu0 0.0
    %v2601 = vand.u32 %v1124, 4294901760
    %2602 = vmatpush1.msra.mxu0 %v2601
    %2603 = vmatprep.subr.mxu0 0.0
    %v2604 = vand.u32 %v1155, 4294901760
    %2605 = vmatpush2.msra.mxu0 %v2604
    %2606 = vmatprep.subr.mxu0 0.0
    %v2607 = vand.u32 %v1154, 4294901760
    %2608 = vmatpush2.msra.mxu0 %v2607
    %2609 = vmatprep.subr.mxu0 0.0
    %v2610 = vand.u32 %v1153, 4294901760
    %2611 = vmatpush2.msra.mxu0 %v2610
    %2612 = vmatprep.subr.mxu0 0.0
    %v2613 = vand.u32 %v1152, 4294901760
    %2614 = vmatpush2.msra.mxu0 %v2613
    %2615 = vmatprep.subr.mxu0 0.0
    %v2616 = vand.u32 %v1151, 4294901760
    %2617 = vmatpush2.msra.mxu0 %v2616
    %2618 = vmatprep.subr.mxu0 0.0
    %v2619 = vand.u32 %v1150, 4294901760
    %2620 = vmatpush2.msra.mxu0 %v2619
    %2621 = vmatprep.subr.mxu0 0.0
    %v2622 = vand.u32 %v1149, 4294901760
    %2623 = vmatpush2.msra.mxu0 %v2622
    %2624 = vmatprep.subr.mxu0 0.0
    %v2625 = vand.u32 %v1148, 4294901760
    %2626 = vmatpush2.msra.mxu0 %v2625
    %2627 = vmatprep.subr.mxu0 0.0
    %v2628 = vand.u32 %v1147, 4294901760
    %2629 = vmatpush2.msra.mxu0 %v2628
    %2630 = vmatprep.subr.mxu0 0.0
    %v2631 = vand.u32 %v1146, 4294901760
    %2632 = vmatpush2.msra.mxu0 %v2631
    %2633 = vmatprep.subr.mxu0 0.0
    %v2634 = vand.u32 %v1145, 4294901760
    %2635 = vmatpush2.msra.mxu0 %v2634
    %2636 = vmatprep.subr.mxu0 0.0
    %v2637 = vand.u32 %v1144, 4294901760
    %2638 = vmatpush2.msra.mxu0 %v2637
    %2639 = vmatprep.subr.mxu0 0.0
    %v2640 = vand.u32 %v1143, 4294901760
    %2641 = vmatpush2.msra.mxu0 %v2640
    %2642 = vmatprep.subr.mxu0 0.0
    %v2643 = vand.u32 %v1142, 4294901760
    %2644 = vmatpush2.msra.mxu0 %v2643
    %2645 = vmatprep.subr.mxu0 0.0
    %v2646 = vand.u32 %v1141, 4294901760
    %2647 = vmatpush2.msra.mxu0 %v2646
    %2648 = vmatprep.subr.mxu0 0.0
    %v2649 = vand.u32 %v1140, 4294901760
    %2650 = vmatpush2.msra.mxu0 %v2649
    %v2651 = vand.u32 %v1686, 4294901760
    %v2652 = vsub.f32 %v1686, %v2651
    %v2653 = vand.u32 %v2652, 4294901760
    %v2654 = vsub.f32 %v2652, %v2653
    %v2655 = vand.u32 %v2654, 4294901760
    %2656 = vmatprep.mubr.f32.mxu0 %v2655
    %v2657 = vand.u32 %v1684, 4294901760
    %v2658 = vsub.f32 %v1684, %v2657
    %v2659 = vand.u32 %v2658, 4294901760
    %v2660 = vsub.f32 %v2658, %v2659
    %v2661 = vand.u32 %v2660, 4294901760
    %2662 = vmatmul.mubr.f32.gmra.mxu0 %v2661
    %v2663 = vpop.f32.mrf.mxu0
    %v2664 = vadd.f32 %v2552, %v2663
    %v2665 = vpop.f32.mrf.mxu0
    %2666 = vdwg.mxu0
    %2667 = vmatprep.subr.mxu0 0.0
    %v2668 = vand.u32 %v1139, 4294901760
    %v2669 = vsub.f32 %v1139, %v2668
    %v2670 = vand.u32 %v2669, 4294901760
    %v2671 = vsub.f32 %v2669, %v2670
    %v2672 = vand.u32 %v2671, 4294901760
    %2673 = vmatpush1.msra.mxu0 %v2672
    %2674 = vmatprep.subr.mxu0 0.0
    %v2675 = vand.u32 %v1138, 4294901760
    %v2676 = vsub.f32 %v1138, %v2675
    %v2677 = vand.u32 %v2676, 4294901760
    %v2678 = vsub.f32 %v2676, %v2677
    %v2679 = vand.u32 %v2678, 4294901760
    %2680 = vmatpush1.msra.mxu0 %v2679
    %2681 = vmatprep.subr.mxu0 0.0
    %v2682 = vand.u32 %v1137, 4294901760
    %v2683 = vsub.f32 %v1137, %v2682
    %v2684 = vand.u32 %v2683, 4294901760
    %v2685 = vsub.f32 %v2683, %v2684
    %v2686 = vand.u32 %v2685, 4294901760
    %2687 = vmatpush1.msra.mxu0 %v2686
    %2688 = vmatprep.subr.mxu0 0.0
    %v2689 = vand.u32 %v1136, 4294901760
    %v2690 = vsub.f32 %v1136, %v2689
    %v2691 = vand.u32 %v2690, 4294901760
    %v2692 = vsub.f32 %v2690, %v2691
    %v2693 = vand.u32 %v2692, 4294901760
    %2694 = vmatpush1.msra.mxu0 %v2693
    %2695 = vmatprep.subr.mxu0 0.0
    %v2696 = vand.u32 %v1135, 4294901760
    %v2697 = vsub.f32 %v1135, %v2696
    %v2698 = vand.u32 %v2697, 4294901760
    %v2699 = vsub.f32 %v2697, %v2698
    %v2700 = vand.u32 %v2699, 4294901760
    %2701 = vmatpush1.msra.mxu0 %v2700
    %2702 = vmatprep.subr.mxu0 0.0
    %v2703 = vand.u32 %v1134, 4294901760
    %v2704 = vsub.f32 %v1134, %v2703
    %v2705 = vand.u32 %v2704, 4294901760
    %v2706 = vsub.f32 %v2704, %v2705
    %v2707 = vand.u32 %v2706, 4294901760
    %2708 = vmatpush1.msra.mxu0 %v2707
    %2709 = vmatprep.subr.mxu0 0.0
    %v2710 = vand.u32 %v1133, 4294901760
    %v2711 = vsub.f32 %v1133, %v2710
    %v2712 = vand.u32 %v2711, 4294901760
    %v2713 = vsub.f32 %v2711, %v2712
    %v2714 = vand.u32 %v2713, 4294901760
    %2715 = vmatpush1.msra.mxu0 %v2714
    %2716 = vmatprep.subr.mxu0 0.0
    %v2717 = vand.u32 %v1132, 4294901760
    %v2718 = vsub.f32 %v1132, %v2717
    %v2719 = vand.u32 %v2718, 4294901760
    %v2720 = vsub.f32 %v2718, %v2719
    %v2721 = vand.u32 %v2720, 4294901760
    %2722 = vmatpush1.msra.mxu0 %v2721
    %2723 = vmatprep.subr.mxu0 0.0
    %v2724 = vand.u32 %v1131, 4294901760
    %v2725 = vsub.f32 %v1131, %v2724
    %v2726 = vand.u32 %v2725, 4294901760
    %v2727 = vsub.f32 %v2725, %v2726
    %v2728 = vand.u32 %v2727, 4294901760
    %2729 = vmatpush1.msra.mxu0 %v2728
    %2730 = vmatprep.subr.mxu0 0.0
    %v2731 = vand.u32 %v1130, 4294901760
    %v2732 = vsub.f32 %v1130, %v2731
    %v2733 = vand.u32 %v2732, 4294901760
    %v2734 = vsub.f32 %v2732, %v2733
    %v2735 = vand.u32 %v2734, 4294901760
    %2736 = vmatpush1.msra.mxu0 %v2735
    %2737 = vmatprep.subr.mxu0 0.0
    %v2738 = vand.u32 %v1129, 4294901760
    %v2739 = vsub.f32 %v1129, %v2738
    %v2740 = vand.u32 %v2739, 4294901760
    %v2741 = vsub.f32 %v2739, %v2740
    %v2742 = vand.u32 %v2741, 4294901760
    %2743 = vmatpush1.msra.mxu0 %v2742
    %2744 = vmatprep.subr.mxu0 0.0
    %v2745 = vand.u32 %v1128, 4294901760
    %v2746 = vsub.f32 %v1128, %v2745
    %v2747 = vand.u32 %v2746, 4294901760
    %v2748 = vsub.f32 %v2746, %v2747
    %v2749 = vand.u32 %v2748, 4294901760
    %2750 = vmatpush1.msra.mxu0 %v2749
    %2751 = vmatprep.subr.mxu0 0.0
    %v2752 = vand.u32 %v1127, 4294901760
    %v2753 = vsub.f32 %v1127, %v2752
    %v2754 = vand.u32 %v2753, 4294901760
    %v2755 = vsub.f32 %v2753, %v2754
    %v2756 = vand.u32 %v2755, 4294901760
    %2757 = vmatpush1.msra.mxu0 %v2756
    %2758 = vmatprep.subr.mxu0 0.0
    %v2759 = vand.u32 %v1126, 4294901760
    %v2760 = vsub.f32 %v1126, %v2759
    %v2761 = vand.u32 %v2760, 4294901760
    %v2762 = vsub.f32 %v2760, %v2761
    %v2763 = vand.u32 %v2762, 4294901760
    %2764 = vmatpush1.msra.mxu0 %v2763
    %2765 = vmatprep.subr.mxu0 0.0
    %v2766 = vand.u32 %v1125, 4294901760
    %v2767 = vsub.f32 %v1125, %v2766
    %v2768 = vand.u32 %v2767, 4294901760
    %v2769 = vsub.f32 %v2767, %v2768
    %v2770 = vand.u32 %v2769, 4294901760
    %2771 = vmatpush1.msra.mxu0 %v2770
    %2772 = vmatprep.subr.mxu0 0.0
    %v2773 = vand.u32 %v1124, 4294901760
    %v2774 = vsub.f32 %v1124, %v2773
    %v2775 = vand.u32 %v2774, 4294901760
    %v2776 = vsub.f32 %v2774, %v2775
    %v2777 = vand.u32 %v2776, 4294901760
    %2778 = vmatpush1.msra.mxu0 %v2777
    %2779 = vmatprep.subr.mxu0 0.0
    %v2780 = vand.u32 %v1155, 4294901760
    %v2781 = vsub.f32 %v1155, %v2780
    %v2782 = vand.u32 %v2781, 4294901760
    %v2783 = vsub.f32 %v2781, %v2782
    %v2784 = vand.u32 %v2783, 4294901760
    %2785 = vmatpush2.msra.mxu0 %v2784
    %2786 = vmatprep.subr.mxu0 0.0
    %v2787 = vand.u32 %v1154, 4294901760
    %v2788 = vsub.f32 %v1154, %v2787
    %v2789 = vand.u32 %v2788, 4294901760
    %v2790 = vsub.f32 %v2788, %v2789
    %v2791 = vand.u32 %v2790, 4294901760
    %2792 = vmatpush2.msra.mxu0 %v2791
    %2793 = vmatprep.subr.mxu0 0.0
    %v2794 = vand.u32 %v1153, 4294901760
    %v2795 = vsub.f32 %v1153, %v2794
    %v2796 = vand.u32 %v2795, 4294901760
    %v2797 = vsub.f32 %v2795, %v2796
    %v2798 = vand.u32 %v2797, 4294901760
    %2799 = vmatpush2.msra.mxu0 %v2798
    %2800 = vmatprep.subr.mxu0 0.0
    %v2801 = vand.u32 %v1152, 4294901760
    %v2802 = vsub.f32 %v1152, %v2801
    %v2803 = vand.u32 %v2802, 4294901760
    %v2804 = vsub.f32 %v2802, %v2803
    %v2805 = vand.u32 %v2804, 4294901760
    %2806 = vmatpush2.msra.mxu0 %v2805
    %2807 = vmatprep.subr.mxu0 0.0
    %v2808 = vand.u32 %v1151, 4294901760
    %v2809 = vsub.f32 %v1151, %v2808
    %v2810 = vand.u32 %v2809, 4294901760
    %v2811 = vsub.f32 %v2809, %v2810
    %v2812 = vand.u32 %v2811, 4294901760
    %2813 = vmatpush2.msra.mxu0 %v2812
    %2814 = vmatprep.subr.mxu0 0.0
    %v2815 = vand.u32 %v1150, 4294901760
    %v2816 = vsub.f32 %v1150, %v2815
    %v2817 = vand.u32 %v2816, 4294901760
    %v2818 = vsub.f32 %v2816, %v2817
    %v2819 = vand.u32 %v2818, 4294901760
    %2820 = vmatpush2.msra.mxu0 %v2819
    %2821 = vmatprep.subr.mxu0 0.0
    %v2822 = vand.u32 %v1149, 4294901760
    %v2823 = vsub.f32 %v1149, %v2822
    %v2824 = vand.u32 %v2823, 4294901760
    %v2825 = vsub.f32 %v2823, %v2824
    %v2826 = vand.u32 %v2825, 4294901760
    %2827 = vmatpush2.msra.mxu0 %v2826
    %2828 = vmatprep.subr.mxu0 0.0
    %v2829 = vand.u32 %v1148, 4294901760
    %v2830 = vsub.f32 %v1148, %v2829
    %v2831 = vand.u32 %v2830, 4294901760
    %v2832 = vsub.f32 %v2830, %v2831
    %v2833 = vand.u32 %v2832, 4294901760
    %2834 = vmatpush2.msra.mxu0 %v2833
    %2835 = vmatprep.subr.mxu0 0.0
    %v2836 = vand.u32 %v1147, 4294901760
    %v2837 = vsub.f32 %v1147, %v2836
    %v2838 = vand.u32 %v2837, 4294901760
    %v2839 = vsub.f32 %v2837, %v2838
    %v2840 = vand.u32 %v2839, 4294901760
    %2841 = vmatpush2.msra.mxu0 %v2840
    %2842 = vmatprep.subr.mxu0 0.0
    %v2843 = vand.u32 %v1146, 4294901760
    %v2844 = vsub.f32 %v1146, %v2843
    %v2845 = vand.u32 %v2844, 4294901760
    %v2846 = vsub.f32 %v2844, %v2845
    %v2847 = vand.u32 %v2846, 4294901760
    %2848 = vmatpush2.msra.mxu0 %v2847
    %2849 = vmatprep.subr.mxu0 0.0
    %v2850 = vand.u32 %v1145, 4294901760
    %v2851 = vsub.f32 %v1145, %v2850
    %v2852 = vand.u32 %v2851, 4294901760
    %v2853 = vsub.f32 %v2851, %v2852
    %v2854 = vand.u32 %v2853, 4294901760
    %2855 = vmatpush2.msra.mxu0 %v2854
    %2856 = vmatprep.subr.mxu0 0.0
    %v2857 = vand.u32 %v1144, 4294901760
    %v2858 = vsub.f32 %v1144, %v2857
    %v2859 = vand.u32 %v2858, 4294901760
    %v2860 = vsub.f32 %v2858, %v2859
    %v2861 = vand.u32 %v2860, 4294901760
    %2862 = vmatpush2.msra.mxu0 %v2861
    %2863 = vmatprep.subr.mxu0 0.0
    %v2864 = vand.u32 %v1143, 4294901760
    %v2865 = vsub.f32 %v1143, %v2864
    %v2866 = vand.u32 %v2865, 4294901760
    %v2867 = vsub.f32 %v2865, %v2866
    %v2868 = vand.u32 %v2867, 4294901760
    %2869 = vmatpush2.msra.mxu0 %v2868
    %2870 = vmatprep.subr.mxu0 0.0
    %v2871 = vand.u32 %v1142, 4294901760
    %v2872 = vsub.f32 %v1142, %v2871
    %v2873 = vand.u32 %v2872, 4294901760
    %v2874 = vsub.f32 %v2872, %v2873
    %v2875 = vand.u32 %v2874, 4294901760
    %2876 = vmatpush2.msra.mxu0 %v2875
    %2877 = vmatprep.subr.mxu0 0.0
    %v2878 = vand.u32 %v1141, 4294901760
    %v2879 = vsub.f32 %v1141, %v2878
    %v2880 = vand.u32 %v2879, 4294901760
    %v2881 = vsub.f32 %v2879, %v2880
    %v2882 = vand.u32 %v2881, 4294901760
    %2883 = vmatpush2.msra.mxu0 %v2882
    %2884 = vmatprep.subr.mxu0 0.0
    %v2885 = vand.u32 %v1140, 4294901760
    %v2886 = vsub.f32 %v1140, %v2885
    %v2887 = vand.u32 %v2886, 4294901760
    %v2888 = vsub.f32 %v2886, %v2887
    %v2889 = vand.u32 %v2888, 4294901760
    %2890 = vmatpush2.msra.mxu0 %v2889
    %v2891 = vand.u32 %v1686, 4294901760
    %2892 = vmatprep.mubr.f32.mxu0 %v2891
    %v2893 = vand.u32 %v1684, 4294901760
    %2894 = vmatmul.mubr.f32.gmra.mxu0 %v2893
    %v2895 = vpop.f32.mrf.mxu0
    %v2896 = vadd.f32 %v2664, %v2895
    %v2897 = vpop.f32.mrf.mxu0
    %2898 = vdwg.mxu0
    %2899 = vmatprep.subr.mxu0 0.0
    %v2900 = vand.u32 %v1139, 4294901760
    %v2901 = vsub.f32 %v1139, %v2900
    %2902 = vmatpush1.msra.mxu0 %v2901
    %2903 = vmatprep.subr.mxu0 0.0
    %v2904 = vand.u32 %v1138, 4294901760
    %v2905 = vsub.f32 %v1138, %v2904
    %2906 = vmatpush1.msra.mxu0 %v2905
    %2907 = vmatprep.subr.mxu0 0.0
    %v2908 = vand.u32 %v1137, 4294901760
    %v2909 = vsub.f32 %v1137, %v2908
    %2910 = vmatpush1.msra.mxu0 %v2909
    %2911 = vmatprep.subr.mxu0 0.0
    %v2912 = vand.u32 %v1136, 4294901760
    %v2913 = vsub.f32 %v1136, %v2912
    %2914 = vmatpush1.msra.mxu0 %v2913
    %2915 = vmatprep.subr.mxu0 0.0
    %v2916 = vand.u32 %v1135, 4294901760
    %v2917 = vsub.f32 %v1135, %v2916
    %2918 = vmatpush1.msra.mxu0 %v2917
    %2919 = vmatprep.subr.mxu0 0.0
    %v2920 = vand.u32 %v1134, 4294901760
    %v2921 = vsub.f32 %v1134, %v2920
    %2922 = vmatpush1.msra.mxu0 %v2921
    %2923 = vmatprep.subr.mxu0 0.0
    %v2924 = vand.u32 %v1133, 4294901760
    %v2925 = vsub.f32 %v1133, %v2924
    %2926 = vmatpush1.msra.mxu0 %v2925
    %2927 = vmatprep.subr.mxu0 0.0
    %v2928 = vand.u32 %v1132, 4294901760
    %v2929 = vsub.f32 %v1132, %v2928
    %2930 = vmatpush1.msra.mxu0 %v2929
    %2931 = vmatprep.subr.mxu0 0.0
    %v2932 = vand.u32 %v1131, 4294901760
    %v2933 = vsub.f32 %v1131, %v2932
    %2934 = vmatpush1.msra.mxu0 %v2933
    %2935 = vmatprep.subr.mxu0 0.0
    %v2936 = vand.u32 %v1130, 4294901760
    %v2937 = vsub.f32 %v1130, %v2936
    %2938 = vmatpush1.msra.mxu0 %v2937
    %2939 = vmatprep.subr.mxu0 0.0
    %v2940 = vand.u32 %v1129, 4294901760
    %v2941 = vsub.f32 %v1129, %v2940
    %2942 = vmatpush1.msra.mxu0 %v2941
    %2943 = vmatprep.subr.mxu0 0.0
    %v2944 = vand.u32 %v1128, 4294901760
    %v2945 = vsub.f32 %v1128, %v2944
    %2946 = vmatpush1.msra.mxu0 %v2945
    %2947 = vmatprep.subr.mxu0 0.0
    %v2948 = vand.u32 %v1127, 4294901760
    %v2949 = vsub.f32 %v1127, %v2948
    %2950 = vmatpush1.msra.mxu0 %v2949
    %2951 = vmatprep.subr.mxu0 0.0
    %v2952 = vand.u32 %v1126, 4294901760
    %v2953 = vsub.f32 %v1126, %v2952
    %2954 = vmatpush1.msra.mxu0 %v2953
    %2955 = vmatprep.subr.mxu0 0.0
    %v2956 = vand.u32 %v1125, 4294901760
    %v2957 = vsub.f32 %v1125, %v2956
    %2958 = vmatpush1.msra.mxu0 %v2957
    %2959 = vmatprep.subr.mxu0 0.0
    %v2960 = vand.u32 %v1124, 4294901760
    %v2961 = vsub.f32 %v1124, %v2960
    %2962 = vmatpush1.msra.mxu0 %v2961
    %2963 = vmatprep.subr.mxu0 0.0
    %v2964 = vand.u32 %v1155, 4294901760
    %v2965 = vsub.f32 %v1155, %v2964
    %2966 = vmatpush2.msra.mxu0 %v2965
    %2967 = vmatprep.subr.mxu0 0.0
    %v2968 = vand.u32 %v1154, 4294901760
    %v2969 = vsub.f32 %v1154, %v2968
    %2970 = vmatpush2.msra.mxu0 %v2969
    %2971 = vmatprep.subr.mxu0 0.0
    %v2972 = vand.u32 %v1153, 4294901760
    %v2973 = vsub.f32 %v1153, %v2972
    %2974 = vmatpush2.msra.mxu0 %v2973
    %2975 = vmatprep.subr.mxu0 0.0
    %v2976 = vand.u32 %v1152, 4294901760
    %v2977 = vsub.f32 %v1152, %v2976
    %2978 = vmatpush2.msra.mxu0 %v2977
    %2979 = vmatprep.subr.mxu0 0.0
    %v2980 = vand.u32 %v1151, 4294901760
    %v2981 = vsub.f32 %v1151, %v2980
    %2982 = vmatpush2.msra.mxu0 %v2981
    %2983 = vmatprep.subr.mxu0 0.0
    %v2984 = vand.u32 %v1150, 4294901760
    %v2985 = vsub.f32 %v1150, %v2984
    %2986 = vmatpush2.msra.mxu0 %v2985
    %2987 = vmatprep.subr.mxu0 0.0
    %v2988 = vand.u32 %v1149, 4294901760
    %v2989 = vsub.f32 %v1149, %v2988
    %2990 = vmatpush2.msra.mxu0 %v2989
    %2991 = vmatprep.subr.mxu0 0.0
    %v2992 = vand.u32 %v1148, 4294901760
    %v2993 = vsub.f32 %v1148, %v2992
    %2994 = vmatpush2.msra.mxu0 %v2993
    %2995 = vmatprep.subr.mxu0 0.0
    %v2996 = vand.u32 %v1147, 4294901760
    %v2997 = vsub.f32 %v1147, %v2996
    %2998 = vmatpush2.msra.mxu0 %v2997
    %2999 = vmatprep.subr.mxu0 0.0
    %v3000 = vand.u32 %v1146, 4294901760
    %v3001 = vsub.f32 %v1146, %v3000
    %3002 = vmatpush2.msra.mxu0 %v3001
    %3003 = vmatprep.subr.mxu0 0.0
    %v3004 = vand.u32 %v1145, 4294901760
    %v3005 = vsub.f32 %v1145, %v3004
    %3006 = vmatpush2.msra.mxu0 %v3005
    %3007 = vmatprep.subr.mxu0 0.0
    %v3008 = vand.u32 %v1144, 4294901760
    %v3009 = vsub.f32 %v1144, %v3008
    %3010 = vmatpush2.msra.mxu0 %v3009
    %3011 = vmatprep.subr.mxu0 0.0
    %v3012 = vand.u32 %v1143, 4294901760
    %v3013 = vsub.f32 %v1143, %v3012
    %3014 = vmatpush2.msra.mxu0 %v3013
    %3015 = vmatprep.subr.mxu0 0.0
    %v3016 = vand.u32 %v1142, 4294901760
    %v3017 = vsub.f32 %v1142, %v3016
    %3018 = vmatpush2.msra.mxu0 %v3017
    %3019 = vmatprep.subr.mxu0 0.0
    %v3020 = vand.u32 %v1141, 4294901760
    %v3021 = vsub.f32 %v1141, %v3020
    %3022 = vmatpush2.msra.mxu0 %v3021
    %3023 = vmatprep.subr.mxu0 0.0
    %v3024 = vand.u32 %v1140, 4294901760
    %v3025 = vsub.f32 %v1140, %v3024
    %3026 = vmatpush2.msra.mxu0 %v3025
    %v3027 = vand.u32 %v1686, 4294901760
    %v3028 = vsub.f32 %v1686, %v3027
    %3029 = vmatprep.mubr.f32.mxu0 %v3028
    %v3030 = vand.u32 %v1684, 4294901760
    %v3031 = vsub.f32 %v1684, %v3030
    %3032 = vmatmul.mubr.f32.gmra.mxu0 %v3031
    %v3033 = vpop.f32.mrf.mxu0
    %v3034 = vadd.f32 %v2896, %v3033
    %v3035 = vpop.f32.mrf.mxu0
    %3036 = vdwg.mxu0
    %3037 = vmatprep.subr.mxu0 0.0
    %v3038 = vand.u32 %v1139, 4294901760
    %3039 = vmatpush1.msra.mxu0 %v3038
    %3040 = vmatprep.subr.mxu0 0.0
    %v3041 = vand.u32 %v1138, 4294901760
    %3042 = vmatpush1.msra.mxu0 %v3041
    %3043 = vmatprep.subr.mxu0 0.0
    %v3044 = vand.u32 %v1137, 4294901760
    %3045 = vmatpush1.msra.mxu0 %v3044
    %3046 = vmatprep.subr.mxu0 0.0
    %v3047 = vand.u32 %v1136, 4294901760
    %3048 = vmatpush1.msra.mxu0 %v3047
    %3049 = vmatprep.subr.mxu0 0.0
    %v3050 = vand.u32 %v1135, 4294901760
    %3051 = vmatpush1.msra.mxu0 %v3050
    %3052 = vmatprep.subr.mxu0 0.0
    %v3053 = vand.u32 %v1134, 4294901760
    %3054 = vmatpush1.msra.mxu0 %v3053
    %3055 = vmatprep.subr.mxu0 0.0
    %v3056 = vand.u32 %v1133, 4294901760
    %3057 = vmatpush1.msra.mxu0 %v3056
    %3058 = vmatprep.subr.mxu0 0.0
    %v3059 = vand.u32 %v1132, 4294901760
    %3060 = vmatpush1.msra.mxu0 %v3059
    %3061 = vmatprep.subr.mxu0 0.0
    %v3062 = vand.u32 %v1131, 4294901760
    %3063 = vmatpush1.msra.mxu0 %v3062
    %3064 = vmatprep.subr.mxu0 0.0
    %v3065 = vand.u32 %v1130, 4294901760
    %3066 = vmatpush1.msra.mxu0 %v3065
    %3067 = vmatprep.subr.mxu0 0.0
    %v3068 = vand.u32 %v1129, 4294901760
    %3069 = vmatpush1.msra.mxu0 %v3068
    %3070 = vmatprep.subr.mxu0 0.0
    %v3071 = vand.u32 %v1128, 4294901760
    %3072 = vmatpush1.msra.mxu0 %v3071
    %3073 = vmatprep.subr.mxu0 0.0
    %v3074 = vand.u32 %v1127, 4294901760
    %3075 = vmatpush1.msra.mxu0 %v3074
    %3076 = vmatprep.subr.mxu0 0.0
    %v3077 = vand.u32 %v1126, 4294901760
    %3078 = vmatpush1.msra.mxu0 %v3077
    %3079 = vmatprep.subr.mxu0 0.0
    %v3080 = vand.u32 %v1125, 4294901760
    %3081 = vmatpush1.msra.mxu0 %v3080
    %3082 = vmatprep.subr.mxu0 0.0
    %v3083 = vand.u32 %v1124, 4294901760
    %3084 = vmatpush1.msra.mxu0 %v3083
    %3085 = vmatprep.subr.mxu0 0.0
    %v3086 = vand.u32 %v1155, 4294901760
    %3087 = vmatpush2.msra.mxu0 %v3086
    %3088 = vmatprep.subr.mxu0 0.0
    %v3089 = vand.u32 %v1154, 4294901760
    %3090 = vmatpush2.msra.mxu0 %v3089
    %3091 = vmatprep.subr.mxu0 0.0
    %v3092 = vand.u32 %v1153, 4294901760
    %3093 = vmatpush2.msra.mxu0 %v3092
    %3094 = vmatprep.subr.mxu0 0.0
    %v3095 = vand.u32 %v1152, 4294901760
    %3096 = vmatpush2.msra.mxu0 %v3095
    %3097 = vmatprep.subr.mxu0 0.0
    %v3098 = vand.u32 %v1151, 4294901760
    %3099 = vmatpush2.msra.mxu0 %v3098
    %3100 = vmatprep.subr.mxu0 0.0
    %v3101 = vand.u32 %v1150, 4294901760
    %3102 = vmatpush2.msra.mxu0 %v3101
    %3103 = vmatprep.subr.mxu0 0.0
    %v3104 = vand.u32 %v1149, 4294901760
    %3105 = vmatpush2.msra.mxu0 %v3104
    %3106 = vmatprep.subr.mxu0 0.0
    %v3107 = vand.u32 %v1148, 4294901760
    %3108 = vmatpush2.msra.mxu0 %v3107
    %3109 = vmatprep.subr.mxu0 0.0
    %v3110 = vand.u32 %v1147, 4294901760
    %3111 = vmatpush2.msra.mxu0 %v3110
    %3112 = vmatprep.subr.mxu0 0.0
    %v3113 = vand.u32 %v1146, 4294901760
    %3114 = vmatpush2.msra.mxu0 %v3113
    %3115 = vmatprep.subr.mxu0 0.0
    %v3116 = vand.u32 %v1145, 4294901760
    %3117 = vmatpush2.msra.mxu0 %v3116
    %3118 = vmatprep.subr.mxu0 0.0
    %v3119 = vand.u32 %v1144, 4294901760
    %3120 = vmatpush2.msra.mxu0 %v3119
    %3121 = vmatprep.subr.mxu0 0.0
    %v3122 = vand.u32 %v1143, 4294901760
    %3123 = vmatpush2.msra.mxu0 %v3122
    %3124 = vmatprep.subr.mxu0 0.0
    %v3125 = vand.u32 %v1142, 4294901760
    %3126 = vmatpush2.msra.mxu0 %v3125
    %3127 = vmatprep.subr.mxu0 0.0
    %v3128 = vand.u32 %v1141, 4294901760
    %3129 = vmatpush2.msra.mxu0 %v3128
    %3130 = vmatprep.subr.mxu0 0.0
    %v3131 = vand.u32 %v1140, 4294901760
    %3132 = vmatpush2.msra.mxu0 %v3131
    %v3133 = vand.u32 %v1686, 4294901760
    %v3134 = vsub.f32 %v1686, %v3133
    %v3135 = vand.u32 %v3134, 4294901760
    %3136 = vmatprep.mubr.f32.mxu0 %v3135
    %v3137 = vand.u32 %v1684, 4294901760
    %v3138 = vsub.f32 %v1684, %v3137
    %v3139 = vand.u32 %v3138, 4294901760
    %3140 = vmatmul.mubr.f32.gmra.mxu0 %v3139
    %v3141 = vpop.f32.mrf.mxu0
    %v3142 = vadd.f32 %v3034, %v3141
    %v3143 = vpop.f32.mrf.mxu0
    %3144 = vdwg.mxu0
    %3145 = vmatprep.subr.mxu0 0.0
    %v3146 = vand.u32 %v1139, 4294901760
    %v3147 = vsub.f32 %v1139, %v3146
    %v3148 = vand.u32 %v3147, 4294901760
    %3149 = vmatpush1.msra.mxu0 %v3148
    %3150 = vmatprep.subr.mxu0 0.0
    %v3151 = vand.u32 %v1138, 4294901760
    %v3152 = vsub.f32 %v1138, %v3151
    %v3153 = vand.u32 %v3152, 4294901760
    %3154 = vmatpush1.msra.mxu0 %v3153
    %3155 = vmatprep.subr.mxu0 0.0
    %v3156 = vand.u32 %v1137, 4294901760
    %v3157 = vsub.f32 %v1137, %v3156
    %v3158 = vand.u32 %v3157, 4294901760
    %3159 = vmatpush1.msra.mxu0 %v3158
    %3160 = vmatprep.subr.mxu0 0.0
    %v3161 = vand.u32 %v1136, 4294901760
    %v3162 = vsub.f32 %v1136, %v3161
    %v3163 = vand.u32 %v3162, 4294901760
    %3164 = vmatpush1.msra.mxu0 %v3163
    %3165 = vmatprep.subr.mxu0 0.0
    %v3166 = vand.u32 %v1135, 4294901760
    %v3167 = vsub.f32 %v1135, %v3166
    %v3168 = vand.u32 %v3167, 4294901760
    %3169 = vmatpush1.msra.mxu0 %v3168
    %3170 = vmatprep.subr.mxu0 0.0
    %v3171 = vand.u32 %v1134, 4294901760
    %v3172 = vsub.f32 %v1134, %v3171
    %v3173 = vand.u32 %v3172, 4294901760
    %3174 = vmatpush1.msra.mxu0 %v3173
    %3175 = vmatprep.subr.mxu0 0.0
    %v3176 = vand.u32 %v1133, 4294901760
    %v3177 = vsub.f32 %v1133, %v3176
    %v3178 = vand.u32 %v3177, 4294901760
    %3179 = vmatpush1.msra.mxu0 %v3178
    %3180 = vmatprep.subr.mxu0 0.0
    %v3181 = vand.u32 %v1132, 4294901760
    %v3182 = vsub.f32 %v1132, %v3181
    %v3183 = vand.u32 %v3182, 4294901760
    %3184 = vmatpush1.msra.mxu0 %v3183
    %3185 = vmatprep.subr.mxu0 0.0
    %v3186 = vand.u32 %v1131, 4294901760
    %v3187 = vsub.f32 %v1131, %v3186
    %v3188 = vand.u32 %v3187, 4294901760
    %3189 = vmatpush1.msra.mxu0 %v3188
    %3190 = vmatprep.subr.mxu0 0.0
    %v3191 = vand.u32 %v1130, 4294901760
    %v3192 = vsub.f32 %v1130, %v3191
    %v3193 = vand.u32 %v3192, 4294901760
    %3194 = vmatpush1.msra.mxu0 %v3193
    %3195 = vmatprep.subr.mxu0 0.0
    %v3196 = vand.u32 %v1129, 4294901760
    %v3197 = vsub.f32 %v1129, %v3196
    %v3198 = vand.u32 %v3197, 4294901760
    %3199 = vmatpush1.msra.mxu0 %v3198
    %3200 = vmatprep.subr.mxu0 0.0
    %v3201 = vand.u32 %v1128, 4294901760
    %v3202 = vsub.f32 %v1128, %v3201
    %v3203 = vand.u32 %v3202, 4294901760
    %3204 = vmatpush1.msra.mxu0 %v3203
    %3205 = vmatprep.subr.mxu0 0.0
    %v3206 = vand.u32 %v1127, 4294901760
    %v3207 = vsub.f32 %v1127, %v3206
    %v3208 = vand.u32 %v3207, 4294901760
    %3209 = vmatpush1.msra.mxu0 %v3208
    %3210 = vmatprep.subr.mxu0 0.0
    %v3211 = vand.u32 %v1126, 4294901760
    %v3212 = vsub.f32 %v1126, %v3211
    %v3213 = vand.u32 %v3212, 4294901760
    %3214 = vmatpush1.msra.mxu0 %v3213
    %3215 = vmatprep.subr.mxu0 0.0
    %v3216 = vand.u32 %v1125, 4294901760
    %v3217 = vsub.f32 %v1125, %v3216
    %v3218 = vand.u32 %v3217, 4294901760
    %3219 = vmatpush1.msra.mxu0 %v3218
    %3220 = vmatprep.subr.mxu0 0.0
    %v3221 = vand.u32 %v1124, 4294901760
    %v3222 = vsub.f32 %v1124, %v3221
    %v3223 = vand.u32 %v3222, 4294901760
    %3224 = vmatpush1.msra.mxu0 %v3223
    %3225 = vmatprep.subr.mxu0 0.0
    %v3226 = vand.u32 %v1155, 4294901760
    %v3227 = vsub.f32 %v1155, %v3226
    %v3228 = vand.u32 %v3227, 4294901760
    %3229 = vmatpush2.msra.mxu0 %v3228
    %3230 = vmatprep.subr.mxu0 0.0
    %v3231 = vand.u32 %v1154, 4294901760
    %v3232 = vsub.f32 %v1154, %v3231
    %v3233 = vand.u32 %v3232, 4294901760
    %3234 = vmatpush2.msra.mxu0 %v3233
    %3235 = vmatprep.subr.mxu0 0.0
    %v3236 = vand.u32 %v1153, 4294901760
    %v3237 = vsub.f32 %v1153, %v3236
    %v3238 = vand.u32 %v3237, 4294901760
    %3239 = vmatpush2.msra.mxu0 %v3238
    %3240 = vmatprep.subr.mxu0 0.0
    %v3241 = vand.u32 %v1152, 4294901760
    %v3242 = vsub.f32 %v1152, %v3241
    %v3243 = vand.u32 %v3242, 4294901760
    %3244 = vmatpush2.msra.mxu0 %v3243
    %3245 = vmatprep.subr.mxu0 0.0
    %v3246 = vand.u32 %v1151, 4294901760
    %v3247 = vsub.f32 %v1151, %v3246
    %v3248 = vand.u32 %v3247, 4294901760
    %3249 = vmatpush2.msra.mxu0 %v3248
    %3250 = vmatprep.subr.mxu0 0.0
    %v3251 = vand.u32 %v1150, 4294901760
    %v3252 = vsub.f32 %v1150, %v3251
    %v3253 = vand.u32 %v3252, 4294901760
    %3254 = vmatpush2.msra.mxu0 %v3253
    %3255 = vmatprep.subr.mxu0 0.0
    %v3256 = vand.u32 %v1149, 4294901760
    %v3257 = vsub.f32 %v1149, %v3256
    %v3258 = vand.u32 %v3257, 4294901760
    %3259 = vmatpush2.msra.mxu0 %v3258
    %3260 = vmatprep.subr.mxu0 0.0
    %v3261 = vand.u32 %v1148, 4294901760
    %v3262 = vsub.f32 %v1148, %v3261
    %v3263 = vand.u32 %v3262, 4294901760
    %3264 = vmatpush2.msra.mxu0 %v3263
    %3265 = vmatprep.subr.mxu0 0.0
    %v3266 = vand.u32 %v1147, 4294901760
    %v3267 = vsub.f32 %v1147, %v3266
    %v3268 = vand.u32 %v3267, 4294901760
    %3269 = vmatpush2.msra.mxu0 %v3268
    %3270 = vmatprep.subr.mxu0 0.0
    %v3271 = vand.u32 %v1146, 4294901760
    %v3272 = vsub.f32 %v1146, %v3271
    %v3273 = vand.u32 %v3272, 4294901760
    %3274 = vmatpush2.msra.mxu0 %v3273
    %3275 = vmatprep.subr.mxu0 0.0
    %v3276 = vand.u32 %v1145, 4294901760
    %v3277 = vsub.f32 %v1145, %v3276
    %v3278 = vand.u32 %v3277, 4294901760
    %3279 = vmatpush2.msra.mxu0 %v3278
    %3280 = vmatprep.subr.mxu0 0.0
    %v3281 = vand.u32 %v1144, 4294901760
    %v3282 = vsub.f32 %v1144, %v3281
    %v3283 = vand.u32 %v3282, 4294901760
    %3284 = vmatpush2.msra.mxu0 %v3283
    %3285 = vmatprep.subr.mxu0 0.0
    %v3286 = vand.u32 %v1143, 4294901760
    %v3287 = vsub.f32 %v1143, %v3286
    %v3288 = vand.u32 %v3287, 4294901760
    %3289 = vmatpush2.msra.mxu0 %v3288
    %3290 = vmatprep.subr.mxu0 0.0
    %v3291 = vand.u32 %v1142, 4294901760
    %v3292 = vsub.f32 %v1142, %v3291
    %v3293 = vand.u32 %v3292, 4294901760
    %3294 = vmatpush2.msra.mxu0 %v3293
    %3295 = vmatprep.subr.mxu0 0.0
    %v3296 = vand.u32 %v1141, 4294901760
    %v3297 = vsub.f32 %v1141, %v3296
    %v3298 = vand.u32 %v3297, 4294901760
    %3299 = vmatpush2.msra.mxu0 %v3298
    %3300 = vmatprep.subr.mxu0 0.0
    %v3301 = vand.u32 %v1140, 4294901760
    %v3302 = vsub.f32 %v1140, %v3301
    %v3303 = vand.u32 %v3302, 4294901760
    %3304 = vmatpush2.msra.mxu0 %v3303
    %v3305 = vand.u32 %v1686, 4294901760
    %3306 = vmatprep.mubr.f32.mxu0 %v3305
    %v3307 = vand.u32 %v1684, 4294901760
    %3308 = vmatmul.mubr.f32.gmra.mxu0 %v3307
    %v3309 = vpop.f32.mrf.mxu0
    %v3310 = vadd.f32 %v3142, %v3309
    %v3311 = vpop.f32.mrf.mxu0
    %3312 = vdwg.mxu0
    %3313 = vmatprep.subr.mxu0 0.0
    %v3314 = vand.u32 %v1139, 4294901760
    %3315 = vmatpush1.msra.mxu0 %v3314
    %3316 = vmatprep.subr.mxu0 0.0
    %v3317 = vand.u32 %v1138, 4294901760
    %3318 = vmatpush1.msra.mxu0 %v3317
    %3319 = vmatprep.subr.mxu0 0.0
    %v3320 = vand.u32 %v1137, 4294901760
    %3321 = vmatpush1.msra.mxu0 %v3320
    %3322 = vmatprep.subr.mxu0 0.0
    %v3323 = vand.u32 %v1136, 4294901760
    %3324 = vmatpush1.msra.mxu0 %v3323
    %3325 = vmatprep.subr.mxu0 0.0
    %v3326 = vand.u32 %v1135, 4294901760
    %3327 = vmatpush1.msra.mxu0 %v3326
    %3328 = vmatprep.subr.mxu0 0.0
    %v3329 = vand.u32 %v1134, 4294901760
    %3330 = vmatpush1.msra.mxu0 %v3329
    %3331 = vmatprep.subr.mxu0 0.0
    %v3332 = vand.u32 %v1133, 4294901760
    %3333 = vmatpush1.msra.mxu0 %v3332
    %3334 = vmatprep.subr.mxu0 0.0
    %v3335 = vand.u32 %v1132, 4294901760
    %3336 = vmatpush1.msra.mxu0 %v3335
    %3337 = vmatprep.subr.mxu0 0.0
    %v3338 = vand.u32 %v1131, 4294901760
    %3339 = vmatpush1.msra.mxu0 %v3338
    %3340 = vmatprep.subr.mxu0 0.0
    %v3341 = vand.u32 %v1130, 4294901760
    %3342 = vmatpush1.msra.mxu0 %v3341
    %3343 = vmatprep.subr.mxu0 0.0
    %v3344 = vand.u32 %v1129, 4294901760
    %3345 = vmatpush1.msra.mxu0 %v3344
    %3346 = vmatprep.subr.mxu0 0.0
    %v3347 = vand.u32 %v1128, 4294901760
    %3348 = vmatpush1.msra.mxu0 %v3347
    %3349 = vmatprep.subr.mxu0 0.0
    %v3350 = vand.u32 %v1127, 4294901760
    %3351 = vmatpush1.msra.mxu0 %v3350
    %3352 = vmatprep.subr.mxu0 0.0
    %v3353 = vand.u32 %v1126, 4294901760
    %3354 = vmatpush1.msra.mxu0 %v3353
    %3355 = vmatprep.subr.mxu0 0.0
    %v3356 = vand.u32 %v1125, 4294901760
    %3357 = vmatpush1.msra.mxu0 %v3356
    %3358 = vmatprep.subr.mxu0 0.0
    %v3359 = vand.u32 %v1124, 4294901760
    %3360 = vmatpush1.msra.mxu0 %v3359
    %3361 = vmatprep.subr.mxu0 0.0
    %v3362 = vand.u32 %v1155, 4294901760
    %3363 = vmatpush2.msra.mxu0 %v3362
    %3364 = vmatprep.subr.mxu0 0.0
    %v3365 = vand.u32 %v1154, 4294901760
    %3366 = vmatpush2.msra.mxu0 %v3365
    %3367 = vmatprep.subr.mxu0 0.0
    %v3368 = vand.u32 %v1153, 4294901760
    %3369 = vmatpush2.msra.mxu0 %v3368
    %3370 = vmatprep.subr.mxu0 0.0
    %v3371 = vand.u32 %v1152, 4294901760
    %3372 = vmatpush2.msra.mxu0 %v3371
    %3373 = vmatprep.subr.mxu0 0.0
    %v3374 = vand.u32 %v1151, 4294901760
    %3375 = vmatpush2.msra.mxu0 %v3374
    %3376 = vmatprep.subr.mxu0 0.0
    %v3377 = vand.u32 %v1150, 4294901760
    %3378 = vmatpush2.msra.mxu0 %v3377
    %3379 = vmatprep.subr.mxu0 0.0
    %v3380 = vand.u32 %v1149, 4294901760
    %3381 = vmatpush2.msra.mxu0 %v3380
    %3382 = vmatprep.subr.mxu0 0.0
    %v3383 = vand.u32 %v1148, 4294901760
    %3384 = vmatpush2.msra.mxu0 %v3383
    %3385 = vmatprep.subr.mxu0 0.0
    %v3386 = vand.u32 %v1147, 4294901760
    %3387 = vmatpush2.msra.mxu0 %v3386
    %3388 = vmatprep.subr.mxu0 0.0
    %v3389 = vand.u32 %v1146, 4294901760
    %3390 = vmatpush2.msra.mxu0 %v3389
    %3391 = vmatprep.subr.mxu0 0.0
    %v3392 = vand.u32 %v1145, 4294901760
    %3393 = vmatpush2.msra.mxu0 %v3392
    %3394 = vmatprep.subr.mxu0 0.0
    %v3395 = vand.u32 %v1144, 4294901760
    %3396 = vmatpush2.msra.mxu0 %v3395
    %3397 = vmatprep.subr.mxu0 0.0
    %v3398 = vand.u32 %v1143, 4294901760
    %3399 = vmatpush2.msra.mxu0 %v3398
    %3400 = vmatprep.subr.mxu0 0.0
    %v3401 = vand.u32 %v1142, 4294901760
    %3402 = vmatpush2.msra.mxu0 %v3401
    %3403 = vmatprep.subr.mxu0 0.0
    %v3404 = vand.u32 %v1141, 4294901760
    %3405 = vmatpush2.msra.mxu0 %v3404
    %3406 = vmatprep.subr.mxu0 0.0
    %v3407 = vand.u32 %v1140, 4294901760
    %3408 = vmatpush2.msra.mxu0 %v3407
    %v3409 = vand.u32 %v1686, 4294901760
    %3410 = vmatprep.mubr.f32.mxu0 %v3409
    %v3411 = vand.u32 %v1684, 4294901760
    %3412 = vmatmul.mubr.f32.gmra.mxu0 %v3411
    %v3413 = vpop.f32.mrf.mxu0
    %v3414 = vadd.f32 %v3310, %v3413
    %v3415 = vpop.f32.mrf.mxu0
    %3416 = vdwg.mxu0
    %3417 = vmatprep.subr.mxu0 0.0
    %v3418 = vand.u32 %v1171, 4294901760
    %3419 = vmatpush1.msra.mxu0 %v3418
    %3420 = vmatprep.subr.mxu0 0.0
    %v3421 = vand.u32 %v1170, 4294901760
    %3422 = vmatpush1.msra.mxu0 %v3421
    %3423 = vmatprep.subr.mxu0 0.0
    %v3424 = vand.u32 %v1169, 4294901760
    %3425 = vmatpush1.msra.mxu0 %v3424
    %3426 = vmatprep.subr.mxu0 0.0
    %v3427 = vand.u32 %v1168, 4294901760
    %3428 = vmatpush1.msra.mxu0 %v3427
    %3429 = vmatprep.subr.mxu0 0.0
    %v3430 = vand.u32 %v1167, 4294901760
    %3431 = vmatpush1.msra.mxu0 %v3430
    %3432 = vmatprep.subr.mxu0 0.0
    %v3433 = vand.u32 %v1166, 4294901760
    %3434 = vmatpush1.msra.mxu0 %v3433
    %3435 = vmatprep.subr.mxu0 0.0
    %v3436 = vand.u32 %v1165, 4294901760
    %3437 = vmatpush1.msra.mxu0 %v3436
    %3438 = vmatprep.subr.mxu0 0.0
    %v3439 = vand.u32 %v1164, 4294901760
    %3440 = vmatpush1.msra.mxu0 %v3439
    %3441 = vmatprep.subr.mxu0 0.0
    %v3442 = vand.u32 %v1163, 4294901760
    %3443 = vmatpush1.msra.mxu0 %v3442
    %3444 = vmatprep.subr.mxu0 0.0
    %v3445 = vand.u32 %v1162, 4294901760
    %3446 = vmatpush1.msra.mxu0 %v3445
    %3447 = vmatprep.subr.mxu0 0.0
    %v3448 = vand.u32 %v1161, 4294901760
    %3449 = vmatpush1.msra.mxu0 %v3448
    %3450 = vmatprep.subr.mxu0 0.0
    %v3451 = vand.u32 %v1160, 4294901760
    %3452 = vmatpush1.msra.mxu0 %v3451
    %3453 = vmatprep.subr.mxu0 0.0
    %v3454 = vand.u32 %v1159, 4294901760
    %3455 = vmatpush1.msra.mxu0 %v3454
    %3456 = vmatprep.subr.mxu0 0.0
    %v3457 = vand.u32 %v1158, 4294901760
    %3458 = vmatpush1.msra.mxu0 %v3457
    %3459 = vmatprep.subr.mxu0 0.0
    %v3460 = vand.u32 %v1157, 4294901760
    %3461 = vmatpush1.msra.mxu0 %v3460
    %3462 = vmatprep.subr.mxu0 0.0
    %v3463 = vand.u32 %v1156, 4294901760
    %3464 = vmatpush1.msra.mxu0 %v3463
    %3465 = vmatprep.subr.mxu0 0.0
    %v3466 = vand.u32 %v1187, 4294901760
    %3467 = vmatpush2.msra.mxu0 %v3466
    %3468 = vmatprep.subr.mxu0 0.0
    %v3469 = vand.u32 %v1186, 4294901760
    %3470 = vmatpush2.msra.mxu0 %v3469
    %3471 = vmatprep.subr.mxu0 0.0
    %v3472 = vand.u32 %v1185, 4294901760
    %3473 = vmatpush2.msra.mxu0 %v3472
    %3474 = vmatprep.subr.mxu0 0.0
    %v3475 = vand.u32 %v1184, 4294901760
    %3476 = vmatpush2.msra.mxu0 %v3475
    %3477 = vmatprep.subr.mxu0 0.0
    %v3478 = vand.u32 %v1183, 4294901760
    %3479 = vmatpush2.msra.mxu0 %v3478
    %3480 = vmatprep.subr.mxu0 0.0
    %v3481 = vand.u32 %v1182, 4294901760
    %3482 = vmatpush2.msra.mxu0 %v3481
    %3483 = vmatprep.subr.mxu0 0.0
    %v3484 = vand.u32 %v1181, 4294901760
    %3485 = vmatpush2.msra.mxu0 %v3484
    %3486 = vmatprep.subr.mxu0 0.0
    %v3487 = vand.u32 %v1180, 4294901760
    %3488 = vmatpush2.msra.mxu0 %v3487
    %3489 = vmatprep.subr.mxu0 0.0
    %v3490 = vand.u32 %v1179, 4294901760
    %3491 = vmatpush2.msra.mxu0 %v3490
    %3492 = vmatprep.subr.mxu0 0.0
    %v3493 = vand.u32 %v1178, 4294901760
    %3494 = vmatpush2.msra.mxu0 %v3493
    %3495 = vmatprep.subr.mxu0 0.0
    %v3496 = vand.u32 %v1177, 4294901760
    %3497 = vmatpush2.msra.mxu0 %v3496
    %3498 = vmatprep.subr.mxu0 0.0
    %v3499 = vand.u32 %v1176, 4294901760
    %3500 = vmatpush2.msra.mxu0 %v3499
    %3501 = vmatprep.subr.mxu0 0.0
    %v3502 = vand.u32 %v1175, 4294901760
    %3503 = vmatpush2.msra.mxu0 %v3502
    %3504 = vmatprep.subr.mxu0 0.0
    %v3505 = vand.u32 %v1174, 4294901760
    %3506 = vmatpush2.msra.mxu0 %v3505
    %3507 = vmatprep.subr.mxu0 0.0
    %v3508 = vand.u32 %v1173, 4294901760
    %3509 = vmatpush2.msra.mxu0 %v3508
    %3510 = vmatprep.subr.mxu0 0.0
    %v3511 = vand.u32 %v1172, 4294901760
    %3512 = vmatpush2.msra.mxu0 %v3511
    %v3513 = vand.u32 %v1690, 4294901760
    %v3514 = vsub.f32 %v1690, %v3513
    %v3515 = vand.u32 %v3514, 4294901760
    %v3516 = vsub.f32 %v3514, %v3515
    %v3517 = vand.u32 %v3516, 4294901760
    %3518 = vmatprep.mubr.f32.mxu0 %v3517
    %v3519 = vand.u32 %v1688, 4294901760
    %v3520 = vsub.f32 %v1688, %v3519
    %v3521 = vand.u32 %v3520, 4294901760
    %v3522 = vsub.f32 %v3520, %v3521
    %v3523 = vand.u32 %v3522, 4294901760
    %3524 = vmatmul.mubr.f32.gmra.mxu0 %v3523
    %v3525 = vpop.f32.mrf.mxu0
    %v3526 = vadd.f32 %v3414, %v3525
    %v3527 = vpop.f32.mrf.mxu0
    %3528 = vdwg.mxu0
    %3529 = vmatprep.subr.mxu0 0.0
    %v3530 = vand.u32 %v1171, 4294901760
    %v3531 = vsub.f32 %v1171, %v3530
    %v3532 = vand.u32 %v3531, 4294901760
    %v3533 = vsub.f32 %v3531, %v3532
    %v3534 = vand.u32 %v3533, 4294901760
    %3535 = vmatpush1.msra.mxu0 %v3534
    %3536 = vmatprep.subr.mxu0 0.0
    %v3537 = vand.u32 %v1170, 4294901760
    %v3538 = vsub.f32 %v1170, %v3537
    %v3539 = vand.u32 %v3538, 4294901760
    %v3540 = vsub.f32 %v3538, %v3539
    %v3541 = vand.u32 %v3540, 4294901760
    %3542 = vmatpush1.msra.mxu0 %v3541
    %3543 = vmatprep.subr.mxu0 0.0
    %v3544 = vand.u32 %v1169, 4294901760
    %v3545 = vsub.f32 %v1169, %v3544
    %v3546 = vand.u32 %v3545, 4294901760
    %v3547 = vsub.f32 %v3545, %v3546
    %v3548 = vand.u32 %v3547, 4294901760
    %3549 = vmatpush1.msra.mxu0 %v3548
    %3550 = vmatprep.subr.mxu0 0.0
    %v3551 = vand.u32 %v1168, 4294901760
    %v3552 = vsub.f32 %v1168, %v3551
    %v3553 = vand.u32 %v3552, 4294901760
    %v3554 = vsub.f32 %v3552, %v3553
    %v3555 = vand.u32 %v3554, 4294901760
    %3556 = vmatpush1.msra.mxu0 %v3555
    %3557 = vmatprep.subr.mxu0 0.0
    %v3558 = vand.u32 %v1167, 4294901760
    %v3559 = vsub.f32 %v1167, %v3558
    %v3560 = vand.u32 %v3559, 4294901760
    %v3561 = vsub.f32 %v3559, %v3560
    %v3562 = vand.u32 %v3561, 4294901760
    %3563 = vmatpush1.msra.mxu0 %v3562
    %3564 = vmatprep.subr.mxu0 0.0
    %v3565 = vand.u32 %v1166, 4294901760
    %v3566 = vsub.f32 %v1166, %v3565
    %v3567 = vand.u32 %v3566, 4294901760
    %v3568 = vsub.f32 %v3566, %v3567
    %v3569 = vand.u32 %v3568, 4294901760
    %3570 = vmatpush1.msra.mxu0 %v3569
    %3571 = vmatprep.subr.mxu0 0.0
    %v3572 = vand.u32 %v1165, 4294901760
    %v3573 = vsub.f32 %v1165, %v3572
    %v3574 = vand.u32 %v3573, 4294901760
    %v3575 = vsub.f32 %v3573, %v3574
    %v3576 = vand.u32 %v3575, 4294901760
    %3577 = vmatpush1.msra.mxu0 %v3576
    %3578 = vmatprep.subr.mxu0 0.0
    %v3579 = vand.u32 %v1164, 4294901760
    %v3580 = vsub.f32 %v1164, %v3579
    %v3581 = vand.u32 %v3580, 4294901760
    %v3582 = vsub.f32 %v3580, %v3581
    %v3583 = vand.u32 %v3582, 4294901760
    %3584 = vmatpush1.msra.mxu0 %v3583
    %3585 = vmatprep.subr.mxu0 0.0
    %v3586 = vand.u32 %v1163, 4294901760
    %v3587 = vsub.f32 %v1163, %v3586
    %v3588 = vand.u32 %v3587, 4294901760
    %v3589 = vsub.f32 %v3587, %v3588
    %v3590 = vand.u32 %v3589, 4294901760
    %3591 = vmatpush1.msra.mxu0 %v3590
    %3592 = vmatprep.subr.mxu0 0.0
    %v3593 = vand.u32 %v1162, 4294901760
    %v3594 = vsub.f32 %v1162, %v3593
    %v3595 = vand.u32 %v3594, 4294901760
    %v3596 = vsub.f32 %v3594, %v3595
    %v3597 = vand.u32 %v3596, 4294901760
    %3598 = vmatpush1.msra.mxu0 %v3597
    %3599 = vmatprep.subr.mxu0 0.0
    %v3600 = vand.u32 %v1161, 4294901760
    %v3601 = vsub.f32 %v1161, %v3600
    %v3602 = vand.u32 %v3601, 4294901760
    %v3603 = vsub.f32 %v3601, %v3602
    %v3604 = vand.u32 %v3603, 4294901760
    %3605 = vmatpush1.msra.mxu0 %v3604
    %3606 = vmatprep.subr.mxu0 0.0
    %v3607 = vand.u32 %v1160, 4294901760
    %v3608 = vsub.f32 %v1160, %v3607
    %v3609 = vand.u32 %v3608, 4294901760
    %v3610 = vsub.f32 %v3608, %v3609
    %v3611 = vand.u32 %v3610, 4294901760
    %3612 = vmatpush1.msra.mxu0 %v3611
    %3613 = vmatprep.subr.mxu0 0.0
    %v3614 = vand.u32 %v1159, 4294901760
    %v3615 = vsub.f32 %v1159, %v3614
    %v3616 = vand.u32 %v3615, 4294901760
    %v3617 = vsub.f32 %v3615, %v3616
    %v3618 = vand.u32 %v3617, 4294901760
    %3619 = vmatpush1.msra.mxu0 %v3618
    %3620 = vmatprep.subr.mxu0 0.0
    %v3621 = vand.u32 %v1158, 4294901760
    %v3622 = vsub.f32 %v1158, %v3621
    %v3623 = vand.u32 %v3622, 4294901760
    %v3624 = vsub.f32 %v3622, %v3623
    %v3625 = vand.u32 %v3624, 4294901760
    %3626 = vmatpush1.msra.mxu0 %v3625
    %3627 = vmatprep.subr.mxu0 0.0
    %v3628 = vand.u32 %v1157, 4294901760
    %v3629 = vsub.f32 %v1157, %v3628
    %v3630 = vand.u32 %v3629, 4294901760
    %v3631 = vsub.f32 %v3629, %v3630
    %v3632 = vand.u32 %v3631, 4294901760
    %3633 = vmatpush1.msra.mxu0 %v3632
    %3634 = vmatprep.subr.mxu0 0.0
    %v3635 = vand.u32 %v1156, 4294901760
    %v3636 = vsub.f32 %v1156, %v3635
    %v3637 = vand.u32 %v3636, 4294901760
    %v3638 = vsub.f32 %v3636, %v3637
    %v3639 = vand.u32 %v3638, 4294901760
    %3640 = vmatpush1.msra.mxu0 %v3639
    %3641 = vmatprep.subr.mxu0 0.0
    %v3642 = vand.u32 %v1187, 4294901760
    %v3643 = vsub.f32 %v1187, %v3642
    %v3644 = vand.u32 %v3643, 4294901760
    %v3645 = vsub.f32 %v3643, %v3644
    %v3646 = vand.u32 %v3645, 4294901760
    %3647 = vmatpush2.msra.mxu0 %v3646
    %3648 = vmatprep.subr.mxu0 0.0
    %v3649 = vand.u32 %v1186, 4294901760
    %v3650 = vsub.f32 %v1186, %v3649
    %v3651 = vand.u32 %v3650, 4294901760
    %v3652 = vsub.f32 %v3650, %v3651
    %v3653 = vand.u32 %v3652, 4294901760
    %3654 = vmatpush2.msra.mxu0 %v3653
    %3655 = vmatprep.subr.mxu0 0.0
    %v3656 = vand.u32 %v1185, 4294901760
    %v3657 = vsub.f32 %v1185, %v3656
    %v3658 = vand.u32 %v3657, 4294901760
    %v3659 = vsub.f32 %v3657, %v3658
    %v3660 = vand.u32 %v3659, 4294901760
    %3661 = vmatpush2.msra.mxu0 %v3660
    %3662 = vmatprep.subr.mxu0 0.0
    %v3663 = vand.u32 %v1184, 4294901760
    %v3664 = vsub.f32 %v1184, %v3663
    %v3665 = vand.u32 %v3664, 4294901760
    %v3666 = vsub.f32 %v3664, %v3665
    %v3667 = vand.u32 %v3666, 4294901760
    %3668 = vmatpush2.msra.mxu0 %v3667
    %3669 = vmatprep.subr.mxu0 0.0
    %v3670 = vand.u32 %v1183, 4294901760
    %v3671 = vsub.f32 %v1183, %v3670
    %v3672 = vand.u32 %v3671, 4294901760
    %v3673 = vsub.f32 %v3671, %v3672
    %v3674 = vand.u32 %v3673, 4294901760
    %3675 = vmatpush2.msra.mxu0 %v3674
    %3676 = vmatprep.subr.mxu0 0.0
    %v3677 = vand.u32 %v1182, 4294901760
    %v3678 = vsub.f32 %v1182, %v3677
    %v3679 = vand.u32 %v3678, 4294901760
    %v3680 = vsub.f32 %v3678, %v3679
    %v3681 = vand.u32 %v3680, 4294901760
    %3682 = vmatpush2.msra.mxu0 %v3681
    %3683 = vmatprep.subr.mxu0 0.0
    %v3684 = vand.u32 %v1181, 4294901760
    %v3685 = vsub.f32 %v1181, %v3684
    %v3686 = vand.u32 %v3685, 4294901760
    %v3687 = vsub.f32 %v3685, %v3686
    %v3688 = vand.u32 %v3687, 4294901760
    %3689 = vmatpush2.msra.mxu0 %v3688
    %3690 = vmatprep.subr.mxu0 0.0
    %v3691 = vand.u32 %v1180, 4294901760
    %v3692 = vsub.f32 %v1180, %v3691
    %v3693 = vand.u32 %v3692, 4294901760
    %v3694 = vsub.f32 %v3692, %v3693
    %v3695 = vand.u32 %v3694, 4294901760
    %3696 = vmatpush2.msra.mxu0 %v3695
    %3697 = vmatprep.subr.mxu0 0.0
    %v3698 = vand.u32 %v1179, 4294901760
    %v3699 = vsub.f32 %v1179, %v3698
    %v3700 = vand.u32 %v3699, 4294901760
    %v3701 = vsub.f32 %v3699, %v3700
    %v3702 = vand.u32 %v3701, 4294901760
    %3703 = vmatpush2.msra.mxu0 %v3702
    %3704 = vmatprep.subr.mxu0 0.0
    %v3705 = vand.u32 %v1178, 4294901760
    %v3706 = vsub.f32 %v1178, %v3705
    %v3707 = vand.u32 %v3706, 4294901760
    %v3708 = vsub.f32 %v3706, %v3707
    %v3709 = vand.u32 %v3708, 4294901760
    %3710 = vmatpush2.msra.mxu0 %v3709
    %3711 = vmatprep.subr.mxu0 0.0
    %v3712 = vand.u32 %v1177, 4294901760
    %v3713 = vsub.f32 %v1177, %v3712
    %v3714 = vand.u32 %v3713, 4294901760
    %v3715 = vsub.f32 %v3713, %v3714
    %v3716 = vand.u32 %v3715, 4294901760
    %3717 = vmatpush2.msra.mxu0 %v3716
    %3718 = vmatprep.subr.mxu0 0.0
    %v3719 = vand.u32 %v1176, 4294901760
    %v3720 = vsub.f32 %v1176, %v3719
    %v3721 = vand.u32 %v3720, 4294901760
    %v3722 = vsub.f32 %v3720, %v3721
    %v3723 = vand.u32 %v3722, 4294901760
    %3724 = vmatpush2.msra.mxu0 %v3723
    %3725 = vmatprep.subr.mxu0 0.0
    %v3726 = vand.u32 %v1175, 4294901760
    %v3727 = vsub.f32 %v1175, %v3726
    %v3728 = vand.u32 %v3727, 4294901760
    %v3729 = vsub.f32 %v3727, %v3728
    %v3730 = vand.u32 %v3729, 4294901760
    %3731 = vmatpush2.msra.mxu0 %v3730
    %3732 = vmatprep.subr.mxu0 0.0
    %v3733 = vand.u32 %v1174, 4294901760
    %v3734 = vsub.f32 %v1174, %v3733
    %v3735 = vand.u32 %v3734, 4294901760
    %v3736 = vsub.f32 %v3734, %v3735
    %v3737 = vand.u32 %v3736, 4294901760
    %3738 = vmatpush2.msra.mxu0 %v3737
    %3739 = vmatprep.subr.mxu0 0.0
    %v3740 = vand.u32 %v1173, 4294901760
    %v3741 = vsub.f32 %v1173, %v3740
    %v3742 = vand.u32 %v3741, 4294901760
    %v3743 = vsub.f32 %v3741, %v3742
    %v3744 = vand.u32 %v3743, 4294901760
    %3745 = vmatpush2.msra.mxu0 %v3744
    %3746 = vmatprep.subr.mxu0 0.0
    %v3747 = vand.u32 %v1172, 4294901760
    %v3748 = vsub.f32 %v1172, %v3747
    %v3749 = vand.u32 %v3748, 4294901760
    %v3750 = vsub.f32 %v3748, %v3749
    %v3751 = vand.u32 %v3750, 4294901760
    %3752 = vmatpush2.msra.mxu0 %v3751
    %v3753 = vand.u32 %v1690, 4294901760
    %3754 = vmatprep.mubr.f32.mxu0 %v3753
    %v3755 = vand.u32 %v1688, 4294901760
    %3756 = vmatmul.mubr.f32.gmra.mxu0 %v3755
    %v3757 = vpop.f32.mrf.mxu0
    %v3758 = vadd.f32 %v3526, %v3757
    %v3759 = vpop.f32.mrf.mxu0
    %3760 = vdwg.mxu0
    %3761 = vmatprep.subr.mxu0 0.0
    %v3762 = vand.u32 %v1171, 4294901760
    %v3763 = vsub.f32 %v1171, %v3762
    %3764 = vmatpush1.msra.mxu0 %v3763
    %3765 = vmatprep.subr.mxu0 0.0
    %v3766 = vand.u32 %v1170, 4294901760
    %v3767 = vsub.f32 %v1170, %v3766
    %3768 = vmatpush1.msra.mxu0 %v3767
    %3769 = vmatprep.subr.mxu0 0.0
    %v3770 = vand.u32 %v1169, 4294901760
    %v3771 = vsub.f32 %v1169, %v3770
    %3772 = vmatpush1.msra.mxu0 %v3771
    %3773 = vmatprep.subr.mxu0 0.0
    %v3774 = vand.u32 %v1168, 4294901760
    %v3775 = vsub.f32 %v1168, %v3774
    %3776 = vmatpush1.msra.mxu0 %v3775
    %3777 = vmatprep.subr.mxu0 0.0
    %v3778 = vand.u32 %v1167, 4294901760
    %v3779 = vsub.f32 %v1167, %v3778
    %3780 = vmatpush1.msra.mxu0 %v3779
    %3781 = vmatprep.subr.mxu0 0.0
    %v3782 = vand.u32 %v1166, 4294901760
    %v3783 = vsub.f32 %v1166, %v3782
    %3784 = vmatpush1.msra.mxu0 %v3783
    %3785 = vmatprep.subr.mxu0 0.0
    %v3786 = vand.u32 %v1165, 4294901760
    %v3787 = vsub.f32 %v1165, %v3786
    %3788 = vmatpush1.msra.mxu0 %v3787
    %3789 = vmatprep.subr.mxu0 0.0
    %v3790 = vand.u32 %v1164, 4294901760
    %v3791 = vsub.f32 %v1164, %v3790
    %3792 = vmatpush1.msra.mxu0 %v3791
    %3793 = vmatprep.subr.mxu0 0.0
    %v3794 = vand.u32 %v1163, 4294901760
    %v3795 = vsub.f32 %v1163, %v3794
    %3796 = vmatpush1.msra.mxu0 %v3795
    %3797 = vmatprep.subr.mxu0 0.0
    %v3798 = vand.u32 %v1162, 4294901760
    %v3799 = vsub.f32 %v1162, %v3798
    %3800 = vmatpush1.msra.mxu0 %v3799
    %3801 = vmatprep.subr.mxu0 0.0
    %v3802 = vand.u32 %v1161, 4294901760
    %v3803 = vsub.f32 %v1161, %v3802
    %3804 = vmatpush1.msra.mxu0 %v3803
    %3805 = vmatprep.subr.mxu0 0.0
    %v3806 = vand.u32 %v1160, 4294901760
    %v3807 = vsub.f32 %v1160, %v3806
    %3808 = vmatpush1.msra.mxu0 %v3807
    %3809 = vmatprep.subr.mxu0 0.0
    %v3810 = vand.u32 %v1159, 4294901760
    %v3811 = vsub.f32 %v1159, %v3810
    %3812 = vmatpush1.msra.mxu0 %v3811
    %3813 = vmatprep.subr.mxu0 0.0
    %v3814 = vand.u32 %v1158, 4294901760
    %v3815 = vsub.f32 %v1158, %v3814
    %3816 = vmatpush1.msra.mxu0 %v3815
    %3817 = vmatprep.subr.mxu0 0.0
    %v3818 = vand.u32 %v1157, 4294901760
    %v3819 = vsub.f32 %v1157, %v3818
    %3820 = vmatpush1.msra.mxu0 %v3819
    %3821 = vmatprep.subr.mxu0 0.0
    %v3822 = vand.u32 %v1156, 4294901760
    %v3823 = vsub.f32 %v1156, %v3822
    %3824 = vmatpush1.msra.mxu0 %v3823
    %3825 = vmatprep.subr.mxu0 0.0
    %v3826 = vand.u32 %v1187, 4294901760
    %v3827 = vsub.f32 %v1187, %v3826
    %3828 = vmatpush2.msra.mxu0 %v3827
    %3829 = vmatprep.subr.mxu0 0.0
    %v3830 = vand.u32 %v1186, 4294901760
    %v3831 = vsub.f32 %v1186, %v3830
    %3832 = vmatpush2.msra.mxu0 %v3831
    %3833 = vmatprep.subr.mxu0 0.0
    %v3834 = vand.u32 %v1185, 4294901760
    %v3835 = vsub.f32 %v1185, %v3834
    %3836 = vmatpush2.msra.mxu0 %v3835
    %3837 = vmatprep.subr.mxu0 0.0
    %v3838 = vand.u32 %v1184, 4294901760
    %v3839 = vsub.f32 %v1184, %v3838
    %3840 = vmatpush2.msra.mxu0 %v3839
    %3841 = vmatprep.subr.mxu0 0.0
    %v3842 = vand.u32 %v1183, 4294901760
    %v3843 = vsub.f32 %v1183, %v3842
    %3844 = vmatpush2.msra.mxu0 %v3843
    %3845 = vmatprep.subr.mxu0 0.0
    %v3846 = vand.u32 %v1182, 4294901760
    %v3847 = vsub.f32 %v1182, %v3846
    %3848 = vmatpush2.msra.mxu0 %v3847
    %3849 = vmatprep.subr.mxu0 0.0
    %v3850 = vand.u32 %v1181, 4294901760
    %v3851 = vsub.f32 %v1181, %v3850
    %3852 = vmatpush2.msra.mxu0 %v3851
    %3853 = vmatprep.subr.mxu0 0.0
    %v3854 = vand.u32 %v1180, 4294901760
    %v3855 = vsub.f32 %v1180, %v3854
    %3856 = vmatpush2.msra.mxu0 %v3855
    %3857 = vmatprep.subr.mxu0 0.0
    %v3858 = vand.u32 %v1179, 4294901760
    %v3859 = vsub.f32 %v1179, %v3858
    %3860 = vmatpush2.msra.mxu0 %v3859
    %3861 = vmatprep.subr.mxu0 0.0
    %v3862 = vand.u32 %v1178, 4294901760
    %v3863 = vsub.f32 %v1178, %v3862
    %3864 = vmatpush2.msra.mxu0 %v3863
    %3865 = vmatprep.subr.mxu0 0.0
    %v3866 = vand.u32 %v1177, 4294901760
    %v3867 = vsub.f32 %v1177, %v3866
    %3868 = vmatpush2.msra.mxu0 %v3867
    %3869 = vmatprep.subr.mxu0 0.0
    %v3870 = vand.u32 %v1176, 4294901760
    %v3871 = vsub.f32 %v1176, %v3870
    %3872 = vmatpush2.msra.mxu0 %v3871
    %3873 = vmatprep.subr.mxu0 0.0
    %v3874 = vand.u32 %v1175, 4294901760
    %v3875 = vsub.f32 %v1175, %v3874
    %3876 = vmatpush2.msra.mxu0 %v3875
    %3877 = vmatprep.subr.mxu0 0.0
    %v3878 = vand.u32 %v1174, 4294901760
    %v3879 = vsub.f32 %v1174, %v3878
    %3880 = vmatpush2.msra.mxu0 %v3879
    %3881 = vmatprep.subr.mxu0 0.0
    %v3882 = vand.u32 %v1173, 4294901760
    %v3883 = vsub.f32 %v1173, %v3882
    %3884 = vmatpush2.msra.mxu0 %v3883
    %3885 = vmatprep.subr.mxu0 0.0
    %v3886 = vand.u32 %v1172, 4294901760
    %v3887 = vsub.f32 %v1172, %v3886
    %3888 = vmatpush2.msra.mxu0 %v3887
    %v3889 = vand.u32 %v1690, 4294901760
    %v3890 = vsub.f32 %v1690, %v3889
    %3891 = vmatprep.mubr.f32.mxu0 %v3890
    %v3892 = vand.u32 %v1688, 4294901760
    %v3893 = vsub.f32 %v1688, %v3892
    %3894 = vmatmul.mubr.f32.gmra.mxu0 %v3893
    %v3895 = vpop.f32.mrf.mxu0
    %v3896 = vadd.f32 %v3758, %v3895
    %v3897 = vpop.f32.mrf.mxu0
    %3898 = vdwg.mxu0
    %3899 = vmatprep.subr.mxu0 0.0
    %v3900 = vand.u32 %v1171, 4294901760
    %3901 = vmatpush1.msra.mxu0 %v3900
    %3902 = vmatprep.subr.mxu0 0.0
    %v3903 = vand.u32 %v1170, 4294901760
    %3904 = vmatpush1.msra.mxu0 %v3903
    %3905 = vmatprep.subr.mxu0 0.0
    %v3906 = vand.u32 %v1169, 4294901760
    %3907 = vmatpush1.msra.mxu0 %v3906
    %3908 = vmatprep.subr.mxu0 0.0
    %v3909 = vand.u32 %v1168, 4294901760
    %3910 = vmatpush1.msra.mxu0 %v3909
    %3911 = vmatprep.subr.mxu0 0.0
    %v3912 = vand.u32 %v1167, 4294901760
    %3913 = vmatpush1.msra.mxu0 %v3912
    %3914 = vmatprep.subr.mxu0 0.0
    %v3915 = vand.u32 %v1166, 4294901760
    %3916 = vmatpush1.msra.mxu0 %v3915
    %3917 = vmatprep.subr.mxu0 0.0
    %v3918 = vand.u32 %v1165, 4294901760
    %3919 = vmatpush1.msra.mxu0 %v3918
    %3920 = vmatprep.subr.mxu0 0.0
    %v3921 = vand.u32 %v1164, 4294901760
    %3922 = vmatpush1.msra.mxu0 %v3921
    %3923 = vmatprep.subr.mxu0 0.0
    %v3924 = vand.u32 %v1163, 4294901760
    %3925 = vmatpush1.msra.mxu0 %v3924
    %3926 = vmatprep.subr.mxu0 0.0
    %v3927 = vand.u32 %v1162, 4294901760
    %3928 = vmatpush1.msra.mxu0 %v3927
    %3929 = vmatprep.subr.mxu0 0.0
    %v3930 = vand.u32 %v1161, 4294901760
    %3931 = vmatpush1.msra.mxu0 %v3930
    %3932 = vmatprep.subr.mxu0 0.0
    %v3933 = vand.u32 %v1160, 4294901760
    %3934 = vmatpush1.msra.mxu0 %v3933
    %3935 = vmatprep.subr.mxu0 0.0
    %v3936 = vand.u32 %v1159, 4294901760
    %3937 = vmatpush1.msra.mxu0 %v3936
    %3938 = vmatprep.subr.mxu0 0.0
    %v3939 = vand.u32 %v1158, 4294901760
    %3940 = vmatpush1.msra.mxu0 %v3939
    %3941 = vmatprep.subr.mxu0 0.0
    %v3942 = vand.u32 %v1157, 4294901760
    %3943 = vmatpush1.msra.mxu0 %v3942
    %3944 = vmatprep.subr.mxu0 0.0
    %v3945 = vand.u32 %v1156, 4294901760
    %3946 = vmatpush1.msra.mxu0 %v3945
    %3947 = vmatprep.subr.mxu0 0.0
    %v3948 = vand.u32 %v1187, 4294901760
    %3949 = vmatpush2.msra.mxu0 %v3948
    %3950 = vmatprep.subr.mxu0 0.0
    %v3951 = vand.u32 %v1186, 4294901760
    %3952 = vmatpush2.msra.mxu0 %v3951
    %3953 = vmatprep.subr.mxu0 0.0
    %v3954 = vand.u32 %v1185, 4294901760
    %3955 = vmatpush2.msra.mxu0 %v3954
    %3956 = vmatprep.subr.mxu0 0.0
    %v3957 = vand.u32 %v1184, 4294901760
    %3958 = vmatpush2.msra.mxu0 %v3957
    %3959 = vmatprep.subr.mxu0 0.0
    %v3960 = vand.u32 %v1183, 4294901760
    %3961 = vmatpush2.msra.mxu0 %v3960
    %3962 = vmatprep.subr.mxu0 0.0
    %v3963 = vand.u32 %v1182, 4294901760
    %3964 = vmatpush2.msra.mxu0 %v3963
    %3965 = vmatprep.subr.mxu0 0.0
    %v3966 = vand.u32 %v1181, 4294901760
    %3967 = vmatpush2.msra.mxu0 %v3966
    %3968 = vmatprep.subr.mxu0 0.0
    %v3969 = vand.u32 %v1180, 4294901760
    %3970 = vmatpush2.msra.mxu0 %v3969
    %3971 = vmatprep.subr.mxu0 0.0
    %v3972 = vand.u32 %v1179, 4294901760
    %3973 = vmatpush2.msra.mxu0 %v3972
    %3974 = vmatprep.subr.mxu0 0.0
    %v3975 = vand.u32 %v1178, 4294901760
    %3976 = vmatpush2.msra.mxu0 %v3975
    %3977 = vmatprep.subr.mxu0 0.0
    %v3978 = vand.u32 %v1177, 4294901760
    %3979 = vmatpush2.msra.mxu0 %v3978
    %3980 = vmatprep.subr.mxu0 0.0
    %v3981 = vand.u32 %v1176, 4294901760
    %3982 = vmatpush2.msra.mxu0 %v3981
    %3983 = vmatprep.subr.mxu0 0.0
    %v3984 = vand.u32 %v1175, 4294901760
    %3985 = vmatpush2.msra.mxu0 %v3984
    %3986 = vmatprep.subr.mxu0 0.0
    %v3987 = vand.u32 %v1174, 4294901760
    %3988 = vmatpush2.msra.mxu0 %v3987
    %3989 = vmatprep.subr.mxu0 0.0
    %v3990 = vand.u32 %v1173, 4294901760
    %3991 = vmatpush2.msra.mxu0 %v3990
    %3992 = vmatprep.subr.mxu0 0.0
    %v3993 = vand.u32 %v1172, 4294901760
    %3994 = vmatpush2.msra.mxu0 %v3993
    %v3995 = vand.u32 %v1690, 4294901760
    %v3996 = vsub.f32 %v1690, %v3995
    %v3997 = vand.u32 %v3996, 4294901760
    %3998 = vmatprep.mubr.f32.mxu0 %v3997
    %v3999 = vand.u32 %v1688, 4294901760
    %v4000 = vsub.f32 %v1688, %v3999
    %v4001 = vand.u32 %v4000, 4294901760
    %4002 = vmatmul.mubr.f32.gmra.mxu0 %v4001
    %v4003 = vpop.f32.mrf.mxu0
    %v4004 = vadd.f32 %v3896, %v4003
    %v4005 = vpop.f32.mrf.mxu0
    %4006 = vdwg.mxu0
    %4007 = vmatprep.subr.mxu0 0.0
    %v4008 = vand.u32 %v1171, 4294901760
    %v4009 = vsub.f32 %v1171, %v4008
    %v4010 = vand.u32 %v4009, 4294901760
    %4011 = vmatpush1.msra.mxu0 %v4010
    %4012 = vmatprep.subr.mxu0 0.0
    %v4013 = vand.u32 %v1170, 4294901760
    %v4014 = vsub.f32 %v1170, %v4013
    %v4015 = vand.u32 %v4014, 4294901760
    %4016 = vmatpush1.msra.mxu0 %v4015
    %4017 = vmatprep.subr.mxu0 0.0
    %v4018 = vand.u32 %v1169, 4294901760
    %v4019 = vsub.f32 %v1169, %v4018
    %v4020 = vand.u32 %v4019, 4294901760
    %4021 = vmatpush1.msra.mxu0 %v4020
    %4022 = vmatprep.subr.mxu0 0.0
    %v4023 = vand.u32 %v1168, 4294901760
    %v4024 = vsub.f32 %v1168, %v4023
    %v4025 = vand.u32 %v4024, 4294901760
    %4026 = vmatpush1.msra.mxu0 %v4025
    %4027 = vmatprep.subr.mxu0 0.0
    %v4028 = vand.u32 %v1167, 4294901760
    %v4029 = vsub.f32 %v1167, %v4028
    %v4030 = vand.u32 %v4029, 4294901760
    %4031 = vmatpush1.msra.mxu0 %v4030
    %4032 = vmatprep.subr.mxu0 0.0
    %v4033 = vand.u32 %v1166, 4294901760
    %v4034 = vsub.f32 %v1166, %v4033
    %v4035 = vand.u32 %v4034, 4294901760
    %4036 = vmatpush1.msra.mxu0 %v4035
    %4037 = vmatprep.subr.mxu0 0.0
    %v4038 = vand.u32 %v1165, 4294901760
    %v4039 = vsub.f32 %v1165, %v4038
    %v4040 = vand.u32 %v4039, 4294901760
    %4041 = vmatpush1.msra.mxu0 %v4040
    %4042 = vmatprep.subr.mxu0 0.0
    %v4043 = vand.u32 %v1164, 4294901760
    %v4044 = vsub.f32 %v1164, %v4043
    %v4045 = vand.u32 %v4044, 4294901760
    %4046 = vmatpush1.msra.mxu0 %v4045
    %4047 = vmatprep.subr.mxu0 0.0
    %v4048 = vand.u32 %v1163, 4294901760
    %v4049 = vsub.f32 %v1163, %v4048
    %v4050 = vand.u32 %v4049, 4294901760
    %4051 = vmatpush1.msra.mxu0 %v4050
    %4052 = vmatprep.subr.mxu0 0.0
    %v4053 = vand.u32 %v1162, 4294901760
    %v4054 = vsub.f32 %v1162, %v4053
    %v4055 = vand.u32 %v4054, 4294901760
    %4056 = vmatpush1.msra.mxu0 %v4055
    %4057 = vmatprep.subr.mxu0 0.0
    %v4058 = vand.u32 %v1161, 4294901760
    %v4059 = vsub.f32 %v1161, %v4058
    %v4060 = vand.u32 %v4059, 4294901760
    %4061 = vmatpush1.msra.mxu0 %v4060
    %4062 = vmatprep.subr.mxu0 0.0
    %v4063 = vand.u32 %v1160, 4294901760
    %v4064 = vsub.f32 %v1160, %v4063
    %v4065 = vand.u32 %v4064, 4294901760
    %4066 = vmatpush1.msra.mxu0 %v4065
    %4067 = vmatprep.subr.mxu0 0.0
    %v4068 = vand.u32 %v1159, 4294901760
    %v4069 = vsub.f32 %v1159, %v4068
    %v4070 = vand.u32 %v4069, 4294901760
    %4071 = vmatpush1.msra.mxu0 %v4070
    %4072 = vmatprep.subr.mxu0 0.0
    %v4073 = vand.u32 %v1158, 4294901760
    %v4074 = vsub.f32 %v1158, %v4073
    %v4075 = vand.u32 %v4074, 4294901760
    %4076 = vmatpush1.msra.mxu0 %v4075
    %4077 = vmatprep.subr.mxu0 0.0
    %v4078 = vand.u32 %v1157, 4294901760
    %v4079 = vsub.f32 %v1157, %v4078
    %v4080 = vand.u32 %v4079, 4294901760
    %4081 = vmatpush1.msra.mxu0 %v4080
    %4082 = vmatprep.subr.mxu0 0.0
    %v4083 = vand.u32 %v1156, 4294901760
    %v4084 = vsub.f32 %v1156, %v4083
    %v4085 = vand.u32 %v4084, 4294901760
    %4086 = vmatpush1.msra.mxu0 %v4085
    %4087 = vmatprep.subr.mxu0 0.0
    %v4088 = vand.u32 %v1187, 4294901760
    %v4089 = vsub.f32 %v1187, %v4088
    %v4090 = vand.u32 %v4089, 4294901760
    %4091 = vmatpush2.msra.mxu0 %v4090
    %4092 = vmatprep.subr.mxu0 0.0
    %v4093 = vand.u32 %v1186, 4294901760
    %v4094 = vsub.f32 %v1186, %v4093
    %v4095 = vand.u32 %v4094, 4294901760
    %4096 = vmatpush2.msra.mxu0 %v4095
    %4097 = vmatprep.subr.mxu0 0.0
    %v4098 = vand.u32 %v1185, 4294901760
    %v4099 = vsub.f32 %v1185, %v4098
    %v4100 = vand.u32 %v4099, 4294901760
    %4101 = vmatpush2.msra.mxu0 %v4100
    %4102 = vmatprep.subr.mxu0 0.0
    %v4103 = vand.u32 %v1184, 4294901760
    %v4104 = vsub.f32 %v1184, %v4103
    %v4105 = vand.u32 %v4104, 4294901760
    %4106 = vmatpush2.msra.mxu0 %v4105
    %4107 = vmatprep.subr.mxu0 0.0
    %v4108 = vand.u32 %v1183, 4294901760
    %v4109 = vsub.f32 %v1183, %v4108
    %v4110 = vand.u32 %v4109, 4294901760
    %4111 = vmatpush2.msra.mxu0 %v4110
    %4112 = vmatprep.subr.mxu0 0.0
    %v4113 = vand.u32 %v1182, 4294901760
    %v4114 = vsub.f32 %v1182, %v4113
    %v4115 = vand.u32 %v4114, 4294901760
    %4116 = vmatpush2.msra.mxu0 %v4115
    %4117 = vmatprep.subr.mxu0 0.0
    %v4118 = vand.u32 %v1181, 4294901760
    %v4119 = vsub.f32 %v1181, %v4118
    %v4120 = vand.u32 %v4119, 4294901760
    %4121 = vmatpush2.msra.mxu0 %v4120
    %4122 = vmatprep.subr.mxu0 0.0
    %v4123 = vand.u32 %v1180, 4294901760
    %v4124 = vsub.f32 %v1180, %v4123
    %v4125 = vand.u32 %v4124, 4294901760
    %4126 = vmatpush2.msra.mxu0 %v4125
    %4127 = vmatprep.subr.mxu0 0.0
    %v4128 = vand.u32 %v1179, 4294901760
    %v4129 = vsub.f32 %v1179, %v4128
    %v4130 = vand.u32 %v4129, 4294901760
    %4131 = vmatpush2.msra.mxu0 %v4130
    %4132 = vmatprep.subr.mxu0 0.0
    %v4133 = vand.u32 %v1178, 4294901760
    %v4134 = vsub.f32 %v1178, %v4133
    %v4135 = vand.u32 %v4134, 4294901760
    %4136 = vmatpush2.msra.mxu0 %v4135
    %4137 = vmatprep.subr.mxu0 0.0
    %v4138 = vand.u32 %v1177, 4294901760
    %v4139 = vsub.f32 %v1177, %v4138
    %v4140 = vand.u32 %v4139, 4294901760
    %4141 = vmatpush2.msra.mxu0 %v4140
    %4142 = vmatprep.subr.mxu0 0.0
    %v4143 = vand.u32 %v1176, 4294901760
    %v4144 = vsub.f32 %v1176, %v4143
    %v4145 = vand.u32 %v4144, 4294901760
    %4146 = vmatpush2.msra.mxu0 %v4145
    %4147 = vmatprep.subr.mxu0 0.0
    %v4148 = vand.u32 %v1175, 4294901760
    %v4149 = vsub.f32 %v1175, %v4148
    %v4150 = vand.u32 %v4149, 4294901760
    %4151 = vmatpush2.msra.mxu0 %v4150
    %4152 = vmatprep.subr.mxu0 0.0
    %v4153 = vand.u32 %v1174, 4294901760
    %v4154 = vsub.f32 %v1174, %v4153
    %v4155 = vand.u32 %v4154, 4294901760
    %4156 = vmatpush2.msra.mxu0 %v4155
    %4157 = vmatprep.subr.mxu0 0.0
    %v4158 = vand.u32 %v1173, 4294901760
    %v4159 = vsub.f32 %v1173, %v4158
    %v4160 = vand.u32 %v4159, 4294901760
    %4161 = vmatpush2.msra.mxu0 %v4160
    %4162 = vmatprep.subr.mxu0 0.0
    %v4163 = vand.u32 %v1172, 4294901760
    %v4164 = vsub.f32 %v1172, %v4163
    %v4165 = vand.u32 %v4164, 4294901760
    %4166 = vmatpush2.msra.mxu0 %v4165
    %v4167 = vand.u32 %v1690, 4294901760
    %4168 = vmatprep.mubr.f32.mxu0 %v4167
    %v4169 = vand.u32 %v1688, 4294901760
    %4170 = vmatmul.mubr.f32.gmra.mxu0 %v4169
    %v4171 = vpop.f32.mrf.mxu0
    %v4172 = vadd.f32 %v4004, %v4171
    %v4173 = vpop.f32.mrf.mxu0
    %4174 = vdwg.mxu0
    %4175 = vmatprep.subr.mxu0 0.0
    %v4176 = vand.u32 %v1171, 4294901760
    %4177 = vmatpush1.msra.mxu0 %v4176
    %4178 = vmatprep.subr.mxu0 0.0
    %v4179 = vand.u32 %v1170, 4294901760
    %4180 = vmatpush1.msra.mxu0 %v4179
    %4181 = vmatprep.subr.mxu0 0.0
    %v4182 = vand.u32 %v1169, 4294901760
    %4183 = vmatpush1.msra.mxu0 %v4182
    %4184 = vmatprep.subr.mxu0 0.0
    %v4185 = vand.u32 %v1168, 4294901760
    %4186 = vmatpush1.msra.mxu0 %v4185
    %4187 = vmatprep.subr.mxu0 0.0
    %v4188 = vand.u32 %v1167, 4294901760
    %4189 = vmatpush1.msra.mxu0 %v4188
    %4190 = vmatprep.subr.mxu0 0.0
    %v4191 = vand.u32 %v1166, 4294901760
    %4192 = vmatpush1.msra.mxu0 %v4191
    %4193 = vmatprep.subr.mxu0 0.0
    %v4194 = vand.u32 %v1165, 4294901760
    %4195 = vmatpush1.msra.mxu0 %v4194
    %4196 = vmatprep.subr.mxu0 0.0
    %v4197 = vand.u32 %v1164, 4294901760
    %4198 = vmatpush1.msra.mxu0 %v4197
    %4199 = vmatprep.subr.mxu0 0.0
    %v4200 = vand.u32 %v1163, 4294901760
    %4201 = vmatpush1.msra.mxu0 %v4200
    %4202 = vmatprep.subr.mxu0 0.0
    %v4203 = vand.u32 %v1162, 4294901760
    %4204 = vmatpush1.msra.mxu0 %v4203
    %4205 = vmatprep.subr.mxu0 0.0
    %v4206 = vand.u32 %v1161, 4294901760
    %4207 = vmatpush1.msra.mxu0 %v4206
    %4208 = vmatprep.subr.mxu0 0.0
    %v4209 = vand.u32 %v1160, 4294901760
    %4210 = vmatpush1.msra.mxu0 %v4209
    %4211 = vmatprep.subr.mxu0 0.0
    %v4212 = vand.u32 %v1159, 4294901760
    %4213 = vmatpush1.msra.mxu0 %v4212
    %4214 = vmatprep.subr.mxu0 0.0
    %v4215 = vand.u32 %v1158, 4294901760
    %4216 = vmatpush1.msra.mxu0 %v4215
    %4217 = vmatprep.subr.mxu0 0.0
    %v4218 = vand.u32 %v1157, 4294901760
    %4219 = vmatpush1.msra.mxu0 %v4218
    %4220 = vmatprep.subr.mxu0 0.0
    %v4221 = vand.u32 %v1156, 4294901760
    %4222 = vmatpush1.msra.mxu0 %v4221
    %4223 = vmatprep.subr.mxu0 0.0
    %v4224 = vand.u32 %v1187, 4294901760
    %4225 = vmatpush2.msra.mxu0 %v4224
    %4226 = vmatprep.subr.mxu0 0.0
    %v4227 = vand.u32 %v1186, 4294901760
    %4228 = vmatpush2.msra.mxu0 %v4227
    %4229 = vmatprep.subr.mxu0 0.0
    %v4230 = vand.u32 %v1185, 4294901760
    %4231 = vmatpush2.msra.mxu0 %v4230
    %4232 = vmatprep.subr.mxu0 0.0
    %v4233 = vand.u32 %v1184, 4294901760
    %4234 = vmatpush2.msra.mxu0 %v4233
    %4235 = vmatprep.subr.mxu0 0.0
    %v4236 = vand.u32 %v1183, 4294901760
    %4237 = vmatpush2.msra.mxu0 %v4236
    %4238 = vmatprep.subr.mxu0 0.0
    %v4239 = vand.u32 %v1182, 4294901760
    %4240 = vmatpush2.msra.mxu0 %v4239
    %4241 = vmatprep.subr.mxu0 0.0
    %v4242 = vand.u32 %v1181, 4294901760
    %4243 = vmatpush2.msra.mxu0 %v4242
    %4244 = vmatprep.subr.mxu0 0.0
    %v4245 = vand.u32 %v1180, 4294901760
    %4246 = vmatpush2.msra.mxu0 %v4245
    %4247 = vmatprep.subr.mxu0 0.0
    %v4248 = vand.u32 %v1179, 4294901760
    %4249 = vmatpush2.msra.mxu0 %v4248
    %4250 = vmatprep.subr.mxu0 0.0
    %v4251 = vand.u32 %v1178, 4294901760
    %4252 = vmatpush2.msra.mxu0 %v4251
    %4253 = vmatprep.subr.mxu0 0.0
    %v4254 = vand.u32 %v1177, 4294901760
    %4255 = vmatpush2.msra.mxu0 %v4254
    %4256 = vmatprep.subr.mxu0 0.0
    %v4257 = vand.u32 %v1176, 4294901760
    %4258 = vmatpush2.msra.mxu0 %v4257
    %4259 = vmatprep.subr.mxu0 0.0
    %v4260 = vand.u32 %v1175, 4294901760
    %4261 = vmatpush2.msra.mxu0 %v4260
    %4262 = vmatprep.subr.mxu0 0.0
    %v4263 = vand.u32 %v1174, 4294901760
    %4264 = vmatpush2.msra.mxu0 %v4263
    %4265 = vmatprep.subr.mxu0 0.0
    %v4266 = vand.u32 %v1173, 4294901760
    %4267 = vmatpush2.msra.mxu0 %v4266
    %4268 = vmatprep.subr.mxu0 0.0
    %v4269 = vand.u32 %v1172, 4294901760
    %4270 = vmatpush2.msra.mxu0 %v4269
    %v4271 = vand.u32 %v1690, 4294901760
    %4272 = vmatprep.mubr.f32.mxu0 %v4271
    %v4273 = vand.u32 %v1688, 4294901760
    %4274 = vmatmul.mubr.f32.gmra.mxu0 %v4273
    %v4275 = vpop.f32.mrf.mxu0
    %v4276 = vadd.f32 %v4172, %v4275
    %v4277 = vpop.f32.mrf.mxu0
    %4278 = vdwg.mxu0
    %4279 = vmatprep.subr.mxu0 0.0
    %4280 = vmatpush1.msra.mxu0 0.0
    %4281 = vmatprep.subr.mxu0 0.0
    %4282 = vmatpush1.msra.mxu0 0.0
    %4283 = vmatprep.subr.mxu0 0.0
    %4284 = vmatpush1.msra.mxu0 0.0
    %4285 = vmatprep.subr.mxu0 0.0
    %4286 = vmatpush1.msra.mxu0 0.0
    %4287 = vmatprep.subr.mxu0 0.0
    %4288 = vmatpush1.msra.mxu0 0.0
    %4289 = vmatprep.subr.mxu0 0.0
    %4290 = vmatpush1.msra.mxu0 0.0
    %4291 = vmatprep.subr.mxu0 0.0
    %4292 = vmatpush1.msra.mxu0 0.0
    %4293 = vmatprep.subr.mxu0 0.0
    %4294 = vmatpush1.msra.mxu0 0.0
    %4295 = vmatprep.subr.mxu0 0.0
    %4296 = vmatpush1.msra.mxu0 0.0
    %4297 = vmatprep.subr.mxu0 0.0
    %4298 = vmatpush1.msra.mxu0 0.0
    %4299 = vmatprep.subr.mxu0 0.0
    %4300 = vmatpush1.msra.mxu0 0.0
    %4301 = vmatprep.subr.mxu0 0.0
    %4302 = vmatpush1.msra.mxu0 0.0
    %4303 = vmatprep.subr.mxu0 0.0
    %4304 = vmatpush1.msra.mxu0 0.0
    %4305 = vmatprep.subr.mxu0 0.0
    %4306 = vmatpush1.msra.mxu0 0.0
    %4307 = vmatprep.subr.mxu0 0.0
    %v4308 = vand.u32 %v1189, 4294901760
    %4309 = vmatpush1.msra.mxu0 %v4308
    %4310 = vmatprep.subr.mxu0 0.0
    %v4311 = vand.u32 %v1188, 4294901760
    %4312 = vmatpush1.msra.mxu0 %v4311
    %4313 = vmatprep.subr.mxu0 0.0
    %4314 = vmatpush2.msra.mxu0 0.0
    %4315 = vmatprep.subr.mxu0 0.0
    %4316 = vmatpush2.msra.mxu0 0.0
    %4317 = vmatprep.subr.mxu0 0.0
    %4318 = vmatpush2.msra.mxu0 0.0
    %4319 = vmatprep.subr.mxu0 0.0
    %4320 = vmatpush2.msra.mxu0 0.0
    %4321 = vmatprep.subr.mxu0 0.0
    %4322 = vmatpush2.msra.mxu0 0.0
    %4323 = vmatprep.subr.mxu0 0.0
    %4324 = vmatpush2.msra.mxu0 0.0
    %4325 = vmatprep.subr.mxu0 0.0
    %4326 = vmatpush2.msra.mxu0 0.0
    %4327 = vmatprep.subr.mxu0 0.0
    %4328 = vmatpush2.msra.mxu0 0.0
    %4329 = vmatprep.subr.mxu0 0.0
    %4330 = vmatpush2.msra.mxu0 0.0
    %4331 = vmatprep.subr.mxu0 0.0
    %4332 = vmatpush2.msra.mxu0 0.0
    %4333 = vmatprep.subr.mxu0 0.0
    %4334 = vmatpush2.msra.mxu0 0.0
    %4335 = vmatprep.subr.mxu0 0.0
    %4336 = vmatpush2.msra.mxu0 0.0
    %4337 = vmatprep.subr.mxu0 0.0
    %4338 = vmatpush2.msra.mxu0 0.0
    %4339 = vmatprep.subr.mxu0 0.0
    %4340 = vmatpush2.msra.mxu0 0.0
    %4341 = vmatprep.subr.mxu0 0.0
    %4342 = vmatpush2.msra.mxu0 0.0
    %4343 = vmatprep.subr.mxu0 0.0
    %4344 = vmatpush2.msra.mxu0 0.0
    %4345 = vmatprep.mubr.f32.mxu0 0.0
    %v4346 = vand.u32 %v1691, 4294901760
    %v4347 = vsub.f32 %v1691, %v4346
    %v4348 = vand.u32 %v4347, 4294901760
    %v4349 = vsub.f32 %v4347, %v4348
    %v4350 = vand.u32 %v4349, 4294901760
    %4351 = vmatmul.mubr.f32.gmra.mxu0 %v4350
    %v4352 = vpop.f32.mrf.mxu0
    %v4353 = vadd.f32 %v4276, %v4352
    %v4354 = vpop.f32.mrf.mxu0
    %4355 = vdwg.mxu0
    %4356 = vmatprep.subr.mxu0 0.0
    %4357 = vmatpush1.msra.mxu0 0.0
    %4358 = vmatprep.subr.mxu0 0.0
    %4359 = vmatpush1.msra.mxu0 0.0
    %4360 = vmatprep.subr.mxu0 0.0
    %4361 = vmatpush1.msra.mxu0 0.0
    %4362 = vmatprep.subr.mxu0 0.0
    %4363 = vmatpush1.msra.mxu0 0.0
    %4364 = vmatprep.subr.mxu0 0.0
    %4365 = vmatpush1.msra.mxu0 0.0
    %4366 = vmatprep.subr.mxu0 0.0
    %4367 = vmatpush1.msra.mxu0 0.0
    %4368 = vmatprep.subr.mxu0 0.0
    %4369 = vmatpush1.msra.mxu0 0.0
    %4370 = vmatprep.subr.mxu0 0.0
    %4371 = vmatpush1.msra.mxu0 0.0
    %4372 = vmatprep.subr.mxu0 0.0
    %4373 = vmatpush1.msra.mxu0 0.0
    %4374 = vmatprep.subr.mxu0 0.0
    %4375 = vmatpush1.msra.mxu0 0.0
    %4376 = vmatprep.subr.mxu0 0.0
    %4377 = vmatpush1.msra.mxu0 0.0
    %4378 = vmatprep.subr.mxu0 0.0
    %4379 = vmatpush1.msra.mxu0 0.0
    %4380 = vmatprep.subr.mxu0 0.0
    %4381 = vmatpush1.msra.mxu0 0.0
    %4382 = vmatprep.subr.mxu0 0.0
    %4383 = vmatpush1.msra.mxu0 0.0
    %4384 = vmatprep.subr.mxu0 0.0
    %v4385 = vand.u32 %v1189, 4294901760
    %v4386 = vsub.f32 %v1189, %v4385
    %v4387 = vand.u32 %v4386, 4294901760
    %v4388 = vsub.f32 %v4386, %v4387
    %v4389 = vand.u32 %v4388, 4294901760
    %4390 = vmatpush1.msra.mxu0 %v4389
    %4391 = vmatprep.subr.mxu0 0.0
    %v4392 = vand.u32 %v1188, 4294901760
    %v4393 = vsub.f32 %v1188, %v4392
    %v4394 = vand.u32 %v4393, 4294901760
    %v4395 = vsub.f32 %v4393, %v4394
    %v4396 = vand.u32 %v4395, 4294901760
    %4397 = vmatpush1.msra.mxu0 %v4396
    %4398 = vmatprep.subr.mxu0 0.0
    %4399 = vmatpush2.msra.mxu0 0.0
    %4400 = vmatprep.subr.mxu0 0.0
    %4401 = vmatpush2.msra.mxu0 0.0
    %4402 = vmatprep.subr.mxu0 0.0
    %4403 = vmatpush2.msra.mxu0 0.0
    %4404 = vmatprep.subr.mxu0 0.0
    %4405 = vmatpush2.msra.mxu0 0.0
    %4406 = vmatprep.subr.mxu0 0.0
    %4407 = vmatpush2.msra.mxu0 0.0
    %4408 = vmatprep.subr.mxu0 0.0
    %4409 = vmatpush2.msra.mxu0 0.0
    %4410 = vmatprep.subr.mxu0 0.0
    %4411 = vmatpush2.msra.mxu0 0.0
    %4412 = vmatprep.subr.mxu0 0.0
    %4413 = vmatpush2.msra.mxu0 0.0
    %4414 = vmatprep.subr.mxu0 0.0
    %4415 = vmatpush2.msra.mxu0 0.0
    %4416 = vmatprep.subr.mxu0 0.0
    %4417 = vmatpush2.msra.mxu0 0.0
    %4418 = vmatprep.subr.mxu0 0.0
    %4419 = vmatpush2.msra.mxu0 0.0
    %4420 = vmatprep.subr.mxu0 0.0
    %4421 = vmatpush2.msra.mxu0 0.0
    %4422 = vmatprep.subr.mxu0 0.0
    %4423 = vmatpush2.msra.mxu0 0.0
    %4424 = vmatprep.subr.mxu0 0.0
    %4425 = vmatpush2.msra.mxu0 0.0
    %4426 = vmatprep.subr.mxu0 0.0
    %4427 = vmatpush2.msra.mxu0 0.0
    %4428 = vmatprep.subr.mxu0 0.0
    %4429 = vmatpush2.msra.mxu0 0.0
    %4430 = vmatprep.mubr.f32.mxu0 0.0
    %v4431 = vand.u32 %v1691, 4294901760
    %4432 = vmatmul.mubr.f32.gmra.mxu0 %v4431
    %v4433 = vpop.f32.mrf.mxu0
    %v4434 = vadd.f32 %v4353, %v4433
    %v4435 = vpop.f32.mrf.mxu0
    %4436 = vdwg.mxu0
    %4437 = vmatprep.subr.mxu0 0.0
    %4438 = vmatpush1.msra.mxu0 0.0
    %4439 = vmatprep.subr.mxu0 0.0
    %4440 = vmatpush1.msra.mxu0 0.0
    %4441 = vmatprep.subr.mxu0 0.0
    %4442 = vmatpush1.msra.mxu0 0.0
    %4443 = vmatprep.subr.mxu0 0.0
    %4444 = vmatpush1.msra.mxu0 0.0
    %4445 = vmatprep.subr.mxu0 0.0
    %4446 = vmatpush1.msra.mxu0 0.0
    %4447 = vmatprep.subr.mxu0 0.0
    %4448 = vmatpush1.msra.mxu0 0.0
    %4449 = vmatprep.subr.mxu0 0.0
    %4450 = vmatpush1.msra.mxu0 0.0
    %4451 = vmatprep.subr.mxu0 0.0
    %4452 = vmatpush1.msra.mxu0 0.0
    %4453 = vmatprep.subr.mxu0 0.0
    %4454 = vmatpush1.msra.mxu0 0.0
    %4455 = vmatprep.subr.mxu0 0.0
    %4456 = vmatpush1.msra.mxu0 0.0
    %4457 = vmatprep.subr.mxu0 0.0
    %4458 = vmatpush1.msra.mxu0 0.0
    %4459 = vmatprep.subr.mxu0 0.0
    %4460 = vmatpush1.msra.mxu0 0.0
    %4461 = vmatprep.subr.mxu0 0.0
    %4462 = vmatpush1.msra.mxu0 0.0
    %4463 = vmatprep.subr.mxu0 0.0
    %4464 = vmatpush1.msra.mxu0 0.0
    %4465 = vmatprep.subr.mxu0 0.0
    %v4466 = vand.u32 %v1189, 4294901760
    %v4467 = vsub.f32 %v1189, %v4466
    %4468 = vmatpush1.msra.mxu0 %v4467
    %4469 = vmatprep.subr.mxu0 0.0
    %v4470 = vand.u32 %v1188, 4294901760
    %v4471 = vsub.f32 %v1188, %v4470
    %4472 = vmatpush1.msra.mxu0 %v4471
    %4473 = vmatprep.subr.mxu0 0.0
    %4474 = vmatpush2.msra.mxu0 0.0
    %4475 = vmatprep.subr.mxu0 0.0
    %4476 = vmatpush2.msra.mxu0 0.0
    %4477 = vmatprep.subr.mxu0 0.0
    %4478 = vmatpush2.msra.mxu0 0.0
    %4479 = vmatprep.subr.mxu0 0.0
    %4480 = vmatpush2.msra.mxu0 0.0
    %4481 = vmatprep.subr.mxu0 0.0
    %4482 = vmatpush2.msra.mxu0 0.0
    %4483 = vmatprep.subr.mxu0 0.0
    %4484 = vmatpush2.msra.mxu0 0.0
    %4485 = vmatprep.subr.mxu0 0.0
    %4486 = vmatpush2.msra.mxu0 0.0
    %4487 = vmatprep.subr.mxu0 0.0
    %4488 = vmatpush2.msra.mxu0 0.0
    %4489 = vmatprep.subr.mxu0 0.0
    %4490 = vmatpush2.msra.mxu0 0.0
    %4491 = vmatprep.subr.mxu0 0.0
    %4492 = vmatpush2.msra.mxu0 0.0
    %4493 = vmatprep.subr.mxu0 0.0
    %4494 = vmatpush2.msra.mxu0 0.0
    %4495 = vmatprep.subr.mxu0 0.0
    %4496 = vmatpush2.msra.mxu0 0.0
    %4497 = vmatprep.subr.mxu0 0.0
    %4498 = vmatpush2.msra.mxu0 0.0
    %4499 = vmatprep.subr.mxu0 0.0
    %4500 = vmatpush2.msra.mxu0 0.0
    %4501 = vmatprep.subr.mxu0 0.0
    %4502 = vmatpush2.msra.mxu0 0.0
    %4503 = vmatprep.subr.mxu0 0.0
    %4504 = vmatpush2.msra.mxu0 0.0
    %4505 = vmatprep.mubr.f32.mxu0 0.0
    %v4506 = vand.u32 %v1691, 4294901760
    %v4507 = vsub.f32 %v1691, %v4506
    %4508 = vmatmul.mubr.f32.gmra.mxu0 %v4507
    %v4509 = vpop.f32.mrf.mxu0
    %v4510 = vadd.f32 %v4434, %v4509
    %v4511 = vpop.f32.mrf.mxu0
    %4512 = vdwg.mxu0
    %4513 = vmatprep.subr.mxu0 0.0
    %4514 = vmatpush1.msra.mxu0 0.0
    %4515 = vmatprep.subr.mxu0 0.0
    %4516 = vmatpush1.msra.mxu0 0.0
    %4517 = vmatprep.subr.mxu0 0.0
    %4518 = vmatpush1.msra.mxu0 0.0
    %4519 = vmatprep.subr.mxu0 0.0
    %4520 = vmatpush1.msra.mxu0 0.0
    %4521 = vmatprep.subr.mxu0 0.0
    %4522 = vmatpush1.msra.mxu0 0.0
    %4523 = vmatprep.subr.mxu0 0.0
    %4524 = vmatpush1.msra.mxu0 0.0
    %4525 = vmatprep.subr.mxu0 0.0
    %4526 = vmatpush1.msra.mxu0 0.0
    %4527 = vmatprep.subr.mxu0 0.0
    %4528 = vmatpush1.msra.mxu0 0.0
    %4529 = vmatprep.subr.mxu0 0.0
    %4530 = vmatpush1.msra.mxu0 0.0
    %4531 = vmatprep.subr.mxu0 0.0
    %4532 = vmatpush1.msra.mxu0 0.0
    %4533 = vmatprep.subr.mxu0 0.0
    %4534 = vmatpush1.msra.mxu0 0.0
    %4535 = vmatprep.subr.mxu0 0.0
    %4536 = vmatpush1.msra.mxu0 0.0
    %4537 = vmatprep.subr.mxu0 0.0
    %4538 = vmatpush1.msra.mxu0 0.0
    %4539 = vmatprep.subr.mxu0 0.0
    %4540 = vmatpush1.msra.mxu0 0.0
    %4541 = vmatprep.subr.mxu0 0.0
    %v4542 = vand.u32 %v1189, 4294901760
    %4543 = vmatpush1.msra.mxu0 %v4542
    %4544 = vmatprep.subr.mxu0 0.0
    %v4545 = vand.u32 %v1188, 4294901760
    %4546 = vmatpush1.msra.mxu0 %v4545
    %4547 = vmatprep.subr.mxu0 0.0
    %4548 = vmatpush2.msra.mxu0 0.0
    %4549 = vmatprep.subr.mxu0 0.0
    %4550 = vmatpush2.msra.mxu0 0.0
    %4551 = vmatprep.subr.mxu0 0.0
    %4552 = vmatpush2.msra.mxu0 0.0
    %4553 = vmatprep.subr.mxu0 0.0
    %4554 = vmatpush2.msra.mxu0 0.0
    %4555 = vmatprep.subr.mxu0 0.0
    %4556 = vmatpush2.msra.mxu0 0.0
    %4557 = vmatprep.subr.mxu0 0.0
    %4558 = vmatpush2.msra.mxu0 0.0
    %4559 = vmatprep.subr.mxu0 0.0
    %4560 = vmatpush2.msra.mxu0 0.0
    %4561 = vmatprep.subr.mxu0 0.0
    %4562 = vmatpush2.msra.mxu0 0.0
    %4563 = vmatprep.subr.mxu0 0.0
    %4564 = vmatpush2.msra.mxu0 0.0
    %4565 = vmatprep.subr.mxu0 0.0
    %4566 = vmatpush2.msra.mxu0 0.0
    %4567 = vmatprep.subr.mxu0 0.0
    %4568 = vmatpush2.msra.mxu0 0.0
    %4569 = vmatprep.subr.mxu0 0.0
    %4570 = vmatpush2.msra.mxu0 0.0
    %4571 = vmatprep.subr.mxu0 0.0
    %4572 = vmatpush2.msra.mxu0 0.0
    %4573 = vmatprep.subr.mxu0 0.0
    %4574 = vmatpush2.msra.mxu0 0.0
    %4575 = vmatprep.subr.mxu0 0.0
    %4576 = vmatpush2.msra.mxu0 0.0
    %4577 = vmatprep.subr.mxu0 0.0
    %4578 = vmatpush2.msra.mxu0 0.0
    %4579 = vmatprep.mubr.f32.mxu0 0.0
    %v4580 = vand.u32 %v1691, 4294901760
    %v4581 = vsub.f32 %v1691, %v4580
    %v4582 = vand.u32 %v4581, 4294901760
    %4583 = vmatmul.mubr.f32.gmra.mxu0 %v4582
    %v4584 = vpop.f32.mrf.mxu0
    %v4585 = vadd.f32 %v4510, %v4584
    %v4586 = vpop.f32.mrf.mxu0
    %4587 = vdwg.mxu0
    %4588 = vmatprep.subr.mxu0 0.0
    %4589 = vmatpush1.msra.mxu0 0.0
    %4590 = vmatprep.subr.mxu0 0.0
    %4591 = vmatpush1.msra.mxu0 0.0
    %4592 = vmatprep.subr.mxu0 0.0
    %4593 = vmatpush1.msra.mxu0 0.0
    %4594 = vmatprep.subr.mxu0 0.0
    %4595 = vmatpush1.msra.mxu0 0.0
    %4596 = vmatprep.subr.mxu0 0.0
    %4597 = vmatpush1.msra.mxu0 0.0
    %4598 = vmatprep.subr.mxu0 0.0
    %4599 = vmatpush1.msra.mxu0 0.0
    %4600 = vmatprep.subr.mxu0 0.0
    %4601 = vmatpush1.msra.mxu0 0.0
    %4602 = vmatprep.subr.mxu0 0.0
    %4603 = vmatpush1.msra.mxu0 0.0
    %4604 = vmatprep.subr.mxu0 0.0
    %4605 = vmatpush1.msra.mxu0 0.0
    %4606 = vmatprep.subr.mxu0 0.0
    %4607 = vmatpush1.msra.mxu0 0.0
    %4608 = vmatprep.subr.mxu0 0.0
    %4609 = vmatpush1.msra.mxu0 0.0
    %4610 = vmatprep.subr.mxu0 0.0
    %4611 = vmatpush1.msra.mxu0 0.0
    %4612 = vmatprep.subr.mxu0 0.0
    %4613 = vmatpush1.msra.mxu0 0.0
    %4614 = vmatprep.subr.mxu0 0.0
    %4615 = vmatpush1.msra.mxu0 0.0
    %4616 = vmatprep.subr.mxu0 0.0
    %v4617 = vand.u32 %v1189, 4294901760
    %v4618 = vsub.f32 %v1189, %v4617
    %v4619 = vand.u32 %v4618, 4294901760
    %4620 = vmatpush1.msra.mxu0 %v4619
    %4621 = vmatprep.subr.mxu0 0.0
    %v4622 = vand.u32 %v1188, 4294901760
    %v4623 = vsub.f32 %v1188, %v4622
    %v4624 = vand.u32 %v4623, 4294901760
    %4625 = vmatpush1.msra.mxu0 %v4624
    %4626 = vmatprep.subr.mxu0 0.0
    %4627 = vmatpush2.msra.mxu0 0.0
    %4628 = vmatprep.subr.mxu0 0.0
    %4629 = vmatpush2.msra.mxu0 0.0
    %4630 = vmatprep.subr.mxu0 0.0
    %4631 = vmatpush2.msra.mxu0 0.0
    %4632 = vmatprep.subr.mxu0 0.0
    %4633 = vmatpush2.msra.mxu0 0.0
    %4634 = vmatprep.subr.mxu0 0.0
    %4635 = vmatpush2.msra.mxu0 0.0
    %4636 = vmatprep.subr.mxu0 0.0
    %4637 = vmatpush2.msra.mxu0 0.0
    %4638 = vmatprep.subr.mxu0 0.0
    %4639 = vmatpush2.msra.mxu0 0.0
    %4640 = vmatprep.subr.mxu0 0.0
    %4641 = vmatpush2.msra.mxu0 0.0
    %4642 = vmatprep.subr.mxu0 0.0
    %4643 = vmatpush2.msra.mxu0 0.0
    %4644 = vmatprep.subr.mxu0 0.0
    %4645 = vmatpush2.msra.mxu0 0.0
    %4646 = vmatprep.subr.mxu0 0.0
    %4647 = vmatpush2.msra.mxu0 0.0
    %4648 = vmatprep.subr.mxu0 0.0
    %4649 = vmatpush2.msra.mxu0 0.0
    %4650 = vmatprep.subr.mxu0 0.0
    %4651 = vmatpush2.msra.mxu0 0.0
    %4652 = vmatprep.subr.mxu0 0.0
    %4653 = vmatpush2.msra.mxu0 0.0
    %4654 = vmatprep.subr.mxu0 0.0
    %4655 = vmatpush2.msra.mxu0 0.0
    %4656 = vmatprep.subr.mxu0 0.0
    %4657 = vmatpush2.msra.mxu0 0.0
    %4658 = vmatprep.mubr.f32.mxu0 0.0
    %v4659 = vand.u32 %v1691, 4294901760
    %4660 = vmatmul.mubr.f32.gmra.mxu0 %v4659
    %v4661 = vpop.f32.mrf.mxu0
    %v4662 = vadd.f32 %v4585, %v4661
    %v4663 = vpop.f32.mrf.mxu0
    %4664 = vdwg.mxu0
    %4665 = vmatprep.subr.mxu0 0.0
    %4666 = vmatpush1.msra.mxu0 0.0
    %4667 = vmatprep.subr.mxu0 0.0
    %4668 = vmatpush1.msra.mxu0 0.0
    %4669 = vmatprep.subr.mxu0 0.0
    %4670 = vmatpush1.msra.mxu0 0.0
    %4671 = vmatprep.subr.mxu0 0.0
    %4672 = vmatpush1.msra.mxu0 0.0
    %4673 = vmatprep.subr.mxu0 0.0
    %4674 = vmatpush1.msra.mxu0 0.0
    %4675 = vmatprep.subr.mxu0 0.0
    %4676 = vmatpush1.msra.mxu0 0.0
    %4677 = vmatprep.subr.mxu0 0.0
    %4678 = vmatpush1.msra.mxu0 0.0
    %4679 = vmatprep.subr.mxu0 0.0
    %4680 = vmatpush1.msra.mxu0 0.0
    %4681 = vmatprep.subr.mxu0 0.0
    %4682 = vmatpush1.msra.mxu0 0.0
    %4683 = vmatprep.subr.mxu0 0.0
    %4684 = vmatpush1.msra.mxu0 0.0
    %4685 = vmatprep.subr.mxu0 0.0
    %4686 = vmatpush1.msra.mxu0 0.0
    %4687 = vmatprep.subr.mxu0 0.0
    %4688 = vmatpush1.msra.mxu0 0.0
    %4689 = vmatprep.subr.mxu0 0.0
    %4690 = vmatpush1.msra.mxu0 0.0
    %4691 = vmatprep.subr.mxu0 0.0
    %4692 = vmatpush1.msra.mxu0 0.0
    %4693 = vmatprep.subr.mxu0 0.0
    %v4694 = vand.u32 %v1189, 4294901760
    %4695 = vmatpush1.msra.mxu0 %v4694
    %4696 = vmatprep.subr.mxu0 0.0
    %v4697 = vand.u32 %v1188, 4294901760
    %4698 = vmatpush1.msra.mxu0 %v4697
    %4699 = vmatprep.subr.mxu0 0.0
    %4700 = vmatpush2.msra.mxu0 0.0
    %4701 = vmatprep.subr.mxu0 0.0
    %4702 = vmatpush2.msra.mxu0 0.0
    %4703 = vmatprep.subr.mxu0 0.0
    %4704 = vmatpush2.msra.mxu0 0.0
    %4705 = vmatprep.subr.mxu0 0.0
    %4706 = vmatpush2.msra.mxu0 0.0
    %4707 = vmatprep.subr.mxu0 0.0
    %4708 = vmatpush2.msra.mxu0 0.0
    %4709 = vmatprep.subr.mxu0 0.0
    %4710 = vmatpush2.msra.mxu0 0.0
    %4711 = vmatprep.subr.mxu0 0.0
    %4712 = vmatpush2.msra.mxu0 0.0
    %4713 = vmatprep.subr.mxu0 0.0
    %4714 = vmatpush2.msra.mxu0 0.0
    %4715 = vmatprep.subr.mxu0 0.0
    %4716 = vmatpush2.msra.mxu0 0.0
    %4717 = vmatprep.subr.mxu0 0.0
    %4718 = vmatpush2.msra.mxu0 0.0
    %4719 = vmatprep.subr.mxu0 0.0
    %4720 = vmatpush2.msra.mxu0 0.0
    %4721 = vmatprep.subr.mxu0 0.0
    %4722 = vmatpush2.msra.mxu0 0.0
    %4723 = vmatprep.subr.mxu0 0.0
    %4724 = vmatpush2.msra.mxu0 0.0
    %4725 = vmatprep.subr.mxu0 0.0
    %4726 = vmatpush2.msra.mxu0 0.0
    %4727 = vmatprep.subr.mxu0 0.0
    %4728 = vmatpush2.msra.mxu0 0.0
    %4729 = vmatprep.subr.mxu0 0.0
    %4730 = vmatpush2.msra.mxu0 0.0
    %4731 = vmatprep.mubr.f32.mxu0 0.0
    %v4732 = vand.u32 %v1691, 4294901760
    %4733 = vmatmul.mubr.f32.gmra.mxu0 %v4732
    %v4734 = vpop.f32.mrf.mxu0
    %v4735 = vadd.f32 %v4662, %v4734
    %v4736 = vpop.f32.mrf.mxu0
    %4737 = vdwg.mxu0
    %v4738 = vmul.f32 %v4735, 0.00390625
    %v4739 = vadd.f32 %v4738, %v1190
    %vm4740 = vcmask 385024
    %4741 = vst.msk [vmem:[#allocation2] sm:$0x1] %vm4740, %v4739
    %4742 = vmatprep.subr.mxu0 0.0
    %4743 = vmatpush1.msra.mxu0 0.0
    %4744 = vmatprep.subr.mxu0 0.0
    %4745 = vmatpush1.msra.mxu0 0.0
    %4746 = vmatprep.subr.mxu0 0.0
    %4747 = vmatpush1.msra.mxu0 0.0
    %4748 = vmatprep.subr.mxu0 0.0
    %4749 = vmatpush1.msra.mxu0 0.0
    %4750 = vmatprep.subr.mxu0 0.0
    %4751 = vmatpush1.msra.mxu0 0.0
    %4752 = vmatprep.subr.mxu0 0.0
    %4753 = vmatpush1.msra.mxu0 0.0
    %4754 = vmatprep.subr.mxu0 0.0
    %4755 = vmatpush1.msra.mxu0 0.0
    %4756 = vmatprep.subr.mxu0 0.0
    %4757 = vmatpush1.msra.mxu0 0.0
    %4758 = vmatprep.subr.mxu0 0.0
    %4759 = vmatpush1.msra.mxu0 0.0
    %4760 = vmatprep.subr.mxu0 0.0
    %4761 = vmatpush1.msra.mxu0 0.0
    %4762 = vmatprep.subr.mxu0 0.0
    %4763 = vmatpush1.msra.mxu0 0.0
    %4764 = vmatprep.subr.mxu0 0.0
    %4765 = vmatpush1.msra.mxu0 0.0
    %4766 = vmatprep.subr.mxu0 0.0
    %4767 = vmatpush1.msra.mxu0 0.0
    %4768 = vmatprep.subr.mxu0 0.0
    %4769 = vmatpush1.msra.mxu0 0.0
    %4770 = vmatprep.subr.mxu0 0.0
    %v4771 = vand.u32 %v1088, 4294901760
    %4772 = vmatpush1.msra.mxu0 %v4771
    %4773 = vmatprep.subr.mxu0 0.0
    %v4774 = vand.u32 %v1081, 4294901760
    %4775 = vmatpush1.msra.mxu0 %v4774
    %4776 = vmatprep.subr.mxu0 0.0
    %4777 = vmatpush2.msra.mxu0 0.0
    %4778 = vmatprep.subr.mxu0 0.0
    %4779 = vmatpush2.msra.mxu0 0.0
    %4780 = vmatprep.subr.mxu0 0.0
    %4781 = vmatpush2.msra.mxu0 0.0
    %4782 = vmatprep.subr.mxu0 0.0
    %4783 = vmatpush2.msra.mxu0 0.0
    %4784 = vmatprep.subr.mxu0 0.0
    %4785 = vmatpush2.msra.mxu0 0.0
    %4786 = vmatprep.subr.mxu0 0.0
    %4787 = vmatpush2.msra.mxu0 0.0
    %4788 = vmatprep.subr.mxu0 0.0
    %4789 = vmatpush2.msra.mxu0 0.0
    %4790 = vmatprep.subr.mxu0 0.0
    %4791 = vmatpush2.msra.mxu0 0.0
    %4792 = vmatprep.subr.mxu0 0.0
    %4793 = vmatpush2.msra.mxu0 0.0
    %4794 = vmatprep.subr.mxu0 0.0
    %4795 = vmatpush2.msra.mxu0 0.0
    %4796 = vmatprep.subr.mxu0 0.0
    %4797 = vmatpush2.msra.mxu0 0.0
    %4798 = vmatprep.subr.mxu0 0.0
    %4799 = vmatpush2.msra.mxu0 0.0
    %4800 = vmatprep.subr.mxu0 0.0
    %4801 = vmatpush2.msra.mxu0 0.0
    %4802 = vmatprep.subr.mxu0 0.0
    %4803 = vmatpush2.msra.mxu0 0.0
    %4804 = vmatprep.subr.mxu0 0.0
    %4805 = vmatpush2.msra.mxu0 0.0
    %4806 = vmatprep.subr.mxu0 0.0
    %4807 = vmatpush2.msra.mxu0 0.0
    %4808 = vmatprep.mubr.f32.mxu0 0.0
    %v4809 = vand.u32 %v1193, 4294901760
    %v4810 = vsub.f32 %v1193, %v4809
    %v4811 = vand.u32 %v4810, 4294901760
    %v4812 = vsub.f32 %v4810, %v4811
    %v4813 = vand.u32 %v4812, 4294901760
    %4814 = vmatmul.mubr.f32.gmra.mxu0 %v4813
    %v4815 = vpop.f32.mrf.mxu0
    %v4816 = vadd.f32 0.0, %v4815
    %v4817 = vpop.f32.mrf.mxu0
    %4818 = vdwg.mxu0
    %4819 = vmatprep.subr.mxu0 0.0
    %4820 = vmatpush1.msra.mxu0 0.0
    %4821 = vmatprep.subr.mxu0 0.0
    %4822 = vmatpush1.msra.mxu0 0.0
    %4823 = vmatprep.subr.mxu0 0.0
    %4824 = vmatpush1.msra.mxu0 0.0
    %4825 = vmatprep.subr.mxu0 0.0
    %4826 = vmatpush1.msra.mxu0 0.0
    %4827 = vmatprep.subr.mxu0 0.0
    %4828 = vmatpush1.msra.mxu0 0.0
    %4829 = vmatprep.subr.mxu0 0.0
    %4830 = vmatpush1.msra.mxu0 0.0
    %4831 = vmatprep.subr.mxu0 0.0
    %4832 = vmatpush1.msra.mxu0 0.0
    %4833 = vmatprep.subr.mxu0 0.0
    %4834 = vmatpush1.msra.mxu0 0.0
    %4835 = vmatprep.subr.mxu0 0.0
    %4836 = vmatpush1.msra.mxu0 0.0
    %4837 = vmatprep.subr.mxu0 0.0
    %4838 = vmatpush1.msra.mxu0 0.0
    %4839 = vmatprep.subr.mxu0 0.0
    %4840 = vmatpush1.msra.mxu0 0.0
    %4841 = vmatprep.subr.mxu0 0.0
    %4842 = vmatpush1.msra.mxu0 0.0
    %4843 = vmatprep.subr.mxu0 0.0
    %4844 = vmatpush1.msra.mxu0 0.0
    %4845 = vmatprep.subr.mxu0 0.0
    %4846 = vmatpush1.msra.mxu0 0.0
    %4847 = vmatprep.subr.mxu0 0.0
    %v4848 = vand.u32 %v1088, 4294901760
    %v4849 = vsub.f32 %v1088, %v4848
    %v4850 = vand.u32 %v4849, 4294901760
    %v4851 = vsub.f32 %v4849, %v4850
    %v4852 = vand.u32 %v4851, 4294901760
    %4853 = vmatpush1.msra.mxu0 %v4852
    %4854 = vmatprep.subr.mxu0 0.0
    %v4855 = vand.u32 %v1081, 4294901760
    %v4856 = vsub.f32 %v1081, %v4855
    %v4857 = vand.u32 %v4856, 4294901760
    %v4858 = vsub.f32 %v4856, %v4857
    %v4859 = vand.u32 %v4858, 4294901760
    %4860 = vmatpush1.msra.mxu0 %v4859
    %4861 = vmatprep.subr.mxu0 0.0
    %4862 = vmatpush2.msra.mxu0 0.0
    %4863 = vmatprep.subr.mxu0 0.0
    %4864 = vmatpush2.msra.mxu0 0.0
    %4865 = vmatprep.subr.mxu0 0.0
    %4866 = vmatpush2.msra.mxu0 0.0
    %4867 = vmatprep.subr.mxu0 0.0
    %4868 = vmatpush2.msra.mxu0 0.0
    %4869 = vmatprep.subr.mxu0 0.0
    %4870 = vmatpush2.msra.mxu0 0.0
    %4871 = vmatprep.subr.mxu0 0.0
    %4872 = vmatpush2.msra.mxu0 0.0
    %4873 = vmatprep.subr.mxu0 0.0
    %4874 = vmatpush2.msra.mxu0 0.0
    %4875 = vmatprep.subr.mxu0 0.0
    %4876 = vmatpush2.msra.mxu0 0.0
    %4877 = vmatprep.subr.mxu0 0.0
    %4878 = vmatpush2.msra.mxu0 0.0
    %4879 = vmatprep.subr.mxu0 0.0
    %4880 = vmatpush2.msra.mxu0 0.0
    %4881 = vmatprep.subr.mxu0 0.0
    %4882 = vmatpush2.msra.mxu0 0.0
    %4883 = vmatprep.subr.mxu0 0.0
    %4884 = vmatpush2.msra.mxu0 0.0
    %4885 = vmatprep.subr.mxu0 0.0
    %4886 = vmatpush2.msra.mxu0 0.0
    %4887 = vmatprep.subr.mxu0 0.0
    %4888 = vmatpush2.msra.mxu0 0.0
    %4889 = vmatprep.subr.mxu0 0.0
    %4890 = vmatpush2.msra.mxu0 0.0
    %4891 = vmatprep.subr.mxu0 0.0
    %4892 = vmatpush2.msra.mxu0 0.0
    %4893 = vmatprep.mubr.f32.mxu0 0.0
    %v4894 = vand.u32 %v1193, 4294901760
    %4895 = vmatmul.mubr.f32.gmra.mxu0 %v4894
    %v4896 = vpop.f32.mrf.mxu0
    %v4897 = vadd.f32 %v4816, %v4896
    %v4898 = vpop.f32.mrf.mxu0
    %4899 = vdwg.mxu0
    %4900 = vmatprep.subr.mxu0 0.0
    %4901 = vmatpush1.msra.mxu0 0.0
    %4902 = vmatprep.subr.mxu0 0.0
    %4903 = vmatpush1.msra.mxu0 0.0
    %4904 = vmatprep.subr.mxu0 0.0
    %4905 = vmatpush1.msra.mxu0 0.0
    %4906 = vmatprep.subr.mxu0 0.0
    %4907 = vmatpush1.msra.mxu0 0.0
    %4908 = vmatprep.subr.mxu0 0.0
    %4909 = vmatpush1.msra.mxu0 0.0
    %4910 = vmatprep.subr.mxu0 0.0
    %4911 = vmatpush1.msra.mxu0 0.0
    %4912 = vmatprep.subr.mxu0 0.0
    %4913 = vmatpush1.msra.mxu0 0.0
    %4914 = vmatprep.subr.mxu0 0.0
    %4915 = vmatpush1.msra.mxu0 0.0
    %4916 = vmatprep.subr.mxu0 0.0
    %4917 = vmatpush1.msra.mxu0 0.0
    %4918 = vmatprep.subr.mxu0 0.0
    %4919 = vmatpush1.msra.mxu0 0.0
    %4920 = vmatprep.subr.mxu0 0.0
    %4921 = vmatpush1.msra.mxu0 0.0
    %4922 = vmatprep.subr.mxu0 0.0
    %4923 = vmatpush1.msra.mxu0 0.0
    %4924 = vmatprep.subr.mxu0 0.0
    %4925 = vmatpush1.msra.mxu0 0.0
    %4926 = vmatprep.subr.mxu0 0.0
    %4927 = vmatpush1.msra.mxu0 0.0
    %4928 = vmatprep.subr.mxu0 0.0
    %v4929 = vand.u32 %v1088, 4294901760
    %v4930 = vsub.f32 %v1088, %v4929
    %4931 = vmatpush1.msra.mxu0 %v4930
    %4932 = vmatprep.subr.mxu0 0.0
    %v4933 = vand.u32 %v1081, 4294901760
    %v4934 = vsub.f32 %v1081, %v4933
    %4935 = vmatpush1.msra.mxu0 %v4934
    %4936 = vmatprep.subr.mxu0 0.0
    %4937 = vmatpush2.msra.mxu0 0.0
    %4938 = vmatprep.subr.mxu0 0.0
    %4939 = vmatpush2.msra.mxu0 0.0
    %4940 = vmatprep.subr.mxu0 0.0
    %4941 = vmatpush2.msra.mxu0 0.0
    %4942 = vmatprep.subr.mxu0 0.0
    %4943 = vmatpush2.msra.mxu0 0.0
    %4944 = vmatprep.subr.mxu0 0.0
    %4945 = vmatpush2.msra.mxu0 0.0
    %4946 = vmatprep.subr.mxu0 0.0
    %4947 = vmatpush2.msra.mxu0 0.0
    %4948 = vmatprep.subr.mxu0 0.0
    %4949 = vmatpush2.msra.mxu0 0.0
    %4950 = vmatprep.subr.mxu0 0.0
    %4951 = vmatpush2.msra.mxu0 0.0
    %4952 = vmatprep.subr.mxu0 0.0
    %4953 = vmatpush2.msra.mxu0 0.0
    %4954 = vmatprep.subr.mxu0 0.0
    %4955 = vmatpush2.msra.mxu0 0.0
    %4956 = vmatprep.subr.mxu0 0.0
    %4957 = vmatpush2.msra.mxu0 0.0
    %4958 = vmatprep.subr.mxu0 0.0
    %4959 = vmatpush2.msra.mxu0 0.0
    %4960 = vmatprep.subr.mxu0 0.0
    %4961 = vmatpush2.msra.mxu0 0.0
    %4962 = vmatprep.subr.mxu0 0.0
    %4963 = vmatpush2.msra.mxu0 0.0
    %4964 = vmatprep.subr.mxu0 0.0
    %4965 = vmatpush2.msra.mxu0 0.0
    %4966 = vmatprep.subr.mxu0 0.0
    %4967 = vmatpush2.msra.mxu0 0.0
    %4968 = vmatprep.mubr.f32.mxu0 0.0
    %v4969 = vand.u32 %v1193, 4294901760
    %v4970 = vsub.f32 %v1193, %v4969
    %4971 = vmatmul.mubr.f32.gmra.mxu0 %v4970
    %v4972 = vpop.f32.mrf.mxu0
    %v4973 = vadd.f32 %v4897, %v4972
    %v4974 = vpop.f32.mrf.mxu0
    %4975 = vdwg.mxu0
    %4976 = vmatprep.subr.mxu0 0.0
    %4977 = vmatpush1.msra.mxu0 0.0
    %4978 = vmatprep.subr.mxu0 0.0
    %4979 = vmatpush1.msra.mxu0 0.0
    %4980 = vmatprep.subr.mxu0 0.0
    %4981 = vmatpush1.msra.mxu0 0.0
    %4982 = vmatprep.subr.mxu0 0.0
    %4983 = vmatpush1.msra.mxu0 0.0
    %4984 = vmatprep.subr.mxu0 0.0
    %4985 = vmatpush1.msra.mxu0 0.0
    %4986 = vmatprep.subr.mxu0 0.0
    %4987 = vmatpush1.msra.mxu0 0.0
    %4988 = vmatprep.subr.mxu0 0.0
    %4989 = vmatpush1.msra.mxu0 0.0
    %4990 = vmatprep.subr.mxu0 0.0
    %4991 = vmatpush1.msra.mxu0 0.0
    %4992 = vmatprep.subr.mxu0 0.0
    %4993 = vmatpush1.msra.mxu0 0.0
    %4994 = vmatprep.subr.mxu0 0.0
    %4995 = vmatpush1.msra.mxu0 0.0
    %4996 = vmatprep.subr.mxu0 0.0
    %4997 = vmatpush1.msra.mxu0 0.0
    %4998 = vmatprep.subr.mxu0 0.0
    %4999 = vmatpush1.msra.mxu0 0.0
    %5000 = vmatprep.subr.mxu0 0.0
    %5001 = vmatpush1.msra.mxu0 0.0
    %5002 = vmatprep.subr.mxu0 0.0
    %5003 = vmatpush1.msra.mxu0 0.0
    %5004 = vmatprep.subr.mxu0 0.0
    %v5005 = vand.u32 %v1088, 4294901760
    %5006 = vmatpush1.msra.mxu0 %v5005
    %5007 = vmatprep.subr.mxu0 0.0
    %v5008 = vand.u32 %v1081, 4294901760
    %5009 = vmatpush1.msra.mxu0 %v5008
    %5010 = vmatprep.subr.mxu0 0.0
    %5011 = vmatpush2.msra.mxu0 0.0
    %5012 = vmatprep.subr.mxu0 0.0
    %5013 = vmatpush2.msra.mxu0 0.0
    %5014 = vmatprep.subr.mxu0 0.0
    %5015 = vmatpush2.msra.mxu0 0.0
    %5016 = vmatprep.subr.mxu0 0.0
    %5017 = vmatpush2.msra.mxu0 0.0
    %5018 = vmatprep.subr.mxu0 0.0
    %5019 = vmatpush2.msra.mxu0 0.0
    %5020 = vmatprep.subr.mxu0 0.0
    %5021 = vmatpush2.msra.mxu0 0.0
    %5022 = vmatprep.subr.mxu0 0.0
    %5023 = vmatpush2.msra.mxu0 0.0
    %5024 = vmatprep.subr.mxu0 0.0
    %5025 = vmatpush2.msra.mxu0 0.0
    %5026 = vmatprep.subr.mxu0 0.0
    %5027 = vmatpush2.msra.mxu0 0.0
    %5028 = vmatprep.subr.mxu0 0.0
    %5029 = vmatpush2.msra.mxu0 0.0
    %5030 = vmatprep.subr.mxu0 0.0
    %5031 = vmatpush2.msra.mxu0 0.0
    %5032 = vmatprep.subr.mxu0 0.0
    %5033 = vmatpush2.msra.mxu0 0.0
    %5034 = vmatprep.subr.mxu0 0.0
    %5035 = vmatpush2.msra.mxu0 0.0
    %5036 = vmatprep.subr.mxu0 0.0
    %5037 = vmatpush2.msra.mxu0 0.0
    %5038 = vmatprep.subr.mxu0 0.0
    %5039 = vmatpush2.msra.mxu0 0.0
    %5040 = vmatprep.subr.mxu0 0.0
    %5041 = vmatpush2.msra.mxu0 0.0
    %5042 = vmatprep.mubr.f32.mxu0 0.0
    %v5043 = vand.u32 %v1193, 4294901760
    %v5044 = vsub.f32 %v1193, %v5043
    %v5045 = vand.u32 %v5044, 4294901760
    %5046 = vmatmul.mubr.f32.gmra.mxu0 %v5045
    %v5047 = vpop.f32.mrf.mxu0
    %v5048 = vadd.f32 %v4973, %v5047
    %v5049 = vpop.f32.mrf.mxu0
    %5050 = vdwg.mxu0
    %5051 = vmatprep.subr.mxu0 0.0
    %5052 = vmatpush1.msra.mxu0 0.0
    %5053 = vmatprep.subr.mxu0 0.0
    %5054 = vmatpush1.msra.mxu0 0.0
    %5055 = vmatprep.subr.mxu0 0.0
    %5056 = vmatpush1.msra.mxu0 0.0
    %5057 = vmatprep.subr.mxu0 0.0
    %5058 = vmatpush1.msra.mxu0 0.0
    %5059 = vmatprep.subr.mxu0 0.0
    %5060 = vmatpush1.msra.mxu0 0.0
    %5061 = vmatprep.subr.mxu0 0.0
    %5062 = vmatpush1.msra.mxu0 0.0
    %5063 = vmatprep.subr.mxu0 0.0
    %5064 = vmatpush1.msra.mxu0 0.0
    %5065 = vmatprep.subr.mxu0 0.0
    %5066 = vmatpush1.msra.mxu0 0.0
    %5067 = vmatprep.subr.mxu0 0.0
    %5068 = vmatpush1.msra.mxu0 0.0
    %5069 = vmatprep.subr.mxu0 0.0
    %5070 = vmatpush1.msra.mxu0 0.0
    %5071 = vmatprep.subr.mxu0 0.0
    %5072 = vmatpush1.msra.mxu0 0.0
    %5073 = vmatprep.subr.mxu0 0.0
    %5074 = vmatpush1.msra.mxu0 0.0
    %5075 = vmatprep.subr.mxu0 0.0
    %5076 = vmatpush1.msra.mxu0 0.0
    %5077 = vmatprep.subr.mxu0 0.0
    %5078 = vmatpush1.msra.mxu0 0.0
    %5079 = vmatprep.subr.mxu0 0.0
    %v5080 = vand.u32 %v1088, 4294901760
    %v5081 = vsub.f32 %v1088, %v5080
    %v5082 = vand.u32 %v5081, 4294901760
    %5083 = vmatpush1.msra.mxu0 %v5082
    %5084 = vmatprep.subr.mxu0 0.0
    %v5085 = vand.u32 %v1081, 4294901760
    %v5086 = vsub.f32 %v1081, %v5085
    %v5087 = vand.u32 %v5086, 4294901760
    %5088 = vmatpush1.msra.mxu0 %v5087
    %5089 = vmatprep.subr.mxu0 0.0
    %5090 = vmatpush2.msra.mxu0 0.0
    %5091 = vmatprep.subr.mxu0 0.0
    %5092 = vmatpush2.msra.mxu0 0.0
    %5093 = vmatprep.subr.mxu0 0.0
    %5094 = vmatpush2.msra.mxu0 0.0
    %5095 = vmatprep.subr.mxu0 0.0
    %5096 = vmatpush2.msra.mxu0 0.0
    %5097 = vmatprep.subr.mxu0 0.0
    %5098 = vmatpush2.msra.mxu0 0.0
    %5099 = vmatprep.subr.mxu0 0.0
    %5100 = vmatpush2.msra.mxu0 0.0
    %5101 = vmatprep.subr.mxu0 0.0
    %5102 = vmatpush2.msra.mxu0 0.0
    %5103 = vmatprep.subr.mxu0 0.0
    %5104 = vmatpush2.msra.mxu0 0.0
    %5105 = vmatprep.subr.mxu0 0.0
    %5106 = vmatpush2.msra.mxu0 0.0
    %5107 = vmatprep.subr.mxu0 0.0
    %5108 = vmatpush2.msra.mxu0 0.0
    %5109 = vmatprep.subr.mxu0 0.0
    %5110 = vmatpush2.msra.mxu0 0.0
    %5111 = vmatprep.subr.mxu0 0.0
    %5112 = vmatpush2.msra.mxu0 0.0
    %5113 = vmatprep.subr.mxu0 0.0
    %5114 = vmatpush2.msra.mxu0 0.0
    %5115 = vmatprep.subr.mxu0 0.0
    %5116 = vmatpush2.msra.mxu0 0.0
    %5117 = vmatprep.subr.mxu0 0.0
    %5118 = vmatpush2.msra.mxu0 0.0
    %5119 = vmatprep.subr.mxu0 0.0
    %5120 = vmatpush2.msra.mxu0 0.0
    %5121 = vmatprep.mubr.f32.mxu0 0.0
    %v5122 = vand.u32 %v1193, 4294901760
    %5123 = vmatmul.mubr.f32.gmra.mxu0 %v5122
    %v5124 = vpop.f32.mrf.mxu0
    %v5125 = vadd.f32 %v5048, %v5124
    %v5126 = vpop.f32.mrf.mxu0
    %5127 = vdwg.mxu0
    %5128 = vmatprep.subr.mxu0 0.0
    %5129 = vmatpush1.msra.mxu0 0.0
    %5130 = vmatprep.subr.mxu0 0.0
    %5131 = vmatpush1.msra.mxu0 0.0
    %5132 = vmatprep.subr.mxu0 0.0
    %5133 = vmatpush1.msra.mxu0 0.0
    %5134 = vmatprep.subr.mxu0 0.0
    %5135 = vmatpush1.msra.mxu0 0.0
    %5136 = vmatprep.subr.mxu0 0.0
    %5137 = vmatpush1.msra.mxu0 0.0
    %5138 = vmatprep.subr.mxu0 0.0
    %5139 = vmatpush1.msra.mxu0 0.0
    %5140 = vmatprep.subr.mxu0 0.0
    %5141 = vmatpush1.msra.mxu0 0.0
    %5142 = vmatprep.subr.mxu0 0.0
    %5143 = vmatpush1.msra.mxu0 0.0
    %5144 = vmatprep.subr.mxu0 0.0
    %5145 = vmatpush1.msra.mxu0 0.0
    %5146 = vmatprep.subr.mxu0 0.0
    %5147 = vmatpush1.msra.mxu0 0.0
    %5148 = vmatprep.subr.mxu0 0.0
    %5149 = vmatpush1.msra.mxu0 0.0
    %5150 = vmatprep.subr.mxu0 0.0
    %5151 = vmatpush1.msra.mxu0 0.0
    %5152 = vmatprep.subr.mxu0 0.0
    %5153 = vmatpush1.msra.mxu0 0.0
    %5154 = vmatprep.subr.mxu0 0.0
    %5155 = vmatpush1.msra.mxu0 0.0
    %5156 = vmatprep.subr.mxu0 0.0
    %v5157 = vand.u32 %v1088, 4294901760
    %5158 = vmatpush1.msra.mxu0 %v5157
    %5159 = vmatprep.subr.mxu0 0.0
    %v5160 = vand.u32 %v1081, 4294901760
    %5161 = vmatpush1.msra.mxu0 %v5160
    %5162 = vmatprep.subr.mxu0 0.0
    %5163 = vmatpush2.msra.mxu0 0.0
    %5164 = vmatprep.subr.mxu0 0.0
    %5165 = vmatpush2.msra.mxu0 0.0
    %5166 = vmatprep.subr.mxu0 0.0
    %5167 = vmatpush2.msra.mxu0 0.0
    %5168 = vmatprep.subr.mxu0 0.0
    %5169 = vmatpush2.msra.mxu0 0.0
    %5170 = vmatprep.subr.mxu0 0.0
    %5171 = vmatpush2.msra.mxu0 0.0
    %5172 = vmatprep.subr.mxu0 0.0
    %5173 = vmatpush2.msra.mxu0 0.0
    %5174 = vmatprep.subr.mxu0 0.0
    %5175 = vmatpush2.msra.mxu0 0.0
    %5176 = vmatprep.subr.mxu0 0.0
    %5177 = vmatpush2.msra.mxu0 0.0
    %5178 = vmatprep.subr.mxu0 0.0
    %5179 = vmatpush2.msra.mxu0 0.0
    %5180 = vmatprep.subr.mxu0 0.0
    %5181 = vmatpush2.msra.mxu0 0.0
    %5182 = vmatprep.subr.mxu0 0.0
    %5183 = vmatpush2.msra.mxu0 0.0
    %5184 = vmatprep.subr.mxu0 0.0
    %5185 = vmatpush2.msra.mxu0 0.0
    %5186 = vmatprep.subr.mxu0 0.0
    %5187 = vmatpush2.msra.mxu0 0.0
    %5188 = vmatprep.subr.mxu0 0.0
    %5189 = vmatpush2.msra.mxu0 0.0
    %5190 = vmatprep.subr.mxu0 0.0
    %5191 = vmatpush2.msra.mxu0 0.0
    %5192 = vmatprep.subr.mxu0 0.0
    %5193 = vmatpush2.msra.mxu0 0.0
    %5194 = vmatprep.mubr.f32.mxu0 0.0
    %v5195 = vand.u32 %v1193, 4294901760
    %5196 = vmatmul.mubr.f32.gmra.mxu0 %v5195
    %v5197 = vpop.f32.mrf.mxu0
    %v5198 = vadd.f32 %v5125, %v5197
    %v5199 = vpop.f32.mrf.mxu0
    %5200 = vdwg.mxu0
    %v5202 = vrot.slane %v5198, 1
    %5203 = vrot.lane.b32.xlu0 %v5202, 112
    %v5204 = vpop.permute.xlu0 %5203
    %v5206 = vrot.slane %v5198, 2
    %5207 = vrot.lane.b32.xlu0 %v5206, 96
    %v5208 = vpop.permute.xlu0 %5207
    %v5210 = vrot.slane %v5198, 3
    %5211 = vrot.lane.b32.xlu0 %v5210, 80
    %v5212 = vpop.permute.xlu0 %5211
    %v5214 = vrot.slane %v5198, 4
    %5215 = vrot.lane.b32.xlu0 %v5214, 64
    %v5216 = vpop.permute.xlu0 %5215
    %v5218 = vrot.slane %v5198, 5
    %5219 = vrot.lane.b32.xlu0 %v5218, 48
    %v5220 = vpop.permute.xlu0 %5219
    %v5222 = vrot.slane %v5198, 6
    %5223 = vrot.lane.b32.xlu0 %v5222, 32
    %v5224 = vpop.permute.xlu0 %5223
    %v5226 = vsel %vm1679, %v5198, %v5204
    %v5227 = vsel %vm1681, %v5204, %v5208
    %v5228 = vsel %vm1683, %v5208, %v5212
    %v5229 = vsel %vm1685, %v5212, %v5216
    %v5230 = vsel %vm1687, %v5216, %v5220
    %v5231 = vsel %vm1689, %v5220, %v5224
    %v5232 = vsel %vm1191, %v5224, 0
    %5234 = vmatprep.subr.mxu0 0.0
    %v5235 = vand.u32 %v1107, 4294901760
    %5236 = vmatpush1.msra.mxu0 %v5235
    %5237 = vmatprep.subr.mxu0 0.0
    %v5238 = vand.u32 %v1106, 4294901760
    %5239 = vmatpush1.msra.mxu0 %v5238
    %5240 = vmatprep.subr.mxu0 0.0
    %v5241 = vand.u32 %v1105, 4294901760
    %5242 = vmatpush1.msra.mxu0 %v5241
    %5243 = vmatprep.subr.mxu0 0.0
    %v5244 = vand.u32 %v1104, 4294901760
    %5245 = vmatpush1.msra.mxu0 %v5244
    %5246 = vmatprep.subr.mxu0 0.0
    %v5247 = vand.u32 %v1103, 4294901760
    %5248 = vmatpush1.msra.mxu0 %v5247
    %5249 = vmatprep.subr.mxu0 0.0
    %v5250 = vand.u32 %v1102, 4294901760
    %5251 = vmatpush1.msra.mxu0 %v5250
    %5252 = vmatprep.subr.mxu0 0.0
    %v5253 = vand.u32 %v1101, 4294901760
    %5254 = vmatpush1.msra.mxu0 %v5253
    %5255 = vmatprep.subr.mxu0 0.0
    %v5256 = vand.u32 %v1100, 4294901760
    %5257 = vmatpush1.msra.mxu0 %v5256
    %5258 = vmatprep.subr.mxu0 0.0
    %v5259 = vand.u32 %v1099, 4294901760
    %5260 = vmatpush1.msra.mxu0 %v5259
    %5261 = vmatprep.subr.mxu0 0.0
    %v5262 = vand.u32 %v1098, 4294901760
    %5263 = vmatpush1.msra.mxu0 %v5262
    %5264 = vmatprep.subr.mxu0 0.0
    %v5265 = vand.u32 %v1097, 4294901760
    %5266 = vmatpush1.msra.mxu0 %v5265
    %5267 = vmatprep.subr.mxu0 0.0
    %v5268 = vand.u32 %v1096, 4294901760
    %5269 = vmatpush1.msra.mxu0 %v5268
    %5270 = vmatprep.subr.mxu0 0.0
    %v5271 = vand.u32 %v1095, 4294901760
    %5272 = vmatpush1.msra.mxu0 %v5271
    %5273 = vmatprep.subr.mxu0 0.0
    %v5274 = vand.u32 %v1094, 4294901760
    %5275 = vmatpush1.msra.mxu0 %v5274
    %5276 = vmatprep.subr.mxu0 0.0
    %v5277 = vand.u32 %v1093, 4294901760
    %5278 = vmatpush1.msra.mxu0 %v5277
    %5279 = vmatprep.subr.mxu0 0.0
    %v5280 = vand.u32 %v1092, 4294901760
    %5281 = vmatpush1.msra.mxu0 %v5280
    %5282 = vmatprep.subr.mxu0 0.0
    %v5283 = vand.u32 %v1123, 4294901760
    %5284 = vmatpush2.msra.mxu0 %v5283
    %5285 = vmatprep.subr.mxu0 0.0
    %v5286 = vand.u32 %v1122, 4294901760
    %5287 = vmatpush2.msra.mxu0 %v5286
    %5288 = vmatprep.subr.mxu0 0.0
    %v5289 = vand.u32 %v1121, 4294901760
    %5290 = vmatpush2.msra.mxu0 %v5289
    %5291 = vmatprep.subr.mxu0 0.0
    %v5292 = vand.u32 %v1120, 4294901760
    %5293 = vmatpush2.msra.mxu0 %v5292
    %5294 = vmatprep.subr.mxu0 0.0
    %v5295 = vand.u32 %v1119, 4294901760
    %5296 = vmatpush2.msra.mxu0 %v5295
    %5297 = vmatprep.subr.mxu0 0.0
    %v5298 = vand.u32 %v1118, 4294901760
    %5299 = vmatpush2.msra.mxu0 %v5298
    %5300 = vmatprep.subr.mxu0 0.0
    %v5301 = vand.u32 %v1117, 4294901760
    %5302 = vmatpush2.msra.mxu0 %v5301
    %5303 = vmatprep.subr.mxu0 0.0
    %v5304 = vand.u32 %v1116, 4294901760
    %5305 = vmatpush2.msra.mxu0 %v5304
    %5306 = vmatprep.subr.mxu0 0.0
    %v5307 = vand.u32 %v1115, 4294901760
    %5308 = vmatpush2.msra.mxu0 %v5307
    %5309 = vmatprep.subr.mxu0 0.0
    %v5310 = vand.u32 %v1114, 4294901760
    %5311 = vmatpush2.msra.mxu0 %v5310
    %5312 = vmatprep.subr.mxu0 0.0
    %v5313 = vand.u32 %v1113, 4294901760
    %5314 = vmatpush2.msra.mxu0 %v5313
    %5315 = vmatprep.subr.mxu0 0.0
    %v5316 = vand.u32 %v1112, 4294901760
    %5317 = vmatpush2.msra.mxu0 %v5316
    %5318 = vmatprep.subr.mxu0 0.0
    %v5319 = vand.u32 %v1111, 4294901760
    %5320 = vmatpush2.msra.mxu0 %v5319
    %5321 = vmatprep.subr.mxu0 0.0
    %v5322 = vand.u32 %v1110, 4294901760
    %5323 = vmatpush2.msra.mxu0 %v5322
    %5324 = vmatprep.subr.mxu0 0.0
    %v5325 = vand.u32 %v1109, 4294901760
    %5326 = vmatpush2.msra.mxu0 %v5325
    %5327 = vmatprep.subr.mxu0 0.0
    %v5328 = vand.u32 %v1108, 4294901760
    %5329 = vmatpush2.msra.mxu0 %v5328
    %v5330 = vand.u32 %v5227, 4294901760
    %v5331 = vsub.f32 %v5227, %v5330
    %v5332 = vand.u32 %v5331, 4294901760
    %v5333 = vsub.f32 %v5331, %v5332
    %v5334 = vand.u32 %v5333, 4294901760
    %5335 = vmatprep.mubr.f32.mxu0 %v5334
    %v5336 = vand.u32 %v5226, 4294901760
    %v5337 = vsub.f32 %v5226, %v5336
    %v5338 = vand.u32 %v5337, 4294901760
    %v5339 = vsub.f32 %v5337, %v5338
    %v5340 = vand.u32 %v5339, 4294901760
    %5341 = vmatmul.mubr.f32.gmra.mxu0 %v5340
    %v5342 = vpop.f32.mrf.mxu0
    %v5343 = vadd.f32 0.0, %v5342
    %v5344 = vpop.f32.mrf.mxu0
    %5345 = vdwg.mxu0
    %5346 = vmatprep.subr.mxu0 0.0
    %v5347 = vand.u32 %v1107, 4294901760
    %v5348 = vsub.f32 %v1107, %v5347
    %v5349 = vand.u32 %v5348, 4294901760
    %v5350 = vsub.f32 %v5348, %v5349
    %v5351 = vand.u32 %v5350, 4294901760
    %5352 = vmatpush1.msra.mxu0 %v5351
    %5353 = vmatprep.subr.mxu0 0.0
    %v5354 = vand.u32 %v1106, 4294901760
    %v5355 = vsub.f32 %v1106, %v5354
    %v5356 = vand.u32 %v5355, 4294901760
    %v5357 = vsub.f32 %v5355, %v5356
    %v5358 = vand.u32 %v5357, 4294901760
    %5359 = vmatpush1.msra.mxu0 %v5358
    %5360 = vmatprep.subr.mxu0 0.0
    %v5361 = vand.u32 %v1105, 4294901760
    %v5362 = vsub.f32 %v1105, %v5361
    %v5363 = vand.u32 %v5362, 4294901760
    %v5364 = vsub.f32 %v5362, %v5363
    %v5365 = vand.u32 %v5364, 4294901760
    %5366 = vmatpush1.msra.mxu0 %v5365
    %5367 = vmatprep.subr.mxu0 0.0
    %v5368 = vand.u32 %v1104, 4294901760
    %v5369 = vsub.f32 %v1104, %v5368
    %v5370 = vand.u32 %v5369, 4294901760
    %v5371 = vsub.f32 %v5369, %v5370
    %v5372 = vand.u32 %v5371, 4294901760
    %5373 = vmatpush1.msra.mxu0 %v5372
    %5374 = vmatprep.subr.mxu0 0.0
    %v5375 = vand.u32 %v1103, 4294901760
    %v5376 = vsub.f32 %v1103, %v5375
    %v5377 = vand.u32 %v5376, 4294901760
    %v5378 = vsub.f32 %v5376, %v5377
    %v5379 = vand.u32 %v5378, 4294901760
    %5380 = vmatpush1.msra.mxu0 %v5379
    %5381 = vmatprep.subr.mxu0 0.0
    %v5382 = vand.u32 %v1102, 4294901760
    %v5383 = vsub.f32 %v1102, %v5382
    %v5384 = vand.u32 %v5383, 4294901760
    %v5385 = vsub.f32 %v5383, %v5384
    %v5386 = vand.u32 %v5385, 4294901760
    %5387 = vmatpush1.msra.mxu0 %v5386
    %5388 = vmatprep.subr.mxu0 0.0
    %v5389 = vand.u32 %v1101, 4294901760
    %v5390 = vsub.f32 %v1101, %v5389
    %v5391 = vand.u32 %v5390, 4294901760
    %v5392 = vsub.f32 %v5390, %v5391
    %v5393 = vand.u32 %v5392, 4294901760
    %5394 = vmatpush1.msra.mxu0 %v5393
    %5395 = vmatprep.subr.mxu0 0.0
    %v5396 = vand.u32 %v1100, 4294901760
    %v5397 = vsub.f32 %v1100, %v5396
    %v5398 = vand.u32 %v5397, 4294901760
    %v5399 = vsub.f32 %v5397, %v5398
    %v5400 = vand.u32 %v5399, 4294901760
    %5401 = vmatpush1.msra.mxu0 %v5400
    %5402 = vmatprep.subr.mxu0 0.0
    %v5403 = vand.u32 %v1099, 4294901760
    %v5404 = vsub.f32 %v1099, %v5403
    %v5405 = vand.u32 %v5404, 4294901760
    %v5406 = vsub.f32 %v5404, %v5405
    %v5407 = vand.u32 %v5406, 4294901760
    %5408 = vmatpush1.msra.mxu0 %v5407
    %5409 = vmatprep.subr.mxu0 0.0
    %v5410 = vand.u32 %v1098, 4294901760
    %v5411 = vsub.f32 %v1098, %v5410
    %v5412 = vand.u32 %v5411, 4294901760
    %v5413 = vsub.f32 %v5411, %v5412
    %v5414 = vand.u32 %v5413, 4294901760
    %5415 = vmatpush1.msra.mxu0 %v5414
    %5416 = vmatprep.subr.mxu0 0.0
    %v5417 = vand.u32 %v1097, 4294901760
    %v5418 = vsub.f32 %v1097, %v5417
    %v5419 = vand.u32 %v5418, 4294901760
    %v5420 = vsub.f32 %v5418, %v5419
    %v5421 = vand.u32 %v5420, 4294901760
    %5422 = vmatpush1.msra.mxu0 %v5421
    %5423 = vmatprep.subr.mxu0 0.0
    %v5424 = vand.u32 %v1096, 4294901760
    %v5425 = vsub.f32 %v1096, %v5424
    %v5426 = vand.u32 %v5425, 4294901760
    %v5427 = vsub.f32 %v5425, %v5426
    %v5428 = vand.u32 %v5427, 4294901760
    %5429 = vmatpush1.msra.mxu0 %v5428
    %5430 = vmatprep.subr.mxu0 0.0
    %v5431 = vand.u32 %v1095, 4294901760
    %v5432 = vsub.f32 %v1095, %v5431
    %v5433 = vand.u32 %v5432, 4294901760
    %v5434 = vsub.f32 %v5432, %v5433
    %v5435 = vand.u32 %v5434, 4294901760
    %5436 = vmatpush1.msra.mxu0 %v5435
    %5437 = vmatprep.subr.mxu0 0.0
    %v5438 = vand.u32 %v1094, 4294901760
    %v5439 = vsub.f32 %v1094, %v5438
    %v5440 = vand.u32 %v5439, 4294901760
    %v5441 = vsub.f32 %v5439, %v5440
    %v5442 = vand.u32 %v5441, 4294901760
    %5443 = vmatpush1.msra.mxu0 %v5442
    %5444 = vmatprep.subr.mxu0 0.0
    %v5445 = vand.u32 %v1093, 4294901760
    %v5446 = vsub.f32 %v1093, %v5445
    %v5447 = vand.u32 %v5446, 4294901760
    %v5448 = vsub.f32 %v5446, %v5447
    %v5449 = vand.u32 %v5448, 4294901760
    %5450 = vmatpush1.msra.mxu0 %v5449
    %5451 = vmatprep.subr.mxu0 0.0
    %v5452 = vand.u32 %v1092, 4294901760
    %v5453 = vsub.f32 %v1092, %v5452
    %v5454 = vand.u32 %v5453, 4294901760
    %v5455 = vsub.f32 %v5453, %v5454
    %v5456 = vand.u32 %v5455, 4294901760
    %5457 = vmatpush1.msra.mxu0 %v5456
    %5458 = vmatprep.subr.mxu0 0.0
    %v5459 = vand.u32 %v1123, 4294901760
    %v5460 = vsub.f32 %v1123, %v5459
    %v5461 = vand.u32 %v5460, 4294901760
    %v5462 = vsub.f32 %v5460, %v5461
    %v5463 = vand.u32 %v5462, 4294901760
    %5464 = vmatpush2.msra.mxu0 %v5463
    %5465 = vmatprep.subr.mxu0 0.0
    %v5466 = vand.u32 %v1122, 4294901760
    %v5467 = vsub.f32 %v1122, %v5466
    %v5468 = vand.u32 %v5467, 4294901760
    %v5469 = vsub.f32 %v5467, %v5468
    %v5470 = vand.u32 %v5469, 4294901760
    %5471 = vmatpush2.msra.mxu0 %v5470
    %5472 = vmatprep.subr.mxu0 0.0
    %v5473 = vand.u32 %v1121, 4294901760
    %v5474 = vsub.f32 %v1121, %v5473
    %v5475 = vand.u32 %v5474, 4294901760
    %v5476 = vsub.f32 %v5474, %v5475
    %v5477 = vand.u32 %v5476, 4294901760
    %5478 = vmatpush2.msra.mxu0 %v5477
    %5479 = vmatprep.subr.mxu0 0.0
    %v5480 = vand.u32 %v1120, 4294901760
    %v5481 = vsub.f32 %v1120, %v5480
    %v5482 = vand.u32 %v5481, 4294901760
    %v5483 = vsub.f32 %v5481, %v5482
    %v5484 = vand.u32 %v5483, 4294901760
    %5485 = vmatpush2.msra.mxu0 %v5484
    %5486 = vmatprep.subr.mxu0 0.0
    %v5487 = vand.u32 %v1119, 4294901760
    %v5488 = vsub.f32 %v1119, %v5487
    %v5489 = vand.u32 %v5488, 4294901760
    %v5490 = vsub.f32 %v5488, %v5489
    %v5491 = vand.u32 %v5490, 4294901760
    %5492 = vmatpush2.msra.mxu0 %v5491
    %5493 = vmatprep.subr.mxu0 0.0
    %v5494 = vand.u32 %v1118, 4294901760
    %v5495 = vsub.f32 %v1118, %v5494
    %v5496 = vand.u32 %v5495, 4294901760
    %v5497 = vsub.f32 %v5495, %v5496
    %v5498 = vand.u32 %v5497, 4294901760
    %5499 = vmatpush2.msra.mxu0 %v5498
    %5500 = vmatprep.subr.mxu0 0.0
    %v5501 = vand.u32 %v1117, 4294901760
    %v5502 = vsub.f32 %v1117, %v5501
    %v5503 = vand.u32 %v5502, 4294901760
    %v5504 = vsub.f32 %v5502, %v5503
    %v5505 = vand.u32 %v5504, 4294901760
    %5506 = vmatpush2.msra.mxu0 %v5505
    %5507 = vmatprep.subr.mxu0 0.0
    %v5508 = vand.u32 %v1116, 4294901760
    %v5509 = vsub.f32 %v1116, %v5508
    %v5510 = vand.u32 %v5509, 4294901760
    %v5511 = vsub.f32 %v5509, %v5510
    %v5512 = vand.u32 %v5511, 4294901760
    %5513 = vmatpush2.msra.mxu0 %v5512
    %5514 = vmatprep.subr.mxu0 0.0
    %v5515 = vand.u32 %v1115, 4294901760
    %v5516 = vsub.f32 %v1115, %v5515
    %v5517 = vand.u32 %v5516, 4294901760
    %v5518 = vsub.f32 %v5516, %v5517
    %v5519 = vand.u32 %v5518, 4294901760
    %5520 = vmatpush2.msra.mxu0 %v5519
    %5521 = vmatprep.subr.mxu0 0.0
    %v5522 = vand.u32 %v1114, 4294901760
    %v5523 = vsub.f32 %v1114, %v5522
    %v5524 = vand.u32 %v5523, 4294901760
    %v5525 = vsub.f32 %v5523, %v5524
    %v5526 = vand.u32 %v5525, 4294901760
    %5527 = vmatpush2.msra.mxu0 %v5526
    %5528 = vmatprep.subr.mxu0 0.0
    %v5529 = vand.u32 %v1113, 4294901760
    %v5530 = vsub.f32 %v1113, %v5529
    %v5531 = vand.u32 %v5530, 4294901760
    %v5532 = vsub.f32 %v5530, %v5531
    %v5533 = vand.u32 %v5532, 4294901760
    %5534 = vmatpush2.msra.mxu0 %v5533
    %5535 = vmatprep.subr.mxu0 0.0
    %v5536 = vand.u32 %v1112, 4294901760
    %v5537 = vsub.f32 %v1112, %v5536
    %v5538 = vand.u32 %v5537, 4294901760
    %v5539 = vsub.f32 %v5537, %v5538
    %v5540 = vand.u32 %v5539, 4294901760
    %5541 = vmatpush2.msra.mxu0 %v5540
    %5542 = vmatprep.subr.mxu0 0.0
    %v5543 = vand.u32 %v1111, 4294901760
    %v5544 = vsub.f32 %v1111, %v5543
    %v5545 = vand.u32 %v5544, 4294901760
    %v5546 = vsub.f32 %v5544, %v5545
    %v5547 = vand.u32 %v5546, 4294901760
    %5548 = vmatpush2.msra.mxu0 %v5547
    %5549 = vmatprep.subr.mxu0 0.0
    %v5550 = vand.u32 %v1110, 4294901760
    %v5551 = vsub.f32 %v1110, %v5550
    %v5552 = vand.u32 %v5551, 4294901760
    %v5553 = vsub.f32 %v5551, %v5552
    %v5554 = vand.u32 %v5553, 4294901760
    %5555 = vmatpush2.msra.mxu0 %v5554
    %5556 = vmatprep.subr.mxu0 0.0
    %v5557 = vand.u32 %v1109, 4294901760
    %v5558 = vsub.f32 %v1109, %v5557
    %v5559 = vand.u32 %v5558, 4294901760
    %v5560 = vsub.f32 %v5558, %v5559
    %v5561 = vand.u32 %v5560, 4294901760
    %5562 = vmatpush2.msra.mxu0 %v5561
    %5563 = vmatprep.subr.mxu0 0.0
    %v5564 = vand.u32 %v1108, 4294901760
    %v5565 = vsub.f32 %v1108, %v5564
    %v5566 = vand.u32 %v5565, 4294901760
    %v5567 = vsub.f32 %v5565, %v5566
    %v5568 = vand.u32 %v5567, 4294901760
    %5569 = vmatpush2.msra.mxu0 %v5568
    %v5570 = vand.u32 %v5227, 4294901760
    %5571 = vmatprep.mubr.f32.mxu0 %v5570
    %v5572 = vand.u32 %v5226, 4294901760
    %5573 = vmatmul.mubr.f32.gmra.mxu0 %v5572
    %v5574 = vpop.f32.mrf.mxu0
    %v5575 = vadd.f32 %v5343, %v5574
    %v5576 = vpop.f32.mrf.mxu0
    %5577 = vdwg.mxu0
    %5578 = vmatprep.subr.mxu0 0.0
    %v5579 = vand.u32 %v1107, 4294901760
    %v5580 = vsub.f32 %v1107, %v5579
    %5581 = vmatpush1.msra.mxu0 %v5580
    %5582 = vmatprep.subr.mxu0 0.0
    %v5583 = vand.u32 %v1106, 4294901760
    %v5584 = vsub.f32 %v1106, %v5583
    %5585 = vmatpush1.msra.mxu0 %v5584
    %5586 = vmatprep.subr.mxu0 0.0
    %v5587 = vand.u32 %v1105, 4294901760
    %v5588 = vsub.f32 %v1105, %v5587
    %5589 = vmatpush1.msra.mxu0 %v5588
    %5590 = vmatprep.subr.mxu0 0.0
    %v5591 = vand.u32 %v1104, 4294901760
    %v5592 = vsub.f32 %v1104, %v5591
    %5593 = vmatpush1.msra.mxu0 %v5592
    %5594 = vmatprep.subr.mxu0 0.0
    %v5595 = vand.u32 %v1103, 4294901760
    %v5596 = vsub.f32 %v1103, %v5595
    %5597 = vmatpush1.msra.mxu0 %v5596
    %5598 = vmatprep.subr.mxu0 0.0
    %v5599 = vand.u32 %v1102, 4294901760
    %v5600 = vsub.f32 %v1102, %v5599
    %5601 = vmatpush1.msra.mxu0 %v5600
    %5602 = vmatprep.subr.mxu0 0.0
    %v5603 = vand.u32 %v1101, 4294901760
    %v5604 = vsub.f32 %v1101, %v5603
    %5605 = vmatpush1.msra.mxu0 %v5604
    %5606 = vmatprep.subr.mxu0 0.0
    %v5607 = vand.u32 %v1100, 4294901760
    %v5608 = vsub.f32 %v1100, %v5607
    %5609 = vmatpush1.msra.mxu0 %v5608
    %5610 = vmatprep.subr.mxu0 0.0
    %v5611 = vand.u32 %v1099, 4294901760
    %v5612 = vsub.f32 %v1099, %v5611
    %5613 = vmatpush1.msra.mxu0 %v5612
    %5614 = vmatprep.subr.mxu0 0.0
    %v5615 = vand.u32 %v1098, 4294901760
    %v5616 = vsub.f32 %v1098, %v5615
    %5617 = vmatpush1.msra.mxu0 %v5616
    %5618 = vmatprep.subr.mxu0 0.0
    %v5619 = vand.u32 %v1097, 4294901760
    %v5620 = vsub.f32 %v1097, %v5619
    %5621 = vmatpush1.msra.mxu0 %v5620
    %5622 = vmatprep.subr.mxu0 0.0
    %v5623 = vand.u32 %v1096, 4294901760
    %v5624 = vsub.f32 %v1096, %v5623
    %5625 = vmatpush1.msra.mxu0 %v5624
    %5626 = vmatprep.subr.mxu0 0.0
    %v5627 = vand.u32 %v1095, 4294901760
    %v5628 = vsub.f32 %v1095, %v5627
    %5629 = vmatpush1.msra.mxu0 %v5628
    %5630 = vmatprep.subr.mxu0 0.0
    %v5631 = vand.u32 %v1094, 4294901760
    %v5632 = vsub.f32 %v1094, %v5631
    %5633 = vmatpush1.msra.mxu0 %v5632
    %5634 = vmatprep.subr.mxu0 0.0
    %v5635 = vand.u32 %v1093, 4294901760
    %v5636 = vsub.f32 %v1093, %v5635
    %5637 = vmatpush1.msra.mxu0 %v5636
    %5638 = vmatprep.subr.mxu0 0.0
    %v5639 = vand.u32 %v1092, 4294901760
    %v5640 = vsub.f32 %v1092, %v5639
    %5641 = vmatpush1.msra.mxu0 %v5640
    %5642 = vmatprep.subr.mxu0 0.0
    %v5643 = vand.u32 %v1123, 4294901760
    %v5644 = vsub.f32 %v1123, %v5643
    %5645 = vmatpush2.msra.mxu0 %v5644
    %5646 = vmatprep.subr.mxu0 0.0
    %v5647 = vand.u32 %v1122, 4294901760
    %v5648 = vsub.f32 %v1122, %v5647
    %5649 = vmatpush2.msra.mxu0 %v5648
    %5650 = vmatprep.subr.mxu0 0.0
    %v5651 = vand.u32 %v1121, 4294901760
    %v5652 = vsub.f32 %v1121, %v5651
    %5653 = vmatpush2.msra.mxu0 %v5652
    %5654 = vmatprep.subr.mxu0 0.0
    %v5655 = vand.u32 %v1120, 4294901760
    %v5656 = vsub.f32 %v1120, %v5655
    %5657 = vmatpush2.msra.mxu0 %v5656
    %5658 = vmatprep.subr.mxu0 0.0
    %v5659 = vand.u32 %v1119, 4294901760
    %v5660 = vsub.f32 %v1119, %v5659
    %5661 = vmatpush2.msra.mxu0 %v5660
    %5662 = vmatprep.subr.mxu0 0.0
    %v5663 = vand.u32 %v1118, 4294901760
    %v5664 = vsub.f32 %v1118, %v5663
    %5665 = vmatpush2.msra.mxu0 %v5664
    %5666 = vmatprep.subr.mxu0 0.0
    %v5667 = vand.u32 %v1117, 4294901760
    %v5668 = vsub.f32 %v1117, %v5667
    %5669 = vmatpush2.msra.mxu0 %v5668
    %5670 = vmatprep.subr.mxu0 0.0
    %v5671 = vand.u32 %v1116, 4294901760
    %v5672 = vsub.f32 %v1116, %v5671
    %5673 = vmatpush2.msra.mxu0 %v5672
    %5674 = vmatprep.subr.mxu0 0.0
    %v5675 = vand.u32 %v1115, 4294901760
    %v5676 = vsub.f32 %v1115, %v5675
    %5677 = vmatpush2.msra.mxu0 %v5676
    %5678 = vmatprep.subr.mxu0 0.0
    %v5679 = vand.u32 %v1114, 4294901760
    %v5680 = vsub.f32 %v1114, %v5679
    %5681 = vmatpush2.msra.mxu0 %v5680
    %5682 = vmatprep.subr.mxu0 0.0
    %v5683 = vand.u32 %v1113, 4294901760
    %v5684 = vsub.f32 %v1113, %v5683
    %5685 = vmatpush2.msra.mxu0 %v5684
    %5686 = vmatprep.subr.mxu0 0.0
    %v5687 = vand.u32 %v1112, 4294901760
    %v5688 = vsub.f32 %v1112, %v5687
    %5689 = vmatpush2.msra.mxu0 %v5688
    %5690 = vmatprep.subr.mxu0 0.0
    %v5691 = vand.u32 %v1111, 4294901760
    %v5692 = vsub.f32 %v1111, %v5691
    %5693 = vmatpush2.msra.mxu0 %v5692
    %5694 = vmatprep.subr.mxu0 0.0
    %v5695 = vand.u32 %v1110, 4294901760
    %v5696 = vsub.f32 %v1110, %v5695
    %5697 = vmatpush2.msra.mxu0 %v5696
    %5698 = vmatprep.subr.mxu0 0.0
    %v5699 = vand.u32 %v1109, 4294901760
    %v5700 = vsub.f32 %v1109, %v5699
    %5701 = vmatpush2.msra.mxu0 %v5700
    %5702 = vmatprep.subr.mxu0 0.0
    %v5703 = vand.u32 %v1108, 4294901760
    %v5704 = vsub.f32 %v1108, %v5703
    %5705 = vmatpush2.msra.mxu0 %v5704
    %v5706 = vand.u32 %v5227, 4294901760
    %v5707 = vsub.f32 %v5227, %v5706
    %5708 = vmatprep.mubr.f32.mxu0 %v5707
    %v5709 = vand.u32 %v5226, 4294901760
    %v5710 = vsub.f32 %v5226, %v5709
    %5711 = vmatmul.mubr.f32.gmra.mxu0 %v5710
    %v5712 = vpop.f32.mrf.mxu0
    %v5713 = vadd.f32 %v5575, %v5712
    %v5714 = vpop.f32.mrf.mxu0
    %5715 = vdwg.mxu0
    %5716 = vmatprep.subr.mxu0 0.0
    %v5717 = vand.u32 %v1107, 4294901760
    %5718 = vmatpush1.msra.mxu0 %v5717
    %5719 = vmatprep.subr.mxu0 0.0
    %v5720 = vand.u32 %v1106, 4294901760
    %5721 = vmatpush1.msra.mxu0 %v5720
    %5722 = vmatprep.subr.mxu0 0.0
    %v5723 = vand.u32 %v1105, 4294901760
    %5724 = vmatpush1.msra.mxu0 %v5723
    %5725 = vmatprep.subr.mxu0 0.0
    %v5726 = vand.u32 %v1104, 4294901760
    %5727 = vmatpush1.msra.mxu0 %v5726
    %5728 = vmatprep.subr.mxu0 0.0
    %v5729 = vand.u32 %v1103, 4294901760
    %5730 = vmatpush1.msra.mxu0 %v5729
    %5731 = vmatprep.subr.mxu0 0.0
    %v5732 = vand.u32 %v1102, 4294901760
    %5733 = vmatpush1.msra.mxu0 %v5732
    %5734 = vmatprep.subr.mxu0 0.0
    %v5735 = vand.u32 %v1101, 4294901760
    %5736 = vmatpush1.msra.mxu0 %v5735
    %5737 = vmatprep.subr.mxu0 0.0
    %v5738 = vand.u32 %v1100, 4294901760
    %5739 = vmatpush1.msra.mxu0 %v5738
    %5740 = vmatprep.subr.mxu0 0.0
    %v5741 = vand.u32 %v1099, 4294901760
    %5742 = vmatpush1.msra.mxu0 %v5741
    %5743 = vmatprep.subr.mxu0 0.0
    %v5744 = vand.u32 %v1098, 4294901760
    %5745 = vmatpush1.msra.mxu0 %v5744
    %5746 = vmatprep.subr.mxu0 0.0
    %v5747 = vand.u32 %v1097, 4294901760
    %5748 = vmatpush1.msra.mxu0 %v5747
    %5749 = vmatprep.subr.mxu0 0.0
    %v5750 = vand.u32 %v1096, 4294901760
    %5751 = vmatpush1.msra.mxu0 %v5750
    %5752 = vmatprep.subr.mxu0 0.0
    %v5753 = vand.u32 %v1095, 4294901760
    %5754 = vmatpush1.msra.mxu0 %v5753
    %5755 = vmatprep.subr.mxu0 0.0
    %v5756 = vand.u32 %v1094, 4294901760
    %5757 = vmatpush1.msra.mxu0 %v5756
    %5758 = vmatprep.subr.mxu0 0.0
    %v5759 = vand.u32 %v1093, 4294901760
    %5760 = vmatpush1.msra.mxu0 %v5759
    %5761 = vmatprep.subr.mxu0 0.0
    %v5762 = vand.u32 %v1092, 4294901760
    %5763 = vmatpush1.msra.mxu0 %v5762
    %5764 = vmatprep.subr.mxu0 0.0
    %v5765 = vand.u32 %v1123, 4294901760
    %5766 = vmatpush2.msra.mxu0 %v5765
    %5767 = vmatprep.subr.mxu0 0.0
    %v5768 = vand.u32 %v1122, 4294901760
    %5769 = vmatpush2.msra.mxu0 %v5768
    %5770 = vmatprep.subr.mxu0 0.0
    %v5771 = vand.u32 %v1121, 4294901760
    %5772 = vmatpush2.msra.mxu0 %v5771
    %5773 = vmatprep.subr.mxu0 0.0
    %v5774 = vand.u32 %v1120, 4294901760
    %5775 = vmatpush2.msra.mxu0 %v5774
    %5776 = vmatprep.subr.mxu0 0.0
    %v5777 = vand.u32 %v1119, 4294901760
    %5778 = vmatpush2.msra.mxu0 %v5777
    %5779 = vmatprep.subr.mxu0 0.0
    %v5780 = vand.u32 %v1118, 4294901760
    %5781 = vmatpush2.msra.mxu0 %v5780
    %5782 = vmatprep.subr.mxu0 0.0
    %v5783 = vand.u32 %v1117, 4294901760
    %5784 = vmatpush2.msra.mxu0 %v5783
    %5785 = vmatprep.subr.mxu0 0.0
    %v5786 = vand.u32 %v1116, 4294901760
    %5787 = vmatpush2.msra.mxu0 %v5786
    %5788 = vmatprep.subr.mxu0 0.0
    %v5789 = vand.u32 %v1115, 4294901760
    %5790 = vmatpush2.msra.mxu0 %v5789
    %5791 = vmatprep.subr.mxu0 0.0
    %v5792 = vand.u32 %v1114, 4294901760
    %5793 = vmatpush2.msra.mxu0 %v5792
    %5794 = vmatprep.subr.mxu0 0.0
    %v5795 = vand.u32 %v1113, 4294901760
    %5796 = vmatpush2.msra.mxu0 %v5795
    %5797 = vmatprep.subr.mxu0 0.0
    %v5798 = vand.u32 %v1112, 4294901760
    %5799 = vmatpush2.msra.mxu0 %v5798
    %5800 = vmatprep.subr.mxu0 0.0
    %v5801 = vand.u32 %v1111, 4294901760
    %5802 = vmatpush2.msra.mxu0 %v5801
    %5803 = vmatprep.subr.mxu0 0.0
    %v5804 = vand.u32 %v1110, 4294901760
    %5805 = vmatpush2.msra.mxu0 %v5804
    %5806 = vmatprep.subr.mxu0 0.0
    %v5807 = vand.u32 %v1109, 4294901760
    %5808 = vmatpush2.msra.mxu0 %v5807
    %5809 = vmatprep.subr.mxu0 0.0
    %v5810 = vand.u32 %v1108, 4294901760
    %5811 = vmatpush2.msra.mxu0 %v5810
    %v5812 = vand.u32 %v5227, 4294901760
    %v5813 = vsub.f32 %v5227, %v5812
    %v5814 = vand.u32 %v5813, 4294901760
    %5815 = vmatprep.mubr.f32.mxu0 %v5814
    %v5816 = vand.u32 %v5226, 4294901760
    %v5817 = vsub.f32 %v5226, %v5816
    %v5818 = vand.u32 %v5817, 4294901760
    %5819 = vmatmul.mubr.f32.gmra.mxu0 %v5818
    %v5820 = vpop.f32.mrf.mxu0
    %v5821 = vadd.f32 %v5713, %v5820
    %v5822 = vpop.f32.mrf.mxu0
    %5823 = vdwg.mxu0
    %5824 = vmatprep.subr.mxu0 0.0
    %v5825 = vand.u32 %v1107, 4294901760
    %v5826 = vsub.f32 %v1107, %v5825
    %v5827 = vand.u32 %v5826, 4294901760
    %5828 = vmatpush1.msra.mxu0 %v5827
    %5829 = vmatprep.subr.mxu0 0.0
    %v5830 = vand.u32 %v1106, 4294901760
    %v5831 = vsub.f32 %v1106, %v5830
    %v5832 = vand.u32 %v5831, 4294901760
    %5833 = vmatpush1.msra.mxu0 %v5832
    %5834 = vmatprep.subr.mxu0 0.0
    %v5835 = vand.u32 %v1105, 4294901760
    %v5836 = vsub.f32 %v1105, %v5835
    %v5837 = vand.u32 %v5836, 4294901760
    %5838 = vmatpush1.msra.mxu0 %v5837
    %5839 = vmatprep.subr.mxu0 0.0
    %v5840 = vand.u32 %v1104, 4294901760
    %v5841 = vsub.f32 %v1104, %v5840
    %v5842 = vand.u32 %v5841, 4294901760
    %5843 = vmatpush1.msra.mxu0 %v5842
    %5844 = vmatprep.subr.mxu0 0.0
    %v5845 = vand.u32 %v1103, 4294901760
    %v5846 = vsub.f32 %v1103, %v5845
    %v5847 = vand.u32 %v5846, 4294901760
    %5848 = vmatpush1.msra.mxu0 %v5847
    %5849 = vmatprep.subr.mxu0 0.0
    %v5850 = vand.u32 %v1102, 4294901760
    %v5851 = vsub.f32 %v1102, %v5850
    %v5852 = vand.u32 %v5851, 4294901760
    %5853 = vmatpush1.msra.mxu0 %v5852
    %5854 = vmatprep.subr.mxu0 0.0
    %v5855 = vand.u32 %v1101, 4294901760
    %v5856 = vsub.f32 %v1101, %v5855
    %v5857 = vand.u32 %v5856, 4294901760
    %5858 = vmatpush1.msra.mxu0 %v5857
    %5859 = vmatprep.subr.mxu0 0.0
    %v5860 = vand.u32 %v1100, 4294901760
    %v5861 = vsub.f32 %v1100, %v5860
    %v5862 = vand.u32 %v5861, 4294901760
    %5863 = vmatpush1.msra.mxu0 %v5862
    %5864 = vmatprep.subr.mxu0 0.0
    %v5865 = vand.u32 %v1099, 4294901760
    %v5866 = vsub.f32 %v1099, %v5865
    %v5867 = vand.u32 %v5866, 4294901760
    %5868 = vmatpush1.msra.mxu0 %v5867
    %5869 = vmatprep.subr.mxu0 0.0
    %v5870 = vand.u32 %v1098, 4294901760
    %v5871 = vsub.f32 %v1098, %v5870
    %v5872 = vand.u32 %v5871, 4294901760
    %5873 = vmatpush1.msra.mxu0 %v5872
    %5874 = vmatprep.subr.mxu0 0.0
    %v5875 = vand.u32 %v1097, 4294901760
    %v5876 = vsub.f32 %v1097, %v5875
    %v5877 = vand.u32 %v5876, 4294901760
    %5878 = vmatpush1.msra.mxu0 %v5877
    %5879 = vmatprep.subr.mxu0 0.0
    %v5880 = vand.u32 %v1096, 4294901760
    %v5881 = vsub.f32 %v1096, %v5880
    %v5882 = vand.u32 %v5881, 4294901760
    %5883 = vmatpush1.msra.mxu0 %v5882
    %5884 = vmatprep.subr.mxu0 0.0
    %v5885 = vand.u32 %v1095, 4294901760
    %v5886 = vsub.f32 %v1095, %v5885
    %v5887 = vand.u32 %v5886, 4294901760
    %5888 = vmatpush1.msra.mxu0 %v5887
    %5889 = vmatprep.subr.mxu0 0.0
    %v5890 = vand.u32 %v1094, 4294901760
    %v5891 = vsub.f32 %v1094, %v5890
    %v5892 = vand.u32 %v5891, 4294901760
    %5893 = vmatpush1.msra.mxu0 %v5892
    %5894 = vmatprep.subr.mxu0 0.0
    %v5895 = vand.u32 %v1093, 4294901760
    %v5896 = vsub.f32 %v1093, %v5895
    %v5897 = vand.u32 %v5896, 4294901760
    %5898 = vmatpush1.msra.mxu0 %v5897
    %5899 = vmatprep.subr.mxu0 0.0
    %v5900 = vand.u32 %v1092, 4294901760
    %v5901 = vsub.f32 %v1092, %v5900
    %v5902 = vand.u32 %v5901, 4294901760
    %5903 = vmatpush1.msra.mxu0 %v5902
    %5904 = vmatprep.subr.mxu0 0.0
    %v5905 = vand.u32 %v1123, 4294901760
    %v5906 = vsub.f32 %v1123, %v5905
    %v5907 = vand.u32 %v5906, 4294901760
    %5908 = vmatpush2.msra.mxu0 %v5907
    %5909 = vmatprep.subr.mxu0 0.0
    %v5910 = vand.u32 %v1122, 4294901760
    %v5911 = vsub.f32 %v1122, %v5910
    %v5912 = vand.u32 %v5911, 4294901760
    %5913 = vmatpush2.msra.mxu0 %v5912
    %5914 = vmatprep.subr.mxu0 0.0
    %v5915 = vand.u32 %v1121, 4294901760
    %v5916 = vsub.f32 %v1121, %v5915
    %v5917 = vand.u32 %v5916, 4294901760
    %5918 = vmatpush2.msra.mxu0 %v5917
    %5919 = vmatprep.subr.mxu0 0.0
    %v5920 = vand.u32 %v1120, 4294901760
    %v5921 = vsub.f32 %v1120, %v5920
    %v5922 = vand.u32 %v5921, 4294901760
    %5923 = vmatpush2.msra.mxu0 %v5922
    %5924 = vmatprep.subr.mxu0 0.0
    %v5925 = vand.u32 %v1119, 4294901760
    %v5926 = vsub.f32 %v1119, %v5925
    %v5927 = vand.u32 %v5926, 4294901760
    %5928 = vmatpush2.msra.mxu0 %v5927
    %5929 = vmatprep.subr.mxu0 0.0
    %v5930 = vand.u32 %v1118, 4294901760
    %v5931 = vsub.f32 %v1118, %v5930
    %v5932 = vand.u32 %v5931, 4294901760
    %5933 = vmatpush2.msra.mxu0 %v5932
    %5934 = vmatprep.subr.mxu0 0.0
    %v5935 = vand.u32 %v1117, 4294901760
    %v5936 = vsub.f32 %v1117, %v5935
    %v5937 = vand.u32 %v5936, 4294901760
    %5938 = vmatpush2.msra.mxu0 %v5937
    %5939 = vmatprep.subr.mxu0 0.0
    %v5940 = vand.u32 %v1116, 4294901760
    %v5941 = vsub.f32 %v1116, %v5940
    %v5942 = vand.u32 %v5941, 4294901760
    %5943 = vmatpush2.msra.mxu0 %v5942
    %5944 = vmatprep.subr.mxu0 0.0
    %v5945 = vand.u32 %v1115, 4294901760
    %v5946 = vsub.f32 %v1115, %v5945
    %v5947 = vand.u32 %v5946, 4294901760
    %5948 = vmatpush2.msra.mxu0 %v5947
    %5949 = vmatprep.subr.mxu0 0.0
    %v5950 = vand.u32 %v1114, 4294901760
    %v5951 = vsub.f32 %v1114, %v5950
    %v5952 = vand.u32 %v5951, 4294901760
    %5953 = vmatpush2.msra.mxu0 %v5952
    %5954 = vmatprep.subr.mxu0 0.0
    %v5955 = vand.u32 %v1113, 4294901760
    %v5956 = vsub.f32 %v1113, %v5955
    %v5957 = vand.u32 %v5956, 4294901760
    %5958 = vmatpush2.msra.mxu0 %v5957
    %5959 = vmatprep.subr.mxu0 0.0
    %v5960 = vand.u32 %v1112, 4294901760
    %v5961 = vsub.f32 %v1112, %v5960
    %v5962 = vand.u32 %v5961, 4294901760
    %5963 = vmatpush2.msra.mxu0 %v5962
    %5964 = vmatprep.subr.mxu0 0.0
    %v5965 = vand.u32 %v1111, 4294901760
    %v5966 = vsub.f32 %v1111, %v5965
    %v5967 = vand.u32 %v5966, 4294901760
    %5968 = vmatpush2.msra.mxu0 %v5967
    %5969 = vmatprep.subr.mxu0 0.0
    %v5970 = vand.u32 %v1110, 4294901760
    %v5971 = vsub.f32 %v1110, %v5970
    %v5972 = vand.u32 %v5971, 4294901760
    %5973 = vmatpush2.msra.mxu0 %v5972
    %5974 = vmatprep.subr.mxu0 0.0
    %v5975 = vand.u32 %v1109, 4294901760
    %v5976 = vsub.f32 %v1109, %v5975
    %v5977 = vand.u32 %v5976, 4294901760
    %5978 = vmatpush2.msra.mxu0 %v5977
    %5979 = vmatprep.subr.mxu0 0.0
    %v5980 = vand.u32 %v1108, 4294901760
    %v5981 = vsub.f32 %v1108, %v5980
    %v5982 = vand.u32 %v5981, 4294901760
    %5983 = vmatpush2.msra.mxu0 %v5982
    %v5984 = vand.u32 %v5227, 4294901760
    %5985 = vmatprep.mubr.f32.mxu0 %v5984
    %v5986 = vand.u32 %v5226, 4294901760
    %5987 = vmatmul.mubr.f32.gmra.mxu0 %v5986
    %v5988 = vpop.f32.mrf.mxu0
    %v5989 = vadd.f32 %v5821, %v5988
    %v5990 = vpop.f32.mrf.mxu0
    %5991 = vdwg.mxu0
    %5992 = vmatprep.subr.mxu0 0.0
    %v5993 = vand.u32 %v1107, 4294901760
    %5994 = vmatpush1.msra.mxu0 %v5993
    %5995 = vmatprep.subr.mxu0 0.0
    %v5996 = vand.u32 %v1106, 4294901760
    %5997 = vmatpush1.msra.mxu0 %v5996
    %5998 = vmatprep.subr.mxu0 0.0
    %v5999 = vand.u32 %v1105, 4294901760
    %6000 = vmatpush1.msra.mxu0 %v5999
    %6001 = vmatprep.subr.mxu0 0.0
    %v6002 = vand.u32 %v1104, 4294901760
    %6003 = vmatpush1.msra.mxu0 %v6002
    %6004 = vmatprep.subr.mxu0 0.0
    %v6005 = vand.u32 %v1103, 4294901760
    %6006 = vmatpush1.msra.mxu0 %v6005
    %6007 = vmatprep.subr.mxu0 0.0
    %v6008 = vand.u32 %v1102, 4294901760
    %6009 = vmatpush1.msra.mxu0 %v6008
    %6010 = vmatprep.subr.mxu0 0.0
    %v6011 = vand.u32 %v1101, 4294901760
    %6012 = vmatpush1.msra.mxu0 %v6011
    %6013 = vmatprep.subr.mxu0 0.0
    %v6014 = vand.u32 %v1100, 4294901760
    %6015 = vmatpush1.msra.mxu0 %v6014
    %6016 = vmatprep.subr.mxu0 0.0
    %v6017 = vand.u32 %v1099, 4294901760
    %6018 = vmatpush1.msra.mxu0 %v6017
    %6019 = vmatprep.subr.mxu0 0.0
    %v6020 = vand.u32 %v1098, 4294901760
    %6021 = vmatpush1.msra.mxu0 %v6020
    %6022 = vmatprep.subr.mxu0 0.0
    %v6023 = vand.u32 %v1097, 4294901760
    %6024 = vmatpush1.msra.mxu0 %v6023
    %6025 = vmatprep.subr.mxu0 0.0
    %v6026 = vand.u32 %v1096, 4294901760
    %6027 = vmatpush1.msra.mxu0 %v6026
    %6028 = vmatprep.subr.mxu0 0.0
    %v6029 = vand.u32 %v1095, 4294901760
    %6030 = vmatpush1.msra.mxu0 %v6029
    %6031 = vmatprep.subr.mxu0 0.0
    %v6032 = vand.u32 %v1094, 4294901760
    %6033 = vmatpush1.msra.mxu0 %v6032
    %6034 = vmatprep.subr.mxu0 0.0
    %v6035 = vand.u32 %v1093, 4294901760
    %6036 = vmatpush1.msra.mxu0 %v6035
    %6037 = vmatprep.subr.mxu0 0.0
    %v6038 = vand.u32 %v1092, 4294901760
    %6039 = vmatpush1.msra.mxu0 %v6038
    %6040 = vmatprep.subr.mxu0 0.0
    %v6041 = vand.u32 %v1123, 4294901760
    %6042 = vmatpush2.msra.mxu0 %v6041
    %6043 = vmatprep.subr.mxu0 0.0
    %v6044 = vand.u32 %v1122, 4294901760
    %6045 = vmatpush2.msra.mxu0 %v6044
    %6046 = vmatprep.subr.mxu0 0.0
    %v6047 = vand.u32 %v1121, 4294901760
    %6048 = vmatpush2.msra.mxu0 %v6047
    %6049 = vmatprep.subr.mxu0 0.0
    %v6050 = vand.u32 %v1120, 4294901760
    %6051 = vmatpush2.msra.mxu0 %v6050
    %6052 = vmatprep.subr.mxu0 0.0
    %v6053 = vand.u32 %v1119, 4294901760
    %6054 = vmatpush2.msra.mxu0 %v6053
    %6055 = vmatprep.subr.mxu0 0.0
    %v6056 = vand.u32 %v1118, 4294901760
    %6057 = vmatpush2.msra.mxu0 %v6056
    %6058 = vmatprep.subr.mxu0 0.0
    %v6059 = vand.u32 %v1117, 4294901760
    %6060 = vmatpush2.msra.mxu0 %v6059
    %6061 = vmatprep.subr.mxu0 0.0
    %v6062 = vand.u32 %v1116, 4294901760
    %6063 = vmatpush2.msra.mxu0 %v6062
    %6064 = vmatprep.subr.mxu0 0.0
    %v6065 = vand.u32 %v1115, 4294901760
    %6066 = vmatpush2.msra.mxu0 %v6065
    %6067 = vmatprep.subr.mxu0 0.0
    %v6068 = vand.u32 %v1114, 4294901760
    %6069 = vmatpush2.msra.mxu0 %v6068
    %6070 = vmatprep.subr.mxu0 0.0
    %v6071 = vand.u32 %v1113, 4294901760
    %6072 = vmatpush2.msra.mxu0 %v6071
    %6073 = vmatprep.subr.mxu0 0.0
    %v6074 = vand.u32 %v1112, 4294901760
    %6075 = vmatpush2.msra.mxu0 %v6074
    %6076 = vmatprep.subr.mxu0 0.0
    %v6077 = vand.u32 %v1111, 4294901760
    %6078 = vmatpush2.msra.mxu0 %v6077
    %6079 = vmatprep.subr.mxu0 0.0
    %v6080 = vand.u32 %v1110, 4294901760
    %6081 = vmatpush2.msra.mxu0 %v6080
    %6082 = vmatprep.subr.mxu0 0.0
    %v6083 = vand.u32 %v1109, 4294901760
    %6084 = vmatpush2.msra.mxu0 %v6083
    %6085 = vmatprep.subr.mxu0 0.0
    %v6086 = vand.u32 %v1108, 4294901760
    %6087 = vmatpush2.msra.mxu0 %v6086
    %v6088 = vand.u32 %v5227, 4294901760
    %6089 = vmatprep.mubr.f32.mxu0 %v6088
    %v6090 = vand.u32 %v5226, 4294901760
    %6091 = vmatmul.mubr.f32.gmra.mxu0 %v6090
    %v6092 = vpop.f32.mrf.mxu0
    %v6093 = vadd.f32 %v5989, %v6092
    %v6094 = vpop.f32.mrf.mxu0
    %6095 = vdwg.mxu0
    %6096 = vmatprep.subr.mxu0 0.0
    %v6097 = vand.u32 %v1139, 4294901760
    %6098 = vmatpush1.msra.mxu0 %v6097
    %6099 = vmatprep.subr.mxu0 0.0
    %v6100 = vand.u32 %v1138, 4294901760
    %6101 = vmatpush1.msra.mxu0 %v6100
    %6102 = vmatprep.subr.mxu0 0.0
    %v6103 = vand.u32 %v1137, 4294901760
    %6104 = vmatpush1.msra.mxu0 %v6103
    %6105 = vmatprep.subr.mxu0 0.0
    %v6106 = vand.u32 %v1136, 4294901760
    %6107 = vmatpush1.msra.mxu0 %v6106
    %6108 = vmatprep.subr.mxu0 0.0
    %v6109 = vand.u32 %v1135, 4294901760
    %6110 = vmatpush1.msra.mxu0 %v6109
    %6111 = vmatprep.subr.mxu0 0.0
    %v6112 = vand.u32 %v1134, 4294901760
    %6113 = vmatpush1.msra.mxu0 %v6112
    %6114 = vmatprep.subr.mxu0 0.0
    %v6115 = vand.u32 %v1133, 4294901760
    %6116 = vmatpush1.msra.mxu0 %v6115
    %6117 = vmatprep.subr.mxu0 0.0
    %v6118 = vand.u32 %v1132, 4294901760
    %6119 = vmatpush1.msra.mxu0 %v6118
    %6120 = vmatprep.subr.mxu0 0.0
    %v6121 = vand.u32 %v1131, 4294901760
    %6122 = vmatpush1.msra.mxu0 %v6121
    %6123 = vmatprep.subr.mxu0 0.0
    %v6124 = vand.u32 %v1130, 4294901760
    %6125 = vmatpush1.msra.mxu0 %v6124
    %6126 = vmatprep.subr.mxu0 0.0
    %v6127 = vand.u32 %v1129, 4294901760
    %6128 = vmatpush1.msra.mxu0 %v6127
    %6129 = vmatprep.subr.mxu0 0.0
    %v6130 = vand.u32 %v1128, 4294901760
    %6131 = vmatpush1.msra.mxu0 %v6130
    %6132 = vmatprep.subr.mxu0 0.0
    %v6133 = vand.u32 %v1127, 4294901760
    %6134 = vmatpush1.msra.mxu0 %v6133
    %6135 = vmatprep.subr.mxu0 0.0
    %v6136 = vand.u32 %v1126, 4294901760
    %6137 = vmatpush1.msra.mxu0 %v6136
    %6138 = vmatprep.subr.mxu0 0.0
    %v6139 = vand.u32 %v1125, 4294901760
    %6140 = vmatpush1.msra.mxu0 %v6139
    %6141 = vmatprep.subr.mxu0 0.0
    %v6142 = vand.u32 %v1124, 4294901760
    %6143 = vmatpush1.msra.mxu0 %v6142
    %6144 = vmatprep.subr.mxu0 0.0
    %v6145 = vand.u32 %v1155, 4294901760
    %6146 = vmatpush2.msra.mxu0 %v6145
    %6147 = vmatprep.subr.mxu0 0.0
    %v6148 = vand.u32 %v1154, 4294901760
    %6149 = vmatpush2.msra.mxu0 %v6148
    %6150 = vmatprep.subr.mxu0 0.0
    %v6151 = vand.u32 %v1153, 4294901760
    %6152 = vmatpush2.msra.mxu0 %v6151
    %6153 = vmatprep.subr.mxu0 0.0
    %v6154 = vand.u32 %v1152, 4294901760
    %6155 = vmatpush2.msra.mxu0 %v6154
    %6156 = vmatprep.subr.mxu0 0.0
    %v6157 = vand.u32 %v1151, 4294901760
    %6158 = vmatpush2.msra.mxu0 %v6157
    %6159 = vmatprep.subr.mxu0 0.0
    %v6160 = vand.u32 %v1150, 4294901760
    %6161 = vmatpush2.msra.mxu0 %v6160
    %6162 = vmatprep.subr.mxu0 0.0
    %v6163 = vand.u32 %v1149, 4294901760
    %6164 = vmatpush2.msra.mxu0 %v6163
    %6165 = vmatprep.subr.mxu0 0.0
    %v6166 = vand.u32 %v1148, 4294901760
    %6167 = vmatpush2.msra.mxu0 %v6166
    %6168 = vmatprep.subr.mxu0 0.0
    %v6169 = vand.u32 %v1147, 4294901760
    %6170 = vmatpush2.msra.mxu0 %v6169
    %6171 = vmatprep.subr.mxu0 0.0
    %v6172 = vand.u32 %v1146, 4294901760
    %6173 = vmatpush2.msra.mxu0 %v6172
    %6174 = vmatprep.subr.mxu0 0.0
    %v6175 = vand.u32 %v1145, 4294901760
    %6176 = vmatpush2.msra.mxu0 %v6175
    %6177 = vmatprep.subr.mxu0 0.0
    %v6178 = vand.u32 %v1144, 4294901760
    %6179 = vmatpush2.msra.mxu0 %v6178
    %6180 = vmatprep.subr.mxu0 0.0
    %v6181 = vand.u32 %v1143, 4294901760
    %6182 = vmatpush2.msra.mxu0 %v6181
    %6183 = vmatprep.subr.mxu0 0.0
    %v6184 = vand.u32 %v1142, 4294901760
    %6185 = vmatpush2.msra.mxu0 %v6184
    %6186 = vmatprep.subr.mxu0 0.0
    %v6187 = vand.u32 %v1141, 4294901760
    %6188 = vmatpush2.msra.mxu0 %v6187
    %6189 = vmatprep.subr.mxu0 0.0
    %v6190 = vand.u32 %v1140, 4294901760
    %6191 = vmatpush2.msra.mxu0 %v6190
    %v6192 = vand.u32 %v5229, 4294901760
    %v6193 = vsub.f32 %v5229, %v6192
    %v6194 = vand.u32 %v6193, 4294901760
    %v6195 = vsub.f32 %v6193, %v6194
    %v6196 = vand.u32 %v6195, 4294901760
    %6197 = vmatprep.mubr.f32.mxu0 %v6196
    %v6198 = vand.u32 %v5228, 4294901760
    %v6199 = vsub.f32 %v5228, %v6198
    %v6200 = vand.u32 %v6199, 4294901760
    %v6201 = vsub.f32 %v6199, %v6200
    %v6202 = vand.u32 %v6201, 4294901760
    %6203 = vmatmul.mubr.f32.gmra.mxu0 %v6202
    %v6204 = vpop.f32.mrf.mxu0
    %v6205 = vadd.f32 %v6093, %v6204
    %v6206 = vpop.f32.mrf.mxu0
    %6207 = vdwg.mxu0
    %6208 = vmatprep.subr.mxu0 0.0
    %v6209 = vand.u32 %v1139, 4294901760
    %v6210 = vsub.f32 %v1139, %v6209
    %v6211 = vand.u32 %v6210, 4294901760
    %v6212 = vsub.f32 %v6210, %v6211
    %v6213 = vand.u32 %v6212, 4294901760
    %6214 = vmatpush1.msra.mxu0 %v6213
    %6215 = vmatprep.subr.mxu0 0.0
    %v6216 = vand.u32 %v1138, 4294901760
    %v6217 = vsub.f32 %v1138, %v6216
    %v6218 = vand.u32 %v6217, 4294901760
    %v6219 = vsub.f32 %v6217, %v6218
    %v6220 = vand.u32 %v6219, 4294901760
    %6221 = vmatpush1.msra.mxu0 %v6220
    %6222 = vmatprep.subr.mxu0 0.0
    %v6223 = vand.u32 %v1137, 4294901760
    %v6224 = vsub.f32 %v1137, %v6223
    %v6225 = vand.u32 %v6224, 4294901760
    %v6226 = vsub.f32 %v6224, %v6225
    %v6227 = vand.u32 %v6226, 4294901760
    %6228 = vmatpush1.msra.mxu0 %v6227
    %6229 = vmatprep.subr.mxu0 0.0
    %v6230 = vand.u32 %v1136, 4294901760
    %v6231 = vsub.f32 %v1136, %v6230
    %v6232 = vand.u32 %v6231, 4294901760
    %v6233 = vsub.f32 %v6231, %v6232
    %v6234 = vand.u32 %v6233, 4294901760
    %6235 = vmatpush1.msra.mxu0 %v6234
    %6236 = vmatprep.subr.mxu0 0.0
    %v6237 = vand.u32 %v1135, 4294901760
    %v6238 = vsub.f32 %v1135, %v6237
    %v6239 = vand.u32 %v6238, 4294901760
    %v6240 = vsub.f32 %v6238, %v6239
    %v6241 = vand.u32 %v6240, 4294901760
    %6242 = vmatpush1.msra.mxu0 %v6241
    %6243 = vmatprep.subr.mxu0 0.0
    %v6244 = vand.u32 %v1134, 4294901760
    %v6245 = vsub.f32 %v1134, %v6244
    %v6246 = vand.u32 %v6245, 4294901760
    %v6247 = vsub.f32 %v6245, %v6246
    %v6248 = vand.u32 %v6247, 4294901760
    %6249 = vmatpush1.msra.mxu0 %v6248
    %6250 = vmatprep.subr.mxu0 0.0
    %v6251 = vand.u32 %v1133, 4294901760
    %v6252 = vsub.f32 %v1133, %v6251
    %v6253 = vand.u32 %v6252, 4294901760
    %v6254 = vsub.f32 %v6252, %v6253
    %v6255 = vand.u32 %v6254, 4294901760
    %6256 = vmatpush1.msra.mxu0 %v6255
    %6257 = vmatprep.subr.mxu0 0.0
    %v6258 = vand.u32 %v1132, 4294901760
    %v6259 = vsub.f32 %v1132, %v6258
    %v6260 = vand.u32 %v6259, 4294901760
    %v6261 = vsub.f32 %v6259, %v6260
    %v6262 = vand.u32 %v6261, 4294901760
    %6263 = vmatpush1.msra.mxu0 %v6262
    %6264 = vmatprep.subr.mxu0 0.0
    %v6265 = vand.u32 %v1131, 4294901760
    %v6266 = vsub.f32 %v1131, %v6265
    %v6267 = vand.u32 %v6266, 4294901760
    %v6268 = vsub.f32 %v6266, %v6267
    %v6269 = vand.u32 %v6268, 4294901760
    %6270 = vmatpush1.msra.mxu0 %v6269
    %6271 = vmatprep.subr.mxu0 0.0
    %v6272 = vand.u32 %v1130, 4294901760
    %v6273 = vsub.f32 %v1130, %v6272
    %v6274 = vand.u32 %v6273, 4294901760
    %v6275 = vsub.f32 %v6273, %v6274
    %v6276 = vand.u32 %v6275, 4294901760
    %6277 = vmatpush1.msra.mxu0 %v6276
    %6278 = vmatprep.subr.mxu0 0.0
    %v6279 = vand.u32 %v1129, 4294901760
    %v6280 = vsub.f32 %v1129, %v6279
    %v6281 = vand.u32 %v6280, 4294901760
    %v6282 = vsub.f32 %v6280, %v6281
    %v6283 = vand.u32 %v6282, 4294901760
    %6284 = vmatpush1.msra.mxu0 %v6283
    %6285 = vmatprep.subr.mxu0 0.0
    %v6286 = vand.u32 %v1128, 4294901760
    %v6287 = vsub.f32 %v1128, %v6286
    %v6288 = vand.u32 %v6287, 4294901760
    %v6289 = vsub.f32 %v6287, %v6288
    %v6290 = vand.u32 %v6289, 4294901760
    %6291 = vmatpush1.msra.mxu0 %v6290
    %6292 = vmatprep.subr.mxu0 0.0
    %v6293 = vand.u32 %v1127, 4294901760
    %v6294 = vsub.f32 %v1127, %v6293
    %v6295 = vand.u32 %v6294, 4294901760
    %v6296 = vsub.f32 %v6294, %v6295
    %v6297 = vand.u32 %v6296, 4294901760
    %6298 = vmatpush1.msra.mxu0 %v6297
    %6299 = vmatprep.subr.mxu0 0.0
    %v6300 = vand.u32 %v1126, 4294901760
    %v6301 = vsub.f32 %v1126, %v6300
    %v6302 = vand.u32 %v6301, 4294901760
    %v6303 = vsub.f32 %v6301, %v6302
    %v6304 = vand.u32 %v6303, 4294901760
    %6305 = vmatpush1.msra.mxu0 %v6304
    %6306 = vmatprep.subr.mxu0 0.0
    %v6307 = vand.u32 %v1125, 4294901760
    %v6308 = vsub.f32 %v1125, %v6307
    %v6309 = vand.u32 %v6308, 4294901760
    %v6310 = vsub.f32 %v6308, %v6309
    %v6311 = vand.u32 %v6310, 4294901760
    %6312 = vmatpush1.msra.mxu0 %v6311
    %6313 = vmatprep.subr.mxu0 0.0
    %v6314 = vand.u32 %v1124, 4294901760
    %v6315 = vsub.f32 %v1124, %v6314
    %v6316 = vand.u32 %v6315, 4294901760
    %v6317 = vsub.f32 %v6315, %v6316
    %v6318 = vand.u32 %v6317, 4294901760
    %6319 = vmatpush1.msra.mxu0 %v6318
    %6320 = vmatprep.subr.mxu0 0.0
    %v6321 = vand.u32 %v1155, 4294901760
    %v6322 = vsub.f32 %v1155, %v6321
    %v6323 = vand.u32 %v6322, 4294901760
    %v6324 = vsub.f32 %v6322, %v6323
    %v6325 = vand.u32 %v6324, 4294901760
    %6326 = vmatpush2.msra.mxu0 %v6325
    %6327 = vmatprep.subr.mxu0 0.0
    %v6328 = vand.u32 %v1154, 4294901760
    %v6329 = vsub.f32 %v1154, %v6328
    %v6330 = vand.u32 %v6329, 4294901760
    %v6331 = vsub.f32 %v6329, %v6330
    %v6332 = vand.u32 %v6331, 4294901760
    %6333 = vmatpush2.msra.mxu0 %v6332
    %6334 = vmatprep.subr.mxu0 0.0
    %v6335 = vand.u32 %v1153, 4294901760
    %v6336 = vsub.f32 %v1153, %v6335
    %v6337 = vand.u32 %v6336, 4294901760
    %v6338 = vsub.f32 %v6336, %v6337
    %v6339 = vand.u32 %v6338, 4294901760
    %6340 = vmatpush2.msra.mxu0 %v6339
    %6341 = vmatprep.subr.mxu0 0.0
    %v6342 = vand.u32 %v1152, 4294901760
    %v6343 = vsub.f32 %v1152, %v6342
    %v6344 = vand.u32 %v6343, 4294901760
    %v6345 = vsub.f32 %v6343, %v6344
    %v6346 = vand.u32 %v6345, 4294901760
    %6347 = vmatpush2.msra.mxu0 %v6346
    %6348 = vmatprep.subr.mxu0 0.0
    %v6349 = vand.u32 %v1151, 4294901760
    %v6350 = vsub.f32 %v1151, %v6349
    %v6351 = vand.u32 %v6350, 4294901760
    %v6352 = vsub.f32 %v6350, %v6351
    %v6353 = vand.u32 %v6352, 4294901760
    %6354 = vmatpush2.msra.mxu0 %v6353
    %6355 = vmatprep.subr.mxu0 0.0
    %v6356 = vand.u32 %v1150, 4294901760
    %v6357 = vsub.f32 %v1150, %v6356
    %v6358 = vand.u32 %v6357, 4294901760
    %v6359 = vsub.f32 %v6357, %v6358
    %v6360 = vand.u32 %v6359, 4294901760
    %6361 = vmatpush2.msra.mxu0 %v6360
    %6362 = vmatprep.subr.mxu0 0.0
    %v6363 = vand.u32 %v1149, 4294901760
    %v6364 = vsub.f32 %v1149, %v6363
    %v6365 = vand.u32 %v6364, 4294901760
    %v6366 = vsub.f32 %v6364, %v6365
    %v6367 = vand.u32 %v6366, 4294901760
    %6368 = vmatpush2.msra.mxu0 %v6367
    %6369 = vmatprep.subr.mxu0 0.0
    %v6370 = vand.u32 %v1148, 4294901760
    %v6371 = vsub.f32 %v1148, %v6370
    %v6372 = vand.u32 %v6371, 4294901760
    %v6373 = vsub.f32 %v6371, %v6372
    %v6374 = vand.u32 %v6373, 4294901760
    %6375 = vmatpush2.msra.mxu0 %v6374
    %6376 = vmatprep.subr.mxu0 0.0
    %v6377 = vand.u32 %v1147, 4294901760
    %v6378 = vsub.f32 %v1147, %v6377
    %v6379 = vand.u32 %v6378, 4294901760
    %v6380 = vsub.f32 %v6378, %v6379
    %v6381 = vand.u32 %v6380, 4294901760
    %6382 = vmatpush2.msra.mxu0 %v6381
    %6383 = vmatprep.subr.mxu0 0.0
    %v6384 = vand.u32 %v1146, 4294901760
    %v6385 = vsub.f32 %v1146, %v6384
    %v6386 = vand.u32 %v6385, 4294901760
    %v6387 = vsub.f32 %v6385, %v6386
    %v6388 = vand.u32 %v6387, 4294901760
    %6389 = vmatpush2.msra.mxu0 %v6388
    %6390 = vmatprep.subr.mxu0 0.0
    %v6391 = vand.u32 %v1145, 4294901760
    %v6392 = vsub.f32 %v1145, %v6391
    %v6393 = vand.u32 %v6392, 4294901760
    %v6394 = vsub.f32 %v6392, %v6393
    %v6395 = vand.u32 %v6394, 4294901760
    %6396 = vmatpush2.msra.mxu0 %v6395
    %6397 = vmatprep.subr.mxu0 0.0
    %v6398 = vand.u32 %v1144, 4294901760
    %v6399 = vsub.f32 %v1144, %v6398
    %v6400 = vand.u32 %v6399, 4294901760
    %v6401 = vsub.f32 %v6399, %v6400
    %v6402 = vand.u32 %v6401, 4294901760
    %6403 = vmatpush2.msra.mxu0 %v6402
    %6404 = vmatprep.subr.mxu0 0.0
    %v6405 = vand.u32 %v1143, 4294901760
    %v6406 = vsub.f32 %v1143, %v6405
    %v6407 = vand.u32 %v6406, 4294901760
    %v6408 = vsub.f32 %v6406, %v6407
    %v6409 = vand.u32 %v6408, 4294901760
    %6410 = vmatpush2.msra.mxu0 %v6409
    %6411 = vmatprep.subr.mxu0 0.0
    %v6412 = vand.u32 %v1142, 4294901760
    %v6413 = vsub.f32 %v1142, %v6412
    %v6414 = vand.u32 %v6413, 4294901760
    %v6415 = vsub.f32 %v6413, %v6414
    %v6416 = vand.u32 %v6415, 4294901760
    %6417 = vmatpush2.msra.mxu0 %v6416
    %6418 = vmatprep.subr.mxu0 0.0
    %v6419 = vand.u32 %v1141, 4294901760
    %v6420 = vsub.f32 %v1141, %v6419
    %v6421 = vand.u32 %v6420, 4294901760
    %v6422 = vsub.f32 %v6420, %v6421
    %v6423 = vand.u32 %v6422, 4294901760
    %6424 = vmatpush2.msra.mxu0 %v6423
    %6425 = vmatprep.subr.mxu0 0.0
    %v6426 = vand.u32 %v1140, 4294901760
    %v6427 = vsub.f32 %v1140, %v6426
    %v6428 = vand.u32 %v6427, 4294901760
    %v6429 = vsub.f32 %v6427, %v6428
    %v6430 = vand.u32 %v6429, 4294901760
    %6431 = vmatpush2.msra.mxu0 %v6430
    %v6432 = vand.u32 %v5229, 4294901760
    %6433 = vmatprep.mubr.f32.mxu0 %v6432
    %v6434 = vand.u32 %v5228, 4294901760
    %6435 = vmatmul.mubr.f32.gmra.mxu0 %v6434
    %v6436 = vpop.f32.mrf.mxu0
    %v6437 = vadd.f32 %v6205, %v6436
    %v6438 = vpop.f32.mrf.mxu0
    %6439 = vdwg.mxu0
    %6440 = vmatprep.subr.mxu0 0.0
    %v6441 = vand.u32 %v1139, 4294901760
    %v6442 = vsub.f32 %v1139, %v6441
    %6443 = vmatpush1.msra.mxu0 %v6442
    %6444 = vmatprep.subr.mxu0 0.0
    %v6445 = vand.u32 %v1138, 4294901760
    %v6446 = vsub.f32 %v1138, %v6445
    %6447 = vmatpush1.msra.mxu0 %v6446
    %6448 = vmatprep.subr.mxu0 0.0
    %v6449 = vand.u32 %v1137, 4294901760
    %v6450 = vsub.f32 %v1137, %v6449
    %6451 = vmatpush1.msra.mxu0 %v6450
    %6452 = vmatprep.subr.mxu0 0.0
    %v6453 = vand.u32 %v1136, 4294901760
    %v6454 = vsub.f32 %v1136, %v6453
    %6455 = vmatpush1.msra.mxu0 %v6454
    %6456 = vmatprep.subr.mxu0 0.0
    %v6457 = vand.u32 %v1135, 4294901760
    %v6458 = vsub.f32 %v1135, %v6457
    %6459 = vmatpush1.msra.mxu0 %v6458
    %6460 = vmatprep.subr.mxu0 0.0
    %v6461 = vand.u32 %v1134, 4294901760
    %v6462 = vsub.f32 %v1134, %v6461
    %6463 = vmatpush1.msra.mxu0 %v6462
    %6464 = vmatprep.subr.mxu0 0.0
    %v6465 = vand.u32 %v1133, 4294901760
    %v6466 = vsub.f32 %v1133, %v6465
    %6467 = vmatpush1.msra.mxu0 %v6466
    %6468 = vmatprep.subr.mxu0 0.0
    %v6469 = vand.u32 %v1132, 4294901760
    %v6470 = vsub.f32 %v1132, %v6469
    %6471 = vmatpush1.msra.mxu0 %v6470
    %6472 = vmatprep.subr.mxu0 0.0
    %v6473 = vand.u32 %v1131, 4294901760
    %v6474 = vsub.f32 %v1131, %v6473
    %6475 = vmatpush1.msra.mxu0 %v6474
    %6476 = vmatprep.subr.mxu0 0.0
    %v6477 = vand.u32 %v1130, 4294901760
    %v6478 = vsub.f32 %v1130, %v6477
    %6479 = vmatpush1.msra.mxu0 %v6478
    %6480 = vmatprep.subr.mxu0 0.0
    %v6481 = vand.u32 %v1129, 4294901760
    %v6482 = vsub.f32 %v1129, %v6481
    %6483 = vmatpush1.msra.mxu0 %v6482
    %6484 = vmatprep.subr.mxu0 0.0
    %v6485 = vand.u32 %v1128, 4294901760
    %v6486 = vsub.f32 %v1128, %v6485
    %6487 = vmatpush1.msra.mxu0 %v6486
    %6488 = vmatprep.subr.mxu0 0.0
    %v6489 = vand.u32 %v1127, 4294901760
    %v6490 = vsub.f32 %v1127, %v6489
    %6491 = vmatpush1.msra.mxu0 %v6490
    %6492 = vmatprep.subr.mxu0 0.0
    %v6493 = vand.u32 %v1126, 4294901760
    %v6494 = vsub.f32 %v1126, %v6493
    %6495 = vmatpush1.msra.mxu0 %v6494
    %6496 = vmatprep.subr.mxu0 0.0
    %v6497 = vand.u32 %v1125, 4294901760
    %v6498 = vsub.f32 %v1125, %v6497
    %6499 = vmatpush1.msra.mxu0 %v6498
    %6500 = vmatprep.subr.mxu0 0.0
    %v6501 = vand.u32 %v1124, 4294901760
    %v6502 = vsub.f32 %v1124, %v6501
    %6503 = vmatpush1.msra.mxu0 %v6502
    %6504 = vmatprep.subr.mxu0 0.0
    %v6505 = vand.u32 %v1155, 4294901760
    %v6506 = vsub.f32 %v1155, %v6505
    %6507 = vmatpush2.msra.mxu0 %v6506
    %6508 = vmatprep.subr.mxu0 0.0
    %v6509 = vand.u32 %v1154, 4294901760
    %v6510 = vsub.f32 %v1154, %v6509
    %6511 = vmatpush2.msra.mxu0 %v6510
    %6512 = vmatprep.subr.mxu0 0.0
    %v6513 = vand.u32 %v1153, 4294901760
    %v6514 = vsub.f32 %v1153, %v6513
    %6515 = vmatpush2.msra.mxu0 %v6514
    %6516 = vmatprep.subr.mxu0 0.0
    %v6517 = vand.u32 %v1152, 4294901760
    %v6518 = vsub.f32 %v1152, %v6517
    %6519 = vmatpush2.msra.mxu0 %v6518
    %6520 = vmatprep.subr.mxu0 0.0
    %v6521 = vand.u32 %v1151, 4294901760
    %v6522 = vsub.f32 %v1151, %v6521
    %6523 = vmatpush2.msra.mxu0 %v6522
    %6524 = vmatprep.subr.mxu0 0.0
    %v6525 = vand.u32 %v1150, 4294901760
    %v6526 = vsub.f32 %v1150, %v6525
    %6527 = vmatpush2.msra.mxu0 %v6526
    %6528 = vmatprep.subr.mxu0 0.0
    %v6529 = vand.u32 %v1149, 4294901760
    %v6530 = vsub.f32 %v1149, %v6529
    %6531 = vmatpush2.msra.mxu0 %v6530
    %6532 = vmatprep.subr.mxu0 0.0
    %v6533 = vand.u32 %v1148, 4294901760
    %v6534 = vsub.f32 %v1148, %v6533
    %6535 = vmatpush2.msra.mxu0 %v6534
    %6536 = vmatprep.subr.mxu0 0.0
    %v6537 = vand.u32 %v1147, 4294901760
    %v6538 = vsub.f32 %v1147, %v6537
    %6539 = vmatpush2.msra.mxu0 %v6538
    %6540 = vmatprep.subr.mxu0 0.0
    %v6541 = vand.u32 %v1146, 4294901760
    %v6542 = vsub.f32 %v1146, %v6541
    %6543 = vmatpush2.msra.mxu0 %v6542
    %6544 = vmatprep.subr.mxu0 0.0
    %v6545 = vand.u32 %v1145, 4294901760
    %v6546 = vsub.f32 %v1145, %v6545
    %6547 = vmatpush2.msra.mxu0 %v6546
    %6548 = vmatprep.subr.mxu0 0.0
    %v6549 = vand.u32 %v1144, 4294901760
    %v6550 = vsub.f32 %v1144, %v6549
    %6551 = vmatpush2.msra.mxu0 %v6550
    %6552 = vmatprep.subr.mxu0 0.0
    %v6553 = vand.u32 %v1143, 4294901760
    %v6554 = vsub.f32 %v1143, %v6553
    %6555 = vmatpush2.msra.mxu0 %v6554
    %6556 = vmatprep.subr.mxu0 0.0
    %v6557 = vand.u32 %v1142, 4294901760
    %v6558 = vsub.f32 %v1142, %v6557
    %6559 = vmatpush2.msra.mxu0 %v6558
    %6560 = vmatprep.subr.mxu0 0.0
    %v6561 = vand.u32 %v1141, 4294901760
    %v6562 = vsub.f32 %v1141, %v6561
    %6563 = vmatpush2.msra.mxu0 %v6562
    %6564 = vmatprep.subr.mxu0 0.0
    %v6565 = vand.u32 %v1140, 4294901760
    %v6566 = vsub.f32 %v1140, %v6565
    %6567 = vmatpush2.msra.mxu0 %v6566
    %v6568 = vand.u32 %v5229, 4294901760
    %v6569 = vsub.f32 %v5229, %v6568
    %6570 = vmatprep.mubr.f32.mxu0 %v6569
    %v6571 = vand.u32 %v5228, 4294901760
    %v6572 = vsub.f32 %v5228, %v6571
    %6573 = vmatmul.mubr.f32.gmra.mxu0 %v6572
    %v6574 = vpop.f32.mrf.mxu0
    %v6575 = vadd.f32 %v6437, %v6574
    %v6576 = vpop.f32.mrf.mxu0
    %6577 = vdwg.mxu0
    %6578 = vmatprep.subr.mxu0 0.0
    %v6579 = vand.u32 %v1139, 4294901760
    %6580 = vmatpush1.msra.mxu0 %v6579
    %6581 = vmatprep.subr.mxu0 0.0
    %v6582 = vand.u32 %v1138, 4294901760
    %6583 = vmatpush1.msra.mxu0 %v6582
    %6584 = vmatprep.subr.mxu0 0.0
    %v6585 = vand.u32 %v1137, 4294901760
    %6586 = vmatpush1.msra.mxu0 %v6585
    %6587 = vmatprep.subr.mxu0 0.0
    %v6588 = vand.u32 %v1136, 4294901760
    %6589 = vmatpush1.msra.mxu0 %v6588
    %6590 = vmatprep.subr.mxu0 0.0
    %v6591 = vand.u32 %v1135, 4294901760
    %6592 = vmatpush1.msra.mxu0 %v6591
    %6593 = vmatprep.subr.mxu0 0.0
    %v6594 = vand.u32 %v1134, 4294901760
    %6595 = vmatpush1.msra.mxu0 %v6594
    %6596 = vmatprep.subr.mxu0 0.0
    %v6597 = vand.u32 %v1133, 4294901760
    %6598 = vmatpush1.msra.mxu0 %v6597
    %6599 = vmatprep.subr.mxu0 0.0
    %v6600 = vand.u32 %v1132, 4294901760
    %6601 = vmatpush1.msra.mxu0 %v6600
    %6602 = vmatprep.subr.mxu0 0.0
    %v6603 = vand.u32 %v1131, 4294901760
    %6604 = vmatpush1.msra.mxu0 %v6603
    %6605 = vmatprep.subr.mxu0 0.0
    %v6606 = vand.u32 %v1130, 4294901760
    %6607 = vmatpush1.msra.mxu0 %v6606
    %6608 = vmatprep.subr.mxu0 0.0
    %v6609 = vand.u32 %v1129, 4294901760
    %6610 = vmatpush1.msra.mxu0 %v6609
    %6611 = vmatprep.subr.mxu0 0.0
    %v6612 = vand.u32 %v1128, 4294901760
    %6613 = vmatpush1.msra.mxu0 %v6612
    %6614 = vmatprep.subr.mxu0 0.0
    %v6615 = vand.u32 %v1127, 4294901760
    %6616 = vmatpush1.msra.mxu0 %v6615
    %6617 = vmatprep.subr.mxu0 0.0
    %v6618 = vand.u32 %v1126, 4294901760
    %6619 = vmatpush1.msra.mxu0 %v6618
    %6620 = vmatprep.subr.mxu0 0.0
    %v6621 = vand.u32 %v1125, 4294901760
    %6622 = vmatpush1.msra.mxu0 %v6621
    %6623 = vmatprep.subr.mxu0 0.0
    %v6624 = vand.u32 %v1124, 4294901760
    %6625 = vmatpush1.msra.mxu0 %v6624
    %6626 = vmatprep.subr.mxu0 0.0
    %v6627 = vand.u32 %v1155, 4294901760
    %6628 = vmatpush2.msra.mxu0 %v6627
    %6629 = vmatprep.subr.mxu0 0.0
    %v6630 = vand.u32 %v1154, 4294901760
    %6631 = vmatpush2.msra.mxu0 %v6630
    %6632 = vmatprep.subr.mxu0 0.0
    %v6633 = vand.u32 %v1153, 4294901760
    %6634 = vmatpush2.msra.mxu0 %v6633
    %6635 = vmatprep.subr.mxu0 0.0
    %v6636 = vand.u32 %v1152, 4294901760
    %6637 = vmatpush2.msra.mxu0 %v6636
    %6638 = vmatprep.subr.mxu0 0.0
    %v6639 = vand.u32 %v1151, 4294901760
    %6640 = vmatpush2.msra.mxu0 %v6639
    %6641 = vmatprep.subr.mxu0 0.0
    %v6642 = vand.u32 %v1150, 4294901760
    %6643 = vmatpush2.msra.mxu0 %v6642
    %6644 = vmatprep.subr.mxu0 0.0
    %v6645 = vand.u32 %v1149, 4294901760
    %6646 = vmatpush2.msra.mxu0 %v6645
    %6647 = vmatprep.subr.mxu0 0.0
    %v6648 = vand.u32 %v1148, 4294901760
    %6649 = vmatpush2.msra.mxu0 %v6648
    %6650 = vmatprep.subr.mxu0 0.0
    %v6651 = vand.u32 %v1147, 4294901760
    %6652 = vmatpush2.msra.mxu0 %v6651
    %6653 = vmatprep.subr.mxu0 0.0
    %v6654 = vand.u32 %v1146, 4294901760
    %6655 = vmatpush2.msra.mxu0 %v6654
    %6656 = vmatprep.subr.mxu0 0.0
    %v6657 = vand.u32 %v1145, 4294901760
    %6658 = vmatpush2.msra.mxu0 %v6657
    %6659 = vmatprep.subr.mxu0 0.0
    %v6660 = vand.u32 %v1144, 4294901760
    %6661 = vmatpush2.msra.mxu0 %v6660
    %6662 = vmatprep.subr.mxu0 0.0
    %v6663 = vand.u32 %v1143, 4294901760
    %6664 = vmatpush2.msra.mxu0 %v6663
    %6665 = vmatprep.subr.mxu0 0.0
    %v6666 = vand.u32 %v1142, 4294901760
    %6667 = vmatpush2.msra.mxu0 %v6666
    %6668 = vmatprep.subr.mxu0 0.0
    %v6669 = vand.u32 %v1141, 4294901760
    %6670 = vmatpush2.msra.mxu0 %v6669
    %6671 = vmatprep.subr.mxu0 0.0
    %v6672 = vand.u32 %v1140, 4294901760
    %6673 = vmatpush2.msra.mxu0 %v6672
    %v6674 = vand.u32 %v5229, 4294901760
    %v6675 = vsub.f32 %v5229, %v6674
    %v6676 = vand.u32 %v6675, 4294901760
    %6677 = vmatprep.mubr.f32.mxu0 %v6676
    %v6678 = vand.u32 %v5228, 4294901760
    %v6679 = vsub.f32 %v5228, %v6678
    %v6680 = vand.u32 %v6679, 4294901760
    %6681 = vmatmul.mubr.f32.gmra.mxu0 %v6680
    %v6682 = vpop.f32.mrf.mxu0
    %v6683 = vadd.f32 %v6575, %v6682
    %v6684 = vpop.f32.mrf.mxu0
    %6685 = vdwg.mxu0
    %6686 = vmatprep.subr.mxu0 0.0
    %v6687 = vand.u32 %v1139, 4294901760
    %v6688 = vsub.f32 %v1139, %v6687
    %v6689 = vand.u32 %v6688, 4294901760
    %6690 = vmatpush1.msra.mxu0 %v6689
    %6691 = vmatprep.subr.mxu0 0.0
    %v6692 = vand.u32 %v1138, 4294901760
    %v6693 = vsub.f32 %v1138, %v6692
    %v6694 = vand.u32 %v6693, 4294901760
    %6695 = vmatpush1.msra.mxu0 %v6694
    %6696 = vmatprep.subr.mxu0 0.0
    %v6697 = vand.u32 %v1137, 4294901760
    %v6698 = vsub.f32 %v1137, %v6697
    %v6699 = vand.u32 %v6698, 4294901760
    %6700 = vmatpush1.msra.mxu0 %v6699
    %6701 = vmatprep.subr.mxu0 0.0
    %v6702 = vand.u32 %v1136, 4294901760
    %v6703 = vsub.f32 %v1136, %v6702
    %v6704 = vand.u32 %v6703, 4294901760
    %6705 = vmatpush1.msra.mxu0 %v6704
    %6706 = vmatprep.subr.mxu0 0.0
    %v6707 = vand.u32 %v1135, 4294901760
    %v6708 = vsub.f32 %v1135, %v6707
    %v6709 = vand.u32 %v6708, 4294901760
    %6710 = vmatpush1.msra.mxu0 %v6709
    %6711 = vmatprep.subr.mxu0 0.0
    %v6712 = vand.u32 %v1134, 4294901760
    %v6713 = vsub.f32 %v1134, %v6712
    %v6714 = vand.u32 %v6713, 4294901760
    %6715 = vmatpush1.msra.mxu0 %v6714
    %6716 = vmatprep.subr.mxu0 0.0
    %v6717 = vand.u32 %v1133, 4294901760
    %v6718 = vsub.f32 %v1133, %v6717
    %v6719 = vand.u32 %v6718, 4294901760
    %6720 = vmatpush1.msra.mxu0 %v6719
    %6721 = vmatprep.subr.mxu0 0.0
    %v6722 = vand.u32 %v1132, 4294901760
    %v6723 = vsub.f32 %v1132, %v6722
    %v6724 = vand.u32 %v6723, 4294901760
    %6725 = vmatpush1.msra.mxu0 %v6724
    %6726 = vmatprep.subr.mxu0 0.0
    %v6727 = vand.u32 %v1131, 4294901760
    %v6728 = vsub.f32 %v1131, %v6727
    %v6729 = vand.u32 %v6728, 4294901760
    %6730 = vmatpush1.msra.mxu0 %v6729
    %6731 = vmatprep.subr.mxu0 0.0
    %v6732 = vand.u32 %v1130, 4294901760
    %v6733 = vsub.f32 %v1130, %v6732
    %v6734 = vand.u32 %v6733, 4294901760
    %6735 = vmatpush1.msra.mxu0 %v6734
    %6736 = vmatprep.subr.mxu0 0.0
    %v6737 = vand.u32 %v1129, 4294901760
    %v6738 = vsub.f32 %v1129, %v6737
    %v6739 = vand.u32 %v6738, 4294901760
    %6740 = vmatpush1.msra.mxu0 %v6739
    %6741 = vmatprep.subr.mxu0 0.0
    %v6742 = vand.u32 %v1128, 4294901760
    %v6743 = vsub.f32 %v1128, %v6742
    %v6744 = vand.u32 %v6743, 4294901760
    %6745 = vmatpush1.msra.mxu0 %v6744
    %6746 = vmatprep.subr.mxu0 0.0
    %v6747 = vand.u32 %v1127, 4294901760
    %v6748 = vsub.f32 %v1127, %v6747
    %v6749 = vand.u32 %v6748, 4294901760
    %6750 = vmatpush1.msra.mxu0 %v6749
    %6751 = vmatprep.subr.mxu0 0.0
    %v6752 = vand.u32 %v1126, 4294901760
    %v6753 = vsub.f32 %v1126, %v6752
    %v6754 = vand.u32 %v6753, 4294901760
    %6755 = vmatpush1.msra.mxu0 %v6754
    %6756 = vmatprep.subr.mxu0 0.0
    %v6757 = vand.u32 %v1125, 4294901760
    %v6758 = vsub.f32 %v1125, %v6757
    %v6759 = vand.u32 %v6758, 4294901760
    %6760 = vmatpush1.msra.mxu0 %v6759
    %6761 = vmatprep.subr.mxu0 0.0
    %v6762 = vand.u32 %v1124, 4294901760
    %v6763 = vsub.f32 %v1124, %v6762
    %v6764 = vand.u32 %v6763, 4294901760
    %6765 = vmatpush1.msra.mxu0 %v6764
    %6766 = vmatprep.subr.mxu0 0.0
    %v6767 = vand.u32 %v1155, 4294901760
    %v6768 = vsub.f32 %v1155, %v6767
    %v6769 = vand.u32 %v6768, 4294901760
    %6770 = vmatpush2.msra.mxu0 %v6769
    %6771 = vmatprep.subr.mxu0 0.0
    %v6772 = vand.u32 %v1154, 4294901760
    %v6773 = vsub.f32 %v1154, %v6772
    %v6774 = vand.u32 %v6773, 4294901760
    %6775 = vmatpush2.msra.mxu0 %v6774
    %6776 = vmatprep.subr.mxu0 0.0
    %v6777 = vand.u32 %v1153, 4294901760
    %v6778 = vsub.f32 %v1153, %v6777
    %v6779 = vand.u32 %v6778, 4294901760
    %6780 = vmatpush2.msra.mxu0 %v6779
    %6781 = vmatprep.subr.mxu0 0.0
    %v6782 = vand.u32 %v1152, 4294901760
    %v6783 = vsub.f32 %v1152, %v6782
    %v6784 = vand.u32 %v6783, 4294901760
    %6785 = vmatpush2.msra.mxu0 %v6784
    %6786 = vmatprep.subr.mxu0 0.0
    %v6787 = vand.u32 %v1151, 4294901760
    %v6788 = vsub.f32 %v1151, %v6787
    %v6789 = vand.u32 %v6788, 4294901760
    %6790 = vmatpush2.msra.mxu0 %v6789
    %6791 = vmatprep.subr.mxu0 0.0
    %v6792 = vand.u32 %v1150, 4294901760
    %v6793 = vsub.f32 %v1150, %v6792
    %v6794 = vand.u32 %v6793, 4294901760
    %6795 = vmatpush2.msra.mxu0 %v6794
    %6796 = vmatprep.subr.mxu0 0.0
    %v6797 = vand.u32 %v1149, 4294901760
    %v6798 = vsub.f32 %v1149, %v6797
    %v6799 = vand.u32 %v6798, 4294901760
    %6800 = vmatpush2.msra.mxu0 %v6799
    %6801 = vmatprep.subr.mxu0 0.0
    %v6802 = vand.u32 %v1148, 4294901760
    %v6803 = vsub.f32 %v1148, %v6802
    %v6804 = vand.u32 %v6803, 4294901760
    %6805 = vmatpush2.msra.mxu0 %v6804
    %6806 = vmatprep.subr.mxu0 0.0
    %v6807 = vand.u32 %v1147, 4294901760
    %v6808 = vsub.f32 %v1147, %v6807
    %v6809 = vand.u32 %v6808, 4294901760
    %6810 = vmatpush2.msra.mxu0 %v6809
    %6811 = vmatprep.subr.mxu0 0.0
    %v6812 = vand.u32 %v1146, 4294901760
    %v6813 = vsub.f32 %v1146, %v6812
    %v6814 = vand.u32 %v6813, 4294901760
    %6815 = vmatpush2.msra.mxu0 %v6814
    %6816 = vmatprep.subr.mxu0 0.0
    %v6817 = vand.u32 %v1145, 4294901760
    %v6818 = vsub.f32 %v1145, %v6817
    %v6819 = vand.u32 %v6818, 4294901760
    %6820 = vmatpush2.msra.mxu0 %v6819
    %6821 = vmatprep.subr.mxu0 0.0
    %v6822 = vand.u32 %v1144, 4294901760
    %v6823 = vsub.f32 %v1144, %v6822
    %v6824 = vand.u32 %v6823, 4294901760
    %6825 = vmatpush2.msra.mxu0 %v6824
    %6826 = vmatprep.subr.mxu0 0.0
    %v6827 = vand.u32 %v1143, 4294901760
    %v6828 = vsub.f32 %v1143, %v6827
    %v6829 = vand.u32 %v6828, 4294901760
    %6830 = vmatpush2.msra.mxu0 %v6829
    %6831 = vmatprep.subr.mxu0 0.0
    %v6832 = vand.u32 %v1142, 4294901760
    %v6833 = vsub.f32 %v1142, %v6832
    %v6834 = vand.u32 %v6833, 4294901760
    %6835 = vmatpush2.msra.mxu0 %v6834
    %6836 = vmatprep.subr.mxu0 0.0
    %v6837 = vand.u32 %v1141, 4294901760
    %v6838 = vsub.f32 %v1141, %v6837
    %v6839 = vand.u32 %v6838, 4294901760
    %6840 = vmatpush2.msra.mxu0 %v6839
    %6841 = vmatprep.subr.mxu0 0.0
    %v6842 = vand.u32 %v1140, 4294901760
    %v6843 = vsub.f32 %v1140, %v6842
    %v6844 = vand.u32 %v6843, 4294901760
    %6845 = vmatpush2.msra.mxu0 %v6844
    %v6846 = vand.u32 %v5229, 4294901760
    %6847 = vmatprep.mubr.f32.mxu0 %v6846
    %v6848 = vand.u32 %v5228, 4294901760
    %6849 = vmatmul.mubr.f32.gmra.mxu0 %v6848
    %v6850 = vpop.f32.mrf.mxu0
    %v6851 = vadd.f32 %v6683, %v6850
    %v6852 = vpop.f32.mrf.mxu0
    %6853 = vdwg.mxu0
    %6854 = vmatprep.subr.mxu0 0.0
    %v6855 = vand.u32 %v1139, 4294901760
    %6856 = vmatpush1.msra.mxu0 %v6855
    %6857 = vmatprep.subr.mxu0 0.0
    %v6858 = vand.u32 %v1138, 4294901760
    %6859 = vmatpush1.msra.mxu0 %v6858
    %6860 = vmatprep.subr.mxu0 0.0
    %v6861 = vand.u32 %v1137, 4294901760
    %6862 = vmatpush1.msra.mxu0 %v6861
    %6863 = vmatprep.subr.mxu0 0.0
    %v6864 = vand.u32 %v1136, 4294901760
    %6865 = vmatpush1.msra.mxu0 %v6864
    %6866 = vmatprep.subr.mxu0 0.0
    %v6867 = vand.u32 %v1135, 4294901760
    %6868 = vmatpush1.msra.mxu0 %v6867
    %6869 = vmatprep.subr.mxu0 0.0
    %v6870 = vand.u32 %v1134, 4294901760
    %6871 = vmatpush1.msra.mxu0 %v6870
    %6872 = vmatprep.subr.mxu0 0.0
    %v6873 = vand.u32 %v1133, 4294901760
    %6874 = vmatpush1.msra.mxu0 %v6873
    %6875 = vmatprep.subr.mxu0 0.0
    %v6876 = vand.u32 %v1132, 4294901760
    %6877 = vmatpush1.msra.mxu0 %v6876
    %6878 = vmatprep.subr.mxu0 0.0
    %v6879 = vand.u32 %v1131, 4294901760
    %6880 = vmatpush1.msra.mxu0 %v6879
    %6881 = vmatprep.subr.mxu0 0.0
    %v6882 = vand.u32 %v1130, 4294901760
    %6883 = vmatpush1.msra.mxu0 %v6882
    %6884 = vmatprep.subr.mxu0 0.0
    %v6885 = vand.u32 %v1129, 4294901760
    %6886 = vmatpush1.msra.mxu0 %v6885
    %6887 = vmatprep.subr.mxu0 0.0
    %v6888 = vand.u32 %v1128, 4294901760
    %6889 = vmatpush1.msra.mxu0 %v6888
    %6890 = vmatprep.subr.mxu0 0.0
    %v6891 = vand.u32 %v1127, 4294901760
    %6892 = vmatpush1.msra.mxu0 %v6891
    %6893 = vmatprep.subr.mxu0 0.0
    %v6894 = vand.u32 %v1126, 4294901760
    %6895 = vmatpush1.msra.mxu0 %v6894
    %6896 = vmatprep.subr.mxu0 0.0
    %v6897 = vand.u32 %v1125, 4294901760
    %6898 = vmatpush1.msra.mxu0 %v6897
    %6899 = vmatprep.subr.mxu0 0.0
    %v6900 = vand.u32 %v1124, 4294901760
    %6901 = vmatpush1.msra.mxu0 %v6900
    %6902 = vmatprep.subr.mxu0 0.0
    %v6903 = vand.u32 %v1155, 4294901760
    %6904 = vmatpush2.msra.mxu0 %v6903
    %6905 = vmatprep.subr.mxu0 0.0
    %v6906 = vand.u32 %v1154, 4294901760
    %6907 = vmatpush2.msra.mxu0 %v6906
    %6908 = vmatprep.subr.mxu0 0.0
    %v6909 = vand.u32 %v1153, 4294901760
    %6910 = vmatpush2.msra.mxu0 %v6909
    %6911 = vmatprep.subr.mxu0 0.0
    %v6912 = vand.u32 %v1152, 4294901760
    %6913 = vmatpush2.msra.mxu0 %v6912
    %6914 = vmatprep.subr.mxu0 0.0
    %v6915 = vand.u32 %v1151, 4294901760
    %6916 = vmatpush2.msra.mxu0 %v6915
    %6917 = vmatprep.subr.mxu0 0.0
    %v6918 = vand.u32 %v1150, 4294901760
    %6919 = vmatpush2.msra.mxu0 %v6918
    %6920 = vmatprep.subr.mxu0 0.0
    %v6921 = vand.u32 %v1149, 4294901760
    %6922 = vmatpush2.msra.mxu0 %v6921
    %6923 = vmatprep.subr.mxu0 0.0
    %v6924 = vand.u32 %v1148, 4294901760
    %6925 = vmatpush2.msra.mxu0 %v6924
    %6926 = vmatprep.subr.mxu0 0.0
    %v6927 = vand.u32 %v1147, 4294901760
    %6928 = vmatpush2.msra.mxu0 %v6927
    %6929 = vmatprep.subr.mxu0 0.0
    %v6930 = vand.u32 %v1146, 4294901760
    %6931 = vmatpush2.msra.mxu0 %v6930
    %6932 = vmatprep.subr.mxu0 0.0
    %v6933 = vand.u32 %v1145, 4294901760
    %6934 = vmatpush2.msra.mxu0 %v6933
    %6935 = vmatprep.subr.mxu0 0.0
    %v6936 = vand.u32 %v1144, 4294901760
    %6937 = vmatpush2.msra.mxu0 %v6936
    %6938 = vmatprep.subr.mxu0 0.0
    %v6939 = vand.u32 %v1143, 4294901760
    %6940 = vmatpush2.msra.mxu0 %v6939
    %6941 = vmatprep.subr.mxu0 0.0
    %v6942 = vand.u32 %v1142, 4294901760
    %6943 = vmatpush2.msra.mxu0 %v6942
    %6944 = vmatprep.subr.mxu0 0.0
    %v6945 = vand.u32 %v1141, 4294901760
    %6946 = vmatpush2.msra.mxu0 %v6945
    %6947 = vmatprep.subr.mxu0 0.0
    %v6948 = vand.u32 %v1140, 4294901760
    %6949 = vmatpush2.msra.mxu0 %v6948
    %v6950 = vand.u32 %v5229, 4294901760
    %6951 = vmatprep.mubr.f32.mxu0 %v6950
    %v6952 = vand.u32 %v5228, 4294901760
    %6953 = vmatmul.mubr.f32.gmra.mxu0 %v6952
    %v6954 = vpop.f32.mrf.mxu0
    %v6955 = vadd.f32 %v6851, %v6954
    %v6956 = vpop.f32.mrf.mxu0
    %6957 = vdwg.mxu0
    %6958 = vmatprep.subr.mxu0 0.0
    %v6959 = vand.u32 %v1171, 4294901760
    %6960 = vmatpush1.msra.mxu0 %v6959
    %6961 = vmatprep.subr.mxu0 0.0
    %v6962 = vand.u32 %v1170, 4294901760
    %6963 = vmatpush1.msra.mxu0 %v6962
    %6964 = vmatprep.subr.mxu0 0.0
    %v6965 = vand.u32 %v1169, 4294901760
    %6966 = vmatpush1.msra.mxu0 %v6965
    %6967 = vmatprep.subr.mxu0 0.0
    %v6968 = vand.u32 %v1168, 4294901760
    %6969 = vmatpush1.msra.mxu0 %v6968
    %6970 = vmatprep.subr.mxu0 0.0
    %v6971 = vand.u32 %v1167, 4294901760
    %6972 = vmatpush1.msra.mxu0 %v6971
    %6973 = vmatprep.subr.mxu0 0.0
    %v6974 = vand.u32 %v1166, 4294901760
    %6975 = vmatpush1.msra.mxu0 %v6974
    %6976 = vmatprep.subr.mxu0 0.0
    %v6977 = vand.u32 %v1165, 4294901760
    %6978 = vmatpush1.msra.mxu0 %v6977
    %6979 = vmatprep.subr.mxu0 0.0
    %v6980 = vand.u32 %v1164, 4294901760
    %6981 = vmatpush1.msra.mxu0 %v6980
    %6982 = vmatprep.subr.mxu0 0.0
    %v6983 = vand.u32 %v1163, 4294901760
    %6984 = vmatpush1.msra.mxu0 %v6983
    %6985 = vmatprep.subr.mxu0 0.0
    %v6986 = vand.u32 %v1162, 4294901760
    %6987 = vmatpush1.msra.mxu0 %v6986
    %6988 = vmatprep.subr.mxu0 0.0
    %v6989 = vand.u32 %v1161, 4294901760
    %6990 = vmatpush1.msra.mxu0 %v6989
    %6991 = vmatprep.subr.mxu0 0.0
    %v6992 = vand.u32 %v1160, 4294901760
    %6993 = vmatpush1.msra.mxu0 %v6992
    %6994 = vmatprep.subr.mxu0 0.0
    %v6995 = vand.u32 %v1159, 4294901760
    %6996 = vmatpush1.msra.mxu0 %v6995
    %6997 = vmatprep.subr.mxu0 0.0
    %v6998 = vand.u32 %v1158, 4294901760
    %6999 = vmatpush1.msra.mxu0 %v6998
    %7000 = vmatprep.subr.mxu0 0.0
    %v7001 = vand.u32 %v1157, 4294901760
    %7002 = vmatpush1.msra.mxu0 %v7001
    %7003 = vmatprep.subr.mxu0 0.0
    %v7004 = vand.u32 %v1156, 4294901760
    %7005 = vmatpush1.msra.mxu0 %v7004
    %7006 = vmatprep.subr.mxu0 0.0
    %v7007 = vand.u32 %v1187, 4294901760
    %7008 = vmatpush2.msra.mxu0 %v7007
    %7009 = vmatprep.subr.mxu0 0.0
    %v7010 = vand.u32 %v1186, 4294901760
    %7011 = vmatpush2.msra.mxu0 %v7010
    %7012 = vmatprep.subr.mxu0 0.0
    %v7013 = vand.u32 %v1185, 4294901760
    %7014 = vmatpush2.msra.mxu0 %v7013
    %7015 = vmatprep.subr.mxu0 0.0
    %v7016 = vand.u32 %v1184, 4294901760
    %7017 = vmatpush2.msra.mxu0 %v7016
    %7018 = vmatprep.subr.mxu0 0.0
    %v7019 = vand.u32 %v1183, 4294901760
    %7020 = vmatpush2.msra.mxu0 %v7019
    %7021 = vmatprep.subr.mxu0 0.0
    %v7022 = vand.u32 %v1182, 4294901760
    %7023 = vmatpush2.msra.mxu0 %v7022
    %7024 = vmatprep.subr.mxu0 0.0
    %v7025 = vand.u32 %v1181, 4294901760
    %7026 = vmatpush2.msra.mxu0 %v7025
    %7027 = vmatprep.subr.mxu0 0.0
    %v7028 = vand.u32 %v1180, 4294901760
    %7029 = vmatpush2.msra.mxu0 %v7028
    %7030 = vmatprep.subr.mxu0 0.0
    %v7031 = vand.u32 %v1179, 4294901760
    %7032 = vmatpush2.msra.mxu0 %v7031
    %7033 = vmatprep.subr.mxu0 0.0
    %v7034 = vand.u32 %v1178, 4294901760
    %7035 = vmatpush2.msra.mxu0 %v7034
    %7036 = vmatprep.subr.mxu0 0.0
    %v7037 = vand.u32 %v1177, 4294901760
    %7038 = vmatpush2.msra.mxu0 %v7037
    %7039 = vmatprep.subr.mxu0 0.0
    %v7040 = vand.u32 %v1176, 4294901760
    %7041 = vmatpush2.msra.mxu0 %v7040
    %7042 = vmatprep.subr.mxu0 0.0
    %v7043 = vand.u32 %v1175, 4294901760
    %7044 = vmatpush2.msra.mxu0 %v7043
    %7045 = vmatprep.subr.mxu0 0.0
    %v7046 = vand.u32 %v1174, 4294901760
    %7047 = vmatpush2.msra.mxu0 %v7046
    %7048 = vmatprep.subr.mxu0 0.0
    %v7049 = vand.u32 %v1173, 4294901760
    %7050 = vmatpush2.msra.mxu0 %v7049
    %7051 = vmatprep.subr.mxu0 0.0
    %v7052 = vand.u32 %v1172, 4294901760
    %7053 = vmatpush2.msra.mxu0 %v7052
    %v7054 = vand.u32 %v5231, 4294901760
    %v7055 = vsub.f32 %v5231, %v7054
    %v7056 = vand.u32 %v7055, 4294901760
    %v7057 = vsub.f32 %v7055, %v7056
    %v7058 = vand.u32 %v7057, 4294901760
    %7059 = vmatprep.mubr.f32.mxu0 %v7058
    %v7060 = vand.u32 %v5230, 4294901760
    %v7061 = vsub.f32 %v5230, %v7060
    %v7062 = vand.u32 %v7061, 4294901760
    %v7063 = vsub.f32 %v7061, %v7062
    %v7064 = vand.u32 %v7063, 4294901760
    %7065 = vmatmul.mubr.f32.gmra.mxu0 %v7064
    %v7066 = vpop.f32.mrf.mxu0
    %v7067 = vadd.f32 %v6955, %v7066
    %v7068 = vpop.f32.mrf.mxu0
    %7069 = vdwg.mxu0
    %7070 = vmatprep.subr.mxu0 0.0
    %v7071 = vand.u32 %v1171, 4294901760
    %v7072 = vsub.f32 %v1171, %v7071
    %v7073 = vand.u32 %v7072, 4294901760
    %v7074 = vsub.f32 %v7072, %v7073
    %v7075 = vand.u32 %v7074, 4294901760
    %7076 = vmatpush1.msra.mxu0 %v7075
    %7077 = vmatprep.subr.mxu0 0.0
    %v7078 = vand.u32 %v1170, 4294901760
    %v7079 = vsub.f32 %v1170, %v7078
    %v7080 = vand.u32 %v7079, 4294901760
    %v7081 = vsub.f32 %v7079, %v7080
    %v7082 = vand.u32 %v7081, 4294901760
    %7083 = vmatpush1.msra.mxu0 %v7082
    %7084 = vmatprep.subr.mxu0 0.0
    %v7085 = vand.u32 %v1169, 4294901760
    %v7086 = vsub.f32 %v1169, %v7085
    %v7087 = vand.u32 %v7086, 4294901760
    %v7088 = vsub.f32 %v7086, %v7087
    %v7089 = vand.u32 %v7088, 4294901760
    %7090 = vmatpush1.msra.mxu0 %v7089
    %7091 = vmatprep.subr.mxu0 0.0
    %v7092 = vand.u32 %v1168, 4294901760
    %v7093 = vsub.f32 %v1168, %v7092
    %v7094 = vand.u32 %v7093, 4294901760
    %v7095 = vsub.f32 %v7093, %v7094
    %v7096 = vand.u32 %v7095, 4294901760
    %7097 = vmatpush1.msra.mxu0 %v7096
    %7098 = vmatprep.subr.mxu0 0.0
    %v7099 = vand.u32 %v1167, 4294901760
    %v7100 = vsub.f32 %v1167, %v7099
    %v7101 = vand.u32 %v7100, 4294901760
    %v7102 = vsub.f32 %v7100, %v7101
    %v7103 = vand.u32 %v7102, 4294901760
    %7104 = vmatpush1.msra.mxu0 %v7103
    %7105 = vmatprep.subr.mxu0 0.0
    %v7106 = vand.u32 %v1166, 4294901760
    %v7107 = vsub.f32 %v1166, %v7106
    %v7108 = vand.u32 %v7107, 4294901760
    %v7109 = vsub.f32 %v7107, %v7108
    %v7110 = vand.u32 %v7109, 4294901760
    %7111 = vmatpush1.msra.mxu0 %v7110
    %7112 = vmatprep.subr.mxu0 0.0
    %v7113 = vand.u32 %v1165, 4294901760
    %v7114 = vsub.f32 %v1165, %v7113
    %v7115 = vand.u32 %v7114, 4294901760
    %v7116 = vsub.f32 %v7114, %v7115
    %v7117 = vand.u32 %v7116, 4294901760
    %7118 = vmatpush1.msra.mxu0 %v7117
    %7119 = vmatprep.subr.mxu0 0.0
    %v7120 = vand.u32 %v1164, 4294901760
    %v7121 = vsub.f32 %v1164, %v7120
    %v7122 = vand.u32 %v7121, 4294901760
    %v7123 = vsub.f32 %v7121, %v7122
    %v7124 = vand.u32 %v7123, 4294901760
    %7125 = vmatpush1.msra.mxu0 %v7124
    %7126 = vmatprep.subr.mxu0 0.0
    %v7127 = vand.u32 %v1163, 4294901760
    %v7128 = vsub.f32 %v1163, %v7127
    %v7129 = vand.u32 %v7128, 4294901760
    %v7130 = vsub.f32 %v7128, %v7129
    %v7131 = vand.u32 %v7130, 4294901760
    %7132 = vmatpush1.msra.mxu0 %v7131
    %7133 = vmatprep.subr.mxu0 0.0
    %v7134 = vand.u32 %v1162, 4294901760
    %v7135 = vsub.f32 %v1162, %v7134
    %v7136 = vand.u32 %v7135, 4294901760
    %v7137 = vsub.f32 %v7135, %v7136
    %v7138 = vand.u32 %v7137, 4294901760
    %7139 = vmatpush1.msra.mxu0 %v7138
    %7140 = vmatprep.subr.mxu0 0.0
    %v7141 = vand.u32 %v1161, 4294901760
    %v7142 = vsub.f32 %v1161, %v7141
    %v7143 = vand.u32 %v7142, 4294901760
    %v7144 = vsub.f32 %v7142, %v7143
    %v7145 = vand.u32 %v7144, 4294901760
    %7146 = vmatpush1.msra.mxu0 %v7145
    %7147 = vmatprep.subr.mxu0 0.0
    %v7148 = vand.u32 %v1160, 4294901760
    %v7149 = vsub.f32 %v1160, %v7148
    %v7150 = vand.u32 %v7149, 4294901760
    %v7151 = vsub.f32 %v7149, %v7150
    %v7152 = vand.u32 %v7151, 4294901760
    %7153 = vmatpush1.msra.mxu0 %v7152
    %7154 = vmatprep.subr.mxu0 0.0
    %v7155 = vand.u32 %v1159, 4294901760
    %v7156 = vsub.f32 %v1159, %v7155
    %v7157 = vand.u32 %v7156, 4294901760
    %v7158 = vsub.f32 %v7156, %v7157
    %v7159 = vand.u32 %v7158, 4294901760
    %7160 = vmatpush1.msra.mxu0 %v7159
    %7161 = vmatprep.subr.mxu0 0.0
    %v7162 = vand.u32 %v1158, 4294901760
    %v7163 = vsub.f32 %v1158, %v7162
    %v7164 = vand.u32 %v7163, 4294901760
    %v7165 = vsub.f32 %v7163, %v7164
    %v7166 = vand.u32 %v7165, 4294901760
    %7167 = vmatpush1.msra.mxu0 %v7166
    %7168 = vmatprep.subr.mxu0 0.0
    %v7169 = vand.u32 %v1157, 4294901760
    %v7170 = vsub.f32 %v1157, %v7169
    %v7171 = vand.u32 %v7170, 4294901760
    %v7172 = vsub.f32 %v7170, %v7171
    %v7173 = vand.u32 %v7172, 4294901760
    %7174 = vmatpush1.msra.mxu0 %v7173
    %7175 = vmatprep.subr.mxu0 0.0
    %v7176 = vand.u32 %v1156, 4294901760
    %v7177 = vsub.f32 %v1156, %v7176
    %v7178 = vand.u32 %v7177, 4294901760
    %v7179 = vsub.f32 %v7177, %v7178
    %v7180 = vand.u32 %v7179, 4294901760
    %7181 = vmatpush1.msra.mxu0 %v7180
    %7182 = vmatprep.subr.mxu0 0.0
    %v7183 = vand.u32 %v1187, 4294901760
    %v7184 = vsub.f32 %v1187, %v7183
    %v7185 = vand.u32 %v7184, 4294901760
    %v7186 = vsub.f32 %v7184, %v7185
    %v7187 = vand.u32 %v7186, 4294901760
    %7188 = vmatpush2.msra.mxu0 %v7187
    %7189 = vmatprep.subr.mxu0 0.0
    %v7190 = vand.u32 %v1186, 4294901760
    %v7191 = vsub.f32 %v1186, %v7190
    %v7192 = vand.u32 %v7191, 4294901760
    %v7193 = vsub.f32 %v7191, %v7192
    %v7194 = vand.u32 %v7193, 4294901760
    %7195 = vmatpush2.msra.mxu0 %v7194
    %7196 = vmatprep.subr.mxu0 0.0
    %v7197 = vand.u32 %v1185, 4294901760
    %v7198 = vsub.f32 %v1185, %v7197
    %v7199 = vand.u32 %v7198, 4294901760
    %v7200 = vsub.f32 %v7198, %v7199
    %v7201 = vand.u32 %v7200, 4294901760
    %7202 = vmatpush2.msra.mxu0 %v7201
    %7203 = vmatprep.subr.mxu0 0.0
    %v7204 = vand.u32 %v1184, 4294901760
    %v7205 = vsub.f32 %v1184, %v7204
    %v7206 = vand.u32 %v7205, 4294901760
    %v7207 = vsub.f32 %v7205, %v7206
    %v7208 = vand.u32 %v7207, 4294901760
    %7209 = vmatpush2.msra.mxu0 %v7208
    %7210 = vmatprep.subr.mxu0 0.0
    %v7211 = vand.u32 %v1183, 4294901760
    %v7212 = vsub.f32 %v1183, %v7211
    %v7213 = vand.u32 %v7212, 4294901760
    %v7214 = vsub.f32 %v7212, %v7213
    %v7215 = vand.u32 %v7214, 4294901760
    %7216 = vmatpush2.msra.mxu0 %v7215
    %7217 = vmatprep.subr.mxu0 0.0
    %v7218 = vand.u32 %v1182, 4294901760
    %v7219 = vsub.f32 %v1182, %v7218
    %v7220 = vand.u32 %v7219, 4294901760
    %v7221 = vsub.f32 %v7219, %v7220
    %v7222 = vand.u32 %v7221, 4294901760
    %7223 = vmatpush2.msra.mxu0 %v7222
    %7224 = vmatprep.subr.mxu0 0.0
    %v7225 = vand.u32 %v1181, 4294901760
    %v7226 = vsub.f32 %v1181, %v7225
    %v7227 = vand.u32 %v7226, 4294901760
    %v7228 = vsub.f32 %v7226, %v7227
    %v7229 = vand.u32 %v7228, 4294901760
    %7230 = vmatpush2.msra.mxu0 %v7229
    %7231 = vmatprep.subr.mxu0 0.0
    %v7232 = vand.u32 %v1180, 4294901760
    %v7233 = vsub.f32 %v1180, %v7232
    %v7234 = vand.u32 %v7233, 4294901760
    %v7235 = vsub.f32 %v7233, %v7234
    %v7236 = vand.u32 %v7235, 4294901760
    %7237 = vmatpush2.msra.mxu0 %v7236
    %7238 = vmatprep.subr.mxu0 0.0
    %v7239 = vand.u32 %v1179, 4294901760
    %v7240 = vsub.f32 %v1179, %v7239
    %v7241 = vand.u32 %v7240, 4294901760
    %v7242 = vsub.f32 %v7240, %v7241
    %v7243 = vand.u32 %v7242, 4294901760
    %7244 = vmatpush2.msra.mxu0 %v7243
    %7245 = vmatprep.subr.mxu0 0.0
    %v7246 = vand.u32 %v1178, 4294901760
    %v7247 = vsub.f32 %v1178, %v7246
    %v7248 = vand.u32 %v7247, 4294901760
    %v7249 = vsub.f32 %v7247, %v7248
    %v7250 = vand.u32 %v7249, 4294901760
    %7251 = vmatpush2.msra.mxu0 %v7250
    %7252 = vmatprep.subr.mxu0 0.0
    %v7253 = vand.u32 %v1177, 4294901760
    %v7254 = vsub.f32 %v1177, %v7253
    %v7255 = vand.u32 %v7254, 4294901760
    %v7256 = vsub.f32 %v7254, %v7255
    %v7257 = vand.u32 %v7256, 4294901760
    %7258 = vmatpush2.msra.mxu0 %v7257
    %7259 = vmatprep.subr.mxu0 0.0
    %v7260 = vand.u32 %v1176, 4294901760
    %v7261 = vsub.f32 %v1176, %v7260
    %v7262 = vand.u32 %v7261, 4294901760
    %v7263 = vsub.f32 %v7261, %v7262
    %v7264 = vand.u32 %v7263, 4294901760
    %7265 = vmatpush2.msra.mxu0 %v7264
    %7266 = vmatprep.subr.mxu0 0.0
    %v7267 = vand.u32 %v1175, 4294901760
    %v7268 = vsub.f32 %v1175, %v7267
    %v7269 = vand.u32 %v7268, 4294901760
    %v7270 = vsub.f32 %v7268, %v7269
    %v7271 = vand.u32 %v7270, 4294901760
    %7272 = vmatpush2.msra.mxu0 %v7271
    %7273 = vmatprep.subr.mxu0 0.0
    %v7274 = vand.u32 %v1174, 4294901760
    %v7275 = vsub.f32 %v1174, %v7274
    %v7276 = vand.u32 %v7275, 4294901760
    %v7277 = vsub.f32 %v7275, %v7276
    %v7278 = vand.u32 %v7277, 4294901760
    %7279 = vmatpush2.msra.mxu0 %v7278
    %7280 = vmatprep.subr.mxu0 0.0
    %v7281 = vand.u32 %v1173, 4294901760
    %v7282 = vsub.f32 %v1173, %v7281
    %v7283 = vand.u32 %v7282, 4294901760
    %v7284 = vsub.f32 %v7282, %v7283
    %v7285 = vand.u32 %v7284, 4294901760
    %7286 = vmatpush2.msra.mxu0 %v7285
    %7287 = vmatprep.subr.mxu0 0.0
    %v7288 = vand.u32 %v1172, 4294901760
    %v7289 = vsub.f32 %v1172, %v7288
    %v7290 = vand.u32 %v7289, 4294901760
    %v7291 = vsub.f32 %v7289, %v7290
    %v7292 = vand.u32 %v7291, 4294901760
    %7293 = vmatpush2.msra.mxu0 %v7292
    %v7294 = vand.u32 %v5231, 4294901760
    %7295 = vmatprep.mubr.f32.mxu0 %v7294
    %v7296 = vand.u32 %v5230, 4294901760
    %7297 = vmatmul.mubr.f32.gmra.mxu0 %v7296
    %v7298 = vpop.f32.mrf.mxu0
    %v7299 = vadd.f32 %v7067, %v7298
    %v7300 = vpop.f32.mrf.mxu0
    %7301 = vdwg.mxu0
    %7302 = vmatprep.subr.mxu0 0.0
    %v7303 = vand.u32 %v1171, 4294901760
    %v7304 = vsub.f32 %v1171, %v7303
    %7305 = vmatpush1.msra.mxu0 %v7304
    %7306 = vmatprep.subr.mxu0 0.0
    %v7307 = vand.u32 %v1170, 4294901760
    %v7308 = vsub.f32 %v1170, %v7307
    %7309 = vmatpush1.msra.mxu0 %v7308
    %7310 = vmatprep.subr.mxu0 0.0
    %v7311 = vand.u32 %v1169, 4294901760
    %v7312 = vsub.f32 %v1169, %v7311
    %7313 = vmatpush1.msra.mxu0 %v7312
    %7314 = vmatprep.subr.mxu0 0.0
    %v7315 = vand.u32 %v1168, 4294901760
    %v7316 = vsub.f32 %v1168, %v7315
    %7317 = vmatpush1.msra.mxu0 %v7316
    %7318 = vmatprep.subr.mxu0 0.0
    %v7319 = vand.u32 %v1167, 4294901760
    %v7320 = vsub.f32 %v1167, %v7319
    %7321 = vmatpush1.msra.mxu0 %v7320
    %7322 = vmatprep.subr.mxu0 0.0
    %v7323 = vand.u32 %v1166, 4294901760
    %v7324 = vsub.f32 %v1166, %v7323
    %7325 = vmatpush1.msra.mxu0 %v7324
    %7326 = vmatprep.subr.mxu0 0.0
    %v7327 = vand.u32 %v1165, 4294901760
    %v7328 = vsub.f32 %v1165, %v7327
    %7329 = vmatpush1.msra.mxu0 %v7328
    %7330 = vmatprep.subr.mxu0 0.0
    %v7331 = vand.u32 %v1164, 4294901760
    %v7332 = vsub.f32 %v1164, %v7331
    %7333 = vmatpush1.msra.mxu0 %v7332
    %7334 = vmatprep.subr.mxu0 0.0
    %v7335 = vand.u32 %v1163, 4294901760
    %v7336 = vsub.f32 %v1163, %v7335
    %7337 = vmatpush1.msra.mxu0 %v7336
    %7338 = vmatprep.subr.mxu0 0.0
    %v7339 = vand.u32 %v1162, 4294901760
    %v7340 = vsub.f32 %v1162, %v7339
    %7341 = vmatpush1.msra.mxu0 %v7340
    %7342 = vmatprep.subr.mxu0 0.0
    %v7343 = vand.u32 %v1161, 4294901760
    %v7344 = vsub.f32 %v1161, %v7343
    %7345 = vmatpush1.msra.mxu0 %v7344
    %7346 = vmatprep.subr.mxu0 0.0
    %v7347 = vand.u32 %v1160, 4294901760
    %v7348 = vsub.f32 %v1160, %v7347
    %7349 = vmatpush1.msra.mxu0 %v7348
    %7350 = vmatprep.subr.mxu0 0.0
    %v7351 = vand.u32 %v1159, 4294901760
    %v7352 = vsub.f32 %v1159, %v7351
    %7353 = vmatpush1.msra.mxu0 %v7352
    %7354 = vmatprep.subr.mxu0 0.0
    %v7355 = vand.u32 %v1158, 4294901760
    %v7356 = vsub.f32 %v1158, %v7355
    %7357 = vmatpush1.msra.mxu0 %v7356
    %7358 = vmatprep.subr.mxu0 0.0
    %v7359 = vand.u32 %v1157, 4294901760
    %v7360 = vsub.f32 %v1157, %v7359
    %7361 = vmatpush1.msra.mxu0 %v7360
    %7362 = vmatprep.subr.mxu0 0.0
    %v7363 = vand.u32 %v1156, 4294901760
    %v7364 = vsub.f32 %v1156, %v7363
    %7365 = vmatpush1.msra.mxu0 %v7364
    %7366 = vmatprep.subr.mxu0 0.0
    %v7367 = vand.u32 %v1187, 4294901760
    %v7368 = vsub.f32 %v1187, %v7367
    %7369 = vmatpush2.msra.mxu0 %v7368
    %7370 = vmatprep.subr.mxu0 0.0
    %v7371 = vand.u32 %v1186, 4294901760
    %v7372 = vsub.f32 %v1186, %v7371
    %7373 = vmatpush2.msra.mxu0 %v7372
    %7374 = vmatprep.subr.mxu0 0.0
    %v7375 = vand.u32 %v1185, 4294901760
    %v7376 = vsub.f32 %v1185, %v7375
    %7377 = vmatpush2.msra.mxu0 %v7376
    %7378 = vmatprep.subr.mxu0 0.0
    %v7379 = vand.u32 %v1184, 4294901760
    %v7380 = vsub.f32 %v1184, %v7379
    %7381 = vmatpush2.msra.mxu0 %v7380
    %7382 = vmatprep.subr.mxu0 0.0
    %v7383 = vand.u32 %v1183, 4294901760
    %v7384 = vsub.f32 %v1183, %v7383
    %7385 = vmatpush2.msra.mxu0 %v7384
    %7386 = vmatprep.subr.mxu0 0.0
    %v7387 = vand.u32 %v1182, 4294901760
    %v7388 = vsub.f32 %v1182, %v7387
    %7389 = vmatpush2.msra.mxu0 %v7388
    %7390 = vmatprep.subr.mxu0 0.0
    %v7391 = vand.u32 %v1181, 4294901760
    %v7392 = vsub.f32 %v1181, %v7391
    %7393 = vmatpush2.msra.mxu0 %v7392
    %7394 = vmatprep.subr.mxu0 0.0
    %v7395 = vand.u32 %v1180, 4294901760
    %v7396 = vsub.f32 %v1180, %v7395
    %7397 = vmatpush2.msra.mxu0 %v7396
    %7398 = vmatprep.subr.mxu0 0.0
    %v7399 = vand.u32 %v1179, 4294901760
    %v7400 = vsub.f32 %v1179, %v7399
    %7401 = vmatpush2.msra.mxu0 %v7400
    %7402 = vmatprep.subr.mxu0 0.0
    %v7403 = vand.u32 %v1178, 4294901760
    %v7404 = vsub.f32 %v1178, %v7403
    %7405 = vmatpush2.msra.mxu0 %v7404
    %7406 = vmatprep.subr.mxu0 0.0
    %v7407 = vand.u32 %v1177, 4294901760
    %v7408 = vsub.f32 %v1177, %v7407
    %7409 = vmatpush2.msra.mxu0 %v7408
    %7410 = vmatprep.subr.mxu0 0.0
    %v7411 = vand.u32 %v1176, 4294901760
    %v7412 = vsub.f32 %v1176, %v7411
    %7413 = vmatpush2.msra.mxu0 %v7412
    %7414 = vmatprep.subr.mxu0 0.0
    %v7415 = vand.u32 %v1175, 4294901760
    %v7416 = vsub.f32 %v1175, %v7415
    %7417 = vmatpush2.msra.mxu0 %v7416
    %7418 = vmatprep.subr.mxu0 0.0
    %v7419 = vand.u32 %v1174, 4294901760
    %v7420 = vsub.f32 %v1174, %v7419
    %7421 = vmatpush2.msra.mxu0 %v7420
    %7422 = vmatprep.subr.mxu0 0.0
    %v7423 = vand.u32 %v1173, 4294901760
    %v7424 = vsub.f32 %v1173, %v7423
    %7425 = vmatpush2.msra.mxu0 %v7424
    %7426 = vmatprep.subr.mxu0 0.0
    %v7427 = vand.u32 %v1172, 4294901760
    %v7428 = vsub.f32 %v1172, %v7427
    %7429 = vmatpush2.msra.mxu0 %v7428
    %v7430 = vand.u32 %v5231, 4294901760
    %v7431 = vsub.f32 %v5231, %v7430
    %7432 = vmatprep.mubr.f32.mxu0 %v7431
    %v7433 = vand.u32 %v5230, 4294901760
    %v7434 = vsub.f32 %v5230, %v7433
    %7435 = vmatmul.mubr.f32.gmra.mxu0 %v7434
    %v7436 = vpop.f32.mrf.mxu0
    %v7437 = vadd.f32 %v7299, %v7436
    %v7438 = vpop.f32.mrf.mxu0
    %7439 = vdwg.mxu0
    %7440 = vmatprep.subr.mxu0 0.0
    %v7441 = vand.u32 %v1171, 4294901760
    %7442 = vmatpush1.msra.mxu0 %v7441
    %7443 = vmatprep.subr.mxu0 0.0
    %v7444 = vand.u32 %v1170, 4294901760
    %7445 = vmatpush1.msra.mxu0 %v7444
    %7446 = vmatprep.subr.mxu0 0.0
    %v7447 = vand.u32 %v1169, 4294901760
    %7448 = vmatpush1.msra.mxu0 %v7447
    %7449 = vmatprep.subr.mxu0 0.0
    %v7450 = vand.u32 %v1168, 4294901760
    %7451 = vmatpush1.msra.mxu0 %v7450
    %7452 = vmatprep.subr.mxu0 0.0
    %v7453 = vand.u32 %v1167, 4294901760
    %7454 = vmatpush1.msra.mxu0 %v7453
    %7455 = vmatprep.subr.mxu0 0.0
    %v7456 = vand.u32 %v1166, 4294901760
    %7457 = vmatpush1.msra.mxu0 %v7456
    %7458 = vmatprep.subr.mxu0 0.0
    %v7459 = vand.u32 %v1165, 4294901760
    %7460 = vmatpush1.msra.mxu0 %v7459
    %7461 = vmatprep.subr.mxu0 0.0
    %v7462 = vand.u32 %v1164, 4294901760
    %7463 = vmatpush1.msra.mxu0 %v7462
    %7464 = vmatprep.subr.mxu0 0.0
    %v7465 = vand.u32 %v1163, 4294901760
    %7466 = vmatpush1.msra.mxu0 %v7465
    %7467 = vmatprep.subr.mxu0 0.0
    %v7468 = vand.u32 %v1162, 4294901760
    %7469 = vmatpush1.msra.mxu0 %v7468
    %7470 = vmatprep.subr.mxu0 0.0
    %v7471 = vand.u32 %v1161, 4294901760
    %7472 = vmatpush1.msra.mxu0 %v7471
    %7473 = vmatprep.subr.mxu0 0.0
    %v7474 = vand.u32 %v1160, 4294901760
    %7475 = vmatpush1.msra.mxu0 %v7474
    %7476 = vmatprep.subr.mxu0 0.0
    %v7477 = vand.u32 %v1159, 4294901760
    %7478 = vmatpush1.msra.mxu0 %v7477
    %7479 = vmatprep.subr.mxu0 0.0
    %v7480 = vand.u32 %v1158, 4294901760
    %7481 = vmatpush1.msra.mxu0 %v7480
    %7482 = vmatprep.subr.mxu0 0.0
    %v7483 = vand.u32 %v1157, 4294901760
    %7484 = vmatpush1.msra.mxu0 %v7483
    %7485 = vmatprep.subr.mxu0 0.0
    %v7486 = vand.u32 %v1156, 4294901760
    %7487 = vmatpush1.msra.mxu0 %v7486
    %7488 = vmatprep.subr.mxu0 0.0
    %v7489 = vand.u32 %v1187, 4294901760
    %7490 = vmatpush2.msra.mxu0 %v7489
    %7491 = vmatprep.subr.mxu0 0.0
    %v7492 = vand.u32 %v1186, 4294901760
    %7493 = vmatpush2.msra.mxu0 %v7492
    %7494 = vmatprep.subr.mxu0 0.0
    %v7495 = vand.u32 %v1185, 4294901760
    %7496 = vmatpush2.msra.mxu0 %v7495
    %7497 = vmatprep.subr.mxu0 0.0
    %v7498 = vand.u32 %v1184, 4294901760
    %7499 = vmatpush2.msra.mxu0 %v7498
    %7500 = vmatprep.subr.mxu0 0.0
    %v7501 = vand.u32 %v1183, 4294901760
    %7502 = vmatpush2.msra.mxu0 %v7501
    %7503 = vmatprep.subr.mxu0 0.0
    %v7504 = vand.u32 %v1182, 4294901760
    %7505 = vmatpush2.msra.mxu0 %v7504
    %7506 = vmatprep.subr.mxu0 0.0
    %v7507 = vand.u32 %v1181, 4294901760
    %7508 = vmatpush2.msra.mxu0 %v7507
    %7509 = vmatprep.subr.mxu0 0.0
    %v7510 = vand.u32 %v1180, 4294901760
    %7511 = vmatpush2.msra.mxu0 %v7510
    %7512 = vmatprep.subr.mxu0 0.0
    %v7513 = vand.u32 %v1179, 4294901760
    %7514 = vmatpush2.msra.mxu0 %v7513
    %7515 = vmatprep.subr.mxu0 0.0
    %v7516 = vand.u32 %v1178, 4294901760
    %7517 = vmatpush2.msra.mxu0 %v7516
    %7518 = vmatprep.subr.mxu0 0.0
    %v7519 = vand.u32 %v1177, 4294901760
    %7520 = vmatpush2.msra.mxu0 %v7519
    %7521 = vmatprep.subr.mxu0 0.0
    %v7522 = vand.u32 %v1176, 4294901760
    %7523 = vmatpush2.msra.mxu0 %v7522
    %7524 = vmatprep.subr.mxu0 0.0
    %v7525 = vand.u32 %v1175, 4294901760
    %7526 = vmatpush2.msra.mxu0 %v7525
    %7527 = vmatprep.subr.mxu0 0.0
    %v7528 = vand.u32 %v1174, 4294901760
    %7529 = vmatpush2.msra.mxu0 %v7528
    %7530 = vmatprep.subr.mxu0 0.0
    %v7531 = vand.u32 %v1173, 4294901760
    %7532 = vmatpush2.msra.mxu0 %v7531
    %7533 = vmatprep.subr.mxu0 0.0
    %v7534 = vand.u32 %v1172, 4294901760
    %7535 = vmatpush2.msra.mxu0 %v7534
    %v7536 = vand.u32 %v5231, 4294901760
    %v7537 = vsub.f32 %v5231, %v7536
    %v7538 = vand.u32 %v7537, 4294901760
    %7539 = vmatprep.mubr.f32.mxu0 %v7538
    %v7540 = vand.u32 %v5230, 4294901760
    %v7541 = vsub.f32 %v5230, %v7540
    %v7542 = vand.u32 %v7541, 4294901760
    %7543 = vmatmul.mubr.f32.gmra.mxu0 %v7542
    %v7544 = vpop.f32.mrf.mxu0
    %v7545 = vadd.f32 %v7437, %v7544
    %v7546 = vpop.f32.mrf.mxu0
    %7547 = vdwg.mxu0
    %7548 = vmatprep.subr.mxu0 0.0
    %v7549 = vand.u32 %v1171, 4294901760
    %v7550 = vsub.f32 %v1171, %v7549
    %v7551 = vand.u32 %v7550, 4294901760
    %7552 = vmatpush1.msra.mxu0 %v7551
    %7553 = vmatprep.subr.mxu0 0.0
    %v7554 = vand.u32 %v1170, 4294901760
    %v7555 = vsub.f32 %v1170, %v7554
    %v7556 = vand.u32 %v7555, 4294901760
    %7557 = vmatpush1.msra.mxu0 %v7556
    %7558 = vmatprep.subr.mxu0 0.0
    %v7559 = vand.u32 %v1169, 4294901760
    %v7560 = vsub.f32 %v1169, %v7559
    %v7561 = vand.u32 %v7560, 4294901760
    %7562 = vmatpush1.msra.mxu0 %v7561
    %7563 = vmatprep.subr.mxu0 0.0
    %v7564 = vand.u32 %v1168, 4294901760
    %v7565 = vsub.f32 %v1168, %v7564
    %v7566 = vand.u32 %v7565, 4294901760
    %7567 = vmatpush1.msra.mxu0 %v7566
    %7568 = vmatprep.subr.mxu0 0.0
    %v7569 = vand.u32 %v1167, 4294901760
    %v7570 = vsub.f32 %v1167, %v7569
    %v7571 = vand.u32 %v7570, 4294901760
    %7572 = vmatpush1.msra.mxu0 %v7571
    %7573 = vmatprep.subr.mxu0 0.0
    %v7574 = vand.u32 %v1166, 4294901760
    %v7575 = vsub.f32 %v1166, %v7574
    %v7576 = vand.u32 %v7575, 4294901760
    %7577 = vmatpush1.msra.mxu0 %v7576
    %7578 = vmatprep.subr.mxu0 0.0
    %v7579 = vand.u32 %v1165, 4294901760
    %v7580 = vsub.f32 %v1165, %v7579
    %v7581 = vand.u32 %v7580, 4294901760
    %7582 = vmatpush1.msra.mxu0 %v7581
    %7583 = vmatprep.subr.mxu0 0.0
    %v7584 = vand.u32 %v1164, 4294901760
    %v7585 = vsub.f32 %v1164, %v7584
    %v7586 = vand.u32 %v7585, 4294901760
    %7587 = vmatpush1.msra.mxu0 %v7586
    %7588 = vmatprep.subr.mxu0 0.0
    %v7589 = vand.u32 %v1163, 4294901760
    %v7590 = vsub.f32 %v1163, %v7589
    %v7591 = vand.u32 %v7590, 4294901760
    %7592 = vmatpush1.msra.mxu0 %v7591
    %7593 = vmatprep.subr.mxu0 0.0
    %v7594 = vand.u32 %v1162, 4294901760
    %v7595 = vsub.f32 %v1162, %v7594
    %v7596 = vand.u32 %v7595, 4294901760
    %7597 = vmatpush1.msra.mxu0 %v7596
    %7598 = vmatprep.subr.mxu0 0.0
    %v7599 = vand.u32 %v1161, 4294901760
    %v7600 = vsub.f32 %v1161, %v7599
    %v7601 = vand.u32 %v7600, 4294901760
    %7602 = vmatpush1.msra.mxu0 %v7601
    %7603 = vmatprep.subr.mxu0 0.0
    %v7604 = vand.u32 %v1160, 4294901760
    %v7605 = vsub.f32 %v1160, %v7604
    %v7606 = vand.u32 %v7605, 4294901760
    %7607 = vmatpush1.msra.mxu0 %v7606
    %7608 = vmatprep.subr.mxu0 0.0
    %v7609 = vand.u32 %v1159, 4294901760
    %v7610 = vsub.f32 %v1159, %v7609
    %v7611 = vand.u32 %v7610, 4294901760
    %7612 = vmatpush1.msra.mxu0 %v7611
    %7613 = vmatprep.subr.mxu0 0.0
    %v7614 = vand.u32 %v1158, 4294901760
    %v7615 = vsub.f32 %v1158, %v7614
    %v7616 = vand.u32 %v7615, 4294901760
    %7617 = vmatpush1.msra.mxu0 %v7616
    %7618 = vmatprep.subr.mxu0 0.0
    %v7619 = vand.u32 %v1157, 4294901760
    %v7620 = vsub.f32 %v1157, %v7619
    %v7621 = vand.u32 %v7620, 4294901760
    %7622 = vmatpush1.msra.mxu0 %v7621
    %7623 = vmatprep.subr.mxu0 0.0
    %v7624 = vand.u32 %v1156, 4294901760
    %v7625 = vsub.f32 %v1156, %v7624
    %v7626 = vand.u32 %v7625, 4294901760
    %7627 = vmatpush1.msra.mxu0 %v7626
    %7628 = vmatprep.subr.mxu0 0.0
    %v7629 = vand.u32 %v1187, 4294901760
    %v7630 = vsub.f32 %v1187, %v7629
    %v7631 = vand.u32 %v7630, 4294901760
    %7632 = vmatpush2.msra.mxu0 %v7631
    %7633 = vmatprep.subr.mxu0 0.0
    %v7634 = vand.u32 %v1186, 4294901760
    %v7635 = vsub.f32 %v1186, %v7634
    %v7636 = vand.u32 %v7635, 4294901760
    %7637 = vmatpush2.msra.mxu0 %v7636
    %7638 = vmatprep.subr.mxu0 0.0
    %v7639 = vand.u32 %v1185, 4294901760
    %v7640 = vsub.f32 %v1185, %v7639
    %v7641 = vand.u32 %v7640, 4294901760
    %7642 = vmatpush2.msra.mxu0 %v7641
    %7643 = vmatprep.subr.mxu0 0.0
    %v7644 = vand.u32 %v1184, 4294901760
    %v7645 = vsub.f32 %v1184, %v7644
    %v7646 = vand.u32 %v7645, 4294901760
    %7647 = vmatpush2.msra.mxu0 %v7646
    %7648 = vmatprep.subr.mxu0 0.0
    %v7649 = vand.u32 %v1183, 4294901760
    %v7650 = vsub.f32 %v1183, %v7649
    %v7651 = vand.u32 %v7650, 4294901760
    %7652 = vmatpush2.msra.mxu0 %v7651
    %7653 = vmatprep.subr.mxu0 0.0
    %v7654 = vand.u32 %v1182, 4294901760
    %v7655 = vsub.f32 %v1182, %v7654
    %v7656 = vand.u32 %v7655, 4294901760
    %7657 = vmatpush2.msra.mxu0 %v7656
    %7658 = vmatprep.subr.mxu0 0.0
    %v7659 = vand.u32 %v1181, 4294901760
    %v7660 = vsub.f32 %v1181, %v7659
    %v7661 = vand.u32 %v7660, 4294901760
    %7662 = vmatpush2.msra.mxu0 %v7661
    %7663 = vmatprep.subr.mxu0 0.0
    %v7664 = vand.u32 %v1180, 4294901760
    %v7665 = vsub.f32 %v1180, %v7664
    %v7666 = vand.u32 %v7665, 4294901760
    %7667 = vmatpush2.msra.mxu0 %v7666
    %7668 = vmatprep.subr.mxu0 0.0
    %v7669 = vand.u32 %v1179, 4294901760
    %v7670 = vsub.f32 %v1179, %v7669
    %v7671 = vand.u32 %v7670, 4294901760
    %7672 = vmatpush2.msra.mxu0 %v7671
    %7673 = vmatprep.subr.mxu0 0.0
    %v7674 = vand.u32 %v1178, 4294901760
    %v7675 = vsub.f32 %v1178, %v7674
    %v7676 = vand.u32 %v7675, 4294901760
    %7677 = vmatpush2.msra.mxu0 %v7676
    %7678 = vmatprep.subr.mxu0 0.0
    %v7679 = vand.u32 %v1177, 4294901760
    %v7680 = vsub.f32 %v1177, %v7679
    %v7681 = vand.u32 %v7680, 4294901760
    %7682 = vmatpush2.msra.mxu0 %v7681
    %7683 = vmatprep.subr.mxu0 0.0
    %v7684 = vand.u32 %v1176, 4294901760
    %v7685 = vsub.f32 %v1176, %v7684
    %v7686 = vand.u32 %v7685, 4294901760
    %7687 = vmatpush2.msra.mxu0 %v7686
    %7688 = vmatprep.subr.mxu0 0.0
    %v7689 = vand.u32 %v1175, 4294901760
    %v7690 = vsub.f32 %v1175, %v7689
    %v7691 = vand.u32 %v7690, 4294901760
    %7692 = vmatpush2.msra.mxu0 %v7691
    %7693 = vmatprep.subr.mxu0 0.0
    %v7694 = vand.u32 %v1174, 4294901760
    %v7695 = vsub.f32 %v1174, %v7694
    %v7696 = vand.u32 %v7695, 4294901760
    %7697 = vmatpush2.msra.mxu0 %v7696
    %7698 = vmatprep.subr.mxu0 0.0
    %v7699 = vand.u32 %v1173, 4294901760
    %v7700 = vsub.f32 %v1173, %v7699
    %v7701 = vand.u32 %v7700, 4294901760
    %7702 = vmatpush2.msra.mxu0 %v7701
    %7703 = vmatprep.subr.mxu0 0.0
    %v7704 = vand.u32 %v1172, 4294901760
    %v7705 = vsub.f32 %v1172, %v7704
    %v7706 = vand.u32 %v7705, 4294901760
    %7707 = vmatpush2.msra.mxu0 %v7706
    %v7708 = vand.u32 %v5231, 4294901760
    %7709 = vmatprep.mubr.f32.mxu0 %v7708
    %v7710 = vand.u32 %v5230, 4294901760
    %7711 = vmatmul.mubr.f32.gmra.mxu0 %v7710
    %v7712 = vpop.f32.mrf.mxu0
    %v7713 = vadd.f32 %v7545, %v7712
    %v7714 = vpop.f32.mrf.mxu0
    %7715 = vdwg.mxu0
    %7716 = vmatprep.subr.mxu0 0.0
    %v7717 = vand.u32 %v1171, 4294901760
    %7718 = vmatpush1.msra.mxu0 %v7717
    %7719 = vmatprep.subr.mxu0 0.0
    %v7720 = vand.u32 %v1170, 4294901760
    %7721 = vmatpush1.msra.mxu0 %v7720
    %7722 = vmatprep.subr.mxu0 0.0
    %v7723 = vand.u32 %v1169, 4294901760
    %7724 = vmatpush1.msra.mxu0 %v7723
    %7725 = vmatprep.subr.mxu0 0.0
    %v7726 = vand.u32 %v1168, 4294901760
    %7727 = vmatpush1.msra.mxu0 %v7726
    %7728 = vmatprep.subr.mxu0 0.0
    %v7729 = vand.u32 %v1167, 4294901760
    %7730 = vmatpush1.msra.mxu0 %v7729
    %7731 = vmatprep.subr.mxu0 0.0
    %v7732 = vand.u32 %v1166, 4294901760
    %7733 = vmatpush1.msra.mxu0 %v7732
    %7734 = vmatprep.subr.mxu0 0.0
    %v7735 = vand.u32 %v1165, 4294901760
    %7736 = vmatpush1.msra.mxu0 %v7735
    %7737 = vmatprep.subr.mxu0 0.0
    %v7738 = vand.u32 %v1164, 4294901760
    %7739 = vmatpush1.msra.mxu0 %v7738
    %7740 = vmatprep.subr.mxu0 0.0
    %v7741 = vand.u32 %v1163, 4294901760
    %7742 = vmatpush1.msra.mxu0 %v7741
    %7743 = vmatprep.subr.mxu0 0.0
    %v7744 = vand.u32 %v1162, 4294901760
    %7745 = vmatpush1.msra.mxu0 %v7744
    %7746 = vmatprep.subr.mxu0 0.0
    %v7747 = vand.u32 %v1161, 4294901760
    %7748 = vmatpush1.msra.mxu0 %v7747
    %7749 = vmatprep.subr.mxu0 0.0
    %v7750 = vand.u32 %v1160, 4294901760
    %7751 = vmatpush1.msra.mxu0 %v7750
    %7752 = vmatprep.subr.mxu0 0.0
    %v7753 = vand.u32 %v1159, 4294901760
    %7754 = vmatpush1.msra.mxu0 %v7753
    %7755 = vmatprep.subr.mxu0 0.0
    %v7756 = vand.u32 %v1158, 4294901760
    %7757 = vmatpush1.msra.mxu0 %v7756
    %7758 = vmatprep.subr.mxu0 0.0
    %v7759 = vand.u32 %v1157, 4294901760
    %7760 = vmatpush1.msra.mxu0 %v7759
    %7761 = vmatprep.subr.mxu0 0.0
    %v7762 = vand.u32 %v1156, 4294901760
    %7763 = vmatpush1.msra.mxu0 %v7762
    %7764 = vmatprep.subr.mxu0 0.0
    %v7765 = vand.u32 %v1187, 4294901760
    %7766 = vmatpush2.msra.mxu0 %v7765
    %7767 = vmatprep.subr.mxu0 0.0
    %v7768 = vand.u32 %v1186, 4294901760
    %7769 = vmatpush2.msra.mxu0 %v7768
    %7770 = vmatprep.subr.mxu0 0.0
    %v7771 = vand.u32 %v1185, 4294901760
    %7772 = vmatpush2.msra.mxu0 %v7771
    %7773 = vmatprep.subr.mxu0 0.0
    %v7774 = vand.u32 %v1184, 4294901760
    %7775 = vmatpush2.msra.mxu0 %v7774
    %7776 = vmatprep.subr.mxu0 0.0
    %v7777 = vand.u32 %v1183, 4294901760
    %7778 = vmatpush2.msra.mxu0 %v7777
    %7779 = vmatprep.subr.mxu0 0.0
    %v7780 = vand.u32 %v1182, 4294901760
    %7781 = vmatpush2.msra.mxu0 %v7780
    %7782 = vmatprep.subr.mxu0 0.0
    %v7783 = vand.u32 %v1181, 4294901760
    %7784 = vmatpush2.msra.mxu0 %v7783
    %7785 = vmatprep.subr.mxu0 0.0
    %v7786 = vand.u32 %v1180, 4294901760
    %7787 = vmatpush2.msra.mxu0 %v7786
    %7788 = vmatprep.subr.mxu0 0.0
    %v7789 = vand.u32 %v1179, 4294901760
    %7790 = vmatpush2.msra.mxu0 %v7789
    %7791 = vmatprep.subr.mxu0 0.0
    %v7792 = vand.u32 %v1178, 4294901760
    %7793 = vmatpush2.msra.mxu0 %v7792
    %7794 = vmatprep.subr.mxu0 0.0
    %v7795 = vand.u32 %v1177, 4294901760
    %7796 = vmatpush2.msra.mxu0 %v7795
    %7797 = vmatprep.subr.mxu0 0.0
    %v7798 = vand.u32 %v1176, 4294901760
    %7799 = vmatpush2.msra.mxu0 %v7798
    %7800 = vmatprep.subr.mxu0 0.0
    %v7801 = vand.u32 %v1175, 4294901760
    %7802 = vmatpush2.msra.mxu0 %v7801
    %7803 = vmatprep.subr.mxu0 0.0
    %v7804 = vand.u32 %v1174, 4294901760
    %7805 = vmatpush2.msra.mxu0 %v7804
    %7806 = vmatprep.subr.mxu0 0.0
    %v7807 = vand.u32 %v1173, 4294901760
    %7808 = vmatpush2.msra.mxu0 %v7807
    %7809 = vmatprep.subr.mxu0 0.0
    %v7810 = vand.u32 %v1172, 4294901760
    %7811 = vmatpush2.msra.mxu0 %v7810
    %v7812 = vand.u32 %v5231, 4294901760
    %7813 = vmatprep.mubr.f32.mxu0 %v7812
    %v7814 = vand.u32 %v5230, 4294901760
    %7815 = vmatmul.mubr.f32.gmra.mxu0 %v7814
    %v7816 = vpop.f32.mrf.mxu0
    %v7817 = vadd.f32 %v7713, %v7816
    %v7818 = vpop.f32.mrf.mxu0
    %7819 = vdwg.mxu0
    %7820 = vmatprep.subr.mxu0 0.0
    %7821 = vmatpush1.msra.mxu0 0.0
    %7822 = vmatprep.subr.mxu0 0.0
    %7823 = vmatpush1.msra.mxu0 0.0
    %7824 = vmatprep.subr.mxu0 0.0
    %7825 = vmatpush1.msra.mxu0 0.0
    %7826 = vmatprep.subr.mxu0 0.0
    %7827 = vmatpush1.msra.mxu0 0.0
    %7828 = vmatprep.subr.mxu0 0.0
    %7829 = vmatpush1.msra.mxu0 0.0
    %7830 = vmatprep.subr.mxu0 0.0
    %7831 = vmatpush1.msra.mxu0 0.0
    %7832 = vmatprep.subr.mxu0 0.0
    %7833 = vmatpush1.msra.mxu0 0.0
    %7834 = vmatprep.subr.mxu0 0.0
    %7835 = vmatpush1.msra.mxu0 0.0
    %7836 = vmatprep.subr.mxu0 0.0
    %7837 = vmatpush1.msra.mxu0 0.0
    %7838 = vmatprep.subr.mxu0 0.0
    %7839 = vmatpush1.msra.mxu0 0.0
    %7840 = vmatprep.subr.mxu0 0.0
    %7841 = vmatpush1.msra.mxu0 0.0
    %7842 = vmatprep.subr.mxu0 0.0
    %7843 = vmatpush1.msra.mxu0 0.0
    %7844 = vmatprep.subr.mxu0 0.0
    %7845 = vmatpush1.msra.mxu0 0.0
    %7846 = vmatprep.subr.mxu0 0.0
    %7847 = vmatpush1.msra.mxu0 0.0
    %7848 = vmatprep.subr.mxu0 0.0
    %v7849 = vand.u32 %v1189, 4294901760
    %7850 = vmatpush1.msra.mxu0 %v7849
    %7851 = vmatprep.subr.mxu0 0.0
    %v7852 = vand.u32 %v1188, 4294901760
    %7853 = vmatpush1.msra.mxu0 %v7852
    %7854 = vmatprep.subr.mxu0 0.0
    %7855 = vmatpush2.msra.mxu0 0.0
    %7856 = vmatprep.subr.mxu0 0.0
    %7857 = vmatpush2.msra.mxu0 0.0
    %7858 = vmatprep.subr.mxu0 0.0
    %7859 = vmatpush2.msra.mxu0 0.0
    %7860 = vmatprep.subr.mxu0 0.0
    %7861 = vmatpush2.msra.mxu0 0.0
    %7862 = vmatprep.subr.mxu0 0.0
    %7863 = vmatpush2.msra.mxu0 0.0
    %7864 = vmatprep.subr.mxu0 0.0
    %7865 = vmatpush2.msra.mxu0 0.0
    %7866 = vmatprep.subr.mxu0 0.0
    %7867 = vmatpush2.msra.mxu0 0.0
    %7868 = vmatprep.subr.mxu0 0.0
    %7869 = vmatpush2.msra.mxu0 0.0
    %7870 = vmatprep.subr.mxu0 0.0
    %7871 = vmatpush2.msra.mxu0 0.0
    %7872 = vmatprep.subr.mxu0 0.0
    %7873 = vmatpush2.msra.mxu0 0.0
    %7874 = vmatprep.subr.mxu0 0.0
    %7875 = vmatpush2.msra.mxu0 0.0
    %7876 = vmatprep.subr.mxu0 0.0
    %7877 = vmatpush2.msra.mxu0 0.0
    %7878 = vmatprep.subr.mxu0 0.0
    %7879 = vmatpush2.msra.mxu0 0.0
    %7880 = vmatprep.subr.mxu0 0.0
    %7881 = vmatpush2.msra.mxu0 0.0
    %7882 = vmatprep.subr.mxu0 0.0
    %7883 = vmatpush2.msra.mxu0 0.0
    %7884 = vmatprep.subr.mxu0 0.0
    %7885 = vmatpush2.msra.mxu0 0.0
    %7886 = vmatprep.mubr.f32.mxu0 0.0
    %v7887 = vand.u32 %v5232, 4294901760
    %v7888 = vsub.f32 %v5232, %v7887
    %v7889 = vand.u32 %v7888, 4294901760
    %v7890 = vsub.f32 %v7888, %v7889
    %v7891 = vand.u32 %v7890, 4294901760
    %7892 = vmatmul.mubr.f32.gmra.mxu0 %v7891
    %v7893 = vpop.f32.mrf.mxu0
    %v7894 = vadd.f32 %v7817, %v7893
    %v7895 = vpop.f32.mrf.mxu0
    %7896 = vdwg.mxu0
    %7897 = vmatprep.subr.mxu0 0.0
    %7898 = vmatpush1.msra.mxu0 0.0
    %7899 = vmatprep.subr.mxu0 0.0
    %7900 = vmatpush1.msra.mxu0 0.0
    %7901 = vmatprep.subr.mxu0 0.0
    %7902 = vmatpush1.msra.mxu0 0.0
    %7903 = vmatprep.subr.mxu0 0.0
    %7904 = vmatpush1.msra.mxu0 0.0
    %7905 = vmatprep.subr.mxu0 0.0
    %7906 = vmatpush1.msra.mxu0 0.0
    %7907 = vmatprep.subr.mxu0 0.0
    %7908 = vmatpush1.msra.mxu0 0.0
    %7909 = vmatprep.subr.mxu0 0.0
    %7910 = vmatpush1.msra.mxu0 0.0
    %7911 = vmatprep.subr.mxu0 0.0
    %7912 = vmatpush1.msra.mxu0 0.0
    %7913 = vmatprep.subr.mxu0 0.0
    %7914 = vmatpush1.msra.mxu0 0.0
    %7915 = vmatprep.subr.mxu0 0.0
    %7916 = vmatpush1.msra.mxu0 0.0
    %7917 = vmatprep.subr.mxu0 0.0
    %7918 = vmatpush1.msra.mxu0 0.0
    %7919 = vmatprep.subr.mxu0 0.0
    %7920 = vmatpush1.msra.mxu0 0.0
    %7921 = vmatprep.subr.mxu0 0.0
    %7922 = vmatpush1.msra.mxu0 0.0
    %7923 = vmatprep.subr.mxu0 0.0
    %7924 = vmatpush1.msra.mxu0 0.0
    %7925 = vmatprep.subr.mxu0 0.0
    %v7926 = vand.u32 %v1189, 4294901760
    %v7927 = vsub.f32 %v1189, %v7926
    %v7928 = vand.u32 %v7927, 4294901760
    %v7929 = vsub.f32 %v7927, %v7928
    %v7930 = vand.u32 %v7929, 4294901760
    %7931 = vmatpush1.msra.mxu0 %v7930
    %7932 = vmatprep.subr.mxu0 0.0
    %v7933 = vand.u32 %v1188, 4294901760
    %v7934 = vsub.f32 %v1188, %v7933
    %v7935 = vand.u32 %v7934, 4294901760
    %v7936 = vsub.f32 %v7934, %v7935
    %v7937 = vand.u32 %v7936, 4294901760
    %7938 = vmatpush1.msra.mxu0 %v7937
    %7939 = vmatprep.subr.mxu0 0.0
    %7940 = vmatpush2.msra.mxu0 0.0
    %7941 = vmatprep.subr.mxu0 0.0
    %7942 = vmatpush2.msra.mxu0 0.0
    %7943 = vmatprep.subr.mxu0 0.0
    %7944 = vmatpush2.msra.mxu0 0.0
    %7945 = vmatprep.subr.mxu0 0.0
    %7946 = vmatpush2.msra.mxu0 0.0
    %7947 = vmatprep.subr.mxu0 0.0
    %7948 = vmatpush2.msra.mxu0 0.0
    %7949 = vmatprep.subr.mxu0 0.0
    %7950 = vmatpush2.msra.mxu0 0.0
    %7951 = vmatprep.subr.mxu0 0.0
    %7952 = vmatpush2.msra.mxu0 0.0
    %7953 = vmatprep.subr.mxu0 0.0
    %7954 = vmatpush2.msra.mxu0 0.0
    %7955 = vmatprep.subr.mxu0 0.0
    %7956 = vmatpush2.msra.mxu0 0.0
    %7957 = vmatprep.subr.mxu0 0.0
    %7958 = vmatpush2.msra.mxu0 0.0
    %7959 = vmatprep.subr.mxu0 0.0
    %7960 = vmatpush2.msra.mxu0 0.0
    %7961 = vmatprep.subr.mxu0 0.0
    %7962 = vmatpush2.msra.mxu0 0.0
    %7963 = vmatprep.subr.mxu0 0.0
    %7964 = vmatpush2.msra.mxu0 0.0
    %7965 = vmatprep.subr.mxu0 0.0
    %7966 = vmatpush2.msra.mxu0 0.0
    %7967 = vmatprep.subr.mxu0 0.0
    %7968 = vmatpush2.msra.mxu0 0.0
    %7969 = vmatprep.subr.mxu0 0.0
    %7970 = vmatpush2.msra.mxu0 0.0
    %7971 = vmatprep.mubr.f32.mxu0 0.0
    %v7972 = vand.u32 %v5232, 4294901760
    %7973 = vmatmul.mubr.f32.gmra.mxu0 %v7972
    %v7974 = vpop.f32.mrf.mxu0
    %v7975 = vadd.f32 %v7894, %v7974
    %v7976 = vpop.f32.mrf.mxu0
    %7977 = vdwg.mxu0
    %7978 = vmatprep.subr.mxu0 0.0
    %7979 = vmatpush1.msra.mxu0 0.0
    %7980 = vmatprep.subr.mxu0 0.0
    %7981 = vmatpush1.msra.mxu0 0.0
    %7982 = vmatprep.subr.mxu0 0.0
    %7983 = vmatpush1.msra.mxu0 0.0
    %7984 = vmatprep.subr.mxu0 0.0
    %7985 = vmatpush1.msra.mxu0 0.0
    %7986 = vmatprep.subr.mxu0 0.0
    %7987 = vmatpush1.msra.mxu0 0.0
    %7988 = vmatprep.subr.mxu0 0.0
    %7989 = vmatpush1.msra.mxu0 0.0
    %7990 = vmatprep.subr.mxu0 0.0
    %7991 = vmatpush1.msra.mxu0 0.0
    %7992 = vmatprep.subr.mxu0 0.0
    %7993 = vmatpush1.msra.mxu0 0.0
    %7994 = vmatprep.subr.mxu0 0.0
    %7995 = vmatpush1.msra.mxu0 0.0
    %7996 = vmatprep.subr.mxu0 0.0
    %7997 = vmatpush1.msra.mxu0 0.0
    %7998 = vmatprep.subr.mxu0 0.0
    %7999 = vmatpush1.msra.mxu0 0.0
    %8000 = vmatprep.subr.mxu0 0.0
    %8001 = vmatpush1.msra.mxu0 0.0
    %8002 = vmatprep.subr.mxu0 0.0
    %8003 = vmatpush1.msra.mxu0 0.0
    %8004 = vmatprep.subr.mxu0 0.0
    %8005 = vmatpush1.msra.mxu0 0.0
    %8006 = vmatprep.subr.mxu0 0.0
    %v8007 = vand.u32 %v1189, 4294901760
    %v8008 = vsub.f32 %v1189, %v8007
    %8009 = vmatpush1.msra.mxu0 %v8008
    %8010 = vmatprep.subr.mxu0 0.0
    %v8011 = vand.u32 %v1188, 4294901760
    %v8012 = vsub.f32 %v1188, %v8011
    %8013 = vmatpush1.msra.mxu0 %v8012
    %8014 = vmatprep.subr.mxu0 0.0
    %8015 = vmatpush2.msra.mxu0 0.0
    %8016 = vmatprep.subr.mxu0 0.0
    %8017 = vmatpush2.msra.mxu0 0.0
    %8018 = vmatprep.subr.mxu0 0.0
    %8019 = vmatpush2.msra.mxu0 0.0
    %8020 = vmatprep.subr.mxu0 0.0
    %8021 = vmatpush2.msra.mxu0 0.0
    %8022 = vmatprep.subr.mxu0 0.0
    %8023 = vmatpush2.msra.mxu0 0.0
    %8024 = vmatprep.subr.mxu0 0.0
    %8025 = vmatpush2.msra.mxu0 0.0
    %8026 = vmatprep.subr.mxu0 0.0
    %8027 = vmatpush2.msra.mxu0 0.0
    %8028 = vmatprep.subr.mxu0 0.0
    %8029 = vmatpush2.msra.mxu0 0.0
    %8030 = vmatprep.subr.mxu0 0.0
    %8031 = vmatpush2.msra.mxu0 0.0
    %8032 = vmatprep.subr.mxu0 0.0
    %8033 = vmatpush2.msra.mxu0 0.0
    %8034 = vmatprep.subr.mxu0 0.0
    %8035 = vmatpush2.msra.mxu0 0.0
    %8036 = vmatprep.subr.mxu0 0.0
    %8037 = vmatpush2.msra.mxu0 0.0
    %8038 = vmatprep.subr.mxu0 0.0
    %8039 = vmatpush2.msra.mxu0 0.0
    %8040 = vmatprep.subr.mxu0 0.0
    %8041 = vmatpush2.msra.mxu0 0.0
    %8042 = vmatprep.subr.mxu0 0.0
    %8043 = vmatpush2.msra.mxu0 0.0
    %8044 = vmatprep.subr.mxu0 0.0
    %8045 = vmatpush2.msra.mxu0 0.0
    %8046 = vmatprep.mubr.f32.mxu0 0.0
    %v8047 = vand.u32 %v5232, 4294901760
    %v8048 = vsub.f32 %v5232, %v8047
    %8049 = vmatmul.mubr.f32.gmra.mxu0 %v8048
    %v8050 = vpop.f32.mrf.mxu0
    %v8051 = vadd.f32 %v7975, %v8050
    %v8052 = vpop.f32.mrf.mxu0
    %8053 = vdwg.mxu0
    %8054 = vmatprep.subr.mxu0 0.0
    %8055 = vmatpush1.msra.mxu0 0.0
    %8056 = vmatprep.subr.mxu0 0.0
    %8057 = vmatpush1.msra.mxu0 0.0
    %8058 = vmatprep.subr.mxu0 0.0
    %8059 = vmatpush1.msra.mxu0 0.0
    %8060 = vmatprep.subr.mxu0 0.0
    %8061 = vmatpush1.msra.mxu0 0.0
    %8062 = vmatprep.subr.mxu0 0.0
    %8063 = vmatpush1.msra.mxu0 0.0
    %8064 = vmatprep.subr.mxu0 0.0
    %8065 = vmatpush1.msra.mxu0 0.0
    %8066 = vmatprep.subr.mxu0 0.0
    %8067 = vmatpush1.msra.mxu0 0.0
    %8068 = vmatprep.subr.mxu0 0.0
    %8069 = vmatpush1.msra.mxu0 0.0
    %8070 = vmatprep.subr.mxu0 0.0
    %8071 = vmatpush1.msra.mxu0 0.0
    %8072 = vmatprep.subr.mxu0 0.0
    %8073 = vmatpush1.msra.mxu0 0.0
    %8074 = vmatprep.subr.mxu0 0.0
    %8075 = vmatpush1.msra.mxu0 0.0
    %8076 = vmatprep.subr.mxu0 0.0
    %8077 = vmatpush1.msra.mxu0 0.0
    %8078 = vmatprep.subr.mxu0 0.0
    %8079 = vmatpush1.msra.mxu0 0.0
    %8080 = vmatprep.subr.mxu0 0.0
    %8081 = vmatpush1.msra.mxu0 0.0
    %8082 = vmatprep.subr.mxu0 0.0
    %v8083 = vand.u32 %v1189, 4294901760
    %8084 = vmatpush1.msra.mxu0 %v8083
    %8085 = vmatprep.subr.mxu0 0.0
    %v8086 = vand.u32 %v1188, 4294901760
    %8087 = vmatpush1.msra.mxu0 %v8086
    %8088 = vmatprep.subr.mxu0 0.0
    %8089 = vmatpush2.msra.mxu0 0.0
    %8090 = vmatprep.subr.mxu0 0.0
    %8091 = vmatpush2.msra.mxu0 0.0
    %8092 = vmatprep.subr.mxu0 0.0
    %8093 = vmatpush2.msra.mxu0 0.0
    %8094 = vmatprep.subr.mxu0 0.0
    %8095 = vmatpush2.msra.mxu0 0.0
    %8096 = vmatprep.subr.mxu0 0.0
    %8097 = vmatpush2.msra.mxu0 0.0
    %8098 = vmatprep.subr.mxu0 0.0
    %8099 = vmatpush2.msra.mxu0 0.0
    %8100 = vmatprep.subr.mxu0 0.0
    %8101 = vmatpush2.msra.mxu0 0.0
    %8102 = vmatprep.subr.mxu0 0.0
    %8103 = vmatpush2.msra.mxu0 0.0
    %8104 = vmatprep.subr.mxu0 0.0
    %8105 = vmatpush2.msra.mxu0 0.0
    %8106 = vmatprep.subr.mxu0 0.0
    %8107 = vmatpush2.msra.mxu0 0.0
    %8108 = vmatprep.subr.mxu0 0.0
    %8109 = vmatpush2.msra.mxu0 0.0
    %8110 = vmatprep.subr.mxu0 0.0
    %8111 = vmatpush2.msra.mxu0 0.0
    %8112 = vmatprep.subr.mxu0 0.0
    %8113 = vmatpush2.msra.mxu0 0.0
    %8114 = vmatprep.subr.mxu0 0.0
    %8115 = vmatpush2.msra.mxu0 0.0
    %8116 = vmatprep.subr.mxu0 0.0
    %8117 = vmatpush2.msra.mxu0 0.0
    %8118 = vmatprep.subr.mxu0 0.0
    %8119 = vmatpush2.msra.mxu0 0.0
    %8120 = vmatprep.mubr.f32.mxu0 0.0
    %v8121 = vand.u32 %v5232, 4294901760
    %v8122 = vsub.f32 %v5232, %v8121
    %v8123 = vand.u32 %v8122, 4294901760
    %8124 = vmatmul.mubr.f32.gmra.mxu0 %v8123
    %v8125 = vpop.f32.mrf.mxu0
    %v8126 = vadd.f32 %v8051, %v8125
    %v8127 = vpop.f32.mrf.mxu0
    %8128 = vdwg.mxu0
    %8129 = vmatprep.subr.mxu0 0.0
    %8130 = vmatpush1.msra.mxu0 0.0
    %8131 = vmatprep.subr.mxu0 0.0
    %8132 = vmatpush1.msra.mxu0 0.0
    %8133 = vmatprep.subr.mxu0 0.0
    %8134 = vmatpush1.msra.mxu0 0.0
    %8135 = vmatprep.subr.mxu0 0.0
    %8136 = vmatpush1.msra.mxu0 0.0
    %8137 = vmatprep.subr.mxu0 0.0
    %8138 = vmatpush1.msra.mxu0 0.0
    %8139 = vmatprep.subr.mxu0 0.0
    %8140 = vmatpush1.msra.mxu0 0.0
    %8141 = vmatprep.subr.mxu0 0.0
    %8142 = vmatpush1.msra.mxu0 0.0
    %8143 = vmatprep.subr.mxu0 0.0
    %8144 = vmatpush1.msra.mxu0 0.0
    %8145 = vmatprep.subr.mxu0 0.0
    %8146 = vmatpush1.msra.mxu0 0.0
    %8147 = vmatprep.subr.mxu0 0.0
    %8148 = vmatpush1.msra.mxu0 0.0
    %8149 = vmatprep.subr.mxu0 0.0
    %8150 = vmatpush1.msra.mxu0 0.0
    %8151 = vmatprep.subr.mxu0 0.0
    %8152 = vmatpush1.msra.mxu0 0.0
    %8153 = vmatprep.subr.mxu0 0.0
    %8154 = vmatpush1.msra.mxu0 0.0
    %8155 = vmatprep.subr.mxu0 0.0
    %8156 = vmatpush1.msra.mxu0 0.0
    %8157 = vmatprep.subr.mxu0 0.0
    %v8158 = vand.u32 %v1189, 4294901760
    %v8159 = vsub.f32 %v1189, %v8158
    %v8160 = vand.u32 %v8159, 4294901760
    %8161 = vmatpush1.msra.mxu0 %v8160
    %8162 = vmatprep.subr.mxu0 0.0
    %v8163 = vand.u32 %v1188, 4294901760
    %v8164 = vsub.f32 %v1188, %v8163
    %v8165 = vand.u32 %v8164, 4294901760
    %8166 = vmatpush1.msra.mxu0 %v8165
    %8167 = vmatprep.subr.mxu0 0.0
    %8168 = vmatpush2.msra.mxu0 0.0
    %8169 = vmatprep.subr.mxu0 0.0
    %8170 = vmatpush2.msra.mxu0 0.0
    %8171 = vmatprep.subr.mxu0 0.0
    %8172 = vmatpush2.msra.mxu0 0.0
    %8173 = vmatprep.subr.mxu0 0.0
    %8174 = vmatpush2.msra.mxu0 0.0
    %8175 = vmatprep.subr.mxu0 0.0
    %8176 = vmatpush2.msra.mxu0 0.0
    %8177 = vmatprep.subr.mxu0 0.0
    %8178 = vmatpush2.msra.mxu0 0.0
    %8179 = vmatprep.subr.mxu0 0.0
    %8180 = vmatpush2.msra.mxu0 0.0
    %8181 = vmatprep.subr.mxu0 0.0
    %8182 = vmatpush2.msra.mxu0 0.0
    %8183 = vmatprep.subr.mxu0 0.0
    %8184 = vmatpush2.msra.mxu0 0.0
    %8185 = vmatprep.subr.mxu0 0.0
    %8186 = vmatpush2.msra.mxu0 0.0
    %8187 = vmatprep.subr.mxu0 0.0
    %8188 = vmatpush2.msra.mxu0 0.0
    %8189 = vmatprep.subr.mxu0 0.0
    %8190 = vmatpush2.msra.mxu0 0.0
    %8191 = vmatprep.subr.mxu0 0.0
    %8192 = vmatpush2.msra.mxu0 0.0
    %8193 = vmatprep.subr.mxu0 0.0
    %8194 = vmatpush2.msra.mxu0 0.0
    %8195 = vmatprep.subr.mxu0 0.0
    %8196 = vmatpush2.msra.mxu0 0.0
    %8197 = vmatprep.subr.mxu0 0.0
    %8198 = vmatpush2.msra.mxu0 0.0
    %8199 = vmatprep.mubr.f32.mxu0 0.0
    %v8200 = vand.u32 %v5232, 4294901760
    %8201 = vmatmul.mubr.f32.gmra.mxu0 %v8200
    %v8202 = vpop.f32.mrf.mxu0
    %v8203 = vadd.f32 %v8126, %v8202
    %v8204 = vpop.f32.mrf.mxu0
    %8205 = vdwg.mxu0
    %8206 = vmatprep.subr.mxu0 0.0
    %8207 = vmatpush1.msra.mxu0 0.0
    %8208 = vmatprep.subr.mxu0 0.0
    %8209 = vmatpush1.msra.mxu0 0.0
    %8210 = vmatprep.subr.mxu0 0.0
    %8211 = vmatpush1.msra.mxu0 0.0
    %8212 = vmatprep.subr.mxu0 0.0
    %8213 = vmatpush1.msra.mxu0 0.0
    %8214 = vmatprep.subr.mxu0 0.0
    %8215 = vmatpush1.msra.mxu0 0.0
    %8216 = vmatprep.subr.mxu0 0.0
    %8217 = vmatpush1.msra.mxu0 0.0
    %8218 = vmatprep.subr.mxu0 0.0
    %8219 = vmatpush1.msra.mxu0 0.0
    %8220 = vmatprep.subr.mxu0 0.0
    %8221 = vmatpush1.msra.mxu0 0.0
    %8222 = vmatprep.subr.mxu0 0.0
    %8223 = vmatpush1.msra.mxu0 0.0
    %8224 = vmatprep.subr.mxu0 0.0
    %8225 = vmatpush1.msra.mxu0 0.0
    %8226 = vmatprep.subr.mxu0 0.0
    %8227 = vmatpush1.msra.mxu0 0.0
    %8228 = vmatprep.subr.mxu0 0.0
    %8229 = vmatpush1.msra.mxu0 0.0
    %8230 = vmatprep.subr.mxu0 0.0
    %8231 = vmatpush1.msra.mxu0 0.0
    %8232 = vmatprep.subr.mxu0 0.0
    %8233 = vmatpush1.msra.mxu0 0.0
    %8234 = vmatprep.subr.mxu0 0.0
    %v8235 = vand.u32 %v1189, 4294901760
    %8236 = vmatpush1.msra.mxu0 %v8235
    %8237 = vmatprep.subr.mxu0 0.0
    %v8238 = vand.u32 %v1188, 4294901760
    %8239 = vmatpush1.msra.mxu0 %v8238
    %8240 = vmatprep.subr.mxu0 0.0
    %8241 = vmatpush2.msra.mxu0 0.0
    %8242 = vmatprep.subr.mxu0 0.0
    %8243 = vmatpush2.msra.mxu0 0.0
    %8244 = vmatprep.subr.mxu0 0.0
    %8245 = vmatpush2.msra.mxu0 0.0
    %8246 = vmatprep.subr.mxu0 0.0
    %8247 = vmatpush2.msra.mxu0 0.0
    %8248 = vmatprep.subr.mxu0 0.0
    %8249 = vmatpush2.msra.mxu0 0.0
    %8250 = vmatprep.subr.mxu0 0.0
    %8251 = vmatpush2.msra.mxu0 0.0
    %8252 = vmatprep.subr.mxu0 0.0
    %8253 = vmatpush2.msra.mxu0 0.0
    %8254 = vmatprep.subr.mxu0 0.0
    %8255 = vmatpush2.msra.mxu0 0.0
    %8256 = vmatprep.subr.mxu0 0.0
    %8257 = vmatpush2.msra.mxu0 0.0
    %8258 = vmatprep.subr.mxu0 0.0
    %8259 = vmatpush2.msra.mxu0 0.0
    %8260 = vmatprep.subr.mxu0 0.0
    %8261 = vmatpush2.msra.mxu0 0.0
    %8262 = vmatprep.subr.mxu0 0.0
    %8263 = vmatpush2.msra.mxu0 0.0
    %8264 = vmatprep.subr.mxu0 0.0
    %8265 = vmatpush2.msra.mxu0 0.0
    %8266 = vmatprep.subr.mxu0 0.0
    %8267 = vmatpush2.msra.mxu0 0.0
    %8268 = vmatprep.subr.mxu0 0.0
    %8269 = vmatpush2.msra.mxu0 0.0
    %8270 = vmatprep.subr.mxu0 0.0
    %8271 = vmatpush2.msra.mxu0 0.0
    %8272 = vmatprep.mubr.f32.mxu0 0.0
    %v8273 = vand.u32 %v5232, 4294901760
    %8274 = vmatmul.mubr.f32.gmra.mxu0 %v8273
    %v8275 = vpop.f32.mrf.mxu0
    %v8276 = vadd.f32 %v8203, %v8275
    %v8277 = vpop.f32.mrf.mxu0
    %8278 = vdwg.mxu0
    %v8279 = vmul.f32 %v8276, 0.00390625
    %v8280 = vadd.f32 %v8279, %v1190
    %8281 = vst.msk [vmem:[#allocation2 + $0x1] sm:$0x1] %vm4740, %v8280
    // Predicated region
    $region22: #{tpu_custom_call.1} parent=1 // pred_check
      _
    $region23: #{tpu_custom_call.1} parent=1 // pred_check_branch
      %8283 = sbr.rel (0) target = $region25
    $region24: #{tpu_custom_call.1} parent=1 // pred_region
      %s8285 = ssub.s32 32, 32
      %8286 = vsyncadd [#allocation3], %s8285
      %s8288 = sshll.u32 [#allocation2], 4
      %s8289 = int_to_ptr.vmem [resolvable:$true] %s8288
      %8291 = dma.vmem_to_hbm [thread:$0]  %s8289, 32, %s5, [#allocation3]
    $region25: #{tpu_custom_call.1} parent=1 // pred_fallthru
      _
    // Predicated region
    $region26: #{tpu_custom_call.1} parent=1 // pred_check
      _
    $region27: #{tpu_custom_call.1} parent=1 // pred_check_branch
      %8293 = sbr.rel (0) target = $region29
    $region28: #{tpu_custom_call.1} parent=1 // pred_region
      %8294 = dma.done [#allocation3], 32
    $region29: #{tpu_custom_call.1} parent=1 // pred_fallthru
      _
    %8295 = vsyncpa [#allocation3], 1

</llo_original>
